<compile_context>
chip_gen: v7x
topology: tpu7x:2x2x1
jax: 0.10.0
libtpu: 0.0.40
codegen_flags: <defaults>
</compile_context>

<pallas_src>
import warnings

import numpy as np
import jax
import jax.numpy as jnp
from jax.experimental import pallas as pl
from jax.experimental.pallas import tpu as pltpu

HP = jax.lax.Precision.HIGHEST   # used only by the pure-JAX reference
LN_EPS = 1e-5
BF16 = jnp.bfloat16
F32 = jnp.float32


def _mm(a, b):
    # single-pass bf16 MXU matmul with f32 accumulation
    return jnp.dot(a.astype(BF16), b.astype(BF16), preferred_element_type=F32)


def _layernorm(z, g, b):
    # single-pass: E[z], E[z^2]; var = E[z^2] - mu^2 (rsqrt goes to the EUP slot)
    mu = jnp.mean(z, axis=-1, keepdims=True)
    ms = jnp.mean(z * z, axis=-1, keepdims=True)
    var = ms - mu * mu
    return (z - mu) * jax.lax.rsqrt(var + LN_EPS) * g + b


def dt_kernel(feat_ref, w_emb_ref, pos_ref, ln0g_ref, ln0b_ref,
              wqkv_ref, bqkv_ref, wo_ref, bo_ref,
              ln1g_ref, ln1b_ref, ln2g_ref, ln2b_ref,
              w1_ref, b1_ref, w2_ref, b2_ref,
              wh_ref, bh_ref, out_ref):
    BB, L, Fdim = feat_ref.shape
    n_layer = wo_ref.shape[0]
    D = wo_ref.shape[1]
    T = out_ref.shape[1]
    M = BB * L  # all BB sequences stacked along the sublane axis for per-token matmuls

    # --- fused embeddings (state/return/action projections + biases via indicator cols) ---
    x = _mm(feat_ref[...].reshape(M, Fdim), w_emb_ref[...])         # (M, D) f32
    x = (x.reshape(BB, L, D) + pos_ref[...]).reshape(M, D)          # + permuted pos_embed
    x = _layernorm(x, ln0g_ref[...], ln0b_ref[...])                 # embed_ln

    scale = D ** -0.5  # n_head = 1 -> head_dim = D

    # --- post-norm TransformerEncoder layers (ReLU FFN, no mask, dropout = identity) ---
    for li in range(n_layer):
        # fused QKV: one lane-dense matmul + one bias add, then static lane slices
        qkv = _mm(x, wqkv_ref[li]) + bqkv_ref[li]                   # (M, pad128(3D)) f32
        q = qkv[:, 0:D]
        k = qkv[:, D:2 * D]
        v = qkv[:, 2 * D:3 * D]

        qb = q.reshape(BB, L, D).astype(BF16)
        kb = k.reshape(BB, L, D).astype(BF16)
        vb = v.reshape(BB, L, D).astype(BF16)

        # per-sequence attention (batched, contracting on last dims -> no transposed copy)
        s = jnp.einsum('bld,bmd->blm', qb, kb,
                       preferred_element_type=F32) * scale          # (BB, L, L)
        s = s - jnp.max(s, axis=-1, keepdims=True)
        p = jnp.exp(s)
        p = p * pl.reciprocal(jnp.sum(p, axis=-1, keepdims=True), approx=True)
        ctx = jnp.einsum('blm,bmd->bld', p.astype(BF16), vb,
                         preferred_element_type=F32)                # (BB, L, D)

        attn_out = _mm(ctx.reshape(M, D), wo_ref[li]) + bo_ref[li]
        x = _layernorm(x + attn_out, ln1g_ref[li], ln1b_ref[li])

        h = jnp.maximum(_mm(x, w1_ref[li]) + b1_ref[li], 0.0)       # (M, 4D)
        ff = _mm(h, w2_ref[li]) + b2_ref[li]
        x = _layernorm(x + ff, ln2g_ref[li], ln2b_ref[li])

    # --- state-token outputs = leading contiguous block (positions 0..T-1) ---
    x_state = x.reshape(BB, L, D)[:, :T, :].reshape(BB * T, D)       # offset-0 slice
    logits = _mm(x_state, wh_ref[...]) + bh_ref[...]                 # (BB*T, 128) lane-dense
    out_ref[...] = logits.reshape(BB, T, out_ref.shape[2]).astype(out_ref.dtype)


def init_params(key, state_dim, action_dim, context_length, embed_dim, n_layer):
    D = embed_dim
    ks = jax.random.split(key, 16)

    def nrm(k, shape, scale=0.02):
        return scale * jax.random.normal(k, shape, F32)

    return dict(
        ws=nrm(ks[0], (state_dim, D)), bs=nrm(ks[1], (1, D)),
        tab=nrm(ks[2], (action_dim, D)),
        wr=nrm(ks[3], (1, D)), br=nrm(ks[4], (1, D)),
        pos=nrm(ks[5], (1, 3 * context_length, D)),   # nonzero so pos-permutation is exercised
        ln0g=jnp.ones((1, D), F32), ln0b=jnp.zeros((1, D), F32),
        wqkv=nrm(ks[6], (n_layer, 3, D, D)), bqkv=nrm(ks[7], (n_layer, 3, 1, D)),
        wo=nrm(ks[8], (n_layer, D, D)), bo=nrm(ks[9], (n_layer, 1, D)),
        ln1g=jnp.ones((n_layer, 1, D), F32), ln1b=jnp.zeros((n_layer, 1, D), F32),
        ln2g=jnp.ones((n_layer, 1, D), F32), ln2b=jnp.zeros((n_layer, 1, D), F32),
        w1=nrm(ks[10], (n_layer, D, 4 * D)), b1=nrm(ks[11], (n_layer, 1, 4 * D)),
        w2=nrm(ks[12], (n_layer, 4 * D, D)), b2=nrm(ks[13], (n_layer, 1, D)),
        wh=nrm(ks[14], (D, action_dim)), bh=nrm(ks[15], (1, action_dim)),
    )


def _full_spec(shape):
    nd = len(shape)
    return pl.BlockSpec(shape, lambda b, _nd=nd: (0,) * _nd)


def _pick_bb(B):
    # prefer <=8 sequences per step AND >=4 grid steps (>=2 per v7x TensorCore, so both the
    # feat prefetch and the logits writeback are hidden behind compute on every core)
    for bb in (8, 4, 2, 1):
        if B % bb == 0 and B // bb >= 4:
            return bb
    warnings.warn("DecisionTransformer pallas kernel: batch too small/odd for a >=4-step "
                  "grid; pipelining (and on v7x a whole TensorCore) may be lost.")
    for bb in (8, 4, 2, 1):
        if B % bb == 0:
            return bb
    return B


def dt_forward(params, states, actions, returns, timesteps, block_b=None):
    del timesteps  # computed but unused in the PyTorch forward
    B, T, S = states.shape
    D = params['ws'].shape[1]
    A = params['tab'].shape[0]
    n_layer = params['wqkv'].shape[0]
    L = 3 * T
    A_PAD = max(128, pl.cdiv(A, 128) * 128)        # lane-dense logits; sliced back outside
    QKV_PAD = max(128, pl.cdiv(3 * D, 128) * 128)  # lane-dense fused QKV width

    if block_b is None:
        block_b = _pick_bb(B)
    assert B % block_b == 0

    acts = jnp.clip(actions.astype(jnp.int32), 0, A - 1)
    onehot = jax.nn.one_hot(acts, A, dtype=F32)                    # (B, T, A)
    rets = returns.astype(F32)[..., None]                          # (B, T, 1)
    sts = states.astype(F32)

    # per-token features; columns: [return(1) | state(S) | onehot(A) | is_return(1) | is_state(1)]
    Fdim = 1 + S + A + 2
    z = lambda *sh: jnp.zeros(sh, F32)
    o = lambda *sh: jnp.ones(sh, F32)
    s_feat = jnp.concatenate([z(B, T, 1), sts, z(B, T, A + 1), o(B, T, 1)], axis=-1)
    r_feat = jnp.concatenate([rets, z(B, T, S + A), o(B, T, 1), z(B, T, 1)], axis=-1)
    a_feat = jnp.concatenate([z(B, T, 1 + S), onehot, z(B, T, 2)], axis=-1)
    # token block order [states | returns | actions] -> head reads the leading block
    feat = jnp.concatenate([s_feat, r_feat, a_feat], axis=1).astype(BF16)  # (B, L, Fdim) bf16

    # fused embedding weight; rows match the feature columns above (biases as indicator rows)
    w_emb = jnp.concatenate(
        [params['wr'], params['ws'], params['tab'], params['br'], params['bs']],
        axis=0).astype(BF16)                                       # (Fdim, D)

    # positional embedding permuted from interleaved [r,s,a,r,s,a,...] to block order [s|r|a]
    pos_il = params['pos'][0, :L, :]
    pos_blk = jnp.concatenate([pos_il[1::3], pos_il[0::3], pos_il[2::3]], axis=0)  # (L, D)

    # fused lane-dense QKV weights / biases
    wqkv_cat = jnp.concatenate([params['wqkv'][:, i] for i in range(3)], axis=-1)  # (nl, D, 3D)
    bqkv_cat = jnp.concatenate([params['bqkv'][:, i] for i in range(3)], axis=-1)  # (nl, 1, 3D)
    wqkv_f = jnp.pad(wqkv_cat, ((0, 0), (0, 0), (0, QKV_PAD - 3 * D))).astype(BF16)
    bqkv_f = jnp.pad(bqkv_cat, ((0, 0), (0, 0), (0, QKV_PAD - 3 * D)))

    # lane-dense action head (pad A -> A_PAD)
    wh_pad = jnp.zeros((D, A_PAD), F32).at[:, :A].set(params['wh']).astype(BF16)
    bh_pad = jnp.zeros((1, A_PAD), F32).at[:, :A].set(params['bh'])

    operands = (
        feat, w_emb, pos_blk, params['ln0g'], params['ln0b'],
        wqkv_f, bqkv_f,
        params['wo'].astype(BF16), params['bo'],
        params['ln1g'], params['ln1b'], params['ln2g'], params['ln2b'],
        params['w1'].astype(BF16), params['b1'],
        params['w2'].astype(BF16), params['b2'],
        wh_pad, bh_pad,
    )

    # NOTE: all layer weights are resident (<1 MiB at demo sizes). If D/n_layer scale up
    # (roughly when n_layer * 8*D*D*2 bytes approaches ~16-24 MiB -- hit first on v7x's
    # 64 MiB VMEM), move the layer loop onto a trailing "arbitrary" grid axis with per-layer
    # BlockSpecs so only one layer's weights stay resident.
    in_specs = [pl.BlockSpec((block_b, L, Fdim), lambda b: (b, 0, 0))] + \
               [_full_spec(op.shape) for op in operands[1:]]

    # rough cost hint so XLA overlaps the surrounding feature-build / slice HLOs
    mm_flops = (2 * B * L * Fdim * D
                + n_layer * (2 * B * L * D * QKV_PAD      # fused QKV
                             + 2 * 2 * B * L * L * D      # scores + ctx
                             + 2 * B * L * D * D          # out proj
                             + 2 * 2 * B * L * D * 4 * D)  # FFN
                + 2 * B * T * D * A_PAD)
    trans = n_layer * B * L * L + (2 * n_layer + 1) * B * L        # exp + rsqrt-ish
    bytes_accessed = sum(int(op.size) * op.dtype.itemsize for op in operands) + B * T * A_PAD * 2
    cost = pl.CostEstimate(flops=int(mm_flops), transcendentals=int(trans),
                           bytes_accessed=int(bytes_accessed))

    out = pl.pallas_call(
        dt_kernel,
        out_shape=jax.ShapeDtypeStruct((B, T, A_PAD), BF16),       # bf16 writeback
        grid_spec=pl.GridSpec(
            grid=(B // block_b,),
            in_specs=in_specs,
            out_specs=pl.BlockSpec((block_b, T, A_PAD), lambda b: (b, 0, 0)),
        ),
        compiler_params=pltpu.CompilerParams(dimension_semantics=("parallel",)),
        cost_estimate=cost,
    )(*operands)
    return out[..., :A].astype(F32)


def dt_reference(params, states, actions, returns):
    """Pure-JAX f32 reference mirroring the PyTorch forward (eval mode, interleaved layout)."""
    B, T, S = states.shape
    D = params['ws'].shape[1]
    A = params['tab'].shape[0]
    acts = jnp.clip(actions.astype(jnp.int32), 0, A - 1)

    st_e = jnp.einsum('bts,sd->btd', states, params['ws'], precision=HP) + params['bs'][0]
    ac_e = params['tab'][acts]
    rt_e = returns[..., None] * params['wr'][0] + params['br'][0]
    seq = jnp.stack([rt_e, st_e, ac_e], axis=2).reshape(B, 3 * T, D)
    seq = seq + params['pos'][:, :3 * T, :]

    def ln(z, g, b):
        mu = z.mean(-1, keepdims=True)
        var = ((z - mu) ** 2).mean(-1, keepdims=True)
        return (z - mu) / jnp.sqrt(var + LN_EPS) * g + b

    x = ln(seq, params['ln0g'][0], params['ln0b'][0])
    for li in range(params['wqkv'].shape[0]):
        q = jnp.einsum('bld,de->ble', x, params['wqkv'][li, 0], precision=HP) + params['bqkv'][li, 0]
        k = jnp.einsum('bld,de->ble', x, params['wqkv'][li, 1], precision=HP) + params['bqkv'][li, 1]
        v = jnp.einsum('bld,de->ble', x, params['wqkv'][li, 2], precision=HP) + params['bqkv'][li, 2]
        s = jnp.einsum('bld,bmd->blm', q, k, precision=HP) * (D ** -0.5)
        p = jax.nn.softmax(s, axis=-1)
        ctx = jnp.einsum('blm,bmd->bld', p, v, precision=HP)
        ao = jnp.einsum('bld,de->ble', ctx, params['wo'][li], precision=HP) + params['bo'][li]
        x = ln(x + ao, params['ln1g'][li][0], params['ln1b'][li][0])
        h = jax.nn.relu(jnp.einsum('bld,de->ble', x, params['w1'][li], precision=HP) + params['b1'][li])
        ff = jnp.einsum('bld,de->ble', h, params['w2'][li], precision=HP) + params['b2'][li]
        x = ln(x + ff, params['ln2g'][li][0], params['ln2b'][li][0])
    xs = x[:, 1::3, :]
    return jnp.einsum('btd,da->bta', xs, params['wh'], precision=HP) + params['bh'][0]


if __name__ == "__main__":
    key = jax.random.PRNGKey(0)
    B, T = 32, 8
    state_dim, action_dim, embed_dim, n_layer = 6, 5, 32, 3
    context_length = 8  # T <= context_length

    kp, ks_, ka, kr, kt = jax.random.split(key, 5)
    params = init_params(kp, state_dim, action_dim, context_length, embed_dim, n_layer)

    states = jax.random.normal(ks_, (B, T, state_dim), jnp.float32)
    actions = jax.random.randint(ka, (B, T), 0, action_dim)
    returns = jax.random.normal(kr, (B, T), jnp.float32)
    timesteps = jax.random.randint(kt, (B, T), 0, 1000)

    out = jax.jit(dt_forward)(params, states, actions, returns, timesteps)
    jax.block_until_ready(out)

    ref = dt_reference(params, states, actions, returns)
    # kernel uses single-pass bf16 MXU matmuls (f32 accumulation) + bf16 logits writeback
    # vs. an f32 reference
    np.testing.assert_allclose(np.asarray(out), np.asarray(ref), rtol=2e-2, atol=8e-3)
    print("KERNEL_OK")
</pallas_src>

<mosaic_0001>
module attributes {stable_mosaic.version = 11 : i64} {
  func.func @dt_kernel(%arg0: i32, %arg1: memref<8x24x14xbf16, #tpu.memory_space<vmem>>, %arg2: memref<14x32xbf16, #tpu.memory_space<vmem>>, %arg3: memref<24x32xf32, #tpu.memory_space<vmem>>, %arg4: memref<1x32xf32, #tpu.memory_space<vmem>>, %arg5: memref<1x32xf32, #tpu.memory_space<vmem>>, %arg6: memref<3x32x128xbf16, #tpu.memory_space<vmem>>, %arg7: memref<3x1x128xf32, #tpu.memory_space<vmem>>, %arg8: memref<3x32x32xbf16, #tpu.memory_space<vmem>>, %arg9: memref<3x1x32xf32, #tpu.memory_space<vmem>>, %arg10: memref<3x1x32xf32, #tpu.memory_space<vmem>>, %arg11: memref<3x1x32xf32, #tpu.memory_space<vmem>>, %arg12: memref<3x1x32xf32, #tpu.memory_space<vmem>>, %arg13: memref<3x1x32xf32, #tpu.memory_space<vmem>>, %arg14: memref<3x32x128xbf16, #tpu.memory_space<vmem>>, %arg15: memref<3x1x128xf32, #tpu.memory_space<vmem>>, %arg16: memref<3x128x32xbf16, #tpu.memory_space<vmem>>, %arg17: memref<3x1x32xf32, #tpu.memory_space<vmem>>, %arg18: memref<32x128xbf16, #tpu.memory_space<vmem>>, %arg19: memref<1x128xf32, #tpu.memory_space<vmem>>, %arg20: memref<8x8x128xbf16, #tpu.memory_space<vmem>>) attributes {dimension_semantics = [#tpu.dimension_semantics<parallel>], iteration_bounds = array<i64: 4>, scalar_prefetch = 0 : i64, scratch_operands = 0 : i64, tpu.core_type = #tpu.core_type<tc>, window_params = [{transform_indices = @transform_0, window_bounds = array<i64: 8, 24, 14>}, {pipeline_mode = #tpu.pipeline_mode<synchronous>, transform_indices = @transform_1, window_bounds = array<i64: 14, 32>}, {pipeline_mode = #tpu.pipeline_mode<synchronous>, transform_indices = @transform_2, window_bounds = array<i64: 24, 32>}, {pipeline_mode = #tpu.pipeline_mode<synchronous>, transform_indices = @transform_3, window_bounds = array<i64: 1, 32>}, {pipeline_mode = #tpu.pipeline_mode<synchronous>, transform_indices = @transform_4, window_bounds = array<i64: 1, 32>}, {pipeline_mode = #tpu.pipeline_mode<synchronous>, transform_indices = @transform_5, window_bounds = array<i64: 3, 32, 128>}, {pipeline_mode = #tpu.pipeline_mode<synchronous>, transform_indices = @transform_6, window_bounds = array<i64: 3, 1, 128>}, {pipeline_mode = #tpu.pipeline_mode<synchronous>, transform_indices = @transform_7, window_bounds = array<i64: 3, 32, 32>}, {pipeline_mode = #tpu.pipeline_mode<synchronous>, transform_indices = @transform_8, window_bounds = array<i64: 3, 1, 32>}, {pipeline_mode = #tpu.pipeline_mode<synchronous>, transform_indices = @transform_9, window_bounds = array<i64: 3, 1, 32>}, {pipeline_mode = #tpu.pipeline_mode<synchronous>, transform_indices = @transform_10, window_bounds = array<i64: 3, 1, 32>}, {pipeline_mode = #tpu.pipeline_mode<synchronous>, transform_indices = @transform_11, window_bounds = array<i64: 3, 1, 32>}, {pipeline_mode = #tpu.pipeline_mode<synchronous>, transform_indices = @transform_12, window_bounds = array<i64: 3, 1, 32>}, {pipeline_mode = #tpu.pipeline_mode<synchronous>, transform_indices = @transform_13, window_bounds = array<i64: 3, 32, 128>}, {pipeline_mode = #tpu.pipeline_mode<synchronous>, transform_indices = @transform_14, window_bounds = array<i64: 3, 1, 128>}, {pipeline_mode = #tpu.pipeline_mode<synchronous>, transform_indices = @transform_15, window_bounds = array<i64: 3, 128, 32>}, {pipeline_mode = #tpu.pipeline_mode<synchronous>, transform_indices = @transform_16, window_bounds = array<i64: 3, 1, 32>}, {pipeline_mode = #tpu.pipeline_mode<synchronous>, transform_indices = @transform_17, window_bounds = array<i64: 32, 128>}, {pipeline_mode = #tpu.pipeline_mode<synchronous>, transform_indices = @transform_18, window_bounds = array<i64: 1, 128>}, {transform_indices = @transform_19, window_bounds = array<i64: 8, 8, 128>}]} {
    %c0 = arith.constant 0 : index
    %c0_0 = arith.constant 0 : index
    %c0_1 = arith.constant 0 : index
    %0 = vector.load %arg1[%c0, %c0_0, %c0_1] : memref<8x24x14xbf16, #tpu.memory_space<vmem>>, vector<8x24x14xbf16>
    %1 = vector.shape_cast %0 : vector<8x24x14xbf16> to vector<192x14xbf16>
    %c0_2 = arith.constant 0 : index
    %c0_3 = arith.constant 0 : index
    %2 = vector.load %arg2[%c0_2, %c0_3] : memref<14x32xbf16, #tpu.memory_space<vmem>>, vector<14x32xbf16>
    %cst = arith.constant dense<0.000000e+00> : vector<192x32xf32>
    %3 = tpu.matmul %1, %2, %cst {dimension_numbers = #tpu.dot_dimension_numbers<[1], [0], [0], [1], [0, 0, 1, 1], [], []>} : vector<192x14xbf16>, vector<14x32xbf16>, vector<192x32xf32> -> vector<192x32xf32>
    %4 = vector.shape_cast %3 : vector<192x32xf32> to vector<8x24x32xf32>
    %c0_4 = arith.constant 0 : index
    %c0_5 = arith.constant 0 : index
    %5 = vector.load %arg3[%c0_4, %c0_5] : memref<24x32xf32, #tpu.memory_space<vmem>>, vector<24x32xf32>
    %6 = vector.shape_cast %5 : vector<24x32xf32> to vector<1x24x32xf32>
    %7 = vector.broadcast %6 : vector<1x24x32xf32> to vector<8x24x32xf32>
    %8 = arith.addf %4, %7 : vector<8x24x32xf32>
    %9 = vector.shape_cast %8 : vector<8x24x32xf32> to vector<192x32xf32>
    %c0_6 = arith.constant 0 : index
    %c0_7 = arith.constant 0 : index
    %10 = vector.load %arg4[%c0_6, %c0_7] : memref<1x32xf32, #tpu.memory_space<vmem>>, vector<1x32xf32>
    %c0_8 = arith.constant 0 : index
    %c0_9 = arith.constant 0 : index
    %11 = vector.load %arg5[%c0_8, %c0_9] : memref<1x32xf32, #tpu.memory_space<vmem>>, vector<1x32xf32>
    %cst_10 = arith.constant dense<0.000000e+00> : vector<192xf32>
    %12 = vector.multi_reduction <add>, %9, %cst_10 [1] : vector<192x32xf32> to vector<192xf32>
    %13 = vector.shape_cast %12 : vector<192xf32> to vector<192x1xf32>
    %cst_11 = arith.constant 3.200000e+01 : f32
    %14 = vector.broadcast %cst_11 : f32 to vector<192x1xf32>
    %15 = arith.divf %13, %14 : vector<192x1xf32>
    %16 = arith.mulf %9, %9 : vector<192x32xf32>
    %cst_12 = arith.constant dense<0.000000e+00> : vector<192xf32>
    %17 = vector.multi_reduction <add>, %16, %cst_12 [1] : vector<192x32xf32> to vector<192xf32>
    %18 = vector.shape_cast %17 : vector<192xf32> to vector<192x1xf32>
    %cst_13 = arith.constant 3.200000e+01 : f32
    %19 = vector.broadcast %cst_13 : f32 to vector<192x1xf32>
    %20 = arith.divf %18, %19 : vector<192x1xf32>
    %21 = arith.mulf %15, %15 : vector<192x1xf32>
    %22 = arith.subf %20, %21 : vector<192x1xf32>
    %23 = vector.broadcast %15 : vector<192x1xf32> to vector<192x32xf32>
    %24 = arith.subf %9, %23 : vector<192x32xf32>
    %cst_14 = arith.constant 9.99999974E-6 : f32
    %25 = vector.broadcast %cst_14 : f32 to vector<192x1xf32>
    %26 = arith.addf %22, %25 : vector<192x1xf32>
    %27 = math.rsqrt %26 : vector<192x1xf32>
    %28 = vector.broadcast %27 : vector<192x1xf32> to vector<192x32xf32>
    %29 = arith.mulf %24, %28 : vector<192x32xf32>
    %30 = vector.broadcast %10 : vector<1x32xf32> to vector<192x32xf32>
    %31 = arith.mulf %29, %30 : vector<192x32xf32>
    %32 = vector.broadcast %11 : vector<1x32xf32> to vector<192x32xf32>
    %33 = arith.addf %31, %32 : vector<192x32xf32>
    %c0_15 = arith.constant 0 : index
    %c0_16 = arith.constant 0 : index
    %c0_17 = arith.constant 0 : index
    %34 = vector.load %arg6[%c0_15, %c0_16, %c0_17] : memref<3x32x128xbf16, #tpu.memory_space<vmem>>, vector<1x32x128xbf16>
    %35 = vector.shape_cast %34 : vector<1x32x128xbf16> to vector<32x128xbf16>
    %36 = arith.truncf %33 : vector<192x32xf32> to vector<192x32xbf16>
    %cst_18 = arith.constant dense<0.000000e+00> : vector<192x128xf32>
    %37 = tpu.matmul %36, %35, %cst_18 {dimension_numbers = #tpu.dot_dimension_numbers<[1], [0], [0], [1], [0, 0, 1, 1], [], []>} : vector<192x32xbf16>, vector<32x128xbf16>, vector<192x128xf32> -> vector<192x128xf32>
    %c0_19 = arith.constant 0 : index
    %c0_20 = arith.constant 0 : index
    %c0_21 = arith.constant 0 : index
    %38 = vector.load %arg7[%c0_19, %c0_20, %c0_21] : memref<3x1x128xf32, #tpu.memory_space<vmem>>, vector<1x1x128xf32>
    %39 = vector.shape_cast %38 : vector<1x1x128xf32> to vector<1x128xf32>
    %40 = vector.broadcast %39 : vector<1x128xf32> to vector<192x128xf32>
    %41 = arith.addf %37, %40 : vector<192x128xf32>
    %42 = vector.extract_strided_slice %41 {offsets = [0, 0], sizes = [192, 32], strides = [1, 1]} : vector<192x128xf32> to vector<192x32xf32>
    %43 = vector.extract_strided_slice %41 {offsets = [0, 32], sizes = [192, 32], strides = [1, 1]} : vector<192x128xf32> to vector<192x32xf32>
    %44 = vector.extract_strided_slice %41 {offsets = [0, 64], sizes = [192, 32], strides = [1, 1]} : vector<192x128xf32> to vector<192x32xf32>
    %45 = vector.shape_cast %42 : vector<192x32xf32> to vector<8x24x32xf32>
    %46 = arith.truncf %45 : vector<8x24x32xf32> to vector<8x24x32xbf16>
    %47 = vector.shape_cast %43 : vector<192x32xf32> to vector<8x24x32xf32>
    %48 = arith.truncf %47 : vector<8x24x32xf32> to vector<8x24x32xbf16>
    %49 = vector.shape_cast %44 : vector<192x32xf32> to vector<8x24x32xf32>
    %50 = arith.truncf %49 : vector<8x24x32xf32> to vector<8x24x32xbf16>
    "tpu.trace_start"() <{level = 10 : i32, message = "bld,bmd->blm"}> : () -> ()
    %cst_22 = arith.constant dense<0.000000e+00> : vector<8x24x24xf32>
    %51 = tpu.matmul %46, %48, %cst_22 {dimension_numbers = #tpu.dot_dimension_numbers<[2], [2], [1], [1], [0, 0, 0, 1, 1, 1], [0], [0]>} : vector<8x24x32xbf16>, vector<8x24x32xbf16>, vector<8x24x24xf32> -> vector<8x24x24xf32>
    "tpu.trace_stop"() : () -> ()
    %cst_23 = arith.constant 0.176776692 : f32
    %52 = vector.broadcast %cst_23 : f32 to vector<8x24x24xf32>
    %53 = arith.mulf %51, %52 : vector<8x24x24xf32>
    %cst_24 = arith.constant dense<0xFF800000> : vector<8x24xf32>
    %54 = vector.multi_reduction <maximumf>, %53, %cst_24 [2] : vector<8x24x24xf32> to vector<8x24xf32>
    %55 = vector.shape_cast %54 : vector<8x24xf32> to vector<8x24x1xf32>
    %56 = vector.broadcast %55 : vector<8x24x1xf32> to vector<8x24x24xf32>
    %57 = arith.subf %53, %56 : vector<8x24x24xf32>
    %58 = math.exp %57 : vector<8x24x24xf32>
    %cst_25 = arith.constant dense<0.000000e+00> : vector<8x24xf32>
    %59 = vector.multi_reduction <add>, %58, %cst_25 [2] : vector<8x24x24xf32> to vector<8x24xf32>
    %60 = vector.shape_cast %59 : vector<8x24xf32> to vector<8x24x1xf32>
    %61 = tpu.reciprocal %60 {approx = true} : vector<8x24x1xf32> -> vector<8x24x1xf32>
    %62 = vector.broadcast %61 : vector<8x24x1xf32> to vector<8x24x24xf32>
    %63 = arith.mulf %58, %62 : vector<8x24x24xf32>
    %64 = arith.truncf %63 : vector<8x24x24xf32> to vector<8x24x24xbf16>
    "tpu.trace_start"() <{level = 10 : i32, message = "blm,bmd->bld"}> : () -> ()
    %cst_26 = arith.constant dense<0.000000e+00> : vector<8x24x32xf32>
    %65 = tpu.matmul %64, %50, %cst_26 {dimension_numbers = #tpu.dot_dimension_numbers<[2], [1], [1], [2], [0, 0, 0, 1, 1, 2], [0], [0]>} : vector<8x24x24xbf16>, vector<8x24x32xbf16>, vector<8x24x32xf32> -> vector<8x24x32xf32>
    "tpu.trace_stop"() : () -> ()
    %66 = vector.shape_cast %65 : vector<8x24x32xf32> to vector<192x32xf32>
    %c0_27 = arith.constant 0 : index
    %c0_28 = arith.constant 0 : index
    %c0_29 = arith.constant 0 : index
    %67 = vector.load %arg8[%c0_27, %c0_28, %c0_29] : memref<3x32x32xbf16, #tpu.memory_space<vmem>>, vector<1x32x32xbf16>
    %68 = vector.shape_cast %67 : vector<1x32x32xbf16> to vector<32x32xbf16>
    %69 = arith.truncf %66 : vector<192x32xf32> to vector<192x32xbf16>
    %cst_30 = arith.constant dense<0.000000e+00> : vector<192x32xf32>
    %70 = tpu.matmul %69, %68, %cst_30 {dimension_numbers = #tpu.dot_dimension_numbers<[1], [0], [0], [1], [0, 0, 1, 1], [], []>} : vector<192x32xbf16>, vector<32x32xbf16>, vector<192x32xf32> -> vector<192x32xf32>
    %c0_31 = arith.constant 0 : index
    %c0_32 = arith.constant 0 : index
    %c0_33 = arith.constant 0 : index
    %71 = vector.load %arg9[%c0_31, %c0_32, %c0_33] : memref<3x1x32xf32, #tpu.memory_space<vmem>>, vector<1x1x32xf32>
    %72 = vector.shape_cast %71 : vector<1x1x32xf32> to vector<1x32xf32>
    %73 = vector.broadcast %72 : vector<1x32xf32> to vector<192x32xf32>
    %74 = arith.addf %70, %73 : vector<192x32xf32>
    %75 = arith.addf %33, %74 : vector<192x32xf32>
    %c0_34 = arith.constant 0 : index
    %c0_35 = arith.constant 0 : index
    %c0_36 = arith.constant 0 : index
    %76 = vector.load %arg10[%c0_34, %c0_35, %c0_36] : memref<3x1x32xf32, #tpu.memory_space<vmem>>, vector<1x1x32xf32>
    %77 = vector.shape_cast %76 : vector<1x1x32xf32> to vector<1x32xf32>
    %c0_37 = arith.constant 0 : index
    %c0_38 = arith.constant 0 : index
    %c0_39 = arith.constant 0 : index
    %78 = vector.load %arg11[%c0_37, %c0_38, %c0_39] : memref<3x1x32xf32, #tpu.memory_space<vmem>>, vector<1x1x32xf32>
    %79 = vector.shape_cast %78 : vector<1x1x32xf32> to vector<1x32xf32>
    %cst_40 = arith.constant dense<0.000000e+00> : vector<192xf32>
    %80 = vector.multi_reduction <add>, %75, %cst_40 [1] : vector<192x32xf32> to vector<192xf32>
    %81 = vector.shape_cast %80 : vector<192xf32> to vector<192x1xf32>
    %cst_41 = arith.constant 3.200000e+01 : f32
    %82 = vector.broadcast %cst_41 : f32 to vector<192x1xf32>
    %83 = arith.divf %81, %82 : vector<192x1xf32>
    %84 = arith.mulf %75, %75 : vector<192x32xf32>
    %cst_42 = arith.constant dense<0.000000e+00> : vector<192xf32>
    %85 = vector.multi_reduction <add>, %84, %cst_42 [1] : vector<192x32xf32> to vector<192xf32>
    %86 = vector.shape_cast %85 : vector<192xf32> to vector<192x1xf32>
    %cst_43 = arith.constant 3.200000e+01 : f32
    %87 = vector.broadcast %cst_43 : f32 to vector<192x1xf32>
    %88 = arith.divf %86, %87 : vector<192x1xf32>
    %89 = arith.mulf %83, %83 : vector<192x1xf32>
    %90 = arith.subf %88, %89 : vector<192x1xf32>
    %91 = vector.broadcast %83 : vector<192x1xf32> to vector<192x32xf32>
    %92 = arith.subf %75, %91 : vector<192x32xf32>
    %cst_44 = arith.constant 9.99999974E-6 : f32
    %93 = vector.broadcast %cst_44 : f32 to vector<192x1xf32>
    %94 = arith.addf %90, %93 : vector<192x1xf32>
    %95 = math.rsqrt %94 : vector<192x1xf32>
    %96 = vector.broadcast %95 : vector<192x1xf32> to vector<192x32xf32>
    %97 = arith.mulf %92, %96 : vector<192x32xf32>
    %98 = vector.broadcast %77 : vector<1x32xf32> to vector<192x32xf32>
    %99 = arith.mulf %97, %98 : vector<192x32xf32>
    %100 = vector.broadcast %79 : vector<1x32xf32> to vector<192x32xf32>
    %101 = arith.addf %99, %100 : vector<192x32xf32>
    %c0_45 = arith.constant 0 : index
    %c0_46 = arith.constant 0 : index
    %c0_47 = arith.constant 0 : index
    %102 = vector.load %arg14[%c0_45, %c0_46, %c0_47] : memref<3x32x128xbf16, #tpu.memory_space<vmem>>, vector<1x32x128xbf16>
    %103 = vector.shape_cast %102 : vector<1x32x128xbf16> to vector<32x128xbf16>
    %104 = arith.truncf %101 : vector<192x32xf32> to vector<192x32xbf16>
    %cst_48 = arith.constant dense<0.000000e+00> : vector<192x128xf32>
    %105 = tpu.matmul %104, %103, %cst_48 {dimension_numbers = #tpu.dot_dimension_numbers<[1], [0], [0], [1], [0, 0, 1, 1], [], []>} : vector<192x32xbf16>, vector<32x128xbf16>, vector<192x128xf32> -> vector<192x128xf32>
    %c0_49 = arith.constant 0 : index
    %c0_50 = arith.constant 0 : index
    %c0_51 = arith.constant 0 : index
    %106 = vector.load %arg15[%c0_49, %c0_50, %c0_51] : memref<3x1x128xf32, #tpu.memory_space<vmem>>, vector<1x1x128xf32>
    %107 = vector.shape_cast %106 : vector<1x1x128xf32> to vector<1x128xf32>
    %108 = vector.broadcast %107 : vector<1x128xf32> to vector<192x128xf32>
    %109 = arith.addf %105, %108 : vector<192x128xf32>
    %cst_52 = arith.constant 0.000000e+00 : f32
    %110 = vector.broadcast %cst_52 : f32 to vector<192x128xf32>
    %111 = arith.maximumf %109, %110 : vector<192x128xf32>
    %c0_53 = arith.constant 0 : index
    %c0_54 = arith.constant 0 : index
    %c0_55 = arith.constant 0 : index
    %112 = vector.load %arg16[%c0_53, %c0_54, %c0_55] : memref<3x128x32xbf16, #tpu.memory_space<vmem>>, vector<1x128x32xbf16>
    %113 = vector.shape_cast %112 : vector<1x128x32xbf16> to vector<128x32xbf16>
    %114 = arith.truncf %111 : vector<192x128xf32> to vector<192x128xbf16>
    %cst_56 = arith.constant dense<0.000000e+00> : vector<192x32xf32>
    %115 = tpu.matmul %114, %113, %cst_56 {dimension_numbers = #tpu.dot_dimension_numbers<[1], [0], [0], [1], [0, 0, 1, 1], [], []>} : vector<192x128xbf16>, vector<128x32xbf16>, vector<192x32xf32> -> vector<192x32xf32>
    %c0_57 = arith.constant 0 : index
    %c0_58 = arith.constant 0 : index
    %c0_59 = arith.constant 0 : index
    %116 = vector.load %arg17[%c0_57, %c0_58, %c0_59] : memref<3x1x32xf32, #tpu.memory_space<vmem>>, vector<1x1x32xf32>
    %117 = vector.shape_cast %116 : vector<1x1x32xf32> to vector<1x32xf32>
    %118 = vector.broadcast %117 : vector<1x32xf32> to vector<192x32xf32>
    %119 = arith.addf %115, %118 : vector<192x32xf32>
    %120 = arith.addf %101, %119 : vector<192x32xf32>
    %c0_60 = arith.constant 0 : index
    %c0_61 = arith.constant 0 : index
    %c0_62 = arith.constant 0 : index
    %121 = vector.load %arg12[%c0_60, %c0_61, %c0_62] : memref<3x1x32xf32, #tpu.memory_space<vmem>>, vector<1x1x32xf32>
    %122 = vector.shape_cast %121 : vector<1x1x32xf32> to vector<1x32xf32>
    %c0_63 = arith.constant 0 : index
    %c0_64 = arith.constant 0 : index
    %c0_65 = arith.constant 0 : index
    %123 = vector.load %arg13[%c0_63, %c0_64, %c0_65] : memref<3x1x32xf32, #tpu.memory_space<vmem>>, vector<1x1x32xf32>
    %124 = vector.shape_cast %123 : vector<1x1x32xf32> to vector<1x32xf32>
    %cst_66 = arith.constant dense<0.000000e+00> : vector<192xf32>
    %125 = vector.multi_reduction <add>, %120, %cst_66 [1] : vector<192x32xf32> to vector<192xf32>
    %126 = vector.shape_cast %125 : vector<192xf32> to vector<192x1xf32>
    %cst_67 = arith.constant 3.200000e+01 : f32
    %127 = vector.broadcast %cst_67 : f32 to vector<192x1xf32>
    %128 = arith.divf %126, %127 : vector<192x1xf32>
    %129 = arith.mulf %120, %120 : vector<192x32xf32>
    %cst_68 = arith.constant dense<0.000000e+00> : vector<192xf32>
    %130 = vector.multi_reduction <add>, %129, %cst_68 [1] : vector<192x32xf32> to vector<192xf32>
    %131 = vector.shape_cast %130 : vector<192xf32> to vector<192x1xf32>
    %cst_69 = arith.constant 3.200000e+01 : f32
    %132 = vector.broadcast %cst_69 : f32 to vector<192x1xf32>
    %133 = arith.divf %131, %132 : vector<192x1xf32>
    %134 = arith.mulf %128, %128 : vector<192x1xf32>
    %135 = arith.subf %133, %134 : vector<192x1xf32>
    %136 = vector.broadcast %128 : vector<192x1xf32> to vector<192x32xf32>
    %137 = arith.subf %120, %136 : vector<192x32xf32>
    %cst_70 = arith.constant 9.99999974E-6 : f32
    %138 = vector.broadcast %cst_70 : f32 to vector<192x1xf32>
    %139 = arith.addf %135, %138 : vector<192x1xf32>
    %140 = math.rsqrt %139 : vector<192x1xf32>
    %141 = vector.broadcast %140 : vector<192x1xf32> to vector<192x32xf32>
    %142 = arith.mulf %137, %141 : vector<192x32xf32>
    %143 = vector.broadcast %122 : vector<1x32xf32> to vector<192x32xf32>
    %144 = arith.mulf %142, %143 : vector<192x32xf32>
    %145 = vector.broadcast %124 : vector<1x32xf32> to vector<192x32xf32>
    %146 = arith.addf %144, %145 : vector<192x32xf32>
    %c1 = arith.constant 1 : index
    %c0_71 = arith.constant 0 : index
    %c0_72 = arith.constant 0 : index
    %147 = vector.load %arg6[%c1, %c0_71, %c0_72] : memref<3x32x128xbf16, #tpu.memory_space<vmem>>, vector<1x32x128xbf16>
    %148 = vector.shape_cast %147 : vector<1x32x128xbf16> to vector<32x128xbf16>
    %149 = arith.truncf %146 : vector<192x32xf32> to vector<192x32xbf16>
    %cst_73 = arith.constant dense<0.000000e+00> : vector<192x128xf32>
    %150 = tpu.matmul %149, %148, %cst_73 {dimension_numbers = #tpu.dot_dimension_numbers<[1], [0], [0], [1], [0, 0, 1, 1], [], []>} : vector<192x32xbf16>, vector<32x128xbf16>, vector<192x128xf32> -> vector<192x128xf32>
    %c1_74 = arith.constant 1 : index
    %c0_75 = arith.constant 0 : index
    %c0_76 = arith.constant 0 : index
    %151 = vector.load %arg7[%c1_74, %c0_75, %c0_76] : memref<3x1x128xf32, #tpu.memory_space<vmem>>, vector<1x1x128xf32>
    %152 = vector.shape_cast %151 : vector<1x1x128xf32> to vector<1x128xf32>
    %153 = vector.broadcast %152 : vector<1x128xf32> to vector<192x128xf32>
    %154 = arith.addf %150, %153 : vector<192x128xf32>
    %155 = vector.extract_strided_slice %154 {offsets = [0, 0], sizes = [192, 32], strides = [1, 1]} : vector<192x128xf32> to vector<192x32xf32>
    %156 = vector.extract_strided_slice %154 {offsets = [0, 32], sizes = [192, 32], strides = [1, 1]} : vector<192x128xf32> to vector<192x32xf32>
    %157 = vector.extract_strided_slice %154 {offsets = [0, 64], sizes = [192, 32], strides = [1, 1]} : vector<192x128xf32> to vector<192x32xf32>
    %158 = vector.shape_cast %155 : vector<192x32xf32> to vector<8x24x32xf32>
    %159 = arith.truncf %158 : vector<8x24x32xf32> to vector<8x24x32xbf16>
    %160 = vector.shape_cast %156 : vector<192x32xf32> to vector<8x24x32xf32>
    %161 = arith.truncf %160 : vector<8x24x32xf32> to vector<8x24x32xbf16>
    %162 = vector.shape_cast %157 : vector<192x32xf32> to vector<8x24x32xf32>
    %163 = arith.truncf %162 : vector<8x24x32xf32> to vector<8x24x32xbf16>
    "tpu.trace_start"() <{level = 10 : i32, message = "bld,bmd->blm"}> : () -> ()
    %cst_77 = arith.constant dense<0.000000e+00> : vector<8x24x24xf32>
    %164 = tpu.matmul %159, %161, %cst_77 {dimension_numbers = #tpu.dot_dimension_numbers<[2], [2], [1], [1], [0, 0, 0, 1, 1, 1], [0], [0]>} : vector<8x24x32xbf16>, vector<8x24x32xbf16>, vector<8x24x24xf32> -> vector<8x24x24xf32>
    "tpu.trace_stop"() : () -> ()
    %cst_78 = arith.constant 0.176776692 : f32
    %165 = vector.broadcast %cst_78 : f32 to vector<8x24x24xf32>
    %166 = arith.mulf %164, %165 : vector<8x24x24xf32>
    %cst_79 = arith.constant dense<0xFF800000> : vector<8x24xf32>
    %167 = vector.multi_reduction <maximumf>, %166, %cst_79 [2] : vector<8x24x24xf32> to vector<8x24xf32>
    %168 = vector.shape_cast %167 : vector<8x24xf32> to vector<8x24x1xf32>
    %169 = vector.broadcast %168 : vector<8x24x1xf32> to vector<8x24x24xf32>
    %170 = arith.subf %166, %169 : vector<8x24x24xf32>
    %171 = math.exp %170 : vector<8x24x24xf32>
    %cst_80 = arith.constant dense<0.000000e+00> : vector<8x24xf32>
    %172 = vector.multi_reduction <add>, %171, %cst_80 [2] : vector<8x24x24xf32> to vector<8x24xf32>
    %173 = vector.shape_cast %172 : vector<8x24xf32> to vector<8x24x1xf32>
    %174 = tpu.reciprocal %173 {approx = true} : vector<8x24x1xf32> -> vector<8x24x1xf32>
    %175 = vector.broadcast %174 : vector<8x24x1xf32> to vector<8x24x24xf32>
    %176 = arith.mulf %171, %175 : vector<8x24x24xf32>
    %177 = arith.truncf %176 : vector<8x24x24xf32> to vector<8x24x24xbf16>
    "tpu.trace_start"() <{level = 10 : i32, message = "blm,bmd->bld"}> : () -> ()
    %cst_81 = arith.constant dense<0.000000e+00> : vector<8x24x32xf32>
    %178 = tpu.matmul %177, %163, %cst_81 {dimension_numbers = #tpu.dot_dimension_numbers<[2], [1], [1], [2], [0, 0, 0, 1, 1, 2], [0], [0]>} : vector<8x24x24xbf16>, vector<8x24x32xbf16>, vector<8x24x32xf32> -> vector<8x24x32xf32>
    "tpu.trace_stop"() : () -> ()
    %179 = vector.shape_cast %178 : vector<8x24x32xf32> to vector<192x32xf32>
    %c1_82 = arith.constant 1 : index
    %c0_83 = arith.constant 0 : index
    %c0_84 = arith.constant 0 : index
    %180 = vector.load %arg8[%c1_82, %c0_83, %c0_84] : memref<3x32x32xbf16, #tpu.memory_space<vmem>>, vector<1x32x32xbf16>
    %181 = vector.shape_cast %180 : vector<1x32x32xbf16> to vector<32x32xbf16>
    %182 = arith.truncf %179 : vector<192x32xf32> to vector<192x32xbf16>
    %cst_85 = arith.constant dense<0.000000e+00> : vector<192x32xf32>
    %183 = tpu.matmul %182, %181, %cst_85 {dimension_numbers = #tpu.dot_dimension_numbers<[1], [0], [0], [1], [0, 0, 1, 1], [], []>} : vector<192x32xbf16>, vector<32x32xbf16>, vector<192x32xf32> -> vector<192x32xf32>
    %c1_86 = arith.constant 1 : index
    %c0_87 = arith.constant 0 : index
    %c0_88 = arith.constant 0 : index
    %184 = vector.load %arg9[%c1_86, %c0_87, %c0_88] : memref<3x1x32xf32, #tpu.memory_space<vmem>>, vector<1x1x32xf32>
    %185 = vector.shape_cast %184 : vector<1x1x32xf32> to vector<1x32xf32>
    %186 = vector.broadcast %185 : vector<1x32xf32> to vector<192x32xf32>
    %187 = arith.addf %183, %186 : vector<192x32xf32>
    %188 = arith.addf %146, %187 : vector<192x32xf32>
    %c1_89 = arith.constant 1 : index
    %c0_90 = arith.constant 0 : index
    %c0_91 = arith.constant 0 : index
    %189 = vector.load %arg10[%c1_89, %c0_90, %c0_91] : memref<3x1x32xf32, #tpu.memory_space<vmem>>, vector<1x1x32xf32>
    %190 = vector.shape_cast %189 : vector<1x1x32xf32> to vector<1x32xf32>
    %c1_92 = arith.constant 1 : index
    %c0_93 = arith.constant 0 : index
    %c0_94 = arith.constant 0 : index
    %191 = vector.load %arg11[%c1_92, %c0_93, %c0_94] : memref<3x1x32xf32, #tpu.memory_space<vmem>>, vector<1x1x32xf32>
    %192 = vector.shape_cast %191 : vector<1x1x32xf32> to vector<1x32xf32>
    %cst_95 = arith.constant dense<0.000000e+00> : vector<192xf32>
    %193 = vector.multi_reduction <add>, %188, %cst_95 [1] : vector<192x32xf32> to vector<192xf32>
    %194 = vector.shape_cast %193 : vector<192xf32> to vector<192x1xf32>
    %cst_96 = arith.constant 3.200000e+01 : f32
    %195 = vector.broadcast %cst_96 : f32 to vector<192x1xf32>
    %196 = arith.divf %194, %195 : vector<192x1xf32>
    %197 = arith.mulf %188, %188 : vector<192x32xf32>
    %cst_97 = arith.constant dense<0.000000e+00> : vector<192xf32>
    %198 = vector.multi_reduction <add>, %197, %cst_97 [1] : vector<192x32xf32> to vector<192xf32>
    %199 = vector.shape_cast %198 : vector<192xf32> to vector<192x1xf32>
    %cst_98 = arith.constant 3.200000e+01 : f32
    %200 = vector.broadcast %cst_98 : f32 to vector<192x1xf32>
    %201 = arith.divf %199, %200 : vector<192x1xf32>
    %202 = arith.mulf %196, %196 : vector<192x1xf32>
    %203 = arith.subf %201, %202 : vector<192x1xf32>
    %204 = vector.broadcast %196 : vector<192x1xf32> to vector<192x32xf32>
    %205 = arith.subf %188, %204 : vector<192x32xf32>
    %cst_99 = arith.constant 9.99999974E-6 : f32
    %206 = vector.broadcast %cst_99 : f32 to vector<192x1xf32>
    %207 = arith.addf %203, %206 : vector<192x1xf32>
    %208 = math.rsqrt %207 : vector<192x1xf32>
    %209 = vector.broadcast %208 : vector<192x1xf32> to vector<192x32xf32>
    %210 = arith.mulf %205, %209 : vector<192x32xf32>
    %211 = vector.broadcast %190 : vector<1x32xf32> to vector<192x32xf32>
    %212 = arith.mulf %210, %211 : vector<192x32xf32>
    %213 = vector.broadcast %192 : vector<1x32xf32> to vector<192x32xf32>
    %214 = arith.addf %212, %213 : vector<192x32xf32>
    %c1_100 = arith.constant 1 : index
    %c0_101 = arith.constant 0 : index
    %c0_102 = arith.constant 0 : index
    %215 = vector.load %arg14[%c1_100, %c0_101, %c0_102] : memref<3x32x128xbf16, #tpu.memory_space<vmem>>, vector<1x32x128xbf16>
    %216 = vector.shape_cast %215 : vector<1x32x128xbf16> to vector<32x128xbf16>
    %217 = arith.truncf %214 : vector<192x32xf32> to vector<192x32xbf16>
    %cst_103 = arith.constant dense<0.000000e+00> : vector<192x128xf32>
    %218 = tpu.matmul %217, %216, %cst_103 {dimension_numbers = #tpu.dot_dimension_numbers<[1], [0], [0], [1], [0, 0, 1, 1], [], []>} : vector<192x32xbf16>, vector<32x128xbf16>, vector<192x128xf32> -> vector<192x128xf32>
    %c1_104 = arith.constant 1 : index
    %c0_105 = arith.constant 0 : index
    %c0_106 = arith.constant 0 : index
    %219 = vector.load %arg15[%c1_104, %c0_105, %c0_106] : memref<3x1x128xf32, #tpu.memory_space<vmem>>, vector<1x1x128xf32>
    %220 = vector.shape_cast %219 : vector<1x1x128xf32> to vector<1x128xf32>
    %221 = vector.broadcast %220 : vector<1x128xf32> to vector<192x128xf32>
    %222 = arith.addf %218, %221 : vector<192x128xf32>
    %cst_107 = arith.constant 0.000000e+00 : f32
    %223 = vector.broadcast %cst_107 : f32 to vector<192x128xf32>
    %224 = arith.maximumf %222, %223 : vector<192x128xf32>
    %c1_108 = arith.constant 1 : index
    %c0_109 = arith.constant 0 : index
    %c0_110 = arith.constant 0 : index
    %225 = vector.load %arg16[%c1_108, %c0_109, %c0_110] : memref<3x128x32xbf16, #tpu.memory_space<vmem>>, vector<1x128x32xbf16>
    %226 = vector.shape_cast %225 : vector<1x128x32xbf16> to vector<128x32xbf16>
    %227 = arith.truncf %224 : vector<192x128xf32> to vector<192x128xbf16>
    %cst_111 = arith.constant dense<0.000000e+00> : vector<192x32xf32>
    %228 = tpu.matmul %227, %226, %cst_111 {dimension_numbers = #tpu.dot_dimension_numbers<[1], [0], [0], [1], [0, 0, 1, 1], [], []>} : vector<192x128xbf16>, vector<128x32xbf16>, vector<192x32xf32> -> vector<192x32xf32>
    %c1_112 = arith.constant 1 : index
    %c0_113 = arith.constant 0 : index
    %c0_114 = arith.constant 0 : index
    %229 = vector.load %arg17[%c1_112, %c0_113, %c0_114] : memref<3x1x32xf32, #tpu.memory_space<vmem>>, vector<1x1x32xf32>
    %230 = vector.shape_cast %229 : vector<1x1x32xf32> to vector<1x32xf32>
    %231 = vector.broadcast %230 : vector<1x32xf32> to vector<192x32xf32>
    %232 = arith.addf %228, %231 : vector<192x32xf32>
    %233 = arith.addf %214, %232 : vector<192x32xf32>
    %c1_115 = arith.constant 1 : index
    %c0_116 = arith.constant 0 : index
    %c0_117 = arith.constant 0 : index
    %234 = vector.load %arg12[%c1_115, %c0_116, %c0_117] : memref<3x1x32xf32, #tpu.memory_space<vmem>>, vector<1x1x32xf32>
    %235 = vector.shape_cast %234 : vector<1x1x32xf32> to vector<1x32xf32>
    %c1_118 = arith.constant 1 : index
    %c0_119 = arith.constant 0 : index
    %c0_120 = arith.constant 0 : index
    %236 = vector.load %arg13[%c1_118, %c0_119, %c0_120] : memref<3x1x32xf32, #tpu.memory_space<vmem>>, vector<1x1x32xf32>
    %237 = vector.shape_cast %236 : vector<1x1x32xf32> to vector<1x32xf32>
    %cst_121 = arith.constant dense<0.000000e+00> : vector<192xf32>
    %238 = vector.multi_reduction <add>, %233, %cst_121 [1] : vector<192x32xf32> to vector<192xf32>
    %239 = vector.shape_cast %238 : vector<192xf32> to vector<192x1xf32>
    %cst_122 = arith.constant 3.200000e+01 : f32
    %240 = vector.broadcast %cst_122 : f32 to vector<192x1xf32>
    %241 = arith.divf %239, %240 : vector<192x1xf32>
    %242 = arith.mulf %233, %233 : vector<192x32xf32>
    %cst_123 = arith.constant dense<0.000000e+00> : vector<192xf32>
    %243 = vector.multi_reduction <add>, %242, %cst_123 [1] : vector<192x32xf32> to vector<192xf32>
    %244 = vector.shape_cast %243 : vector<192xf32> to vector<192x1xf32>
    %cst_124 = arith.constant 3.200000e+01 : f32
    %245 = vector.broadcast %cst_124 : f32 to vector<192x1xf32>
    %246 = arith.divf %244, %245 : vector<192x1xf32>
    %247 = arith.mulf %241, %241 : vector<192x1xf32>
    %248 = arith.subf %246, %247 : vector<192x1xf32>
    %249 = vector.broadcast %241 : vector<192x1xf32> to vector<192x32xf32>
    %250 = arith.subf %233, %249 : vector<192x32xf32>
    %cst_125 = arith.constant 9.99999974E-6 : f32
    %251 = vector.broadcast %cst_125 : f32 to vector<192x1xf32>
    %252 = arith.addf %248, %251 : vector<192x1xf32>
    %253 = math.rsqrt %252 : vector<192x1xf32>
    %254 = vector.broadcast %253 : vector<192x1xf32> to vector<192x32xf32>
    %255 = arith.mulf %250, %254 : vector<192x32xf32>
    %256 = vector.broadcast %235 : vector<1x32xf32> to vector<192x32xf32>
    %257 = arith.mulf %255, %256 : vector<192x32xf32>
    %258 = vector.broadcast %237 : vector<1x32xf32> to vector<192x32xf32>
    %259 = arith.addf %257, %258 : vector<192x32xf32>
    %c2 = arith.constant 2 : index
    %c0_126 = arith.constant 0 : index
    %c0_127 = arith.constant 0 : index
    %260 = vector.load %arg6[%c2, %c0_126, %c0_127] : memref<3x32x128xbf16, #tpu.memory_space<vmem>>, vector<1x32x128xbf16>
    %261 = vector.shape_cast %260 : vector<1x32x128xbf16> to vector<32x128xbf16>
    %262 = arith.truncf %259 : vector<192x32xf32> to vector<192x32xbf16>
    %cst_128 = arith.constant dense<0.000000e+00> : vector<192x128xf32>
    %263 = tpu.matmul %262, %261, %cst_128 {dimension_numbers = #tpu.dot_dimension_numbers<[1], [0], [0], [1], [0, 0, 1, 1], [], []>} : vector<192x32xbf16>, vector<32x128xbf16>, vector<192x128xf32> -> vector<192x128xf32>
    %c2_129 = arith.constant 2 : index
    %c0_130 = arith.constant 0 : index
    %c0_131 = arith.constant 0 : index
    %264 = vector.load %arg7[%c2_129, %c0_130, %c0_131] : memref<3x1x128xf32, #tpu.memory_space<vmem>>, vector<1x1x128xf32>
    %265 = vector.shape_cast %264 : vector<1x1x128xf32> to vector<1x128xf32>
    %266 = vector.broadcast %265 : vector<1x128xf32> to vector<192x128xf32>
    %267 = arith.addf %263, %266 : vector<192x128xf32>
    %268 = vector.extract_strided_slice %267 {offsets = [0, 0], sizes = [192, 32], strides = [1, 1]} : vector<192x128xf32> to vector<192x32xf32>
    %269 = vector.extract_strided_slice %267 {offsets = [0, 32], sizes = [192, 32], strides = [1, 1]} : vector<192x128xf32> to vector<192x32xf32>
    %270 = vector.extract_strided_slice %267 {offsets = [0, 64], sizes = [192, 32], strides = [1, 1]} : vector<192x128xf32> to vector<192x32xf32>
    %271 = vector.shape_cast %268 : vector<192x32xf32> to vector<8x24x32xf32>
    %272 = arith.truncf %271 : vector<8x24x32xf32> to vector<8x24x32xbf16>
    %273 = vector.shape_cast %269 : vector<192x32xf32> to vector<8x24x32xf32>
    %274 = arith.truncf %273 : vector<8x24x32xf32> to vector<8x24x32xbf16>
    %275 = vector.shape_cast %270 : vector<192x32xf32> to vector<8x24x32xf32>
    %276 = arith.truncf %275 : vector<8x24x32xf32> to vector<8x24x32xbf16>
    "tpu.trace_start"() <{level = 10 : i32, message = "bld,bmd->blm"}> : () -> ()
    %cst_132 = arith.constant dense<0.000000e+00> : vector<8x24x24xf32>
    %277 = tpu.matmul %272, %274, %cst_132 {dimension_numbers = #tpu.dot_dimension_numbers<[2], [2], [1], [1], [0, 0, 0, 1, 1, 1], [0], [0]>} : vector<8x24x32xbf16>, vector<8x24x32xbf16>, vector<8x24x24xf32> -> vector<8x24x24xf32>
    "tpu.trace_stop"() : () -> ()
    %cst_133 = arith.constant 0.176776692 : f32
    %278 = vector.broadcast %cst_133 : f32 to vector<8x24x24xf32>
    %279 = arith.mulf %277, %278 : vector<8x24x24xf32>
    %cst_134 = arith.constant dense<0xFF800000> : vector<8x24xf32>
    %280 = vector.multi_reduction <maximumf>, %279, %cst_134 [2] : vector<8x24x24xf32> to vector<8x24xf32>
    %281 = vector.shape_cast %280 : vector<8x24xf32> to vector<8x24x1xf32>
    %282 = vector.broadcast %281 : vector<8x24x1xf32> to vector<8x24x24xf32>
    %283 = arith.subf %279, %282 : vector<8x24x24xf32>
    %284 = math.exp %283 : vector<8x24x24xf32>
    %cst_135 = arith.constant dense<0.000000e+00> : vector<8x24xf32>
    %285 = vector.multi_reduction <add>, %284, %cst_135 [2] : vector<8x24x24xf32> to vector<8x24xf32>
    %286 = vector.shape_cast %285 : vector<8x24xf32> to vector<8x24x1xf32>
    %287 = tpu.reciprocal %286 {approx = true} : vector<8x24x1xf32> -> vector<8x24x1xf32>
    %288 = vector.broadcast %287 : vector<8x24x1xf32> to vector<8x24x24xf32>
    %289 = arith.mulf %284, %288 : vector<8x24x24xf32>
    %290 = arith.truncf %289 : vector<8x24x24xf32> to vector<8x24x24xbf16>
    "tpu.trace_start"() <{level = 10 : i32, message = "blm,bmd->bld"}> : () -> ()
    %cst_136 = arith.constant dense<0.000000e+00> : vector<8x24x32xf32>
    %291 = tpu.matmul %290, %276, %cst_136 {dimension_numbers = #tpu.dot_dimension_numbers<[2], [1], [1], [2], [0, 0, 0, 1, 1, 2], [0], [0]>} : vector<8x24x24xbf16>, vector<8x24x32xbf16>, vector<8x24x32xf32> -> vector<8x24x32xf32>
    "tpu.trace_stop"() : () -> ()
    %292 = vector.shape_cast %291 : vector<8x24x32xf32> to vector<192x32xf32>
    %c2_137 = arith.constant 2 : index
    %c0_138 = arith.constant 0 : index
    %c0_139 = arith.constant 0 : index
    %293 = vector.load %arg8[%c2_137, %c0_138, %c0_139] : memref<3x32x32xbf16, #tpu.memory_space<vmem>>, vector<1x32x32xbf16>
    %294 = vector.shape_cast %293 : vector<1x32x32xbf16> to vector<32x32xbf16>
    %295 = arith.truncf %292 : vector<192x32xf32> to vector<192x32xbf16>
    %cst_140 = arith.constant dense<0.000000e+00> : vector<192x32xf32>
    %296 = tpu.matmul %295, %294, %cst_140 {dimension_numbers = #tpu.dot_dimension_numbers<[1], [0], [0], [1], [0, 0, 1, 1], [], []>} : vector<192x32xbf16>, vector<32x32xbf16>, vector<192x32xf32> -> vector<192x32xf32>
    %c2_141 = arith.constant 2 : index
    %c0_142 = arith.constant 0 : index
    %c0_143 = arith.constant 0 : index
    %297 = vector.load %arg9[%c2_141, %c0_142, %c0_143] : memref<3x1x32xf32, #tpu.memory_space<vmem>>, vector<1x1x32xf32>
    %298 = vector.shape_cast %297 : vector<1x1x32xf32> to vector<1x32xf32>
    %299 = vector.broadcast %298 : vector<1x32xf32> to vector<192x32xf32>
    %300 = arith.addf %296, %299 : vector<192x32xf32>
    %301 = arith.addf %259, %300 : vector<192x32xf32>
    %c2_144 = arith.constant 2 : index
    %c0_145 = arith.constant 0 : index
    %c0_146 = arith.constant 0 : index
    %302 = vector.load %arg10[%c2_144, %c0_145, %c0_146] : memref<3x1x32xf32, #tpu.memory_space<vmem>>, vector<1x1x32xf32>
    %303 = vector.shape_cast %302 : vector<1x1x32xf32> to vector<1x32xf32>
    %c2_147 = arith.constant 2 : index
    %c0_148 = arith.constant 0 : index
    %c0_149 = arith.constant 0 : index
    %304 = vector.load %arg11[%c2_147, %c0_148, %c0_149] : memref<3x1x32xf32, #tpu.memory_space<vmem>>, vector<1x1x32xf32>
    %305 = vector.shape_cast %304 : vector<1x1x32xf32> to vector<1x32xf32>
    %cst_150 = arith.constant dense<0.000000e+00> : vector<192xf32>
    %306 = vector.multi_reduction <add>, %301, %cst_150 [1] : vector<192x32xf32> to vector<192xf32>
    %307 = vector.shape_cast %306 : vector<192xf32> to vector<192x1xf32>
    %cst_151 = arith.constant 3.200000e+01 : f32
    %308 = vector.broadcast %cst_151 : f32 to vector<192x1xf32>
    %309 = arith.divf %307, %308 : vector<192x1xf32>
    %310 = arith.mulf %301, %301 : vector<192x32xf32>
    %cst_152 = arith.constant dense<0.000000e+00> : vector<192xf32>
    %311 = vector.multi_reduction <add>, %310, %cst_152 [1] : vector<192x32xf32> to vector<192xf32>
    %312 = vector.shape_cast %311 : vector<192xf32> to vector<192x1xf32>
    %cst_153 = arith.constant 3.200000e+01 : f32
    %313 = vector.broadcast %cst_153 : f32 to vector<192x1xf32>
    %314 = arith.divf %312, %313 : vector<192x1xf32>
    %315 = arith.mulf %309, %309 : vector<192x1xf32>
    %316 = arith.subf %314, %315 : vector<192x1xf32>
    %317 = vector.broadcast %309 : vector<192x1xf32> to vector<192x32xf32>
    %318 = arith.subf %301, %317 : vector<192x32xf32>
    %cst_154 = arith.constant 9.99999974E-6 : f32
    %319 = vector.broadcast %cst_154 : f32 to vector<192x1xf32>
    %320 = arith.addf %316, %319 : vector<192x1xf32>
    %321 = math.rsqrt %320 : vector<192x1xf32>
    %322 = vector.broadcast %321 : vector<192x1xf32> to vector<192x32xf32>
    %323 = arith.mulf %318, %322 : vector<192x32xf32>
    %324 = vector.broadcast %303 : vector<1x32xf32> to vector<192x32xf32>
    %325 = arith.mulf %323, %324 : vector<192x32xf32>
    %326 = vector.broadcast %305 : vector<1x32xf32> to vector<192x32xf32>
    %327 = arith.addf %325, %326 : vector<192x32xf32>
    %c2_155 = arith.constant 2 : index
    %c0_156 = arith.constant 0 : index
    %c0_157 = arith.constant 0 : index
    %328 = vector.load %arg14[%c2_155, %c0_156, %c0_157] : memref<3x32x128xbf16, #tpu.memory_space<vmem>>, vector<1x32x128xbf16>
    %329 = vector.shape_cast %328 : vector<1x32x128xbf16> to vector<32x128xbf16>
    %330 = arith.truncf %327 : vector<192x32xf32> to vector<192x32xbf16>
    %cst_158 = arith.constant dense<0.000000e+00> : vector<192x128xf32>
    %331 = tpu.matmul %330, %329, %cst_158 {dimension_numbers = #tpu.dot_dimension_numbers<[1], [0], [0], [1], [0, 0, 1, 1], [], []>} : vector<192x32xbf16>, vector<32x128xbf16>, vector<192x128xf32> -> vector<192x128xf32>
    %c2_159 = arith.constant 2 : index
    %c0_160 = arith.constant 0 : index
    %c0_161 = arith.constant 0 : index
    %332 = vector.load %arg15[%c2_159, %c0_160, %c0_161] : memref<3x1x128xf32, #tpu.memory_space<vmem>>, vector<1x1x128xf32>
    %333 = vector.shape_cast %332 : vector<1x1x128xf32> to vector<1x128xf32>
    %334 = vector.broadcast %333 : vector<1x128xf32> to vector<192x128xf32>
    %335 = arith.addf %331, %334 : vector<192x128xf32>
    %cst_162 = arith.constant 0.000000e+00 : f32
    %336 = vector.broadcast %cst_162 : f32 to vector<192x128xf32>
    %337 = arith.maximumf %335, %336 : vector<192x128xf32>
    %c2_163 = arith.constant 2 : index
    %c0_164 = arith.constant 0 : index
    %c0_165 = arith.constant 0 : index
    %338 = vector.load %arg16[%c2_163, %c0_164, %c0_165] : memref<3x128x32xbf16, #tpu.memory_space<vmem>>, vector<1x128x32xbf16>
    %339 = vector.shape_cast %338 : vector<1x128x32xbf16> to vector<128x32xbf16>
    %340 = arith.truncf %337 : vector<192x128xf32> to vector<192x128xbf16>
    %cst_166 = arith.constant dense<0.000000e+00> : vector<192x32xf32>
    %341 = tpu.matmul %340, %339, %cst_166 {dimension_numbers = #tpu.dot_dimension_numbers<[1], [0], [0], [1], [0, 0, 1, 1], [], []>} : vector<192x128xbf16>, vector<128x32xbf16>, vector<192x32xf32> -> vector<192x32xf32>
    %c2_167 = arith.constant 2 : index
    %c0_168 = arith.constant 0 : index
    %c0_169 = arith.constant 0 : index
    %342 = vector.load %arg17[%c2_167, %c0_168, %c0_169] : memref<3x1x32xf32, #tpu.memory_space<vmem>>, vector<1x1x32xf32>
    %343 = vector.shape_cast %342 : vector<1x1x32xf32> to vector<1x32xf32>
    %344 = vector.broadcast %343 : vector<1x32xf32> to vector<192x32xf32>
    %345 = arith.addf %341, %344 : vector<192x32xf32>
    %346 = arith.addf %327, %345 : vector<192x32xf32>
    %c2_170 = arith.constant 2 : index
    %c0_171 = arith.constant 0 : index
    %c0_172 = arith.constant 0 : index
    %347 = vector.load %arg12[%c2_170, %c0_171, %c0_172] : memref<3x1x32xf32, #tpu.memory_space<vmem>>, vector<1x1x32xf32>
    %348 = vector.shape_cast %347 : vector<1x1x32xf32> to vector<1x32xf32>
    %c2_173 = arith.constant 2 : index
    %c0_174 = arith.constant 0 : index
    %c0_175 = arith.constant 0 : index
    %349 = vector.load %arg13[%c2_173, %c0_174, %c0_175] : memref<3x1x32xf32, #tpu.memory_space<vmem>>, vector<1x1x32xf32>
    %350 = vector.shape_cast %349 : vector<1x1x32xf32> to vector<1x32xf32>
    %cst_176 = arith.constant dense<0.000000e+00> : vector<192xf32>
    %351 = vector.multi_reduction <add>, %346, %cst_176 [1] : vector<192x32xf32> to vector<192xf32>
    %352 = vector.shape_cast %351 : vector<192xf32> to vector<192x1xf32>
    %cst_177 = arith.constant 3.200000e+01 : f32
    %353 = vector.broadcast %cst_177 : f32 to vector<192x1xf32>
    %354 = arith.divf %352, %353 : vector<192x1xf32>
    %355 = arith.mulf %346, %346 : vector<192x32xf32>
    %cst_178 = arith.constant dense<0.000000e+00> : vector<192xf32>
    %356 = vector.multi_reduction <add>, %355, %cst_178 [1] : vector<192x32xf32> to vector<192xf32>
    %357 = vector.shape_cast %356 : vector<192xf32> to vector<192x1xf32>
    %cst_179 = arith.constant 3.200000e+01 : f32
    %358 = vector.broadcast %cst_179 : f32 to vector<192x1xf32>
    %359 = arith.divf %357, %358 : vector<192x1xf32>
    %360 = arith.mulf %354, %354 : vector<192x1xf32>
    %361 = arith.subf %359, %360 : vector<192x1xf32>
    %362 = vector.broadcast %354 : vector<192x1xf32> to vector<192x32xf32>
    %363 = arith.subf %346, %362 : vector<192x32xf32>
    %cst_180 = arith.constant 9.99999974E-6 : f32
    %364 = vector.broadcast %cst_180 : f32 to vector<192x1xf32>
    %365 = arith.addf %361, %364 : vector<192x1xf32>
    %366 = math.rsqrt %365 : vector<192x1xf32>
    %367 = vector.broadcast %366 : vector<192x1xf32> to vector<192x32xf32>
    %368 = arith.mulf %363, %367 : vector<192x32xf32>
    %369 = vector.broadcast %348 : vector<1x32xf32> to vector<192x32xf32>
    %370 = arith.mulf %368, %369 : vector<192x32xf32>
    %371 = vector.broadcast %350 : vector<1x32xf32> to vector<192x32xf32>
    %372 = arith.addf %370, %371 : vector<192x32xf32>
    %373 = vector.shape_cast %372 : vector<192x32xf32> to vector<8x24x32xf32>
    %374 = vector.extract_strided_slice %373 {offsets = [0, 0, 0], sizes = [8, 8, 32], strides = [1, 1, 1]} : vector<8x24x32xf32> to vector<8x8x32xf32>
    %375 = vector.shape_cast %374 : vector<8x8x32xf32> to vector<64x32xf32>
    %c0_181 = arith.constant 0 : index
    %c0_182 = arith.constant 0 : index
    %376 = vector.load %arg18[%c0_181, %c0_182] : memref<32x128xbf16, #tpu.memory_space<vmem>>, vector<32x128xbf16>
    %377 = arith.truncf %375 : vector<64x32xf32> to vector<64x32xbf16>
    %cst_183 = arith.constant dense<0.000000e+00> : vector<64x128xf32>
    %378 = tpu.matmul %377, %376, %cst_183 {dimension_numbers = #tpu.dot_dimension_numbers<[1], [0], [0], [1], [0, 0, 1, 1], [], []>} : vector<64x32xbf16>, vector<32x128xbf16>, vector<64x128xf32> -> vector<64x128xf32>
    %c0_184 = arith.constant 0 : index
    %c0_185 = arith.constant 0 : index
    %379 = vector.load %arg19[%c0_184, %c0_185] : memref<1x128xf32, #tpu.memory_space<vmem>>, vector<1x128xf32>
    %380 = vector.broadcast %379 : vector<1x128xf32> to vector<64x128xf32>
    %381 = arith.addf %378, %380 : vector<64x128xf32>
    %382 = vector.shape_cast %381 : vector<64x128xf32> to vector<8x8x128xf32>
    %383 = arith.truncf %382 : vector<8x8x128xf32> to vector<8x8x128xbf16>
    %c0_186 = arith.constant 0 : index
    %c0_187 = arith.constant 0 : index
    %c0_188 = arith.constant 0 : index
    %384 = vector.load %arg20[%c0_186, %c0_187, %c0_188] : memref<8x8x128xbf16, #tpu.memory_space<vmem>>, vector<8x8x128xbf16>
    tpu.vector_store %arg20[%c0_186, %c0_187, %c0_188], %383 {strides = array<i32>} : memref<8x8x128xbf16, #tpu.memory_space<vmem>>, vector<8x8x128xbf16>,
    return
  }
  func.func @transform_0(%arg0: i32) -> (i32, i32, i32) {
    %c0_i32 = arith.constant 0 : i32
    %c0_i32_0 = arith.constant 0 : i32
    %c0_i32_1 = arith.constant 0 : i32
    return %arg0, %c0_i32, %c0_i32_0 : i32, i32, i32
  }
  func.func @transform_1(%arg0: i32) -> (i32, i32) {
    %c0_i32 = arith.constant 0 : i32
    %c0_i32_0 = arith.constant 0 : i32
    %c0_i32_1 = arith.constant 0 : i32
    return %c0_i32, %c0_i32_0 : i32, i32
  }
  func.func @transform_2(%arg0: i32) -> (i32, i32) {
    %c0_i32 = arith.constant 0 : i32
    %c0_i32_0 = arith.constant 0 : i32
    %c0_i32_1 = arith.constant 0 : i32
    return %c0_i32, %c0_i32_0 : i32, i32
  }
  func.func @transform_3(%arg0: i32) -> (i32, i32) {
    %c0_i32 = arith.constant 0 : i32
    %c0_i32_0 = arith.constant 0 : i32
    %c0_i32_1 = arith.constant 0 : i32
    return %c0_i32, %c0_i32_0 : i32, i32
  }
  func.func @transform_4(%arg0: i32) -> (i32, i32) {
    %c0_i32 = arith.constant 0 : i32
    %c0_i32_0 = arith.constant 0 : i32
    %c0_i32_1 = arith.constant 0 : i32
    return %c0_i32, %c0_i32_0 : i32, i32
  }
  func.func @transform_5(%arg0: i32) -> (i32, i32, i32) {
    %c0_i32 = arith.constant 0 : i32
    %c0_i32_0 = arith.constant 0 : i32
    %c0_i32_1 = arith.constant 0 : i32
    %c0_i32_2 = arith.constant 0 : i32
    return %c0_i32, %c0_i32_0, %c0_i32_1 : i32, i32, i32
  }
  func.func @transform_6(%arg0: i32) -> (i32, i32, i32) {
    %c0_i32 = arith.constant 0 : i32
    %c0_i32_0 = arith.constant 0 : i32
    %c0_i32_1 = arith.constant 0 : i32
    %c0_i32_2 = arith.constant 0 : i32
    return %c0_i32, %c0_i32_0, %c0_i32_1 : i32, i32, i32
  }
  func.func @transform_7(%arg0: i32) -> (i32, i32, i32) {
    %c0_i32 = arith.constant 0 : i32
    %c0_i32_0 = arith.constant 0 : i32
    %c0_i32_1 = arith.constant 0 : i32
    %c0_i32_2 = arith.constant 0 : i32
    return %c0_i32, %c0_i32_0, %c0_i32_1 : i32, i32, i32
  }
  func.func @transform_8(%arg0: i32) -> (i32, i32, i32) {
    %c0_i32 = arith.constant 0 : i32
    %c0_i32_0 = arith.constant 0 : i32
    %c0_i32_1 = arith.constant 0 : i32
    %c0_i32_2 = arith.constant 0 : i32
    return %c0_i32, %c0_i32_0, %c0_i32_1 : i32, i32, i32
  }
  func.func @transform_9(%arg0: i32) -> (i32, i32, i32) {
    %c0_i32 = arith.constant 0 : i32
    %c0_i32_0 = arith.constant 0 : i32
    %c0_i32_1 = arith.constant 0 : i32
    %c0_i32_2 = arith.constant 0 : i32
    return %c0_i32, %c0_i32_0, %c0_i32_1 : i32, i32, i32
  }
  func.func @transform_10(%arg0: i32) -> (i32, i32, i32) {
    %c0_i32 = arith.constant 0 : i32
    %c0_i32_0 = arith.constant 0 : i32
    %c0_i32_1 = arith.constant 0 : i32
    %c0_i32_2 = arith.constant 0 : i32
    return %c0_i32, %c0_i32_0, %c0_i32_1 : i32, i32, i32
  }
  func.func @transform_11(%arg0: i32) -> (i32, i32, i32) {
    %c0_i32 = arith.constant 0 : i32
    %c0_i32_0 = arith.constant 0 : i32
    %c0_i32_1 = arith.constant 0 : i32
    %c0_i32_2 = arith.constant 0 : i32
    return %c0_i32, %c0_i32_0, %c0_i32_1 : i32, i32, i32
  }
  func.func @transform_12(%arg0: i32) -> (i32, i32, i32) {
    %c0_i32 = arith.constant 0 : i32
    %c0_i32_0 = arith.constant 0 : i32
    %c0_i32_1 = arith.constant 0 : i32
    %c0_i32_2 = arith.constant 0 : i32
    return %c0_i32, %c0_i32_0, %c0_i32_1 : i32, i32, i32
  }
  func.func @transform_13(%arg0: i32) -> (i32, i32, i32) {
    %c0_i32 = arith.constant 0 : i32
    %c0_i32_0 = arith.constant 0 : i32
    %c0_i32_1 = arith.constant 0 : i32
    %c0_i32_2 = arith.constant 0 : i32
    return %c0_i32, %c0_i32_0, %c0_i32_1 : i32, i32, i32
  }
  func.func @transform_14(%arg0: i32) -> (i32, i32, i32) {
    %c0_i32 = arith.constant 0 : i32
    %c0_i32_0 = arith.constant 0 : i32
    %c0_i32_1 = arith.constant 0 : i32
    %c0_i32_2 = arith.constant 0 : i32
    return %c0_i32, %c0_i32_0, %c0_i32_1 : i32, i32, i32
  }
  func.func @transform_15(%arg0: i32) -> (i32, i32, i32) {
    %c0_i32 = arith.constant 0 : i32
    %c0_i32_0 = arith.constant 0 : i32
    %c0_i32_1 = arith.constant 0 : i32
    %c0_i32_2 = arith.constant 0 : i32
    return %c0_i32, %c0_i32_0, %c0_i32_1 : i32, i32, i32
  }
  func.func @transform_16(%arg0: i32) -> (i32, i32, i32) {
    %c0_i32 = arith.constant 0 : i32
    %c0_i32_0 = arith.constant 0 : i32
    %c0_i32_1 = arith.constant 0 : i32
    %c0_i32_2 = arith.constant 0 : i32
    return %c0_i32, %c0_i32_0, %c0_i32_1 : i32, i32, i32
  }
  func.func @transform_17(%arg0: i32) -> (i32, i32) {
    %c0_i32 = arith.constant 0 : i32
    %c0_i32_0 = arith.constant 0 : i32
    %c0_i32_1 = arith.constant 0 : i32
    return %c0_i32, %c0_i32_0 : i32, i32
  }
  func.func @transform_18(%arg0: i32) -> (i32, i32) {
    %c0_i32 = arith.constant 0 : i32
    %c0_i32_0 = arith.constant 0 : i32
    %c0_i32_1 = arith.constant 0 : i32
    return %c0_i32, %c0_i32_0 : i32, i32
  }
  func.func @transform_19(%arg0: i32) -> (i32, i32, i32) {
    %c0_i32 = arith.constant 0 : i32
    %c0_i32_0 = arith.constant 0 : i32
    %c0_i32_1 = arith.constant 0 : i32
    return %arg0, %c0_i32, %c0_i32_0 : i32, i32, i32
  }
}

</mosaic_0001>

<llo_original>
// kernel: dt_forward.1
$region0: #{dt_forward.1}
  #allocation0 [shape = 'u32[]', space=smem, size = 0x4, offset = 0x4, fixed_abs, tag = 'smem constant byte address 0x4 - core index']
  #allocation1 [shape = 'u32[144,128]{1,0:T(1,128)}', space=vmem, size = 0x12000, scoped, tag = 'internal scratch']
  %s0 = inlined_call_operand.vmem [shape: bf16[32,24,14], index: 0, kind: input, shape index: {}]
  %s1 = inlined_call_operand.vmem [shape: bf16[14,32], index: 1, kind: input, shape index: {}]
  %s2 = inlined_call_operand.vmem [shape: f32[24,32], index: 2, kind: input, shape index: {}]
  %s3 = inlined_call_operand.vmem [shape: f32[1,32], index: 3, kind: input, shape index: {}]
  %s4 = inlined_call_operand.vmem [shape: f32[1,32], index: 4, kind: input, shape index: {}]
  %s5 = inlined_call_operand.vmem [shape: bf16[3,32,128], index: 5, kind: input, shape index: {}]
  %s6 = inlined_call_operand.vmem [shape: f32[3,1,128], index: 6, kind: input, shape index: {}]
  %s7 = inlined_call_operand.vmem [shape: bf16[3,32,32], index: 7, kind: input, shape index: {}]
  %s8 = inlined_call_operand.vmem [shape: f32[3,1,32], index: 8, kind: input, shape index: {}]
  %s9 = inlined_call_operand.vmem [shape: f32[3,1,32], index: 9, kind: input, shape index: {}]
  %s10 = inlined_call_operand.vmem [shape: f32[3,1,32], index: 10, kind: input, shape index: {}]
  %s11 = inlined_call_operand.vmem [shape: f32[3,1,32], index: 11, kind: input, shape index: {}]
  %s12 = inlined_call_operand.vmem [shape: f32[3,1,32], index: 12, kind: input, shape index: {}]
  %s13 = inlined_call_operand.vmem [shape: bf16[3,32,128], index: 13, kind: input, shape index: {}]
  %s14 = inlined_call_operand.vmem [shape: f32[3,1,128], index: 14, kind: input, shape index: {}]
  %s15 = inlined_call_operand.vmem [shape: bf16[3,128,32], index: 15, kind: input, shape index: {}]
  %s16 = inlined_call_operand.vmem [shape: f32[3,1,32], index: 16, kind: input, shape index: {}]
  %s17 = inlined_call_operand.vmem [shape: bf16[32,128], index: 17, kind: input, shape index: {}]
  %s18 = inlined_call_operand.vmem [shape: f32[1,128], index: 18, kind: input, shape index: {}]
  %s19 = inlined_call_operand.vmem [shape: bf16[32,8,128], index: 19, kind: output, shape index: {}]
  %s20 = sld [smem:[#allocation0]]
  $region109: #{dt_forward.1} parent=0
    _
  %s22 = ssub.s32 1, %s20
  %s23 = scalar_select 0, %s22, %s20
  loop: start=0, step=1, limit=6
  $region2: #{dt_forward.1} parent=0 // loop_pre_header
    _
  $region3: #{dt_forward.1} parent=0 // loop_header
    %s25 = sphi 0, %s29
    %p26 = scmp.ge.s32.totalorder %s25, 6
    %s35 = sphi 0, %s37
    %s38 = sphi 0, %s35
    %s39 = sphi 0, %s38
    %s55 = sphi 0, %s39
    %s59 = sphi 0, %s59
    %s61 = sphi 0, %s59
    %s62 = sphi 0, %s61
    %s76 = sphi 0, %s62
    %s80 = sphi 0, %s80
    %s82 = sphi 0, %s80
    %s83 = sphi 0, %s82
    %s97 = sphi 0, %s83
    %s101 = sphi 0, %s101
    %s103 = sphi 0, %s101
    %s104 = sphi 0, %s103
    %s118 = sphi 0, %s104
    %s122 = sphi 0, %s122
    %s124 = sphi 0, %s122
    %s125 = sphi 0, %s124
    %s139 = sphi 0, %s125
    %s143 = sphi 0, %s143
    %s145 = sphi 0, %s143
    %s146 = sphi 0, %s145
    %s160 = sphi 0, %s146
    %s164 = sphi 0, %s164
    %s166 = sphi 0, %s164
    %s167 = sphi 0, %s166
    %s181 = sphi 0, %s167
    %s185 = sphi 0, %s185
    %s187 = sphi 0, %s185
    %s188 = sphi 0, %s187
    %s202 = sphi 0, %s188
    %s206 = sphi 0, %s206
    %s208 = sphi 0, %s206
    %s209 = sphi 0, %s208
    %s223 = sphi 0, %s209
    %s227 = sphi 0, %s227
    %s229 = sphi 0, %s227
    %s230 = sphi 0, %s229
    %s244 = sphi 0, %s230
    %s248 = sphi 0, %s248
    %s250 = sphi 0, %s248
    %s251 = sphi 0, %s250
    %s265 = sphi 0, %s251
    %s269 = sphi 0, %s269
    %s271 = sphi 0, %s269
    %s272 = sphi 0, %s271
    %s286 = sphi 0, %s272
    %s290 = sphi 0, %s290
    %s292 = sphi 0, %s290
    %s293 = sphi 0, %s292
    %s307 = sphi 0, %s293
    %s311 = sphi 0, %s311
    %s313 = sphi 0, %s311
    %s314 = sphi 0, %s313
    %s328 = sphi 0, %s314
    %s332 = sphi 0, %s332
    %s334 = sphi 0, %s332
    %s335 = sphi 0, %s334
    %s349 = sphi 0, %s335
    %s353 = sphi 0, %s353
    %s355 = sphi 0, %s353
    %s356 = sphi 0, %s355
    %s370 = sphi 0, %s356
    %s374 = sphi 0, %s374
    %s376 = sphi 0, %s374
    %s377 = sphi 0, %s376
    %s391 = sphi 0, %s377
    %s395 = sphi 0, %s395
    %s397 = sphi 0, %s395
    %s398 = sphi 0, %s397
    %s412 = sphi 0, %s398
    %s416 = sphi 0, %s416
    %s418 = sphi 0, %s416
    %s419 = sphi 0, %s418
    %s433 = sphi 0, %s419
    %s439 = sphi 0, %s441
    %s442 = sphi 0, %s439
    %s443 = sphi 0, %s442
    %s459 = sphi 0, %s443
  $region4: #{dt_forward.1} parent=0 // loop_header_branch
    %28 = sbr.rel (%p26) target = $region8
  $region5: #{dt_forward.1} parent=0 // loop_body
    %s30 = ssub.s32 %s25, 1
    %s31 = ssub.s32 %s25, 2
    %s32 = sadd.s32 %s25, 1
    %s33 = ssub.s32 %s25, %s32
    %p34 = scmp.eq.s32.totalorder %s33, 0
    %s36 = sadd.s32 %s35, 1
    %s37 = scalar_select %p34, %s35, %s36
    %p40 = pneg %p34
    %p41 = scmp.eq.s32.totalorder %s25, 3
    %p42 = por %p40, %p41
    %p43 = scmp.ne.s32.totalorder %s35, %s38
    %p44 = scmp.eq.s32.totalorder %s25, 0
    %p45 = por %p43, %p44
    %p46 = scmp.ne.s32.totalorder %s35, %s38
    %p47 = scmp.eq.s32.totalorder %s30, 3
    %p48 = por %p46, %p47
    %p49 = scmp.ne.s32.totalorder %s38, %s39
    %p50 = scmp.eq.s32.totalorder %s30, 0
    %p51 = por %p49, %p50
    %p52 = scmp.ne.s32.totalorder %s38, %s39
    %p53 = scmp.eq.s32.totalorder %s31, 3
    %p54 = por %p52, %p53
    %p56 = scmp.ne.s32.totalorder %s39, %s55
    %p57 = scmp.eq.s32.totalorder %s31, 0
    %p58 = por %p56, %p57
    %s60 = sadd.s32 %s59, 1
    %p63 = scmp.eq.s32.totalorder %s25, 3
    %p64 = scmp.ne.s32.totalorder %s59, %s61
    %p65 = scmp.eq.s32.totalorder %s25, 0
    %p66 = por %p64, %p65
    %p67 = scmp.ne.s32.totalorder %s59, %s61
    %p68 = scmp.eq.s32.totalorder %s30, 3
    %p69 = por %p67, %p68
    %p70 = scmp.ne.s32.totalorder %s61, %s62
    %p71 = scmp.eq.s32.totalorder %s30, 0
    %p72 = por %p70, %p71
    %p73 = scmp.ne.s32.totalorder %s61, %s62
    %p74 = scmp.eq.s32.totalorder %s31, 3
    %p75 = por %p73, %p74
    %p77 = scmp.ne.s32.totalorder %s62, %s76
    %p78 = scmp.eq.s32.totalorder %s31, 0
    %p79 = por %p77, %p78
    %s81 = sadd.s32 %s80, 1
    %p84 = scmp.eq.s32.totalorder %s25, 3
    %p85 = scmp.ne.s32.totalorder %s80, %s82
    %p86 = scmp.eq.s32.totalorder %s25, 0
    %p87 = por %p85, %p86
    %p88 = scmp.ne.s32.totalorder %s80, %s82
    %p89 = scmp.eq.s32.totalorder %s30, 3
    %p90 = por %p88, %p89
    %p91 = scmp.ne.s32.totalorder %s82, %s83
    %p92 = scmp.eq.s32.totalorder %s30, 0
    %p93 = por %p91, %p92
    %p94 = scmp.ne.s32.totalorder %s82, %s83
    %p95 = scmp.eq.s32.totalorder %s31, 3
    %p96 = por %p94, %p95
    %p98 = scmp.ne.s32.totalorder %s83, %s97
    %p99 = scmp.eq.s32.totalorder %s31, 0
    %p100 = por %p98, %p99
    %s102 = sadd.s32 %s101, 1
    %p105 = scmp.eq.s32.totalorder %s25, 3
    %p106 = scmp.ne.s32.totalorder %s101, %s103
    %p107 = scmp.eq.s32.totalorder %s25, 0
    %p108 = por %p106, %p107
    %p109 = scmp.ne.s32.totalorder %s101, %s103
    %p110 = scmp.eq.s32.totalorder %s30, 3
    %p111 = por %p109, %p110
    %p112 = scmp.ne.s32.totalorder %s103, %s104
    %p113 = scmp.eq.s32.totalorder %s30, 0
    %p114 = por %p112, %p113
    %p115 = scmp.ne.s32.totalorder %s103, %s104
    %p116 = scmp.eq.s32.totalorder %s31, 3
    %p117 = por %p115, %p116
    %p119 = scmp.ne.s32.totalorder %s104, %s118
    %p120 = scmp.eq.s32.totalorder %s31, 0
    %p121 = por %p119, %p120
    %s123 = sadd.s32 %s122, 1
    %p126 = scmp.eq.s32.totalorder %s25, 3
    %p127 = scmp.ne.s32.totalorder %s122, %s124
    %p128 = scmp.eq.s32.totalorder %s25, 0
    %p129 = por %p127, %p128
    %p130 = scmp.ne.s32.totalorder %s122, %s124
    %p131 = scmp.eq.s32.totalorder %s30, 3
    %p132 = por %p130, %p131
    %p133 = scmp.ne.s32.totalorder %s124, %s125
    %p134 = scmp.eq.s32.totalorder %s30, 0
    %p135 = por %p133, %p134
    %p136 = scmp.ne.s32.totalorder %s124, %s125
    %p137 = scmp.eq.s32.totalorder %s31, 3
    %p138 = por %p136, %p137
    %p140 = scmp.ne.s32.totalorder %s125, %s139
    %p141 = scmp.eq.s32.totalorder %s31, 0
    %p142 = por %p140, %p141
    %s144 = sadd.s32 %s143, 1
    %p147 = scmp.eq.s32.totalorder %s25, 3
    %p148 = scmp.ne.s32.totalorder %s143, %s145
    %p149 = scmp.eq.s32.totalorder %s25, 0
    %p150 = por %p148, %p149
    %p151 = scmp.ne.s32.totalorder %s143, %s145
    %p152 = scmp.eq.s32.totalorder %s30, 3
    %p153 = por %p151, %p152
    %p154 = scmp.ne.s32.totalorder %s145, %s146
    %p155 = scmp.eq.s32.totalorder %s30, 0
    %p156 = por %p154, %p155
    %p157 = scmp.ne.s32.totalorder %s145, %s146
    %p158 = scmp.eq.s32.totalorder %s31, 3
    %p159 = por %p157, %p158
    %p161 = scmp.ne.s32.totalorder %s146, %s160
    %p162 = scmp.eq.s32.totalorder %s31, 0
    %p163 = por %p161, %p162
    %s165 = sadd.s32 %s164, 1
    %p168 = scmp.eq.s32.totalorder %s25, 3
    %p169 = scmp.ne.s32.totalorder %s164, %s166
    %p170 = scmp.eq.s32.totalorder %s25, 0
    %p171 = por %p169, %p170
    %p172 = scmp.ne.s32.totalorder %s164, %s166
    %p173 = scmp.eq.s32.totalorder %s30, 3
    %p174 = por %p172, %p173
    %p175 = scmp.ne.s32.totalorder %s166, %s167
    %p176 = scmp.eq.s32.totalorder %s30, 0
    %p177 = por %p175, %p176
    %p178 = scmp.ne.s32.totalorder %s166, %s167
    %p179 = scmp.eq.s32.totalorder %s31, 3
    %p180 = por %p178, %p179
    %p182 = scmp.ne.s32.totalorder %s167, %s181
    %p183 = scmp.eq.s32.totalorder %s31, 0
    %p184 = por %p182, %p183
    %s186 = sadd.s32 %s185, 1
    %p189 = scmp.eq.s32.totalorder %s25, 3
    %p190 = scmp.ne.s32.totalorder %s185, %s187
    %p191 = scmp.eq.s32.totalorder %s25, 0
    %p192 = por %p190, %p191
    %p193 = scmp.ne.s32.totalorder %s185, %s187
    %p194 = scmp.eq.s32.totalorder %s30, 3
    %p195 = por %p193, %p194
    %p196 = scmp.ne.s32.totalorder %s187, %s188
    %p197 = scmp.eq.s32.totalorder %s30, 0
    %p198 = por %p196, %p197
    %p199 = scmp.ne.s32.totalorder %s187, %s188
    %p200 = scmp.eq.s32.totalorder %s31, 3
    %p201 = por %p199, %p200
    %p203 = scmp.ne.s32.totalorder %s188, %s202
    %p204 = scmp.eq.s32.totalorder %s31, 0
    %p205 = por %p203, %p204
    %s207 = sadd.s32 %s206, 1
    %p210 = scmp.eq.s32.totalorder %s25, 3
    %p211 = scmp.ne.s32.totalorder %s206, %s208
    %p212 = scmp.eq.s32.totalorder %s25, 0
    %p213 = por %p211, %p212
    %p214 = scmp.ne.s32.totalorder %s206, %s208
    %p215 = scmp.eq.s32.totalorder %s30, 3
    %p216 = por %p214, %p215
    %p217 = scmp.ne.s32.totalorder %s208, %s209
    %p218 = scmp.eq.s32.totalorder %s30, 0
    %p219 = por %p217, %p218
    %p220 = scmp.ne.s32.totalorder %s208, %s209
    %p221 = scmp.eq.s32.totalorder %s31, 3
    %p222 = por %p220, %p221
    %p224 = scmp.ne.s32.totalorder %s209, %s223
    %p225 = scmp.eq.s32.totalorder %s31, 0
    %p226 = por %p224, %p225
    %s228 = sadd.s32 %s227, 1
    %p231 = scmp.eq.s32.totalorder %s25, 3
    %p232 = scmp.ne.s32.totalorder %s227, %s229
    %p233 = scmp.eq.s32.totalorder %s25, 0
    %p234 = por %p232, %p233
    %p235 = scmp.ne.s32.totalorder %s227, %s229
    %p236 = scmp.eq.s32.totalorder %s30, 3
    %p237 = por %p235, %p236
    %p238 = scmp.ne.s32.totalorder %s229, %s230
    %p239 = scmp.eq.s32.totalorder %s30, 0
    %p240 = por %p238, %p239
    %p241 = scmp.ne.s32.totalorder %s229, %s230
    %p242 = scmp.eq.s32.totalorder %s31, 3
    %p243 = por %p241, %p242
    %p245 = scmp.ne.s32.totalorder %s230, %s244
    %p246 = scmp.eq.s32.totalorder %s31, 0
    %p247 = por %p245, %p246
    %s249 = sadd.s32 %s248, 1
    %p252 = scmp.eq.s32.totalorder %s25, 3
    %p253 = scmp.ne.s32.totalorder %s248, %s250
    %p254 = scmp.eq.s32.totalorder %s25, 0
    %p255 = por %p253, %p254
    %p256 = scmp.ne.s32.totalorder %s248, %s250
    %p257 = scmp.eq.s32.totalorder %s30, 3
    %p258 = por %p256, %p257
    %p259 = scmp.ne.s32.totalorder %s250, %s251
    %p260 = scmp.eq.s32.totalorder %s30, 0
    %p261 = por %p259, %p260
    %p262 = scmp.ne.s32.totalorder %s250, %s251
    %p263 = scmp.eq.s32.totalorder %s31, 3
    %p264 = por %p262, %p263
    %p266 = scmp.ne.s32.totalorder %s251, %s265
    %p267 = scmp.eq.s32.totalorder %s31, 0
    %p268 = por %p266, %p267
    %s270 = sadd.s32 %s269, 1
    %p273 = scmp.eq.s32.totalorder %s25, 3
    %p274 = scmp.ne.s32.totalorder %s269, %s271
    %p275 = scmp.eq.s32.totalorder %s25, 0
    %p276 = por %p274, %p275
    %p277 = scmp.ne.s32.totalorder %s269, %s271
    %p278 = scmp.eq.s32.totalorder %s30, 3
    %p279 = por %p277, %p278
    %p280 = scmp.ne.s32.totalorder %s271, %s272
    %p281 = scmp.eq.s32.totalorder %s30, 0
    %p282 = por %p280, %p281
    %p283 = scmp.ne.s32.totalorder %s271, %s272
    %p284 = scmp.eq.s32.totalorder %s31, 3
    %p285 = por %p283, %p284
    %p287 = scmp.ne.s32.totalorder %s272, %s286
    %p288 = scmp.eq.s32.totalorder %s31, 0
    %p289 = por %p287, %p288
    %s291 = sadd.s32 %s290, 1
    %p294 = scmp.eq.s32.totalorder %s25, 3
    %p295 = scmp.ne.s32.totalorder %s290, %s292
    %p296 = scmp.eq.s32.totalorder %s25, 0
    %p297 = por %p295, %p296
    %p298 = scmp.ne.s32.totalorder %s290, %s292
    %p299 = scmp.eq.s32.totalorder %s30, 3
    %p300 = por %p298, %p299
    %p301 = scmp.ne.s32.totalorder %s292, %s293
    %p302 = scmp.eq.s32.totalorder %s30, 0
    %p303 = por %p301, %p302
    %p304 = scmp.ne.s32.totalorder %s292, %s293
    %p305 = scmp.eq.s32.totalorder %s31, 3
    %p306 = por %p304, %p305
    %p308 = scmp.ne.s32.totalorder %s293, %s307
    %p309 = scmp.eq.s32.totalorder %s31, 0
    %p310 = por %p308, %p309
    %s312 = sadd.s32 %s311, 1
    %p315 = scmp.eq.s32.totalorder %s25, 3
    %p316 = scmp.ne.s32.totalorder %s311, %s313
    %p317 = scmp.eq.s32.totalorder %s25, 0
    %p318 = por %p316, %p317
    %p319 = scmp.ne.s32.totalorder %s311, %s313
    %p320 = scmp.eq.s32.totalorder %s30, 3
    %p321 = por %p319, %p320
    %p322 = scmp.ne.s32.totalorder %s313, %s314
    %p323 = scmp.eq.s32.totalorder %s30, 0
    %p324 = por %p322, %p323
    %p325 = scmp.ne.s32.totalorder %s313, %s314
    %p326 = scmp.eq.s32.totalorder %s31, 3
    %p327 = por %p325, %p326
    %p329 = scmp.ne.s32.totalorder %s314, %s328
    %p330 = scmp.eq.s32.totalorder %s31, 0
    %p331 = por %p329, %p330
    %s333 = sadd.s32 %s332, 1
    %p336 = scmp.eq.s32.totalorder %s25, 3
    %p337 = scmp.ne.s32.totalorder %s332, %s334
    %p338 = scmp.eq.s32.totalorder %s25, 0
    %p339 = por %p337, %p338
    %p340 = scmp.ne.s32.totalorder %s332, %s334
    %p341 = scmp.eq.s32.totalorder %s30, 3
    %p342 = por %p340, %p341
    %p343 = scmp.ne.s32.totalorder %s334, %s335
    %p344 = scmp.eq.s32.totalorder %s30, 0
    %p345 = por %p343, %p344
    %p346 = scmp.ne.s32.totalorder %s334, %s335
    %p347 = scmp.eq.s32.totalorder %s31, 3
    %p348 = por %p346, %p347
    %p350 = scmp.ne.s32.totalorder %s335, %s349
    %p351 = scmp.eq.s32.totalorder %s31, 0
    %p352 = por %p350, %p351
    %s354 = sadd.s32 %s353, 1
    %p357 = scmp.eq.s32.totalorder %s25, 3
    %p358 = scmp.ne.s32.totalorder %s353, %s355
    %p359 = scmp.eq.s32.totalorder %s25, 0
    %p360 = por %p358, %p359
    %p361 = scmp.ne.s32.totalorder %s353, %s355
    %p362 = scmp.eq.s32.totalorder %s30, 3
    %p363 = por %p361, %p362
    %p364 = scmp.ne.s32.totalorder %s355, %s356
    %p365 = scmp.eq.s32.totalorder %s30, 0
    %p366 = por %p364, %p365
    %p367 = scmp.ne.s32.totalorder %s355, %s356
    %p368 = scmp.eq.s32.totalorder %s31, 3
    %p369 = por %p367, %p368
    %p371 = scmp.ne.s32.totalorder %s356, %s370
    %p372 = scmp.eq.s32.totalorder %s31, 0
    %p373 = por %p371, %p372
    %s375 = sadd.s32 %s374, 1
    %p378 = scmp.eq.s32.totalorder %s25, 3
    %p379 = scmp.ne.s32.totalorder %s374, %s376
    %p380 = scmp.eq.s32.totalorder %s25, 0
    %p381 = por %p379, %p380
    %p382 = scmp.ne.s32.totalorder %s374, %s376
    %p383 = scmp.eq.s32.totalorder %s30, 3
    %p384 = por %p382, %p383
    %p385 = scmp.ne.s32.totalorder %s376, %s377
    %p386 = scmp.eq.s32.totalorder %s30, 0
    %p387 = por %p385, %p386
    %p388 = scmp.ne.s32.totalorder %s376, %s377
    %p389 = scmp.eq.s32.totalorder %s31, 3
    %p390 = por %p388, %p389
    %p392 = scmp.ne.s32.totalorder %s377, %s391
    %p393 = scmp.eq.s32.totalorder %s31, 0
    %p394 = por %p392, %p393
    %s396 = sadd.s32 %s395, 1
    %p399 = scmp.eq.s32.totalorder %s25, 3
    %p400 = scmp.ne.s32.totalorder %s395, %s397
    %p401 = scmp.eq.s32.totalorder %s25, 0
    %p402 = por %p400, %p401
    %p403 = scmp.ne.s32.totalorder %s395, %s397
    %p404 = scmp.eq.s32.totalorder %s30, 3
    %p405 = por %p403, %p404
    %p406 = scmp.ne.s32.totalorder %s397, %s398
    %p407 = scmp.eq.s32.totalorder %s30, 0
    %p408 = por %p406, %p407
    %p409 = scmp.ne.s32.totalorder %s397, %s398
    %p410 = scmp.eq.s32.totalorder %s31, 3
    %p411 = por %p409, %p410
    %p413 = scmp.ne.s32.totalorder %s398, %s412
    %p414 = scmp.eq.s32.totalorder %s31, 0
    %p415 = por %p413, %p414
    %s417 = sadd.s32 %s416, 1
    %p420 = scmp.eq.s32.totalorder %s25, 3
    %p421 = scmp.ne.s32.totalorder %s416, %s418
    %p422 = scmp.eq.s32.totalorder %s25, 0
    %p423 = por %p421, %p422
    %p424 = scmp.ne.s32.totalorder %s416, %s418
    %p425 = scmp.eq.s32.totalorder %s30, 3
    %p426 = por %p424, %p425
    %p427 = scmp.ne.s32.totalorder %s418, %s419
    %p428 = scmp.eq.s32.totalorder %s30, 0
    %p429 = por %p427, %p428
    %p430 = scmp.ne.s32.totalorder %s418, %s419
    %p431 = scmp.eq.s32.totalorder %s31, 3
    %p432 = por %p430, %p431
    %p434 = scmp.ne.s32.totalorder %s419, %s433
    %p435 = scmp.eq.s32.totalorder %s31, 0
    %p436 = por %p434, %p435
    %s437 = ssub.s32 %s25, %s32
    %p438 = scmp.eq.s32.totalorder %s437, 0
    %s440 = sadd.s32 %s439, 1
    %s441 = scalar_select %p438, %s439, %s440
    %p444 = pneg %p438
    %p445 = scmp.eq.s32.totalorder %s25, 3
    %p446 = por %p444, %p445
    %p447 = scmp.ne.s32.totalorder %s439, %s442
    %p448 = scmp.eq.s32.totalorder %s25, 0
    %p449 = por %p447, %p448
    %p450 = scmp.ne.s32.totalorder %s439, %s442
    %p451 = scmp.eq.s32.totalorder %s30, 3
    %p452 = por %p450, %p451
    %p453 = scmp.ne.s32.totalorder %s442, %s443
    %p454 = scmp.eq.s32.totalorder %s30, 0
    %p455 = por %p453, %p454
    %p456 = scmp.ne.s32.totalorder %s442, %s443
    %p457 = scmp.eq.s32.totalorder %s31, 3
    %p458 = por %p456, %p457
    %p460 = scmp.ne.s32.totalorder %s443, %s459
    %p461 = scmp.eq.s32.totalorder %s31, 0
    %p462 = por %p460, %p461
    %p463 = scmp.le.s32.totalorder 1, %s25
    %p464 = scmp.lt.s32.totalorder %s25, 5
    %p465 = pnand %p463, %p464
    %p466 = pneg %p465
    // Predicated region
    $region9: #{dt_forward.1} parent=5 // pred_check
      _
    $region10: #{dt_forward.1} parent=5 // pred_check_branch
      %468 = sbr.rel (%p465) target = $region12
    $region11: #{dt_forward.1} parent=5 // pred_region
      %s469 = ssub.s32 %s25, 1
      // Predicated region
      $region13: #{dt_forward.1} parent=11 // pred_check
        %p470 = pneg %p72
      $region14: #{dt_forward.1} parent=11 // pred_check_branch
        %472 = sbr.rel (%p470) target = $region16
      $region15: #{dt_forward.1} parent=11 // pred_region
        _
      $region16: #{dt_forward.1} parent=11 // pred_fallthru
        _
      // Predicated region
      $region17: #{dt_forward.1} parent=11 // pred_check
        %p473 = pneg %p93
      $region18: #{dt_forward.1} parent=11 // pred_check_branch
        %475 = sbr.rel (%p473) target = $region20
      $region19: #{dt_forward.1} parent=11 // pred_region
        _
      $region20: #{dt_forward.1} parent=11 // pred_fallthru
        _
      // Predicated region
      $region21: #{dt_forward.1} parent=11 // pred_check
        %p476 = pneg %p114
      $region22: #{dt_forward.1} parent=11 // pred_check_branch
        %478 = sbr.rel (%p476) target = $region24
      $region23: #{dt_forward.1} parent=11 // pred_region
        _
      $region24: #{dt_forward.1} parent=11 // pred_fallthru
        _
      // Predicated region
      $region25: #{dt_forward.1} parent=11 // pred_check
        %p479 = pneg %p135
      $region26: #{dt_forward.1} parent=11 // pred_check_branch
        %481 = sbr.rel (%p479) target = $region28
      $region27: #{dt_forward.1} parent=11 // pred_region
        _
      $region28: #{dt_forward.1} parent=11 // pred_fallthru
        _
      // Predicated region
      $region29: #{dt_forward.1} parent=11 // pred_check
        %p482 = pneg %p156
      $region30: #{dt_forward.1} parent=11 // pred_check_branch
        %484 = sbr.rel (%p482) target = $region32
      $region31: #{dt_forward.1} parent=11 // pred_region
        _
      $region32: #{dt_forward.1} parent=11 // pred_fallthru
        _
      // Predicated region
      $region33: #{dt_forward.1} parent=11 // pred_check
        %p485 = pneg %p177
      $region34: #{dt_forward.1} parent=11 // pred_check_branch
        %487 = sbr.rel (%p485) target = $region36
      $region35: #{dt_forward.1} parent=11 // pred_region
        _
      $region36: #{dt_forward.1} parent=11 // pred_fallthru
        _
      // Predicated region
      $region37: #{dt_forward.1} parent=11 // pred_check
        %p488 = pneg %p198
      $region38: #{dt_forward.1} parent=11 // pred_check_branch
        %490 = sbr.rel (%p488) target = $region40
      $region39: #{dt_forward.1} parent=11 // pred_region
        _
      $region40: #{dt_forward.1} parent=11 // pred_fallthru
        _
      // Predicated region
      $region41: #{dt_forward.1} parent=11 // pred_check
        %p491 = pneg %p219
      $region42: #{dt_forward.1} parent=11 // pred_check_branch
        %493 = sbr.rel (%p491) target = $region44
      $region43: #{dt_forward.1} parent=11 // pred_region
        _
      $region44: #{dt_forward.1} parent=11 // pred_fallthru
        _
      // Predicated region
      $region45: #{dt_forward.1} parent=11 // pred_check
        %p494 = pneg %p240
      $region46: #{dt_forward.1} parent=11 // pred_check_branch
        %496 = sbr.rel (%p494) target = $region48
      $region47: #{dt_forward.1} parent=11 // pred_region
        _
      $region48: #{dt_forward.1} parent=11 // pred_fallthru
        _
      // Predicated region
      $region49: #{dt_forward.1} parent=11 // pred_check
        %p497 = pneg %p261
      $region50: #{dt_forward.1} parent=11 // pred_check_branch
        %499 = sbr.rel (%p497) target = $region52
      $region51: #{dt_forward.1} parent=11 // pred_region
        _
      $region52: #{dt_forward.1} parent=11 // pred_fallthru
        _
      // Predicated region
      $region53: #{dt_forward.1} parent=11 // pred_check
        %p500 = pneg %p282
      $region54: #{dt_forward.1} parent=11 // pred_check_branch
        %502 = sbr.rel (%p500) target = $region56
      $region55: #{dt_forward.1} parent=11 // pred_region
        _
      $region56: #{dt_forward.1} parent=11 // pred_fallthru
        _
      // Predicated region
      $region57: #{dt_forward.1} parent=11 // pred_check
        %p503 = pneg %p303
      $region58: #{dt_forward.1} parent=11 // pred_check_branch
        %505 = sbr.rel (%p503) target = $region60
      $region59: #{dt_forward.1} parent=11 // pred_region
        _
      $region60: #{dt_forward.1} parent=11 // pred_fallthru
        _
      // Predicated region
      $region61: #{dt_forward.1} parent=11 // pred_check
        %p506 = pneg %p324
      $region62: #{dt_forward.1} parent=11 // pred_check_branch
        %508 = sbr.rel (%p506) target = $region64
      $region63: #{dt_forward.1} parent=11 // pred_region
        _
      $region64: #{dt_forward.1} parent=11 // pred_fallthru
        _
      // Predicated region
      $region65: #{dt_forward.1} parent=11 // pred_check
        %p509 = pneg %p345
      $region66: #{dt_forward.1} parent=11 // pred_check_branch
        %511 = sbr.rel (%p509) target = $region68
      $region67: #{dt_forward.1} parent=11 // pred_region
        _
      $region68: #{dt_forward.1} parent=11 // pred_fallthru
        _
      // Predicated region
      $region69: #{dt_forward.1} parent=11 // pred_check
        %p512 = pneg %p366
      $region70: #{dt_forward.1} parent=11 // pred_check_branch
        %514 = sbr.rel (%p512) target = $region72
      $region71: #{dt_forward.1} parent=11 // pred_region
        _
      $region72: #{dt_forward.1} parent=11 // pred_fallthru
        _
      // Predicated region
      $region73: #{dt_forward.1} parent=11 // pred_check
        %p515 = pneg %p387
      $region74: #{dt_forward.1} parent=11 // pred_check_branch
        %517 = sbr.rel (%p515) target = $region76
      $region75: #{dt_forward.1} parent=11 // pred_region
        _
      $region76: #{dt_forward.1} parent=11 // pred_fallthru
        _
      // Predicated region
      $region77: #{dt_forward.1} parent=11 // pred_check
        %p518 = pneg %p408
      $region78: #{dt_forward.1} parent=11 // pred_check_branch
        %520 = sbr.rel (%p518) target = $region80
      $region79: #{dt_forward.1} parent=11 // pred_region
        _
      $region80: #{dt_forward.1} parent=11 // pred_fallthru
        _
      // Predicated region
      $region81: #{dt_forward.1} parent=11 // pred_check
        %p521 = pneg %p429
      $region82: #{dt_forward.1} parent=11 // pred_check_branch
        %523 = sbr.rel (%p521) target = $region84
      $region83: #{dt_forward.1} parent=11 // pred_region
        _
      $region84: #{dt_forward.1} parent=11 // pred_fallthru
        _
    $region12: #{dt_forward.1} parent=5 // pred_fallthru
      _
    %p524 = scmp.lt.s32.totalorder %s25, 4
    // Predicated region
    $region85: #{dt_forward.1} parent=5 // pred_check
      %p525 = pneg %p524
    $region86: #{dt_forward.1} parent=5 // pred_check_branch
      %527 = sbr.rel (%p525) target = $region88
    $region87: #{dt_forward.1} parent=5 // pred_region
      // Predicated region
      $region89: #{dt_forward.1} parent=87 // pred_check
        %p528 = pneg %p45
      $region90: #{dt_forward.1} parent=87 // pred_check_branch
        %530 = sbr.rel (%p528) target = $region92
      $region91: #{dt_forward.1} parent=87 // pred_region
        %s531 = smul.u32 8, %s25
        %p532 = scmp.lt.s32.totalorder %s531, 31
        %s533 = scalar_select %p532, %s531, 31
        %s534 = smul.addr %s533, 3
        %s535 = smul.addr %s534, 4
        %s536 = scalar_lea.vmem %s0, %s535
        %s537 = smul.u32 8, %s25
      $region92: #{dt_forward.1} parent=87 // pred_fallthru
        _
    $region88: #{dt_forward.1} parent=5 // pred_fallthru
      _
    %p538 = scmp.le.s32.totalorder 1, %s25
    %p539 = scmp.lt.s32.totalorder %s25, 5
    %p540 = pnand %p538, %p539
    %p541 = pneg %p540
    // Predicated region
    $region93: #{dt_forward.1} parent=5 // pred_check
      _
    $region94: #{dt_forward.1} parent=5 // pred_check_branch
      %543 = sbr.rel (%p540) target = $region96
    $region95: #{dt_forward.1} parent=5 // pred_region
      %s544 = ssub.s32 %s25, 1
      %s545 = smul.u32 8, %s30
      %p546 = scmp.lt.s32.totalorder %s545, 31
      %s547 = scalar_select %p546, %s545, 31
      %s548 = smul.addr %s547, 3
      %s549 = smul.addr %s548, 4
      %s550 = scalar_lea.vmem %s0, %s549
      %p551 = pneg %p51
      %p552 = pneg %p48
      %p553 = pneg %p72
      %p554 = pneg %p69
      %p555 = pneg %p93
      %p556 = pneg %p90
      %p557 = pneg %p114
      %p558 = pneg %p111
      %p559 = pneg %p135
      %p560 = pneg %p132
      %p561 = pneg %p156
      %p562 = pneg %p153
      %p563 = pneg %p177
      %p564 = pneg %p174
      %p565 = pneg %p198
      %p566 = pneg %p195
      %p567 = pneg %p219
      %p568 = pneg %p216
      %p569 = pneg %p240
      %p570 = pneg %p237
      %p571 = pneg %p261
      %p572 = pneg %p258
      %p573 = pneg %p282
      %p574 = pneg %p279
      %p575 = pneg %p303
      %p576 = pneg %p300
      %p577 = pneg %p324
      %p578 = pneg %p321
      %p579 = pneg %p345
      %p580 = pneg %p342
      %p581 = pneg %p366
      %p582 = pneg %p363
      %p583 = pneg %p387
      %p584 = pneg %p384
      %p585 = pneg %p408
      %p586 = pneg %p405
      %p587 = pneg %p429
      %p588 = pneg %p426
      %p589 = pneg %p455
      %p590 = pneg %p452
      %s591 = smul.u32 8, %s30
      %p592 = scmp.lt.s32.totalorder %s591, 31
      %s593 = scalar_select %p592, %s591, 31
      %s594 = smul.addr %s593, 4
      %s595 = scalar_lea.vmem %s19, %s594
      %s596 = smul.u32 8, %s30
      %p597 = scmp.lt.s32.totalorder %s596, 31
      %s598 = scalar_select %p597, %s596, 31
      %s599 = smul.addr %s598, 3
      %s600 = smul.addr %s599, 4
      %s601 = scalar_lea.vmem %s0, %s600
      %s602 = smul.u32 8, %s30
      %s603 = smul.u32 8, %s30
      %p604 = scmp.lt.s32.totalorder %s603, 31
      %s605 = scalar_select %p604, %s603, 31
      %s606 = smul.addr %s605, 4
      %s607 = scalar_lea.vmem %s19, %s606
      %s608 = smul.u32 8, %s30
      %v610 = vld [vmem:[%s601] sm:$0xf]
      %v611 = vld [vmem:[%s601 + $0x4] sm:$0xf]
      %v612 = vld [vmem:[%s601 + $0x8] sm:$0xf]
      %v613 = vld [vmem:[%s601 + $0xc] sm:$0xf]
      %v614 = vld [vmem:[%s601 + $0x10] sm:$0xf]
      %v615 = vld [vmem:[%s601 + $0x14] sm:$0xf]
      %v616 = vld [vmem:[%s601 + $0x18] sm:$0xf]
      %v617 = vld [vmem:[%s601 + $0x1c] sm:$0xf]
      %v618 = vld [vmem:[%s601 + $0x20] sm:$0xf]
      %v619 = vld [vmem:[%s601 + $0x24] sm:$0xf]
      %v620 = vld [vmem:[%s601 + $0x28] sm:$0xf]
      %v621 = vld [vmem:[%s601 + $0x2c] sm:$0xf]
      %v622 = vld [vmem:[%s601 + $0x30] sm:$0xf]
      %v623 = vld [vmem:[%s601 + $0x34] sm:$0xf]
      %v624 = vld [vmem:[%s601 + $0x38] sm:$0xf]
      %v625 = vld [vmem:[%s601 + $0x3c] sm:$0xf]
      %v626 = vld [vmem:[%s601 + $0x40] sm:$0xf]
      %v627 = vld [vmem:[%s601 + $0x44] sm:$0xf]
      %v628 = vld [vmem:[%s601 + $0x48] sm:$0xf]
      %v629 = vld [vmem:[%s601 + $0x4c] sm:$0xf]
      %v630 = vld [vmem:[%s601 + $0x50] sm:$0xf]
      %v631 = vld [vmem:[%s601 + $0x54] sm:$0xf]
      %v632 = vld [vmem:[%s601 + $0x58] sm:$0xf]
      %v633 = vld [vmem:[%s601 + $0x5c] sm:$0xf]
      %v634 = vld [vmem:[%s1] sm:$0xf]
      %v635 = vld [vmem:[%s1 + $0x4] sm:$0x7]
      %v660 = vunpack.c.l.b16 %v610
      %v661 = vunpack.c.l.b16 %v611
      %v662 = vunpack.c.l.b16 %v612
      %v663 = vunpack.c.l.b16 %v613
      %v664 = vunpack.c.l.b16 %v614
      %v665 = vunpack.c.l.b16 %v615
      %v666 = vunpack.c.l.b16 %v616
      %v667 = vunpack.c.l.b16 %v617
      %v668 = vunpack.c.l.b16 %v618
      %v669 = vunpack.c.l.b16 %v619
      %v670 = vunpack.c.l.b16 %v620
      %v671 = vunpack.c.l.b16 %v621
      %v672 = vunpack.c.l.b16 %v622
      %v673 = vunpack.c.l.b16 %v623
      %v674 = vunpack.c.l.b16 %v624
      %v675 = vunpack.c.l.b16 %v625
      %v676 = vunpack.c.l.b16 %v626
      %v677 = vunpack.c.l.b16 %v627
      %v678 = vunpack.c.l.b16 %v628
      %v679 = vunpack.c.l.b16 %v629
      %v680 = vunpack.c.l.b16 %v630
      %v681 = vunpack.c.l.b16 %v631
      %v682 = vunpack.c.l.b16 %v632
      %v683 = vunpack.c.l.b16 %v633
      %v684 = vpack.c.b16 %v661, %v660
      %v685 = vpack.c.b16 %v663, %v662
      %v686 = vpack.c.b16 %v665, %v664
      %v687 = vpack.c.b16 %v667, %v666
      %v688 = vpack.c.b16 %v669, %v668
      %v689 = vpack.c.b16 %v671, %v670
      %v690 = vpack.c.b16 %v673, %v672
      %v691 = vpack.c.b16 %v675, %v674
      %v692 = vpack.c.b16 %v677, %v676
      %v693 = vpack.c.b16 %v679, %v678
      %v694 = vpack.c.b16 %v681, %v680
      %v695 = vpack.c.b16 %v683, %v682
      %v698 = vunpack.c.l.b16 %v634
      %v699 = vunpack.c.l.b16 %v635
      %v700 = vpack.c.b16 %v699, %v698
      %vm701 = vcmask 113664
      %v703 = vsel %vm701, %v684, 0
      %v706 = vsel %vm701, %v685, 0
      %v709 = vsel %vm701, %v686, 0
      %v712 = vsel %vm701, %v687, 0
      %v715 = vsel %vm701, %v688, 0
      %v718 = vsel %vm701, %v689, 0
      %v721 = vsel %vm701, %v690, 0
      %v724 = vsel %vm701, %v691, 0
      %v727 = vsel %vm701, %v692, 0
      %v730 = vsel %vm701, %v693, 0
      %v733 = vsel %vm701, %v694, 0
      %v736 = vsel %vm701, %v695, 0
      %vm738 = vcmask 1046528
      %v740 = vsel %vm738, %v700, 0
      %742 = vmatprep.subr.bf16.mxu0 0
      %743 = vmatpush1.bf16.msra.mxu0 %v740
      %744 = vmatprep.subr.bf16.mxu0 0
      %745 = vmatpush1.bf16.msra.mxu0 0
      %746 = vmatprep.subr.bf16.mxu0 0
      %747 = vmatpush1.bf16.msra.mxu0 0
      %748 = vmatprep.subr.bf16.mxu0 0
      %749 = vmatpush1.bf16.msra.mxu0 0
      %750 = vmatprep.subr.bf16.mxu0 0
      %751 = vmatpush1.bf16.msra.mxu0 0
      %752 = vmatprep.subr.bf16.mxu0 0
      %753 = vmatpush1.bf16.msra.mxu0 0
      %754 = vmatprep.subr.bf16.mxu0 0
      %755 = vmatpush1.bf16.msra.mxu0 0
      %756 = vmatprep.subr.bf16.mxu0 0
      %757 = vmatpush1.bf16.msra.mxu0 0
      %758 = vmatprep.subr.bf16.mxu0 0
      %759 = vmatpush1.bf16.msra.mxu0 0
      %760 = vmatprep.subr.bf16.mxu0 0
      %761 = vmatpush1.bf16.msra.mxu0 0
      %762 = vmatprep.subr.bf16.mxu0 0
      %763 = vmatpush1.bf16.msra.mxu0 0
      %764 = vmatprep.subr.bf16.mxu0 0
      %765 = vmatpush1.bf16.msra.mxu0 0
      %766 = vmatprep.subr.bf16.mxu0 0
      %767 = vmatpush1.bf16.msra.mxu0 0
      %768 = vmatprep.subr.bf16.mxu0 0
      %769 = vmatpush1.bf16.msra.mxu0 0
      %770 = vmatprep.subr.bf16.mxu0 0
      %771 = vmatpush1.bf16.msra.mxu0 0
      %772 = vmatprep.subr.bf16.mxu0 0
      %773 = vmatpush1.bf16.msra.mxu0 0
      %774 = vmatprep.mubr.bf16.mxu0 0
      %775 = vmatmul.mubr.bf16.gmra.mrb[0].mxu0 %v703
      %v776 = vpop.f32.mrb[0].mxu0
      %v777 = vadd.f32 0.0, %v776
      %v778 = vpop.f32.mrb[0].mxu0
      %v779 = vpop.f32.mrb[0].mxu0
      %v780 = vadd.f32 0.0, %v779
      %v781 = vpop.f32.mrb[0].mxu0
      %782 = vmatprep.mubr.bf16.mxu0 0
      %783 = vmatmul.mubr.bf16.gmra.mrb[0].mxu0 %v706
      %v784 = vpop.f32.mrb[0].mxu0
      %v785 = vadd.f32 0.0, %v784
      %v786 = vpop.f32.mrb[0].mxu0
      %v787 = vpop.f32.mrb[0].mxu0
      %v788 = vadd.f32 0.0, %v787
      %v789 = vpop.f32.mrb[0].mxu0
      %790 = vmatprep.mubr.bf16.mxu0 0
      %791 = vmatmul.mubr.bf16.gmra.mrb[0].mxu0 %v709
      %v792 = vpop.f32.mrb[0].mxu0
      %v793 = vadd.f32 0.0, %v792
      %v794 = vpop.f32.mrb[0].mxu0
      %v795 = vpop.f32.mrb[0].mxu0
      %v796 = vadd.f32 0.0, %v795
      %v797 = vpop.f32.mrb[0].mxu0
      %798 = vmatprep.mubr.bf16.mxu0 0
      %799 = vmatmul.mubr.bf16.gmra.mrb[0].mxu0 %v712
      %v800 = vpop.f32.mrb[0].mxu0
      %v801 = vadd.f32 0.0, %v800
      %v802 = vpop.f32.mrb[0].mxu0
      %v803 = vpop.f32.mrb[0].mxu0
      %v804 = vadd.f32 0.0, %v803
      %v805 = vpop.f32.mrb[0].mxu0
      %806 = vmatprep.mubr.bf16.mxu0 0
      %807 = vmatmul.mubr.bf16.gmra.mrb[0].mxu0 %v715
      %v808 = vpop.f32.mrb[0].mxu0
      %v809 = vadd.f32 0.0, %v808
      %v810 = vpop.f32.mrb[0].mxu0
      %v811 = vpop.f32.mrb[0].mxu0
      %v812 = vadd.f32 0.0, %v811
      %v813 = vpop.f32.mrb[0].mxu0
      %814 = vmatprep.mubr.bf16.mxu0 0
      %815 = vmatmul.mubr.bf16.gmra.mrb[0].mxu0 %v718
      %v816 = vpop.f32.mrb[0].mxu0
      %v817 = vadd.f32 0.0, %v816
      %v818 = vpop.f32.mrb[0].mxu0
      %v819 = vpop.f32.mrb[0].mxu0
      %v820 = vadd.f32 0.0, %v819
      %v821 = vpop.f32.mrb[0].mxu0
      %822 = vmatprep.mubr.bf16.mxu0 0
      %823 = vmatmul.mubr.bf16.gmra.mrb[0].mxu0 %v721
      %v824 = vpop.f32.mrb[0].mxu0
      %v825 = vadd.f32 0.0, %v824
      %v826 = vpop.f32.mrb[0].mxu0
      %v827 = vpop.f32.mrb[0].mxu0
      %v828 = vadd.f32 0.0, %v827
      %v829 = vpop.f32.mrb[0].mxu0
      %830 = vmatprep.mubr.bf16.mxu0 0
      %831 = vmatmul.mubr.bf16.gmra.mrb[0].mxu0 %v724
      %v832 = vpop.f32.mrb[0].mxu0
      %v833 = vadd.f32 0.0, %v832
      %v834 = vpop.f32.mrb[0].mxu0
      %v835 = vpop.f32.mrb[0].mxu0
      %v836 = vadd.f32 0.0, %v835
      %v837 = vpop.f32.mrb[0].mxu0
      %838 = vmatprep.mubr.bf16.mxu0 0
      %839 = vmatmul.mubr.bf16.gmra.mrb[0].mxu0 %v727
      %v840 = vpop.f32.mrb[0].mxu0
      %v841 = vadd.f32 0.0, %v840
      %v842 = vpop.f32.mrb[0].mxu0
      %v843 = vpop.f32.mrb[0].mxu0
      %v844 = vadd.f32 0.0, %v843
      %v845 = vpop.f32.mrb[0].mxu0
      %846 = vmatprep.mubr.bf16.mxu0 0
      %847 = vmatmul.mubr.bf16.gmra.mrb[0].mxu0 %v730
      %v848 = vpop.f32.mrb[0].mxu0
      %v849 = vadd.f32 0.0, %v848
      %v850 = vpop.f32.mrb[0].mxu0
      %v851 = vpop.f32.mrb[0].mxu0
      %v852 = vadd.f32 0.0, %v851
      %v853 = vpop.f32.mrb[0].mxu0
      %854 = vmatprep.mubr.bf16.mxu0 0
      %855 = vmatmul.mubr.bf16.gmra.mrb[0].mxu0 %v733
      %v856 = vpop.f32.mrb[0].mxu0
      %v857 = vadd.f32 0.0, %v856
      %v858 = vpop.f32.mrb[0].mxu0
      %v859 = vpop.f32.mrb[0].mxu0
      %v860 = vadd.f32 0.0, %v859
      %v861 = vpop.f32.mrb[0].mxu0
      %862 = vmatprep.mubr.bf16.mxu0 0
      %863 = vmatmul.mubr.bf16.gmra.mrb[0].mxu0 %v736
      %v864 = vpop.f32.mrb[0].mxu0
      %v865 = vadd.f32 0.0, %v864
      %v866 = vpop.f32.mrb[0].mxu0
      %v867 = vpop.f32.mrb[0].mxu0
      %v868 = vadd.f32 0.0, %v867
      %v869 = vpop.f32.mrb[0].mxu0
      %870 = vdwg.mxu0
      %v871 = vld [vmem:[%s2] sm:$0xff]
      %v872 = vld [vmem:[%s2 + $0x8] sm:$0xff]
      %v873 = vld [vmem:[%s2 + $0x10] sm:$0xff]
      %v874 = vadd.f32 %v777, %v871
      %v875 = vadd.f32 %v780, %v872
      %v876 = vadd.f32 %v785, %v873
      %v877 = vadd.f32 %v788, %v871
      %v878 = vadd.f32 %v793, %v872
      %v879 = vadd.f32 %v796, %v873
      %v880 = vadd.f32 %v801, %v871
      %v881 = vadd.f32 %v804, %v872
      %v882 = vadd.f32 %v809, %v873
      %v883 = vadd.f32 %v812, %v871
      %v884 = vadd.f32 %v817, %v872
      %v885 = vadd.f32 %v820, %v873
      %v886 = vadd.f32 %v825, %v871
      %v887 = vadd.f32 %v828, %v872
      %v888 = vadd.f32 %v833, %v873
      %v889 = vadd.f32 %v836, %v871
      %v890 = vadd.f32 %v841, %v872
      %v891 = vadd.f32 %v844, %v873
      %v892 = vadd.f32 %v849, %v871
      %v893 = vadd.f32 %v852, %v872
      %v894 = vadd.f32 %v857, %v873
      %v895 = vadd.f32 %v860, %v871
      %v896 = vadd.f32 %v865, %v872
      %v897 = vadd.f32 %v868, %v873
      %v898 = vld [vmem:[%s3] sm:$0x1]
      %v899 = vld [vmem:[%s4] sm:$0x1]
      %vm900 = vcmask 261120
      %v901 = vsel %vm900, %v874, 0.0
      %902 = vadd.xlane.f32.xlu0 %v901
      %v903 = vpop.xlane.xlu0 %902
      %v904 = vsel %vm900, %v875, 0.0
      %905 = vadd.xlane.f32.xlu0 %v904
      %v906 = vpop.xlane.xlu0 %905
      %v907 = vsel %vm900, %v876, 0.0
      %908 = vadd.xlane.f32.xlu0 %v907
      %v909 = vpop.xlane.xlu0 %908
      %v910 = vsel %vm900, %v877, 0.0
      %911 = vadd.xlane.f32.xlu0 %v910
      %v912 = vpop.xlane.xlu0 %911
      %v913 = vsel %vm900, %v878, 0.0
      %914 = vadd.xlane.f32.xlu0 %v913
      %v915 = vpop.xlane.xlu0 %914
      %v916 = vsel %vm900, %v879, 0.0
      %917 = vadd.xlane.f32.xlu0 %v916
      %v918 = vpop.xlane.xlu0 %917
      %v919 = vsel %vm900, %v880, 0.0
      %920 = vadd.xlane.f32.xlu0 %v919
      %v921 = vpop.xlane.xlu0 %920
      %v922 = vsel %vm900, %v881, 0.0
      %923 = vadd.xlane.f32.xlu0 %v922
      %v924 = vpop.xlane.xlu0 %923
      %v925 = vsel %vm900, %v882, 0.0
      %926 = vadd.xlane.f32.xlu0 %v925
      %v927 = vpop.xlane.xlu0 %926
      %v928 = vsel %vm900, %v883, 0.0
      %929 = vadd.xlane.f32.xlu0 %v928
      %v930 = vpop.xlane.xlu0 %929
      %v931 = vsel %vm900, %v884, 0.0
      %932 = vadd.xlane.f32.xlu0 %v931
      %v933 = vpop.xlane.xlu0 %932
      %v934 = vsel %vm900, %v885, 0.0
      %935 = vadd.xlane.f32.xlu0 %v934
      %v936 = vpop.xlane.xlu0 %935
      %v937 = vsel %vm900, %v886, 0.0
      %938 = vadd.xlane.f32.xlu0 %v937
      %v939 = vpop.xlane.xlu0 %938
      %v940 = vsel %vm900, %v887, 0.0
      %941 = vadd.xlane.f32.xlu0 %v940
      %v942 = vpop.xlane.xlu0 %941
      %v943 = vsel %vm900, %v888, 0.0
      %944 = vadd.xlane.f32.xlu0 %v943
      %v945 = vpop.xlane.xlu0 %944
      %v946 = vsel %vm900, %v889, 0.0
      %947 = vadd.xlane.f32.xlu0 %v946
      %v948 = vpop.xlane.xlu0 %947
      %v949 = vsel %vm900, %v890, 0.0
      %950 = vadd.xlane.f32.xlu0 %v949
      %v951 = vpop.xlane.xlu0 %950
      %v952 = vsel %vm900, %v891, 0.0
      %953 = vadd.xlane.f32.xlu0 %v952
      %v954 = vpop.xlane.xlu0 %953
      %v955 = vsel %vm900, %v892, 0.0
      %956 = vadd.xlane.f32.xlu0 %v955
      %v957 = vpop.xlane.xlu0 %956
      %v958 = vsel %vm900, %v893, 0.0
      %959 = vadd.xlane.f32.xlu0 %v958
      %v960 = vpop.xlane.xlu0 %959
      %v961 = vsel %vm900, %v894, 0.0
      %962 = vadd.xlane.f32.xlu0 %v961
      %v963 = vpop.xlane.xlu0 %962
      %v964 = vsel %vm900, %v895, 0.0
      %965 = vadd.xlane.f32.xlu0 %v964
      %v966 = vpop.xlane.xlu0 %965
      %v967 = vsel %vm900, %v896, 0.0
      %968 = vadd.xlane.f32.xlu0 %v967
      %v969 = vpop.xlane.xlu0 %968
      %v970 = vsel %vm900, %v897, 0.0
      %971 = vadd.xlane.f32.xlu0 %v970
      %v972 = vpop.xlane.xlu0 %971
      %v973 = vrcp.pop 32.0
      %v974 = vmul.f32 %v903, %v973
      %v975 = vmul.f32 %v906, %v973
      %v976 = vmul.f32 %v909, %v973
      %v977 = vmul.f32 %v912, %v973
      %v978 = vmul.f32 %v915, %v973
      %v979 = vmul.f32 %v918, %v973
      %v980 = vmul.f32 %v921, %v973
      %v981 = vmul.f32 %v924, %v973
      %v982 = vmul.f32 %v927, %v973
      %v983 = vmul.f32 %v930, %v973
      %v984 = vmul.f32 %v933, %v973
      %v985 = vmul.f32 %v936, %v973
      %v986 = vmul.f32 %v939, %v973
      %v987 = vmul.f32 %v942, %v973
      %v988 = vmul.f32 %v945, %v973
      %v989 = vmul.f32 %v948, %v973
      %v990 = vmul.f32 %v951, %v973
      %v991 = vmul.f32 %v954, %v973
      %v992 = vmul.f32 %v957, %v973
      %v993 = vmul.f32 %v960, %v973
      %v994 = vmul.f32 %v963, %v973
      %v995 = vmul.f32 %v966, %v973
      %v996 = vmul.f32 %v969, %v973
      %v997 = vmul.f32 %v972, %v973
      %v998 = vmul.f32 %v874, %v874
      %v999 = vmul.f32 %v875, %v875
      %v1000 = vmul.f32 %v876, %v876
      %v1001 = vmul.f32 %v877, %v877
      %v1002 = vmul.f32 %v878, %v878
      %v1003 = vmul.f32 %v879, %v879
      %v1004 = vmul.f32 %v880, %v880
      %v1005 = vmul.f32 %v881, %v881
      %v1006 = vmul.f32 %v882, %v882
      %v1007 = vmul.f32 %v883, %v883
      %v1008 = vmul.f32 %v884, %v884
      %v1009 = vmul.f32 %v885, %v885
      %v1010 = vmul.f32 %v886, %v886
      %v1011 = vmul.f32 %v887, %v887
      %v1012 = vmul.f32 %v888, %v888
      %v1013 = vmul.f32 %v889, %v889
      %v1014 = vmul.f32 %v890, %v890
      %v1015 = vmul.f32 %v891, %v891
      %v1016 = vmul.f32 %v892, %v892
      %v1017 = vmul.f32 %v893, %v893
      %v1018 = vmul.f32 %v894, %v894
      %v1019 = vmul.f32 %v895, %v895
      %v1020 = vmul.f32 %v896, %v896
      %v1021 = vmul.f32 %v897, %v897
      %v1022 = vsel %vm900, %v998, 0.0
      %1023 = vadd.xlane.f32.xlu0 %v1022
      %v1024 = vpop.xlane.xlu0 %1023
      %v1025 = vsel %vm900, %v999, 0.0
      %1026 = vadd.xlane.f32.xlu0 %v1025
      %v1027 = vpop.xlane.xlu0 %1026
      %v1028 = vsel %vm900, %v1000, 0.0
      %1029 = vadd.xlane.f32.xlu0 %v1028
      %v1030 = vpop.xlane.xlu0 %1029
      %v1031 = vsel %vm900, %v1001, 0.0
      %1032 = vadd.xlane.f32.xlu0 %v1031
      %v1033 = vpop.xlane.xlu0 %1032
      %v1034 = vsel %vm900, %v1002, 0.0
      %1035 = vadd.xlane.f32.xlu0 %v1034
      %v1036 = vpop.xlane.xlu0 %1035
      %v1037 = vsel %vm900, %v1003, 0.0
      %1038 = vadd.xlane.f32.xlu0 %v1037
      %v1039 = vpop.xlane.xlu0 %1038
      %v1040 = vsel %vm900, %v1004, 0.0
      %1041 = vadd.xlane.f32.xlu0 %v1040
      %v1042 = vpop.xlane.xlu0 %1041
      %v1043 = vsel %vm900, %v1005, 0.0
      %1044 = vadd.xlane.f32.xlu0 %v1043
      %v1045 = vpop.xlane.xlu0 %1044
      %v1046 = vsel %vm900, %v1006, 0.0
      %1047 = vadd.xlane.f32.xlu0 %v1046
      %v1048 = vpop.xlane.xlu0 %1047
      %v1049 = vsel %vm900, %v1007, 0.0
      %1050 = vadd.xlane.f32.xlu0 %v1049
      %v1051 = vpop.xlane.xlu0 %1050
      %v1052 = vsel %vm900, %v1008, 0.0
      %1053 = vadd.xlane.f32.xlu0 %v1052
      %v1054 = vpop.xlane.xlu0 %1053
      %v1055 = vsel %vm900, %v1009, 0.0
      %1056 = vadd.xlane.f32.xlu0 %v1055
      %v1057 = vpop.xlane.xlu0 %1056
      %v1058 = vsel %vm900, %v1010, 0.0
      %1059 = vadd.xlane.f32.xlu0 %v1058
      %v1060 = vpop.xlane.xlu0 %1059
      %v1061 = vsel %vm900, %v1011, 0.0
      %1062 = vadd.xlane.f32.xlu0 %v1061
      %v1063 = vpop.xlane.xlu0 %1062
      %v1064 = vsel %vm900, %v1012, 0.0
      %1065 = vadd.xlane.f32.xlu0 %v1064
      %v1066 = vpop.xlane.xlu0 %1065
      %v1067 = vsel %vm900, %v1013, 0.0
      %1068 = vadd.xlane.f32.xlu0 %v1067
      %v1069 = vpop.xlane.xlu0 %1068
      %v1070 = vsel %vm900, %v1014, 0.0
      %1071 = vadd.xlane.f32.xlu0 %v1070
      %v1072 = vpop.xlane.xlu0 %1071
      %v1073 = vsel %vm900, %v1015, 0.0
      %1074 = vadd.xlane.f32.xlu0 %v1073
      %v1075 = vpop.xlane.xlu0 %1074
      %v1076 = vsel %vm900, %v1016, 0.0
      %1077 = vadd.xlane.f32.xlu0 %v1076
      %v1078 = vpop.xlane.xlu0 %1077
      %v1079 = vsel %vm900, %v1017, 0.0
      %1080 = vadd.xlane.f32.xlu0 %v1079
      %v1081 = vpop.xlane.xlu0 %1080
      %v1082 = vsel %vm900, %v1018, 0.0
      %1083 = vadd.xlane.f32.xlu0 %v1082
      %v1084 = vpop.xlane.xlu0 %1083
      %v1085 = vsel %vm900, %v1019, 0.0
      %1086 = vadd.xlane.f32.xlu0 %v1085
      %v1087 = vpop.xlane.xlu0 %1086
      %v1088 = vsel %vm900, %v1020, 0.0
      %1089 = vadd.xlane.f32.xlu0 %v1088
      %v1090 = vpop.xlane.xlu0 %1089
      %v1091 = vsel %vm900, %v1021, 0.0
      %1092 = vadd.xlane.f32.xlu0 %v1091
      %v1093 = vpop.xlane.xlu0 %1092
      %v1094 = vmul.f32 %v1024, %v973
      %v1095 = vmul.f32 %v1027, %v973
      %v1096 = vmul.f32 %v1030, %v973
      %v1097 = vmul.f32 %v1033, %v973
      %v1098 = vmul.f32 %v1036, %v973
      %v1099 = vmul.f32 %v1039, %v973
      %v1100 = vmul.f32 %v1042, %v973
      %v1101 = vmul.f32 %v1045, %v973
      %v1102 = vmul.f32 %v1048, %v973
      %v1103 = vmul.f32 %v1051, %v973
      %v1104 = vmul.f32 %v1054, %v973
      %v1105 = vmul.f32 %v1057, %v973
      %v1106 = vmul.f32 %v1060, %v973
      %v1107 = vmul.f32 %v1063, %v973
      %v1108 = vmul.f32 %v1066, %v973
      %v1109 = vmul.f32 %v1069, %v973
      %v1110 = vmul.f32 %v1072, %v973
      %v1111 = vmul.f32 %v1075, %v973
      %v1112 = vmul.f32 %v1078, %v973
      %v1113 = vmul.f32 %v1081, %v973
      %v1114 = vmul.f32 %v1084, %v973
      %v1115 = vmul.f32 %v1087, %v973
      %v1116 = vmul.f32 %v1090, %v973
      %v1117 = vmul.f32 %v1093, %v973
      %v1118 = vmul.f32 %v974, %v974
      %v1119 = vmul.f32 %v975, %v975
      %v1120 = vmul.f32 %v976, %v976
      %v1121 = vmul.f32 %v977, %v977
      %v1122 = vmul.f32 %v978, %v978
      %v1123 = vmul.f32 %v979, %v979
      %v1124 = vmul.f32 %v980, %v980
      %v1125 = vmul.f32 %v981, %v981
      %v1126 = vmul.f32 %v982, %v982
      %v1127 = vmul.f32 %v983, %v983
      %v1128 = vmul.f32 %v984, %v984
      %v1129 = vmul.f32 %v985, %v985
      %v1130 = vmul.f32 %v986, %v986
      %v1131 = vmul.f32 %v987, %v987
      %v1132 = vmul.f32 %v988, %v988
      %v1133 = vmul.f32 %v989, %v989
      %v1134 = vmul.f32 %v990, %v990
      %v1135 = vmul.f32 %v991, %v991
      %v1136 = vmul.f32 %v992, %v992
      %v1137 = vmul.f32 %v993, %v993
      %v1138 = vmul.f32 %v994, %v994
      %v1139 = vmul.f32 %v995, %v995
      %v1140 = vmul.f32 %v996, %v996
      %v1141 = vmul.f32 %v997, %v997
      %v1142 = vsub.f32 %v1094, %v1118
      %v1143 = vsub.f32 %v1095, %v1119
      %v1144 = vsub.f32 %v1096, %v1120
      %v1145 = vsub.f32 %v1097, %v1121
      %v1146 = vsub.f32 %v1098, %v1122
      %v1147 = vsub.f32 %v1099, %v1123
      %v1148 = vsub.f32 %v1100, %v1124
      %v1149 = vsub.f32 %v1101, %v1125
      %v1150 = vsub.f32 %v1102, %v1126
      %v1151 = vsub.f32 %v1103, %v1127
      %v1152 = vsub.f32 %v1104, %v1128
      %v1153 = vsub.f32 %v1105, %v1129
      %v1154 = vsub.f32 %v1106, %v1130
      %v1155 = vsub.f32 %v1107, %v1131
      %v1156 = vsub.f32 %v1108, %v1132
      %v1157 = vsub.f32 %v1109, %v1133
      %v1158 = vsub.f32 %v1110, %v1134
      %v1159 = vsub.f32 %v1111, %v1135
      %v1160 = vsub.f32 %v1112, %v1136
      %v1161 = vsub.f32 %v1113, %v1137
      %v1162 = vsub.f32 %v1114, %v1138
      %v1163 = vsub.f32 %v1115, %v1139
      %v1164 = vsub.f32 %v1116, %v1140
      %v1165 = vsub.f32 %v1117, %v1141
      %v1166 = vsub.f32 %v874, %v974
      %v1167 = vsub.f32 %v875, %v975
      %v1168 = vsub.f32 %v876, %v976
      %v1169 = vsub.f32 %v877, %v977
      %v1170 = vsub.f32 %v878, %v978
      %v1171 = vsub.f32 %v879, %v979
      %v1172 = vsub.f32 %v880, %v980
      %v1173 = vsub.f32 %v881, %v981
      %v1174 = vsub.f32 %v882, %v982
      %v1175 = vsub.f32 %v883, %v983
      %v1176 = vsub.f32 %v884, %v984
      %v1177 = vsub.f32 %v885, %v985
      %v1178 = vsub.f32 %v886, %v986
      %v1179 = vsub.f32 %v887, %v987
      %v1180 = vsub.f32 %v888, %v988
      %v1181 = vsub.f32 %v889, %v989
      %v1182 = vsub.f32 %v890, %v990
      %v1183 = vsub.f32 %v891, %v991
      %v1184 = vsub.f32 %v892, %v992
      %v1185 = vsub.f32 %v893, %v993
      %v1186 = vsub.f32 %v894, %v994
      %v1187 = vsub.f32 %v895, %v995
      %v1188 = vsub.f32 %v896, %v996
      %v1189 = vsub.f32 %v897, %v997
      %v1190 = vadd.f32 %v1142, 1e-05
      %v1191 = vadd.f32 %v1143, 1e-05
      %v1192 = vadd.f32 %v1144, 1e-05
      %v1193 = vadd.f32 %v1145, 1e-05
      %v1194 = vadd.f32 %v1146, 1e-05
      %v1195 = vadd.f32 %v1147, 1e-05
      %v1196 = vadd.f32 %v1148, 1e-05
      %v1197 = vadd.f32 %v1149, 1e-05
      %v1198 = vadd.f32 %v1150, 1e-05
      %v1199 = vadd.f32 %v1151, 1e-05
      %v1200 = vadd.f32 %v1152, 1e-05
      %v1201 = vadd.f32 %v1153, 1e-05
      %v1202 = vadd.f32 %v1154, 1e-05
      %v1203 = vadd.f32 %v1155, 1e-05
      %v1204 = vadd.f32 %v1156, 1e-05
      %v1205 = vadd.f32 %v1157, 1e-05
      %v1206 = vadd.f32 %v1158, 1e-05
      %v1207 = vadd.f32 %v1159, 1e-05
      %v1208 = vadd.f32 %v1160, 1e-05
      %v1209 = vadd.f32 %v1161, 1e-05
      %v1210 = vadd.f32 %v1162, 1e-05
      %v1211 = vadd.f32 %v1163, 1e-05
      %v1212 = vadd.f32 %v1164, 1e-05
      %v1213 = vadd.f32 %v1165, 1e-05
      %v1214 = vrsqrt.pop %v1190
      %v1215 = vrsqrt.pop %v1191
      %v1216 = vrsqrt.pop %v1192
      %v1217 = vrsqrt.pop %v1193
      %v1218 = vrsqrt.pop %v1194
      %v1219 = vrsqrt.pop %v1195
      %v1220 = vrsqrt.pop %v1196
      %v1221 = vrsqrt.pop %v1197
      %v1222 = vrsqrt.pop %v1198
      %v1223 = vrsqrt.pop %v1199
      %v1224 = vrsqrt.pop %v1200
      %v1225 = vrsqrt.pop %v1201
      %v1226 = vrsqrt.pop %v1202
      %v1227 = vrsqrt.pop %v1203
      %v1228 = vrsqrt.pop %v1204
      %v1229 = vrsqrt.pop %v1205
      %v1230 = vrsqrt.pop %v1206
      %v1231 = vrsqrt.pop %v1207
      %v1232 = vrsqrt.pop %v1208
      %v1233 = vrsqrt.pop %v1209
      %v1234 = vrsqrt.pop %v1210
      %v1235 = vrsqrt.pop %v1211
      %v1236 = vrsqrt.pop %v1212
      %v1237 = vrsqrt.pop %v1213
      %v1238 = vmul.f32 %v1166, %v1214
      %v1239 = vmul.f32 %v1167, %v1215
      %v1240 = vmul.f32 %v1168, %v1216
      %v1241 = vmul.f32 %v1169, %v1217
      %v1242 = vmul.f32 %v1170, %v1218
      %v1243 = vmul.f32 %v1171, %v1219
      %v1244 = vmul.f32 %v1172, %v1220
      %v1245 = vmul.f32 %v1173, %v1221
      %v1246 = vmul.f32 %v1174, %v1222
      %v1247 = vmul.f32 %v1175, %v1223
      %v1248 = vmul.f32 %v1176, %v1224
      %v1249 = vmul.f32 %v1177, %v1225
      %v1250 = vmul.f32 %v1178, %v1226
      %v1251 = vmul.f32 %v1179, %v1227
      %v1252 = vmul.f32 %v1180, %v1228
      %v1253 = vmul.f32 %v1181, %v1229
      %v1254 = vmul.f32 %v1182, %v1230
      %v1255 = vmul.f32 %v1183, %v1231
      %v1256 = vmul.f32 %v1184, %v1232
      %v1257 = vmul.f32 %v1185, %v1233
      %v1258 = vmul.f32 %v1186, %v1234
      %v1259 = vmul.f32 %v1187, %v1235
      %v1260 = vmul.f32 %v1188, %v1236
      %v1261 = vmul.f32 %v1189, %v1237
      %v1263 = vlaneseq
      %v1264 = vshrl.u32 %v1263, 7
      %v1265 = vsub.s32 0, %v1264
      %v1266 = vrot.slane %v898, %v1265
      %v1268 = vmul.f32 %v1238, %v1266
      %v1269 = vmul.f32 %v1239, %v1266
      %v1270 = vmul.f32 %v1240, %v1266
      %v1271 = vmul.f32 %v1241, %v1266
      %v1272 = vmul.f32 %v1242, %v1266
      %v1273 = vmul.f32 %v1243, %v1266
      %v1274 = vmul.f32 %v1244, %v1266
      %v1275 = vmul.f32 %v1245, %v1266
      %v1276 = vmul.f32 %v1246, %v1266
      %v1277 = vmul.f32 %v1247, %v1266
      %v1278 = vmul.f32 %v1248, %v1266
      %v1279 = vmul.f32 %v1249, %v1266
      %v1280 = vmul.f32 %v1250, %v1266
      %v1281 = vmul.f32 %v1251, %v1266
      %v1282 = vmul.f32 %v1252, %v1266
      %v1283 = vmul.f32 %v1253, %v1266
      %v1284 = vmul.f32 %v1254, %v1266
      %v1285 = vmul.f32 %v1255, %v1266
      %v1286 = vmul.f32 %v1256, %v1266
      %v1287 = vmul.f32 %v1257, %v1266
      %v1288 = vmul.f32 %v1258, %v1266
      %v1289 = vmul.f32 %v1259, %v1266
      %v1290 = vmul.f32 %v1260, %v1266
      %v1291 = vmul.f32 %v1261, %v1266
      %v1293 = vlaneseq
      %v1294 = vshrl.u32 %v1293, 7
      %v1295 = vsub.s32 0, %v1294
      %v1296 = vrot.slane %v899, %v1295
      %v1298 = vadd.f32 %v1268, %v1296
      %v1299 = vadd.f32 %v1269, %v1296
      %v1300 = vadd.f32 %v1270, %v1296
      %v1301 = vadd.f32 %v1271, %v1296
      %v1302 = vadd.f32 %v1272, %v1296
      %v1303 = vadd.f32 %v1273, %v1296
      %v1304 = vadd.f32 %v1274, %v1296
      %v1305 = vadd.f32 %v1275, %v1296
      %v1306 = vadd.f32 %v1276, %v1296
      %v1307 = vadd.f32 %v1277, %v1296
      %v1308 = vadd.f32 %v1278, %v1296
      %v1309 = vadd.f32 %v1279, %v1296
      %v1310 = vadd.f32 %v1280, %v1296
      %v1311 = vadd.f32 %v1281, %v1296
      %v1312 = vadd.f32 %v1282, %v1296
      %v1313 = vadd.f32 %v1283, %v1296
      %v1314 = vadd.f32 %v1284, %v1296
      %v1315 = vadd.f32 %v1285, %v1296
      %v1316 = vadd.f32 %v1286, %v1296
      %v1317 = vadd.f32 %v1287, %v1296
      %v1318 = vadd.f32 %v1288, %v1296
      %v1319 = vadd.f32 %v1289, %v1296
      %v1320 = vadd.f32 %v1290, %v1296
      %v1321 = vadd.f32 %v1291, %v1296
      %v1322 = vld [vmem:[%s5] sm:$0xf]
      %v1323 = vld [vmem:[%s5 + $0x4] sm:$0xf]
      %v1324 = vld [vmem:[%s5 + $0x8] sm:$0xf]
      %v1325 = vld [vmem:[%s5 + $0xc] sm:$0xf]
      %v1326 = vpack.c.bf16 %v1299, %v1298
      %v1327 = vpack.c.bf16 %v1301, %v1300
      %v1328 = vpack.c.bf16 %v1303, %v1302
      %v1329 = vpack.c.bf16 %v1305, %v1304
      %v1330 = vpack.c.bf16 %v1307, %v1306
      %v1331 = vpack.c.bf16 %v1309, %v1308
      %v1332 = vpack.c.bf16 %v1311, %v1310
      %v1333 = vpack.c.bf16 %v1313, %v1312
      %v1334 = vpack.c.bf16 %v1315, %v1314
      %v1335 = vpack.c.bf16 %v1317, %v1316
      %v1336 = vpack.c.bf16 %v1319, %v1318
      %v1337 = vpack.c.bf16 %v1321, %v1320
      %v1338 = vld [vmem:[%s6] sm:$0x1]
      %v1340 = vlaneseq
      %v1341 = vshrl.u32 %v1340, 7
      %v1342 = vsub.s32 0, %v1341
      %v1343 = vrot.slane %v1338, %v1342
      %v1349 = vunpack.c.l.b16 %v1322
      %v1350 = vunpack.c.l.b16 %v1323
      %v1351 = vunpack.c.l.b16 %v1324
      %v1352 = vunpack.c.l.b16 %v1325
      %v1353 = vpack.c.b16 %v1350, %v1349
      %v1354 = vpack.c.b16 %v1352, %v1351
      %v1358 = vsel %vm900, %v1326, 0
      %v1361 = vsel %vm900, %v1327, 0
      %v1364 = vsel %vm900, %v1328, 0
      %v1367 = vsel %vm900, %v1329, 0
      %v1370 = vsel %vm900, %v1330, 0
      %v1373 = vsel %vm900, %v1331, 0
      %v1376 = vsel %vm900, %v1332, 0
      %v1379 = vsel %vm900, %v1333, 0
      %v1382 = vsel %vm900, %v1334, 0
      %v1385 = vsel %vm900, %v1335, 0
      %v1388 = vsel %vm900, %v1336, 0
      %v1391 = vsel %vm900, %v1337, 0
      %1393 = vmatprep.subr.bf16.mxu0 0
      %1394 = vmatpush1.bf16.msra.mxu0 %v1353
      %1395 = vmatprep.subr.bf16.mxu0 0
      %1396 = vmatpush1.bf16.msra.mxu0 %v1354
      %1397 = vmatprep.subr.bf16.mxu0 0
      %1398 = vmatpush1.bf16.msra.mxu0 0
      %1399 = vmatprep.subr.bf16.mxu0 0
      %1400 = vmatpush1.bf16.msra.mxu0 0
      %1401 = vmatprep.subr.bf16.mxu0 0
      %1402 = vmatpush1.bf16.msra.mxu0 0
      %1403 = vmatprep.subr.bf16.mxu0 0
      %1404 = vmatpush1.bf16.msra.mxu0 0
      %1405 = vmatprep.subr.bf16.mxu0 0
      %1406 = vmatpush1.bf16.msra.mxu0 0
      %1407 = vmatprep.subr.bf16.mxu0 0
      %1408 = vmatpush1.bf16.msra.mxu0 0
      %1409 = vmatprep.subr.bf16.mxu0 0
      %1410 = vmatpush1.bf16.msra.mxu0 0
      %1411 = vmatprep.subr.bf16.mxu0 0
      %1412 = vmatpush1.bf16.msra.mxu0 0
      %1413 = vmatprep.subr.bf16.mxu0 0
      %1414 = vmatpush1.bf16.msra.mxu0 0
      %1415 = vmatprep.subr.bf16.mxu0 0
      %1416 = vmatpush1.bf16.msra.mxu0 0
      %1417 = vmatprep.subr.bf16.mxu0 0
      %1418 = vmatpush1.bf16.msra.mxu0 0
      %1419 = vmatprep.subr.bf16.mxu0 0
      %1420 = vmatpush1.bf16.msra.mxu0 0
      %1421 = vmatprep.subr.bf16.mxu0 0
      %1422 = vmatpush1.bf16.msra.mxu0 0
      %1423 = vmatprep.subr.bf16.mxu0 0
      %1424 = vmatpush1.bf16.msra.mxu0 0
      %1425 = vmatprep.mubr.bf16.mxu0 0
      %1426 = vmatmul.mubr.bf16.gmra.mrb[0].mxu0 %v1358
      %v1427 = vpop.f32.mrb[0].mxu0
      %v1428 = vadd.f32 %v1343, %v1427
      %v1429 = vpop.f32.mrb[0].mxu0
      %v1430 = vpop.f32.mrb[0].mxu0
      %v1431 = vadd.f32 %v1343, %v1430
      %v1432 = vpop.f32.mrb[0].mxu0
      %1433 = vmatprep.mubr.bf16.mxu0 0
      %1434 = vmatmul.mubr.bf16.gmra.mrb[0].mxu0 %v1361
      %v1435 = vpop.f32.mrb[0].mxu0
      %v1436 = vadd.f32 %v1343, %v1435
      %v1437 = vpop.f32.mrb[0].mxu0
      %v1438 = vpop.f32.mrb[0].mxu0
      %v1439 = vadd.f32 %v1343, %v1438
      %v1440 = vpop.f32.mrb[0].mxu0
      %1441 = vmatprep.mubr.bf16.mxu0 0
      %1442 = vmatmul.mubr.bf16.gmra.mrb[0].mxu0 %v1364
      %v1443 = vpop.f32.mrb[0].mxu0
      %v1444 = vadd.f32 %v1343, %v1443
      %v1445 = vpop.f32.mrb[0].mxu0
      %v1446 = vpop.f32.mrb[0].mxu0
      %v1447 = vadd.f32 %v1343, %v1446
      %v1448 = vpop.f32.mrb[0].mxu0
      %1449 = vmatprep.mubr.bf16.mxu0 0
      %1450 = vmatmul.mubr.bf16.gmra.mrb[0].mxu0 %v1367
      %v1451 = vpop.f32.mrb[0].mxu0
      %v1452 = vadd.f32 %v1343, %v1451
      %v1453 = vpop.f32.mrb[0].mxu0
      %v1454 = vpop.f32.mrb[0].mxu0
      %v1455 = vadd.f32 %v1343, %v1454
      %v1456 = vpop.f32.mrb[0].mxu0
      %1457 = vmatprep.mubr.bf16.mxu0 0
      %1458 = vmatmul.mubr.bf16.gmra.mrb[0].mxu0 %v1370
      %v1459 = vpop.f32.mrb[0].mxu0
      %v1460 = vadd.f32 %v1343, %v1459
      %v1461 = vpop.f32.mrb[0].mxu0
      %v1462 = vpop.f32.mrb[0].mxu0
      %v1463 = vadd.f32 %v1343, %v1462
      %v1464 = vpop.f32.mrb[0].mxu0
      %1465 = vmatprep.mubr.bf16.mxu0 0
      %1466 = vmatmul.mubr.bf16.gmra.mrb[0].mxu0 %v1373
      %v1467 = vpop.f32.mrb[0].mxu0
      %v1468 = vadd.f32 %v1343, %v1467
      %v1469 = vpop.f32.mrb[0].mxu0
      %v1470 = vpop.f32.mrb[0].mxu0
      %v1471 = vadd.f32 %v1343, %v1470
      %v1472 = vpop.f32.mrb[0].mxu0
      %1473 = vmatprep.mubr.bf16.mxu0 0
      %1474 = vmatmul.mubr.bf16.gmra.mrb[0].mxu0 %v1376
      %v1475 = vpop.f32.mrb[0].mxu0
      %v1476 = vadd.f32 %v1343, %v1475
      %v1477 = vpop.f32.mrb[0].mxu0
      %v1478 = vpop.f32.mrb[0].mxu0
      %v1479 = vadd.f32 %v1343, %v1478
      %v1480 = vpop.f32.mrb[0].mxu0
      %1481 = vmatprep.mubr.bf16.mxu0 0
      %1482 = vmatmul.mubr.bf16.gmra.mrb[0].mxu0 %v1379
      %v1483 = vpop.f32.mrb[0].mxu0
      %v1484 = vadd.f32 %v1343, %v1483
      %v1485 = vpop.f32.mrb[0].mxu0
      %v1486 = vpop.f32.mrb[0].mxu0
      %v1487 = vadd.f32 %v1343, %v1486
      %v1488 = vpop.f32.mrb[0].mxu0
      %1489 = vmatprep.mubr.bf16.mxu0 0
      %1490 = vmatmul.mubr.bf16.gmra.mrb[0].mxu0 %v1382
      %v1491 = vpop.f32.mrb[0].mxu0
      %v1492 = vadd.f32 %v1343, %v1491
      %v1493 = vpop.f32.mrb[0].mxu0
      %v1494 = vpop.f32.mrb[0].mxu0
      %v1495 = vadd.f32 %v1343, %v1494
      %v1496 = vpop.f32.mrb[0].mxu0
      %1497 = vmatprep.mubr.bf16.mxu0 0
      %1498 = vmatmul.mubr.bf16.gmra.mrb[0].mxu0 %v1385
      %v1499 = vpop.f32.mrb[0].mxu0
      %v1500 = vadd.f32 %v1343, %v1499
      %v1501 = vpop.f32.mrb[0].mxu0
      %v1502 = vpop.f32.mrb[0].mxu0
      %v1503 = vadd.f32 %v1343, %v1502
      %v1504 = vpop.f32.mrb[0].mxu0
      %1505 = vmatprep.mubr.bf16.mxu0 0
      %1506 = vmatmul.mubr.bf16.gmra.mrb[0].mxu0 %v1388
      %v1507 = vpop.f32.mrb[0].mxu0
      %v1508 = vadd.f32 %v1343, %v1507
      %v1509 = vpop.f32.mrb[0].mxu0
      %v1510 = vpop.f32.mrb[0].mxu0
      %v1511 = vadd.f32 %v1343, %v1510
      %v1512 = vpop.f32.mrb[0].mxu0
      %1513 = vmatprep.mubr.bf16.mxu0 0
      %1514 = vmatmul.mubr.bf16.gmra.mrb[0].mxu0 %v1391
      %v1515 = vpop.f32.mrb[0].mxu0
      %v1516 = vadd.f32 %v1343, %v1515
      %v1517 = vpop.f32.mrb[0].mxu0
      %v1518 = vpop.f32.mrb[0].mxu0
      %v1519 = vadd.f32 %v1343, %v1518
      %v1520 = vpop.f32.mrb[0].mxu0
      %1521 = vdwg.mxu0
      %v1522 = vpack.c.bf16 %v1431, %v1428
      %v1523 = vpack.c.bf16 %v1436, %v1436
      %v1524 = vpack.c.bf16 %v1444, %v1439
      %v1525 = vpack.c.bf16 %v1447, %v1447
      %v1526 = vpack.c.bf16 %v1455, %v1452
      %v1527 = vpack.c.bf16 %v1460, %v1460
      %v1528 = vpack.c.bf16 %v1468, %v1463
      %v1529 = vpack.c.bf16 %v1471, %v1471
      %v1530 = vpack.c.bf16 %v1479, %v1476
      %v1531 = vpack.c.bf16 %v1484, %v1484
      %v1532 = vpack.c.bf16 %v1492, %v1487
      %v1533 = vpack.c.bf16 %v1495, %v1495
      %v1534 = vpack.c.bf16 %v1503, %v1500
      %v1535 = vpack.c.bf16 %v1508, %v1508
      %v1536 = vpack.c.bf16 %v1516, %v1511
      %v1537 = vpack.c.bf16 %v1519, %v1519
      %1540 = vrot.lane.b32.xlu0 %v1522, 96
      %v1541 = vpop.permute.xlu0 %1540
      %1542 = vrot.lane.b32.xlu0 %v1523, 96
      %v1543 = vpop.permute.xlu0 %1542
      %v1545 = vsel %vm900, %v1522, 0
      %v1548 = vsel %vm900, %v1523, 0
      %v1551 = vsel %vm900, %v1541, 0
      %v1554 = vsel %vm900, %v1543, 0
      %1556 = vmatprep.subr.bf16.mxu0 0
      %1557 = vmatpush1.bf16.xpose.msra.mxu0 %v1551
      %1558 = vmatprep.subr.bf16.mxu0 0
      %1559 = vmatpush1.bf16.xpose.msra.mxu0 %v1554
      %1560 = vmatprep.subr.bf16.mxu0 0
      %1561 = vmatpush1.bf16.xpose.msra.mxu0 0
      %1562 = vmatprep.subr.bf16.mxu0 0
      %1563 = vmatpush1.bf16.xpose.msra.mxu0 0
      %1564 = vmatprep.subr.bf16.mxu0 0
      %1565 = vmatpush1.bf16.xpose.msra.mxu0 0
      %1566 = vmatprep.subr.bf16.mxu0 0
      %1567 = vmatpush1.bf16.xpose.msra.mxu0 0
      %1568 = vmatprep.subr.bf16.mxu0 0
      %1569 = vmatpush1.bf16.xpose.msra.mxu0 0
      %1570 = vmatprep.subr.bf16.mxu0 0
      %1571 = vmatpush1.bf16.xpose.msra.mxu0 0
      %1572 = vmatprep.subr.bf16.mxu0 0
      %1573 = vmatpush1.bf16.xpose.msra.mxu0 0
      %1574 = vmatprep.subr.bf16.mxu0 0
      %1575 = vmatpush1.bf16.xpose.msra.mxu0 0
      %1576 = vmatprep.subr.bf16.mxu0 0
      %1577 = vmatpush1.bf16.xpose.msra.mxu0 0
      %1578 = vmatprep.subr.bf16.mxu0 0
      %1579 = vmatpush1.bf16.xpose.msra.mxu0 0
      %1580 = vmatprep.subr.bf16.mxu0 0
      %1581 = vmatpush1.bf16.xpose.msra.mxu0 0
      %1582 = vmatprep.subr.bf16.mxu0 0
      %1583 = vmatpush1.bf16.xpose.msra.mxu0 0
      %1584 = vmatprep.subr.bf16.mxu0 0
      %1585 = vmatpush1.bf16.xpose.msra.mxu0 0
      %1586 = vmatprep.subr.bf16.mxu0 0
      %1587 = vmatpush1.bf16.xpose.msra.mxu0 0
      %1588 = vmatprep.mubr.bf16.mxu0 0
      %1589 = vmatmul.mubr.bf16.gmra.mrb[0].mxu0 %v1545
      %v1590 = vpop.f32.mrb[0].mxu0
      %v1591 = vadd.f32 0.0, %v1590
      %v1592 = vpop.f32.mrb[0].mxu0
      %v1593 = vpop.f32.mrb[0].mxu0
      %v1594 = vadd.f32 0.0, %v1593
      %v1595 = vpop.f32.mrb[0].mxu0
      %1596 = vmatprep.mubr.bf16.mxu0 0
      %1597 = vmatmul.mubr.bf16.gmra.mrb[0].mxu0 %v1548
      %v1598 = vpop.f32.mrb[0].mxu0
      %v1599 = vadd.f32 0.0, %v1598
      %v1600 = vpop.f32.mrb[0].mxu0
      %v1601 = vpop.f32.mrb[0].mxu0
      %v1602 = vpop.f32.mrb[0].mxu0
      %1603 = vdwg.mxu0
      %1606 = vrot.lane.b32.xlu0 %v1524, 96
      %v1607 = vpop.permute.xlu0 %1606
      %1608 = vrot.lane.b32.xlu0 %v1525, 96
      %v1609 = vpop.permute.xlu0 %1608
      %v1611 = vsel %vm900, %v1524, 0
      %v1614 = vsel %vm900, %v1525, 0
      %v1617 = vsel %vm900, %v1607, 0
      %v1620 = vsel %vm900, %v1609, 0
      %1622 = vmatprep.subr.bf16.mxu0 0
      %1623 = vmatpush1.bf16.xpose.msra.mxu0 %v1617
      %1624 = vmatprep.subr.bf16.mxu0 0
      %1625 = vmatpush1.bf16.xpose.msra.mxu0 %v1620
      %1626 = vmatprep.subr.bf16.mxu0 0
      %1627 = vmatpush1.bf16.xpose.msra.mxu0 0
      %1628 = vmatprep.subr.bf16.mxu0 0
      %1629 = vmatpush1.bf16.xpose.msra.mxu0 0
      %1630 = vmatprep.subr.bf16.mxu0 0
      %1631 = vmatpush1.bf16.xpose.msra.mxu0 0
      %1632 = vmatprep.subr.bf16.mxu0 0
      %1633 = vmatpush1.bf16.xpose.msra.mxu0 0
      %1634 = vmatprep.subr.bf16.mxu0 0
      %1635 = vmatpush1.bf16.xpose.msra.mxu0 0
      %1636 = vmatprep.subr.bf16.mxu0 0
      %1637 = vmatpush1.bf16.xpose.msra.mxu0 0
      %1638 = vmatprep.subr.bf16.mxu0 0
      %1639 = vmatpush1.bf16.xpose.msra.mxu0 0
      %1640 = vmatprep.subr.bf16.mxu0 0
      %1641 = vmatpush1.bf16.xpose.msra.mxu0 0
      %1642 = vmatprep.subr.bf16.mxu0 0
      %1643 = vmatpush1.bf16.xpose.msra.mxu0 0
      %1644 = vmatprep.subr.bf16.mxu0 0
      %1645 = vmatpush1.bf16.xpose.msra.mxu0 0
      %1646 = vmatprep.subr.bf16.mxu0 0
      %1647 = vmatpush1.bf16.xpose.msra.mxu0 0
      %1648 = vmatprep.subr.bf16.mxu0 0
      %1649 = vmatpush1.bf16.xpose.msra.mxu0 0
      %1650 = vmatprep.subr.bf16.mxu0 0
      %1651 = vmatpush1.bf16.xpose.msra.mxu0 0
      %1652 = vmatprep.subr.bf16.mxu0 0
      %1653 = vmatpush1.bf16.xpose.msra.mxu0 0
      %1654 = vmatprep.mubr.bf16.mxu0 0
      %1655 = vmatmul.mubr.bf16.gmra.mrb[0].mxu0 %v1611
      %v1656 = vpop.f32.mrb[0].mxu0
      %v1657 = vadd.f32 0.0, %v1656
      %v1658 = vpop.f32.mrb[0].mxu0
      %v1659 = vpop.f32.mrb[0].mxu0
      %v1660 = vadd.f32 0.0, %v1659
      %v1661 = vpop.f32.mrb[0].mxu0
      %1662 = vmatprep.mubr.bf16.mxu0 0
      %1663 = vmatmul.mubr.bf16.gmra.mrb[0].mxu0 %v1614
      %v1664 = vpop.f32.mrb[0].mxu0
      %v1665 = vadd.f32 0.0, %v1664
      %v1666 = vpop.f32.mrb[0].mxu0
      %v1667 = vpop.f32.mrb[0].mxu0
      %v1668 = vpop.f32.mrb[0].mxu0
      %1669 = vdwg.mxu0
      %1672 = vrot.lane.b32.xlu0 %v1526, 96
      %v1673 = vpop.permute.xlu0 %1672
      %1674 = vrot.lane.b32.xlu0 %v1527, 96
      %v1675 = vpop.permute.xlu0 %1674
      %v1677 = vsel %vm900, %v1526, 0
      %v1680 = vsel %vm900, %v1527, 0
      %v1683 = vsel %vm900, %v1673, 0
      %v1686 = vsel %vm900, %v1675, 0
      %1688 = vmatprep.subr.bf16.mxu0 0
      %1689 = vmatpush1.bf16.xpose.msra.mxu0 %v1683
      %1690 = vmatprep.subr.bf16.mxu0 0
      %1691 = vmatpush1.bf16.xpose.msra.mxu0 %v1686
      %1692 = vmatprep.subr.bf16.mxu0 0
      %1693 = vmatpush1.bf16.xpose.msra.mxu0 0
      %1694 = vmatprep.subr.bf16.mxu0 0
      %1695 = vmatpush1.bf16.xpose.msra.mxu0 0
      %1696 = vmatprep.subr.bf16.mxu0 0
      %1697 = vmatpush1.bf16.xpose.msra.mxu0 0
      %1698 = vmatprep.subr.bf16.mxu0 0
      %1699 = vmatpush1.bf16.xpose.msra.mxu0 0
      %1700 = vmatprep.subr.bf16.mxu0 0
      %1701 = vmatpush1.bf16.xpose.msra.mxu0 0
      %1702 = vmatprep.subr.bf16.mxu0 0
      %1703 = vmatpush1.bf16.xpose.msra.mxu0 0
      %1704 = vmatprep.subr.bf16.mxu0 0
      %1705 = vmatpush1.bf16.xpose.msra.mxu0 0
      %1706 = vmatprep.subr.bf16.mxu0 0
      %1707 = vmatpush1.bf16.xpose.msra.mxu0 0
      %1708 = vmatprep.subr.bf16.mxu0 0
      %1709 = vmatpush1.bf16.xpose.msra.mxu0 0
      %1710 = vmatprep.subr.bf16.mxu0 0
      %1711 = vmatpush1.bf16.xpose.msra.mxu0 0
      %1712 = vmatprep.subr.bf16.mxu0 0
      %1713 = vmatpush1.bf16.xpose.msra.mxu0 0
      %1714 = vmatprep.subr.bf16.mxu0 0
      %1715 = vmatpush1.bf16.xpose.msra.mxu0 0
      %1716 = vmatprep.subr.bf16.mxu0 0
      %1717 = vmatpush1.bf16.xpose.msra.mxu0 0
      %1718 = vmatprep.subr.bf16.mxu0 0
      %1719 = vmatpush1.bf16.xpose.msra.mxu0 0
      %1720 = vmatprep.mubr.bf16.mxu0 0
      %1721 = vmatmul.mubr.bf16.gmra.mrb[0].mxu0 %v1677
      %v1722 = vpop.f32.mrb[0].mxu0
      %v1723 = vadd.f32 0.0, %v1722
      %v1724 = vpop.f32.mrb[0].mxu0
      %v1725 = vpop.f32.mrb[0].mxu0
      %v1726 = vadd.f32 0.0, %v1725
      %v1727 = vpop.f32.mrb[0].mxu0
      %1728 = vmatprep.mubr.bf16.mxu0 0
      %1729 = vmatmul.mubr.bf16.gmra.mrb[0].mxu0 %v1680
      %v1730 = vpop.f32.mrb[0].mxu0
      %v1731 = vadd.f32 0.0, %v1730
      %v1732 = vpop.f32.mrb[0].mxu0
      %v1733 = vpop.f32.mrb[0].mxu0
      %v1734 = vpop.f32.mrb[0].mxu0
      %1735 = vdwg.mxu0
      %1738 = vrot.lane.b32.xlu0 %v1528, 96
      %v1739 = vpop.permute.xlu0 %1738
      %1740 = vrot.lane.b32.xlu0 %v1529, 96
      %v1741 = vpop.permute.xlu0 %1740
      %v1743 = vsel %vm900, %v1528, 0
      %v1746 = vsel %vm900, %v1529, 0
      %v1749 = vsel %vm900, %v1739, 0
      %v1752 = vsel %vm900, %v1741, 0
      %1754 = vmatprep.subr.bf16.mxu0 0
      %1755 = vmatpush1.bf16.xpose.msra.mxu0 %v1749
      %1756 = vmatprep.subr.bf16.mxu0 0
      %1757 = vmatpush1.bf16.xpose.msra.mxu0 %v1752
      %1758 = vmatprep.subr.bf16.mxu0 0
      %1759 = vmatpush1.bf16.xpose.msra.mxu0 0
      %1760 = vmatprep.subr.bf16.mxu0 0
      %1761 = vmatpush1.bf16.xpose.msra.mxu0 0
      %1762 = vmatprep.subr.bf16.mxu0 0
      %1763 = vmatpush1.bf16.xpose.msra.mxu0 0
      %1764 = vmatprep.subr.bf16.mxu0 0
      %1765 = vmatpush1.bf16.xpose.msra.mxu0 0
      %1766 = vmatprep.subr.bf16.mxu0 0
      %1767 = vmatpush1.bf16.xpose.msra.mxu0 0
      %1768 = vmatprep.subr.bf16.mxu0 0
      %1769 = vmatpush1.bf16.xpose.msra.mxu0 0
      %1770 = vmatprep.subr.bf16.mxu0 0
      %1771 = vmatpush1.bf16.xpose.msra.mxu0 0
      %1772 = vmatprep.subr.bf16.mxu0 0
      %1773 = vmatpush1.bf16.xpose.msra.mxu0 0
      %1774 = vmatprep.subr.bf16.mxu0 0
      %1775 = vmatpush1.bf16.xpose.msra.mxu0 0
      %1776 = vmatprep.subr.bf16.mxu0 0
      %1777 = vmatpush1.bf16.xpose.msra.mxu0 0
      %1778 = vmatprep.subr.bf16.mxu0 0
      %1779 = vmatpush1.bf16.xpose.msra.mxu0 0
      %1780 = vmatprep.subr.bf16.mxu0 0
      %1781 = vmatpush1.bf16.xpose.msra.mxu0 0
      %1782 = vmatprep.subr.bf16.mxu0 0
      %1783 = vmatpush1.bf16.xpose.msra.mxu0 0
      %1784 = vmatprep.subr.bf16.mxu0 0
      %1785 = vmatpush1.bf16.xpose.msra.mxu0 0
      %1786 = vmatprep.mubr.bf16.mxu0 0
      %1787 = vmatmul.mubr.bf16.gmra.mrb[0].mxu0 %v1743
      %v1788 = vpop.f32.mrb[0].mxu0
      %v1789 = vadd.f32 0.0, %v1788
      %v1790 = vpop.f32.mrb[0].mxu0
      %v1791 = vpop.f32.mrb[0].mxu0
      %v1792 = vadd.f32 0.0, %v1791
      %v1793 = vpop.f32.mrb[0].mxu0
      %1794 = vmatprep.mubr.bf16.mxu0 0
      %1795 = vmatmul.mubr.bf16.gmra.mrb[0].mxu0 %v1746
      %v1796 = vpop.f32.mrb[0].mxu0
      %v1797 = vadd.f32 0.0, %v1796
      %v1798 = vpop.f32.mrb[0].mxu0
      %v1799 = vpop.f32.mrb[0].mxu0
      %v1800 = vpop.f32.mrb[0].mxu0
      %1801 = vdwg.mxu0
      %1804 = vrot.lane.b32.xlu0 %v1530, 96
      %v1805 = vpop.permute.xlu0 %1804
      %1806 = vrot.lane.b32.xlu0 %v1531, 96
      %v1807 = vpop.permute.xlu0 %1806
      %v1809 = vsel %vm900, %v1530, 0
      %v1812 = vsel %vm900, %v1531, 0
      %v1815 = vsel %vm900, %v1805, 0
      %v1818 = vsel %vm900, %v1807, 0
      %1820 = vmatprep.subr.bf16.mxu0 0
      %1821 = vmatpush1.bf16.xpose.msra.mxu0 %v1815
      %1822 = vmatprep.subr.bf16.mxu0 0
      %1823 = vmatpush1.bf16.xpose.msra.mxu0 %v1818
      %1824 = vmatprep.subr.bf16.mxu0 0
      %1825 = vmatpush1.bf16.xpose.msra.mxu0 0
      %1826 = vmatprep.subr.bf16.mxu0 0
      %1827 = vmatpush1.bf16.xpose.msra.mxu0 0
      %1828 = vmatprep.subr.bf16.mxu0 0
      %1829 = vmatpush1.bf16.xpose.msra.mxu0 0
      %1830 = vmatprep.subr.bf16.mxu0 0
      %1831 = vmatpush1.bf16.xpose.msra.mxu0 0
      %1832 = vmatprep.subr.bf16.mxu0 0
      %1833 = vmatpush1.bf16.xpose.msra.mxu0 0
      %1834 = vmatprep.subr.bf16.mxu0 0
      %1835 = vmatpush1.bf16.xpose.msra.mxu0 0
      %1836 = vmatprep.subr.bf16.mxu0 0
      %1837 = vmatpush1.bf16.xpose.msra.mxu0 0
      %1838 = vmatprep.subr.bf16.mxu0 0
      %1839 = vmatpush1.bf16.xpose.msra.mxu0 0
      %1840 = vmatprep.subr.bf16.mxu0 0
      %1841 = vmatpush1.bf16.xpose.msra.mxu0 0
      %1842 = vmatprep.subr.bf16.mxu0 0
      %1843 = vmatpush1.bf16.xpose.msra.mxu0 0
      %1844 = vmatprep.subr.bf16.mxu0 0
      %1845 = vmatpush1.bf16.xpose.msra.mxu0 0
      %1846 = vmatprep.subr.bf16.mxu0 0
      %1847 = vmatpush1.bf16.xpose.msra.mxu0 0
      %1848 = vmatprep.subr.bf16.mxu0 0
      %1849 = vmatpush1.bf16.xpose.msra.mxu0 0
      %1850 = vmatprep.subr.bf16.mxu0 0
      %1851 = vmatpush1.bf16.xpose.msra.mxu0 0
      %1852 = vmatprep.mubr.bf16.mxu0 0
      %1853 = vmatmul.mubr.bf16.gmra.mrb[0].mxu0 %v1809
      %v1854 = vpop.f32.mrb[0].mxu0
      %v1855 = vadd.f32 0.0, %v1854
      %v1856 = vpop.f32.mrb[0].mxu0
      %v1857 = vpop.f32.mrb[0].mxu0
      %v1858 = vadd.f32 0.0, %v1857
      %v1859 = vpop.f32.mrb[0].mxu0
      %1860 = vmatprep.mubr.bf16.mxu0 0
      %1861 = vmatmul.mubr.bf16.gmra.mrb[0].mxu0 %v1812
      %v1862 = vpop.f32.mrb[0].mxu0
      %v1863 = vadd.f32 0.0, %v1862
      %v1864 = vpop.f32.mrb[0].mxu0
      %v1865 = vpop.f32.mrb[0].mxu0
      %v1866 = vpop.f32.mrb[0].mxu0
      %1867 = vdwg.mxu0
      %1870 = vrot.lane.b32.xlu0 %v1532, 96
      %v1871 = vpop.permute.xlu0 %1870
      %1872 = vrot.lane.b32.xlu0 %v1533, 96
      %v1873 = vpop.permute.xlu0 %1872
      %v1875 = vsel %vm900, %v1532, 0
      %v1878 = vsel %vm900, %v1533, 0
      %v1881 = vsel %vm900, %v1871, 0
      %v1884 = vsel %vm900, %v1873, 0
      %1886 = vmatprep.subr.bf16.mxu0 0
      %1887 = vmatpush1.bf16.xpose.msra.mxu0 %v1881
      %1888 = vmatprep.subr.bf16.mxu0 0
      %1889 = vmatpush1.bf16.xpose.msra.mxu0 %v1884
      %1890 = vmatprep.subr.bf16.mxu0 0
      %1891 = vmatpush1.bf16.xpose.msra.mxu0 0
      %1892 = vmatprep.subr.bf16.mxu0 0
      %1893 = vmatpush1.bf16.xpose.msra.mxu0 0
      %1894 = vmatprep.subr.bf16.mxu0 0
      %1895 = vmatpush1.bf16.xpose.msra.mxu0 0
      %1896 = vmatprep.subr.bf16.mxu0 0
      %1897 = vmatpush1.bf16.xpose.msra.mxu0 0
      %1898 = vmatprep.subr.bf16.mxu0 0
      %1899 = vmatpush1.bf16.xpose.msra.mxu0 0
      %1900 = vmatprep.subr.bf16.mxu0 0
      %1901 = vmatpush1.bf16.xpose.msra.mxu0 0
      %1902 = vmatprep.subr.bf16.mxu0 0
      %1903 = vmatpush1.bf16.xpose.msra.mxu0 0
      %1904 = vmatprep.subr.bf16.mxu0 0
      %1905 = vmatpush1.bf16.xpose.msra.mxu0 0
      %1906 = vmatprep.subr.bf16.mxu0 0
      %1907 = vmatpush1.bf16.xpose.msra.mxu0 0
      %1908 = vmatprep.subr.bf16.mxu0 0
      %1909 = vmatpush1.bf16.xpose.msra.mxu0 0
      %1910 = vmatprep.subr.bf16.mxu0 0
      %1911 = vmatpush1.bf16.xpose.msra.mxu0 0
      %1912 = vmatprep.subr.bf16.mxu0 0
      %1913 = vmatpush1.bf16.xpose.msra.mxu0 0
      %1914 = vmatprep.subr.bf16.mxu0 0
      %1915 = vmatpush1.bf16.xpose.msra.mxu0 0
      %1916 = vmatprep.subr.bf16.mxu0 0
      %1917 = vmatpush1.bf16.xpose.msra.mxu0 0
      %1918 = vmatprep.mubr.bf16.mxu0 0
      %1919 = vmatmul.mubr.bf16.gmra.mrb[0].mxu0 %v1875
      %v1920 = vpop.f32.mrb[0].mxu0
      %v1921 = vadd.f32 0.0, %v1920
      %v1922 = vpop.f32.mrb[0].mxu0
      %v1923 = vpop.f32.mrb[0].mxu0
      %v1924 = vadd.f32 0.0, %v1923
      %v1925 = vpop.f32.mrb[0].mxu0
      %1926 = vmatprep.mubr.bf16.mxu0 0
      %1927 = vmatmul.mubr.bf16.gmra.mrb[0].mxu0 %v1878
      %v1928 = vpop.f32.mrb[0].mxu0
      %v1929 = vadd.f32 0.0, %v1928
      %v1930 = vpop.f32.mrb[0].mxu0
      %v1931 = vpop.f32.mrb[0].mxu0
      %v1932 = vpop.f32.mrb[0].mxu0
      %1933 = vdwg.mxu0
      %1936 = vrot.lane.b32.xlu0 %v1534, 96
      %v1937 = vpop.permute.xlu0 %1936
      %1938 = vrot.lane.b32.xlu0 %v1535, 96
      %v1939 = vpop.permute.xlu0 %1938
      %v1941 = vsel %vm900, %v1534, 0
      %v1944 = vsel %vm900, %v1535, 0
      %v1947 = vsel %vm900, %v1937, 0
      %v1950 = vsel %vm900, %v1939, 0
      %1952 = vmatprep.subr.bf16.mxu0 0
      %1953 = vmatpush1.bf16.xpose.msra.mxu0 %v1947
      %1954 = vmatprep.subr.bf16.mxu0 0
      %1955 = vmatpush1.bf16.xpose.msra.mxu0 %v1950
      %1956 = vmatprep.subr.bf16.mxu0 0
      %1957 = vmatpush1.bf16.xpose.msra.mxu0 0
      %1958 = vmatprep.subr.bf16.mxu0 0
      %1959 = vmatpush1.bf16.xpose.msra.mxu0 0
      %1960 = vmatprep.subr.bf16.mxu0 0
      %1961 = vmatpush1.bf16.xpose.msra.mxu0 0
      %1962 = vmatprep.subr.bf16.mxu0 0
      %1963 = vmatpush1.bf16.xpose.msra.mxu0 0
      %1964 = vmatprep.subr.bf16.mxu0 0
      %1965 = vmatpush1.bf16.xpose.msra.mxu0 0
      %1966 = vmatprep.subr.bf16.mxu0 0
      %1967 = vmatpush1.bf16.xpose.msra.mxu0 0
      %1968 = vmatprep.subr.bf16.mxu0 0
      %1969 = vmatpush1.bf16.xpose.msra.mxu0 0
      %1970 = vmatprep.subr.bf16.mxu0 0
      %1971 = vmatpush1.bf16.xpose.msra.mxu0 0
      %1972 = vmatprep.subr.bf16.mxu0 0
      %1973 = vmatpush1.bf16.xpose.msra.mxu0 0
      %1974 = vmatprep.subr.bf16.mxu0 0
      %1975 = vmatpush1.bf16.xpose.msra.mxu0 0
      %1976 = vmatprep.subr.bf16.mxu0 0
      %1977 = vmatpush1.bf16.xpose.msra.mxu0 0
      %1978 = vmatprep.subr.bf16.mxu0 0
      %1979 = vmatpush1.bf16.xpose.msra.mxu0 0
      %1980 = vmatprep.subr.bf16.mxu0 0
      %1981 = vmatpush1.bf16.xpose.msra.mxu0 0
      %1982 = vmatprep.subr.bf16.mxu0 0
      %1983 = vmatpush1.bf16.xpose.msra.mxu0 0
      %1984 = vmatprep.mubr.bf16.mxu0 0
      %1985 = vmatmul.mubr.bf16.gmra.mrb[0].mxu0 %v1941
      %v1986 = vpop.f32.mrb[0].mxu0
      %v1987 = vadd.f32 0.0, %v1986
      %v1988 = vpop.f32.mrb[0].mxu0
      %v1989 = vpop.f32.mrb[0].mxu0
      %v1990 = vadd.f32 0.0, %v1989
      %v1991 = vpop.f32.mrb[0].mxu0
      %1992 = vmatprep.mubr.bf16.mxu0 0
      %1993 = vmatmul.mubr.bf16.gmra.mrb[0].mxu0 %v1944
      %v1994 = vpop.f32.mrb[0].mxu0
      %v1995 = vadd.f32 0.0, %v1994
      %v1996 = vpop.f32.mrb[0].mxu0
      %v1997 = vpop.f32.mrb[0].mxu0
      %v1998 = vpop.f32.mrb[0].mxu0
      %1999 = vdwg.mxu0
      %2002 = vrot.lane.b32.xlu0 %v1536, 96
      %v2003 = vpop.permute.xlu0 %2002
      %2004 = vrot.lane.b32.xlu0 %v1537, 96
      %v2005 = vpop.permute.xlu0 %2004
      %v2007 = vsel %vm900, %v1536, 0
      %v2010 = vsel %vm900, %v1537, 0
      %v2013 = vsel %vm900, %v2003, 0
      %v2016 = vsel %vm900, %v2005, 0
      %2018 = vmatprep.subr.bf16.mxu0 0
      %2019 = vmatpush1.bf16.xpose.msra.mxu0 %v2013
      %2020 = vmatprep.subr.bf16.mxu0 0
      %2021 = vmatpush1.bf16.xpose.msra.mxu0 %v2016
      %2022 = vmatprep.subr.bf16.mxu0 0
      %2023 = vmatpush1.bf16.xpose.msra.mxu0 0
      %2024 = vmatprep.subr.bf16.mxu0 0
      %2025 = vmatpush1.bf16.xpose.msra.mxu0 0
      %2026 = vmatprep.subr.bf16.mxu0 0
      %2027 = vmatpush1.bf16.xpose.msra.mxu0 0
      %2028 = vmatprep.subr.bf16.mxu0 0
      %2029 = vmatpush1.bf16.xpose.msra.mxu0 0
      %2030 = vmatprep.subr.bf16.mxu0 0
      %2031 = vmatpush1.bf16.xpose.msra.mxu0 0
      %2032 = vmatprep.subr.bf16.mxu0 0
      %2033 = vmatpush1.bf16.xpose.msra.mxu0 0
      %2034 = vmatprep.subr.bf16.mxu0 0
      %2035 = vmatpush1.bf16.xpose.msra.mxu0 0
      %2036 = vmatprep.subr.bf16.mxu0 0
      %2037 = vmatpush1.bf16.xpose.msra.mxu0 0
      %2038 = vmatprep.subr.bf16.mxu0 0
      %2039 = vmatpush1.bf16.xpose.msra.mxu0 0
      %2040 = vmatprep.subr.bf16.mxu0 0
      %2041 = vmatpush1.bf16.xpose.msra.mxu0 0
      %2042 = vmatprep.subr.bf16.mxu0 0
      %2043 = vmatpush1.bf16.xpose.msra.mxu0 0
      %2044 = vmatprep.subr.bf16.mxu0 0
      %2045 = vmatpush1.bf16.xpose.msra.mxu0 0
      %2046 = vmatprep.subr.bf16.mxu0 0
      %2047 = vmatpush1.bf16.xpose.msra.mxu0 0
      %2048 = vmatprep.subr.bf16.mxu0 0
      %2049 = vmatpush1.bf16.xpose.msra.mxu0 0
      %2050 = vmatprep.mubr.bf16.mxu0 0
      %2051 = vmatmul.mubr.bf16.gmra.mrb[0].mxu0 %v2007
      %v2052 = vpop.f32.mrb[0].mxu0
      %v2053 = vadd.f32 0.0, %v2052
      %v2054 = vpop.f32.mrb[0].mxu0
      %v2055 = vpop.f32.mrb[0].mxu0
      %v2056 = vadd.f32 0.0, %v2055
      %v2057 = vpop.f32.mrb[0].mxu0
      %2058 = vmatprep.mubr.bf16.mxu0 0
      %2059 = vmatmul.mubr.bf16.gmra.mrb[0].mxu0 %v2010
      %v2060 = vpop.f32.mrb[0].mxu0
      %v2061 = vadd.f32 0.0, %v2060
      %v2062 = vpop.f32.mrb[0].mxu0
      %v2063 = vpop.f32.mrb[0].mxu0
      %v2064 = vpop.f32.mrb[0].mxu0
      %2065 = vdwg.mxu0
      %v2066 = vmul.f32 %v1591, 0.17677669
      %v2067 = vmul.f32 %v1594, 0.17677669
      %v2068 = vmul.f32 %v1599, 0.17677669
      %v2069 = vmul.f32 %v1657, 0.17677669
      %v2070 = vmul.f32 %v1660, 0.17677669
      %v2071 = vmul.f32 %v1665, 0.17677669
      %v2072 = vmul.f32 %v1723, 0.17677669
      %v2073 = vmul.f32 %v1726, 0.17677669
      %v2074 = vmul.f32 %v1731, 0.17677669
      %v2075 = vmul.f32 %v1789, 0.17677669
      %v2076 = vmul.f32 %v1792, 0.17677669
      %v2077 = vmul.f32 %v1797, 0.17677669
      %v2078 = vmul.f32 %v1855, 0.17677669
      %v2079 = vmul.f32 %v1858, 0.17677669
      %v2080 = vmul.f32 %v1863, 0.17677669
      %v2081 = vmul.f32 %v1921, 0.17677669
      %v2082 = vmul.f32 %v1924, 0.17677669
      %v2083 = vmul.f32 %v1929, 0.17677669
      %v2084 = vmul.f32 %v1987, 0.17677669
      %v2085 = vmul.f32 %v1990, 0.17677669
      %v2086 = vmul.f32 %v1995, 0.17677669
      %v2087 = vmul.f32 %v2053, 0.17677669
      %v2088 = vmul.f32 %v2056, 0.17677669
      %v2089 = vmul.f32 %v2061, 0.17677669
      %vm2090 = vcmask 195584
      %v2091 = vsel %vm2090, %v2066, -inf
      %2092 = vmax.xlane.f32.xlu0 %v2091
      %v2093 = vpop.xlane.xlu0 %2092
      %v2094 = vsel %vm2090, %v2067, -inf
      %2095 = vmax.xlane.f32.xlu0 %v2094
      %v2096 = vpop.xlane.xlu0 %2095
      %v2097 = vsel %vm2090, %v2068, -inf
      %2098 = vmax.xlane.f32.xlu0 %v2097
      %v2099 = vpop.xlane.xlu0 %2098
      %v2100 = vsel %vm2090, %v2069, -inf
      %2101 = vmax.xlane.f32.xlu0 %v2100
      %v2102 = vpop.xlane.xlu0 %2101
      %v2103 = vsel %vm2090, %v2070, -inf
      %2104 = vmax.xlane.f32.xlu0 %v2103
      %v2105 = vpop.xlane.xlu0 %2104
      %v2106 = vsel %vm2090, %v2071, -inf
      %2107 = vmax.xlane.f32.xlu0 %v2106
      %v2108 = vpop.xlane.xlu0 %2107
      %v2109 = vsel %vm2090, %v2072, -inf
      %2110 = vmax.xlane.f32.xlu0 %v2109
      %v2111 = vpop.xlane.xlu0 %2110
      %v2112 = vsel %vm2090, %v2073, -inf
      %2113 = vmax.xlane.f32.xlu0 %v2112
      %v2114 = vpop.xlane.xlu0 %2113
      %v2115 = vsel %vm2090, %v2074, -inf
      %2116 = vmax.xlane.f32.xlu0 %v2115
      %v2117 = vpop.xlane.xlu0 %2116
      %v2118 = vsel %vm2090, %v2075, -inf
      %2119 = vmax.xlane.f32.xlu0 %v2118
      %v2120 = vpop.xlane.xlu0 %2119
      %v2121 = vsel %vm2090, %v2076, -inf
      %2122 = vmax.xlane.f32.xlu0 %v2121
      %v2123 = vpop.xlane.xlu0 %2122
      %v2124 = vsel %vm2090, %v2077, -inf
      %2125 = vmax.xlane.f32.xlu0 %v2124
      %v2126 = vpop.xlane.xlu0 %2125
      %v2127 = vsel %vm2090, %v2078, -inf
      %2128 = vmax.xlane.f32.xlu0 %v2127
      %v2129 = vpop.xlane.xlu0 %2128
      %v2130 = vsel %vm2090, %v2079, -inf
      %2131 = vmax.xlane.f32.xlu0 %v2130
      %v2132 = vpop.xlane.xlu0 %2131
      %v2133 = vsel %vm2090, %v2080, -inf
      %2134 = vmax.xlane.f32.xlu0 %v2133
      %v2135 = vpop.xlane.xlu0 %2134
      %v2136 = vsel %vm2090, %v2081, -inf
      %2137 = vmax.xlane.f32.xlu0 %v2136
      %v2138 = vpop.xlane.xlu0 %2137
      %v2139 = vsel %vm2090, %v2082, -inf
      %2140 = vmax.xlane.f32.xlu0 %v2139
      %v2141 = vpop.xlane.xlu0 %2140
      %v2142 = vsel %vm2090, %v2083, -inf
      %2143 = vmax.xlane.f32.xlu0 %v2142
      %v2144 = vpop.xlane.xlu0 %2143
      %v2145 = vsel %vm2090, %v2084, -inf
      %2146 = vmax.xlane.f32.xlu0 %v2145
      %v2147 = vpop.xlane.xlu0 %2146
      %v2148 = vsel %vm2090, %v2085, -inf
      %2149 = vmax.xlane.f32.xlu0 %v2148
      %v2150 = vpop.xlane.xlu0 %2149
      %v2151 = vsel %vm2090, %v2086, -inf
      %2152 = vmax.xlane.f32.xlu0 %v2151
      %v2153 = vpop.xlane.xlu0 %2152
      %v2154 = vsel %vm2090, %v2087, -inf
      %2155 = vmax.xlane.f32.xlu0 %v2154
      %v2156 = vpop.xlane.xlu0 %2155
      %v2157 = vsel %vm2090, %v2088, -inf
      %2158 = vmax.xlane.f32.xlu0 %v2157
      %v2159 = vpop.xlane.xlu0 %2158
      %v2160 = vsel %vm2090, %v2089, -inf
      %2161 = vmax.xlane.f32.xlu0 %v2160
      %v2162 = vpop.xlane.xlu0 %2161
      %v2163 = vsub.f32 %v2066, %v2093
      %v2164 = vsub.f32 %v2067, %v2096
      %v2165 = vsub.f32 %v2068, %v2099
      %v2166 = vsub.f32 %v2069, %v2102
      %v2167 = vsub.f32 %v2070, %v2105
      %v2168 = vsub.f32 %v2071, %v2108
      %v2169 = vsub.f32 %v2072, %v2111
      %v2170 = vsub.f32 %v2073, %v2114
      %v2171 = vsub.f32 %v2074, %v2117
      %v2172 = vsub.f32 %v2075, %v2120
      %v2173 = vsub.f32 %v2076, %v2123
      %v2174 = vsub.f32 %v2077, %v2126
      %v2175 = vsub.f32 %v2078, %v2129
      %v2176 = vsub.f32 %v2079, %v2132
      %v2177 = vsub.f32 %v2080, %v2135
      %v2178 = vsub.f32 %v2081, %v2138
      %v2179 = vsub.f32 %v2082, %v2141
      %v2180 = vsub.f32 %v2083, %v2144
      %v2181 = vsub.f32 %v2084, %v2147
      %v2182 = vsub.f32 %v2085, %v2150
      %v2183 = vsub.f32 %v2086, %v2153
      %v2184 = vsub.f32 %v2087, %v2156
      %v2185 = vsub.f32 %v2088, %v2159
      %v2186 = vsub.f32 %v2089, %v2162
      %v2187 = vmul.f32 %v2163, 1.442695
      %v2188 = vpow.pop %v2187
      %v2189 = vmul.f32 %v2164, 1.442695
      %v2190 = vpow.pop %v2189
      %v2191 = vmul.f32 %v2165, 1.442695
      %v2192 = vpow.pop %v2191
      %v2193 = vmul.f32 %v2166, 1.442695
      %v2194 = vpow.pop %v2193
      %v2195 = vmul.f32 %v2167, 1.442695
      %v2196 = vpow.pop %v2195
      %v2197 = vmul.f32 %v2168, 1.442695
      %v2198 = vpow.pop %v2197
      %v2199 = vmul.f32 %v2169, 1.442695
      %v2200 = vpow.pop %v2199
      %v2201 = vmul.f32 %v2170, 1.442695
      %v2202 = vpow.pop %v2201
      %v2203 = vmul.f32 %v2171, 1.442695
      %v2204 = vpow.pop %v2203
      %v2205 = vmul.f32 %v2172, 1.442695
      %v2206 = vpow.pop %v2205
      %v2207 = vmul.f32 %v2173, 1.442695
      %v2208 = vpow.pop %v2207
      %v2209 = vmul.f32 %v2174, 1.442695
      %v2210 = vpow.pop %v2209
      %v2211 = vmul.f32 %v2175, 1.442695
      %v2212 = vpow.pop %v2211
      %v2213 = vmul.f32 %v2176, 1.442695
      %v2214 = vpow.pop %v2213
      %v2215 = vmul.f32 %v2177, 1.442695
      %v2216 = vpow.pop %v2215
      %v2217 = vmul.f32 %v2178, 1.442695
      %v2218 = vpow.pop %v2217
      %v2219 = vmul.f32 %v2179, 1.442695
      %v2220 = vpow.pop %v2219
      %v2221 = vmul.f32 %v2180, 1.442695
      %v2222 = vpow.pop %v2221
      %v2223 = vmul.f32 %v2181, 1.442695
      %v2224 = vpow.pop %v2223
      %v2225 = vmul.f32 %v2182, 1.442695
      %v2226 = vpow.pop %v2225
      %v2227 = vmul.f32 %v2183, 1.442695
      %v2228 = vpow.pop %v2227
      %v2229 = vmul.f32 %v2184, 1.442695
      %v2230 = vpow.pop %v2229
      %v2231 = vmul.f32 %v2185, 1.442695
      %v2232 = vpow.pop %v2231
      %v2233 = vmul.f32 %v2186, 1.442695
      %v2234 = vpow.pop %v2233
      %v2235 = vsel %vm2090, %v2188, 0.0
      %2236 = vadd.xlane.f32.xlu0 %v2235
      %v2237 = vpop.xlane.xlu0 %2236
      %v2238 = vsel %vm2090, %v2190, 0.0
      %2239 = vadd.xlane.f32.xlu0 %v2238
      %v2240 = vpop.xlane.xlu0 %2239
      %v2241 = vsel %vm2090, %v2192, 0.0
      %2242 = vadd.xlane.f32.xlu0 %v2241
      %v2243 = vpop.xlane.xlu0 %2242
      %v2244 = vsel %vm2090, %v2194, 0.0
      %2245 = vadd.xlane.f32.xlu0 %v2244
      %v2246 = vpop.xlane.xlu0 %2245
      %v2247 = vsel %vm2090, %v2196, 0.0
      %2248 = vadd.xlane.f32.xlu0 %v2247
      %v2249 = vpop.xlane.xlu0 %2248
      %v2250 = vsel %vm2090, %v2198, 0.0
      %2251 = vadd.xlane.f32.xlu0 %v2250
      %v2252 = vpop.xlane.xlu0 %2251
      %v2253 = vsel %vm2090, %v2200, 0.0
      %2254 = vadd.xlane.f32.xlu0 %v2253
      %v2255 = vpop.xlane.xlu0 %2254
      %v2256 = vsel %vm2090, %v2202, 0.0
      %2257 = vadd.xlane.f32.xlu0 %v2256
      %v2258 = vpop.xlane.xlu0 %2257
      %v2259 = vsel %vm2090, %v2204, 0.0
      %2260 = vadd.xlane.f32.xlu0 %v2259
      %v2261 = vpop.xlane.xlu0 %2260
      %v2262 = vsel %vm2090, %v2206, 0.0
      %2263 = vadd.xlane.f32.xlu0 %v2262
      %v2264 = vpop.xlane.xlu0 %2263
      %v2265 = vsel %vm2090, %v2208, 0.0
      %2266 = vadd.xlane.f32.xlu0 %v2265
      %v2267 = vpop.xlane.xlu0 %2266
      %v2268 = vsel %vm2090, %v2210, 0.0
      %2269 = vadd.xlane.f32.xlu0 %v2268
      %v2270 = vpop.xlane.xlu0 %2269
      %v2271 = vsel %vm2090, %v2212, 0.0
      %2272 = vadd.xlane.f32.xlu0 %v2271
      %v2273 = vpop.xlane.xlu0 %2272
      %v2274 = vsel %vm2090, %v2214, 0.0
      %2275 = vadd.xlane.f32.xlu0 %v2274
      %v2276 = vpop.xlane.xlu0 %2275
      %v2277 = vsel %vm2090, %v2216, 0.0
      %2278 = vadd.xlane.f32.xlu0 %v2277
      %v2279 = vpop.xlane.xlu0 %2278
      %v2280 = vsel %vm2090, %v2218, 0.0
      %2281 = vadd.xlane.f32.xlu0 %v2280
      %v2282 = vpop.xlane.xlu0 %2281
      %v2283 = vsel %vm2090, %v2220, 0.0
      %2284 = vadd.xlane.f32.xlu0 %v2283
      %v2285 = vpop.xlane.xlu0 %2284
      %v2286 = vsel %vm2090, %v2222, 0.0
      %2287 = vadd.xlane.f32.xlu0 %v2286
      %v2288 = vpop.xlane.xlu0 %2287
      %v2289 = vsel %vm2090, %v2224, 0.0
      %2290 = vadd.xlane.f32.xlu0 %v2289
      %v2291 = vpop.xlane.xlu0 %2290
      %v2292 = vsel %vm2090, %v2226, 0.0
      %2293 = vadd.xlane.f32.xlu0 %v2292
      %v2294 = vpop.xlane.xlu0 %2293
      %v2295 = vsel %vm2090, %v2228, 0.0
      %2296 = vadd.xlane.f32.xlu0 %v2295
      %v2297 = vpop.xlane.xlu0 %2296
      %v2298 = vsel %vm2090, %v2230, 0.0
      %2299 = vadd.xlane.f32.xlu0 %v2298
      %v2300 = vpop.xlane.xlu0 %2299
      %v2301 = vsel %vm2090, %v2232, 0.0
      %2302 = vadd.xlane.f32.xlu0 %v2301
      %v2303 = vpop.xlane.xlu0 %2302
      %v2304 = vsel %vm2090, %v2234, 0.0
      %2305 = vadd.xlane.f32.xlu0 %v2304
      %v2306 = vpop.xlane.xlu0 %2305
      %v2307 = vrcp.pop %v2237
      %v2308 = vrcp.pop %v2240
      %v2309 = vrcp.pop %v2243
      %v2310 = vrcp.pop %v2246
      %v2311 = vrcp.pop %v2249
      %v2312 = vrcp.pop %v2252
      %v2313 = vrcp.pop %v2255
      %v2314 = vrcp.pop %v2258
      %v2315 = vrcp.pop %v2261
      %v2316 = vrcp.pop %v2264
      %v2317 = vrcp.pop %v2267
      %v2318 = vrcp.pop %v2270
      %v2319 = vrcp.pop %v2273
      %v2320 = vrcp.pop %v2276
      %v2321 = vrcp.pop %v2279
      %v2322 = vrcp.pop %v2282
      %v2323 = vrcp.pop %v2285
      %v2324 = vrcp.pop %v2288
      %v2325 = vrcp.pop %v2291
      %v2326 = vrcp.pop %v2294
      %v2327 = vrcp.pop %v2297
      %v2328 = vrcp.pop %v2300
      %v2329 = vrcp.pop %v2303
      %v2330 = vrcp.pop %v2306
      %v2331 = vmul.f32 %v2188, %v2307
      %v2332 = vmul.f32 %v2190, %v2308
      %v2333 = vmul.f32 %v2192, %v2309
      %v2334 = vmul.f32 %v2194, %v2310
      %v2335 = vmul.f32 %v2196, %v2311
      %v2336 = vmul.f32 %v2198, %v2312
      %v2337 = vmul.f32 %v2200, %v2313
      %v2338 = vmul.f32 %v2202, %v2314
      %v2339 = vmul.f32 %v2204, %v2315
      %v2340 = vmul.f32 %v2206, %v2316
      %v2341 = vmul.f32 %v2208, %v2317
      %v2342 = vmul.f32 %v2210, %v2318
      %v2343 = vmul.f32 %v2212, %v2319
      %v2344 = vmul.f32 %v2214, %v2320
      %v2345 = vmul.f32 %v2216, %v2321
      %v2346 = vmul.f32 %v2218, %v2322
      %v2347 = vmul.f32 %v2220, %v2323
      %v2348 = vmul.f32 %v2222, %v2324
      %v2349 = vmul.f32 %v2224, %v2325
      %v2350 = vmul.f32 %v2226, %v2326
      %v2351 = vmul.f32 %v2228, %v2327
      %v2352 = vmul.f32 %v2230, %v2328
      %v2353 = vmul.f32 %v2232, %v2329
      %v2354 = vmul.f32 %v2234, %v2330
      %v2355 = vpack.c.bf16 %v2332, %v2331
      %v2356 = vpack.c.bf16 %v2333, %v2333
      %v2357 = vpack.c.bf16 %v2335, %v2334
      %v2358 = vpack.c.bf16 %v2336, %v2336
      %v2359 = vpack.c.bf16 %v2338, %v2337
      %v2360 = vpack.c.bf16 %v2339, %v2339
      %v2361 = vpack.c.bf16 %v2341, %v2340
      %v2362 = vpack.c.bf16 %v2342, %v2342
      %v2363 = vpack.c.bf16 %v2344, %v2343
      %v2364 = vpack.c.bf16 %v2345, %v2345
      %v2365 = vpack.c.bf16 %v2347, %v2346
      %v2366 = vpack.c.bf16 %v2348, %v2348
      %v2367 = vpack.c.bf16 %v2350, %v2349
      %v2368 = vpack.c.bf16 %v2351, %v2351
      %v2369 = vpack.c.bf16 %v2353, %v2352
      %v2370 = vpack.c.bf16 %v2354, %v2354
      %2371 = vrot.lane.b32.xlu0 %v1522, 64
      %v2372 = vpop.permute.xlu0 %2371
      %2373 = vrot.lane.b32.xlu0 %v1523, 64
      %v2374 = vpop.permute.xlu0 %2373
      %v2377 = vsel %vm2090, %v2355, 0
      %v2380 = vsel %vm2090, %v2356, 0
      %vm2382 = vcmask 1043456
      %v2384 = vsel %vm2382, %v2374, 0
      %2386 = vmatprep.subr.bf16.mxu0 0
      %2387 = vmatpush1.bf16.msra.mxu0 %v2372
      %2388 = vmatprep.subr.bf16.mxu0 0
      %2389 = vmatpush1.bf16.msra.mxu0 %v2384
      %2390 = vmatprep.subr.bf16.mxu0 0
      %2391 = vmatpush1.bf16.msra.mxu0 0
      %2392 = vmatprep.subr.bf16.mxu0 0
      %2393 = vmatpush1.bf16.msra.mxu0 0
      %2394 = vmatprep.subr.bf16.mxu0 0
      %2395 = vmatpush1.bf16.msra.mxu0 0
      %2396 = vmatprep.subr.bf16.mxu0 0
      %2397 = vmatpush1.bf16.msra.mxu0 0
      %2398 = vmatprep.subr.bf16.mxu0 0
      %2399 = vmatpush1.bf16.msra.mxu0 0
      %2400 = vmatprep.subr.bf16.mxu0 0
      %2401 = vmatpush1.bf16.msra.mxu0 0
      %2402 = vmatprep.subr.bf16.mxu0 0
      %2403 = vmatpush1.bf16.msra.mxu0 0
      %2404 = vmatprep.subr.bf16.mxu0 0
      %2405 = vmatpush1.bf16.msra.mxu0 0
      %2406 = vmatprep.subr.bf16.mxu0 0
      %2407 = vmatpush1.bf16.msra.mxu0 0
      %2408 = vmatprep.subr.bf16.mxu0 0
      %2409 = vmatpush1.bf16.msra.mxu0 0
      %2410 = vmatprep.subr.bf16.mxu0 0
      %2411 = vmatpush1.bf16.msra.mxu0 0
      %2412 = vmatprep.subr.bf16.mxu0 0
      %2413 = vmatpush1.bf16.msra.mxu0 0
      %2414 = vmatprep.subr.bf16.mxu0 0
      %2415 = vmatpush1.bf16.msra.mxu0 0
      %2416 = vmatprep.subr.bf16.mxu0 0
      %2417 = vmatpush1.bf16.msra.mxu0 0
      %2418 = vmatprep.mubr.bf16.mxu0 0
      %2419 = vmatmul.mubr.bf16.gmra.mrb[0].mxu0 %v2377
      %v2420 = vpop.f32.mrb[0].mxu0
      %v2421 = vadd.f32 0.0, %v2420
      %v2422 = vpop.f32.mrb[0].mxu0
      %v2423 = vpop.f32.mrb[0].mxu0
      %v2424 = vadd.f32 0.0, %v2423
      %v2425 = vpop.f32.mrb[0].mxu0
      %2426 = vmatprep.mubr.bf16.mxu0 0
      %2427 = vmatmul.mubr.bf16.gmra.mrb[0].mxu0 %v2380
      %v2428 = vpop.f32.mrb[0].mxu0
      %v2429 = vadd.f32 0.0, %v2428
      %v2430 = vpop.f32.mrb[0].mxu0
      %v2431 = vpop.f32.mrb[0].mxu0
      %v2432 = vpop.f32.mrb[0].mxu0
      %2433 = vdwg.mxu0
      %2434 = vrot.lane.b32.xlu0 %v1524, 64
      %v2435 = vpop.permute.xlu0 %2434
      %2436 = vrot.lane.b32.xlu0 %v1525, 64
      %v2437 = vpop.permute.xlu0 %2436
      %v2440 = vsel %vm2090, %v2357, 0
      %v2443 = vsel %vm2090, %v2358, 0
      %v2446 = vsel %vm2382, %v2437, 0
      %2448 = vmatprep.subr.bf16.mxu0 0
      %2449 = vmatpush1.bf16.msra.mxu0 %v2435
      %2450 = vmatprep.subr.bf16.mxu0 0
      %2451 = vmatpush1.bf16.msra.mxu0 %v2446
      %2452 = vmatprep.subr.bf16.mxu0 0
      %2453 = vmatpush1.bf16.msra.mxu0 0
      %2454 = vmatprep.subr.bf16.mxu0 0
      %2455 = vmatpush1.bf16.msra.mxu0 0
      %2456 = vmatprep.subr.bf16.mxu0 0
      %2457 = vmatpush1.bf16.msra.mxu0 0
      %2458 = vmatprep.subr.bf16.mxu0 0
      %2459 = vmatpush1.bf16.msra.mxu0 0
      %2460 = vmatprep.subr.bf16.mxu0 0
      %2461 = vmatpush1.bf16.msra.mxu0 0
      %2462 = vmatprep.subr.bf16.mxu0 0
      %2463 = vmatpush1.bf16.msra.mxu0 0
      %2464 = vmatprep.subr.bf16.mxu0 0
      %2465 = vmatpush1.bf16.msra.mxu0 0
      %2466 = vmatprep.subr.bf16.mxu0 0
      %2467 = vmatpush1.bf16.msra.mxu0 0
      %2468 = vmatprep.subr.bf16.mxu0 0
      %2469 = vmatpush1.bf16.msra.mxu0 0
      %2470 = vmatprep.subr.bf16.mxu0 0
      %2471 = vmatpush1.bf16.msra.mxu0 0
      %2472 = vmatprep.subr.bf16.mxu0 0
      %2473 = vmatpush1.bf16.msra.mxu0 0
      %2474 = vmatprep.subr.bf16.mxu0 0
      %2475 = vmatpush1.bf16.msra.mxu0 0
      %2476 = vmatprep.subr.bf16.mxu0 0
      %2477 = vmatpush1.bf16.msra.mxu0 0
      %2478 = vmatprep.subr.bf16.mxu0 0
      %2479 = vmatpush1.bf16.msra.mxu0 0
      %2480 = vmatprep.mubr.bf16.mxu0 0
      %2481 = vmatmul.mubr.bf16.gmra.mrb[0].mxu0 %v2440
      %v2482 = vpop.f32.mrb[0].mxu0
      %v2483 = vadd.f32 0.0, %v2482
      %v2484 = vpop.f32.mrb[0].mxu0
      %v2485 = vpop.f32.mrb[0].mxu0
      %v2486 = vadd.f32 0.0, %v2485
      %v2487 = vpop.f32.mrb[0].mxu0
      %2488 = vmatprep.mubr.bf16.mxu0 0
      %2489 = vmatmul.mubr.bf16.gmra.mrb[0].mxu0 %v2443
      %v2490 = vpop.f32.mrb[0].mxu0
      %v2491 = vadd.f32 0.0, %v2490
      %v2492 = vpop.f32.mrb[0].mxu0
      %v2493 = vpop.f32.mrb[0].mxu0
      %v2494 = vpop.f32.mrb[0].mxu0
      %2495 = vdwg.mxu0
      %2496 = vrot.lane.b32.xlu0 %v1526, 64
      %v2497 = vpop.permute.xlu0 %2496
      %2498 = vrot.lane.b32.xlu0 %v1527, 64
      %v2499 = vpop.permute.xlu0 %2498
      %v2502 = vsel %vm2090, %v2359, 0
      %v2505 = vsel %vm2090, %v2360, 0
      %v2508 = vsel %vm2382, %v2499, 0
      %2510 = vmatprep.subr.bf16.mxu0 0
      %2511 = vmatpush1.bf16.msra.mxu0 %v2497
      %2512 = vmatprep.subr.bf16.mxu0 0
      %2513 = vmatpush1.bf16.msra.mxu0 %v2508
      %2514 = vmatprep.subr.bf16.mxu0 0
      %2515 = vmatpush1.bf16.msra.mxu0 0
      %2516 = vmatprep.subr.bf16.mxu0 0
      %2517 = vmatpush1.bf16.msra.mxu0 0
      %2518 = vmatprep.subr.bf16.mxu0 0
      %2519 = vmatpush1.bf16.msra.mxu0 0
      %2520 = vmatprep.subr.bf16.mxu0 0
      %2521 = vmatpush1.bf16.msra.mxu0 0
      %2522 = vmatprep.subr.bf16.mxu0 0
      %2523 = vmatpush1.bf16.msra.mxu0 0
      %2524 = vmatprep.subr.bf16.mxu0 0
      %2525 = vmatpush1.bf16.msra.mxu0 0
      %2526 = vmatprep.subr.bf16.mxu0 0
      %2527 = vmatpush1.bf16.msra.mxu0 0
      %2528 = vmatprep.subr.bf16.mxu0 0
      %2529 = vmatpush1.bf16.msra.mxu0 0
      %2530 = vmatprep.subr.bf16.mxu0 0
      %2531 = vmatpush1.bf16.msra.mxu0 0
      %2532 = vmatprep.subr.bf16.mxu0 0
      %2533 = vmatpush1.bf16.msra.mxu0 0
      %2534 = vmatprep.subr.bf16.mxu0 0
      %2535 = vmatpush1.bf16.msra.mxu0 0
      %2536 = vmatprep.subr.bf16.mxu0 0
      %2537 = vmatpush1.bf16.msra.mxu0 0
      %2538 = vmatprep.subr.bf16.mxu0 0
      %2539 = vmatpush1.bf16.msra.mxu0 0
      %2540 = vmatprep.subr.bf16.mxu0 0
      %2541 = vmatpush1.bf16.msra.mxu0 0
      %2542 = vmatprep.mubr.bf16.mxu0 0
      %2543 = vmatmul.mubr.bf16.gmra.mrb[0].mxu0 %v2502
      %v2544 = vpop.f32.mrb[0].mxu0
      %v2545 = vadd.f32 0.0, %v2544
      %v2546 = vpop.f32.mrb[0].mxu0
      %v2547 = vpop.f32.mrb[0].mxu0
      %v2548 = vadd.f32 0.0, %v2547
      %v2549 = vpop.f32.mrb[0].mxu0
      %2550 = vmatprep.mubr.bf16.mxu0 0
      %2551 = vmatmul.mubr.bf16.gmra.mrb[0].mxu0 %v2505
      %v2552 = vpop.f32.mrb[0].mxu0
      %v2553 = vadd.f32 0.0, %v2552
      %v2554 = vpop.f32.mrb[0].mxu0
      %v2555 = vpop.f32.mrb[0].mxu0
      %v2556 = vpop.f32.mrb[0].mxu0
      %2557 = vdwg.mxu0
      %2558 = vrot.lane.b32.xlu0 %v1528, 64
      %v2559 = vpop.permute.xlu0 %2558
      %2560 = vrot.lane.b32.xlu0 %v1529, 64
      %v2561 = vpop.permute.xlu0 %2560
      %v2564 = vsel %vm2090, %v2361, 0
      %v2567 = vsel %vm2090, %v2362, 0
      %v2570 = vsel %vm2382, %v2561, 0
      %2572 = vmatprep.subr.bf16.mxu0 0
      %2573 = vmatpush1.bf16.msra.mxu0 %v2559
      %2574 = vmatprep.subr.bf16.mxu0 0
      %2575 = vmatpush1.bf16.msra.mxu0 %v2570
      %2576 = vmatprep.subr.bf16.mxu0 0
      %2577 = vmatpush1.bf16.msra.mxu0 0
      %2578 = vmatprep.subr.bf16.mxu0 0
      %2579 = vmatpush1.bf16.msra.mxu0 0
      %2580 = vmatprep.subr.bf16.mxu0 0
      %2581 = vmatpush1.bf16.msra.mxu0 0
      %2582 = vmatprep.subr.bf16.mxu0 0
      %2583 = vmatpush1.bf16.msra.mxu0 0
      %2584 = vmatprep.subr.bf16.mxu0 0
      %2585 = vmatpush1.bf16.msra.mxu0 0
      %2586 = vmatprep.subr.bf16.mxu0 0
      %2587 = vmatpush1.bf16.msra.mxu0 0
      %2588 = vmatprep.subr.bf16.mxu0 0
      %2589 = vmatpush1.bf16.msra.mxu0 0
      %2590 = vmatprep.subr.bf16.mxu0 0
      %2591 = vmatpush1.bf16.msra.mxu0 0
      %2592 = vmatprep.subr.bf16.mxu0 0
      %2593 = vmatpush1.bf16.msra.mxu0 0
      %2594 = vmatprep.subr.bf16.mxu0 0
      %2595 = vmatpush1.bf16.msra.mxu0 0
      %2596 = vmatprep.subr.bf16.mxu0 0
      %2597 = vmatpush1.bf16.msra.mxu0 0
      %2598 = vmatprep.subr.bf16.mxu0 0
      %2599 = vmatpush1.bf16.msra.mxu0 0
      %2600 = vmatprep.subr.bf16.mxu0 0
      %2601 = vmatpush1.bf16.msra.mxu0 0
      %2602 = vmatprep.subr.bf16.mxu0 0
      %2603 = vmatpush1.bf16.msra.mxu0 0
      %2604 = vmatprep.mubr.bf16.mxu0 0
      %2605 = vmatmul.mubr.bf16.gmra.mrb[0].mxu0 %v2564
      %v2606 = vpop.f32.mrb[0].mxu0
      %v2607 = vadd.f32 0.0, %v2606
      %v2608 = vpop.f32.mrb[0].mxu0
      %v2609 = vpop.f32.mrb[0].mxu0
      %v2610 = vadd.f32 0.0, %v2609
      %v2611 = vpop.f32.mrb[0].mxu0
      %2612 = vmatprep.mubr.bf16.mxu0 0
      %2613 = vmatmul.mubr.bf16.gmra.mrb[0].mxu0 %v2567
      %v2614 = vpop.f32.mrb[0].mxu0
      %v2615 = vadd.f32 0.0, %v2614
      %v2616 = vpop.f32.mrb[0].mxu0
      %v2617 = vpop.f32.mrb[0].mxu0
      %v2618 = vpop.f32.mrb[0].mxu0
      %2619 = vdwg.mxu0
      %2620 = vrot.lane.b32.xlu0 %v1530, 64
      %v2621 = vpop.permute.xlu0 %2620
      %2622 = vrot.lane.b32.xlu0 %v1531, 64
      %v2623 = vpop.permute.xlu0 %2622
      %v2626 = vsel %vm2090, %v2363, 0
      %v2629 = vsel %vm2090, %v2364, 0
      %v2632 = vsel %vm2382, %v2623, 0
      %2634 = vmatprep.subr.bf16.mxu0 0
      %2635 = vmatpush1.bf16.msra.mxu0 %v2621
      %2636 = vmatprep.subr.bf16.mxu0 0
      %2637 = vmatpush1.bf16.msra.mxu0 %v2632
      %2638 = vmatprep.subr.bf16.mxu0 0
      %2639 = vmatpush1.bf16.msra.mxu0 0
      %2640 = vmatprep.subr.bf16.mxu0 0
      %2641 = vmatpush1.bf16.msra.mxu0 0
      %2642 = vmatprep.subr.bf16.mxu0 0
      %2643 = vmatpush1.bf16.msra.mxu0 0
      %2644 = vmatprep.subr.bf16.mxu0 0
      %2645 = vmatpush1.bf16.msra.mxu0 0
      %2646 = vmatprep.subr.bf16.mxu0 0
      %2647 = vmatpush1.bf16.msra.mxu0 0
      %2648 = vmatprep.subr.bf16.mxu0 0
      %2649 = vmatpush1.bf16.msra.mxu0 0
      %2650 = vmatprep.subr.bf16.mxu0 0
      %2651 = vmatpush1.bf16.msra.mxu0 0
      %2652 = vmatprep.subr.bf16.mxu0 0
      %2653 = vmatpush1.bf16.msra.mxu0 0
      %2654 = vmatprep.subr.bf16.mxu0 0
      %2655 = vmatpush1.bf16.msra.mxu0 0
      %2656 = vmatprep.subr.bf16.mxu0 0
      %2657 = vmatpush1.bf16.msra.mxu0 0
      %2658 = vmatprep.subr.bf16.mxu0 0
      %2659 = vmatpush1.bf16.msra.mxu0 0
      %2660 = vmatprep.subr.bf16.mxu0 0
      %2661 = vmatpush1.bf16.msra.mxu0 0
      %2662 = vmatprep.subr.bf16.mxu0 0
      %2663 = vmatpush1.bf16.msra.mxu0 0
      %2664 = vmatprep.subr.bf16.mxu0 0
      %2665 = vmatpush1.bf16.msra.mxu0 0
      %2666 = vmatprep.mubr.bf16.mxu0 0
      %2667 = vmatmul.mubr.bf16.gmra.mrb[0].mxu0 %v2626
      %v2668 = vpop.f32.mrb[0].mxu0
      %v2669 = vadd.f32 0.0, %v2668
      %v2670 = vpop.f32.mrb[0].mxu0
      %v2671 = vpop.f32.mrb[0].mxu0
      %v2672 = vadd.f32 0.0, %v2671
      %v2673 = vpop.f32.mrb[0].mxu0
      %2674 = vmatprep.mubr.bf16.mxu0 0
      %2675 = vmatmul.mubr.bf16.gmra.mrb[0].mxu0 %v2629
      %v2676 = vpop.f32.mrb[0].mxu0
      %v2677 = vadd.f32 0.0, %v2676
      %v2678 = vpop.f32.mrb[0].mxu0
      %v2679 = vpop.f32.mrb[0].mxu0
      %v2680 = vpop.f32.mrb[0].mxu0
      %2681 = vdwg.mxu0
      %2682 = vrot.lane.b32.xlu0 %v1532, 64
      %v2683 = vpop.permute.xlu0 %2682
      %2684 = vrot.lane.b32.xlu0 %v1533, 64
      %v2685 = vpop.permute.xlu0 %2684
      %v2688 = vsel %vm2090, %v2365, 0
      %v2691 = vsel %vm2090, %v2366, 0
      %v2694 = vsel %vm2382, %v2685, 0
      %2696 = vmatprep.subr.bf16.mxu0 0
      %2697 = vmatpush1.bf16.msra.mxu0 %v2683
      %2698 = vmatprep.subr.bf16.mxu0 0
      %2699 = vmatpush1.bf16.msra.mxu0 %v2694
      %2700 = vmatprep.subr.bf16.mxu0 0
      %2701 = vmatpush1.bf16.msra.mxu0 0
      %2702 = vmatprep.subr.bf16.mxu0 0
      %2703 = vmatpush1.bf16.msra.mxu0 0
      %2704 = vmatprep.subr.bf16.mxu0 0
      %2705 = vmatpush1.bf16.msra.mxu0 0
      %2706 = vmatprep.subr.bf16.mxu0 0
      %2707 = vmatpush1.bf16.msra.mxu0 0
      %2708 = vmatprep.subr.bf16.mxu0 0
      %2709 = vmatpush1.bf16.msra.mxu0 0
      %2710 = vmatprep.subr.bf16.mxu0 0
      %2711 = vmatpush1.bf16.msra.mxu0 0
      %2712 = vmatprep.subr.bf16.mxu0 0
      %2713 = vmatpush1.bf16.msra.mxu0 0
      %2714 = vmatprep.subr.bf16.mxu0 0
      %2715 = vmatpush1.bf16.msra.mxu0 0
      %2716 = vmatprep.subr.bf16.mxu0 0
      %2717 = vmatpush1.bf16.msra.mxu0 0
      %2718 = vmatprep.subr.bf16.mxu0 0
      %2719 = vmatpush1.bf16.msra.mxu0 0
      %2720 = vmatprep.subr.bf16.mxu0 0
      %2721 = vmatpush1.bf16.msra.mxu0 0
      %2722 = vmatprep.subr.bf16.mxu0 0
      %2723 = vmatpush1.bf16.msra.mxu0 0
      %2724 = vmatprep.subr.bf16.mxu0 0
      %2725 = vmatpush1.bf16.msra.mxu0 0
      %2726 = vmatprep.subr.bf16.mxu0 0
      %2727 = vmatpush1.bf16.msra.mxu0 0
      %2728 = vmatprep.mubr.bf16.mxu0 0
      %2729 = vmatmul.mubr.bf16.gmra.mrb[0].mxu0 %v2688
      %v2730 = vpop.f32.mrb[0].mxu0
      %v2731 = vadd.f32 0.0, %v2730
      %v2732 = vpop.f32.mrb[0].mxu0
      %v2733 = vpop.f32.mrb[0].mxu0
      %v2734 = vadd.f32 0.0, %v2733
      %v2735 = vpop.f32.mrb[0].mxu0
      %2736 = vmatprep.mubr.bf16.mxu0 0
      %2737 = vmatmul.mubr.bf16.gmra.mrb[0].mxu0 %v2691
      %v2738 = vpop.f32.mrb[0].mxu0
      %v2739 = vadd.f32 0.0, %v2738
      %v2740 = vpop.f32.mrb[0].mxu0
      %v2741 = vpop.f32.mrb[0].mxu0
      %v2742 = vpop.f32.mrb[0].mxu0
      %2743 = vdwg.mxu0
      %2744 = vrot.lane.b32.xlu0 %v1534, 64
      %v2745 = vpop.permute.xlu0 %2744
      %2746 = vrot.lane.b32.xlu0 %v1535, 64
      %v2747 = vpop.permute.xlu0 %2746
      %v2750 = vsel %vm2090, %v2367, 0
      %v2753 = vsel %vm2090, %v2368, 0
      %v2756 = vsel %vm2382, %v2747, 0
      %2758 = vmatprep.subr.bf16.mxu0 0
      %2759 = vmatpush1.bf16.msra.mxu0 %v2745
      %2760 = vmatprep.subr.bf16.mxu0 0
      %2761 = vmatpush1.bf16.msra.mxu0 %v2756
      %2762 = vmatprep.subr.bf16.mxu0 0
      %2763 = vmatpush1.bf16.msra.mxu0 0
      %2764 = vmatprep.subr.bf16.mxu0 0
      %2765 = vmatpush1.bf16.msra.mxu0 0
      %2766 = vmatprep.subr.bf16.mxu0 0
      %2767 = vmatpush1.bf16.msra.mxu0 0
      %2768 = vmatprep.subr.bf16.mxu0 0
      %2769 = vmatpush1.bf16.msra.mxu0 0
      %2770 = vmatprep.subr.bf16.mxu0 0
      %2771 = vmatpush1.bf16.msra.mxu0 0
      %2772 = vmatprep.subr.bf16.mxu0 0
      %2773 = vmatpush1.bf16.msra.mxu0 0
      %2774 = vmatprep.subr.bf16.mxu0 0
      %2775 = vmatpush1.bf16.msra.mxu0 0
      %2776 = vmatprep.subr.bf16.mxu0 0
      %2777 = vmatpush1.bf16.msra.mxu0 0
      %2778 = vmatprep.subr.bf16.mxu0 0
      %2779 = vmatpush1.bf16.msra.mxu0 0
      %2780 = vmatprep.subr.bf16.mxu0 0
      %2781 = vmatpush1.bf16.msra.mxu0 0
      %2782 = vmatprep.subr.bf16.mxu0 0
      %2783 = vmatpush1.bf16.msra.mxu0 0
      %2784 = vmatprep.subr.bf16.mxu0 0
      %2785 = vmatpush1.bf16.msra.mxu0 0
      %2786 = vmatprep.subr.bf16.mxu0 0
      %2787 = vmatpush1.bf16.msra.mxu0 0
      %2788 = vmatprep.subr.bf16.mxu0 0
      %2789 = vmatpush1.bf16.msra.mxu0 0
      %2790 = vmatprep.mubr.bf16.mxu0 0
      %2791 = vmatmul.mubr.bf16.gmra.mrb[0].mxu0 %v2750
      %v2792 = vpop.f32.mrb[0].mxu0
      %v2793 = vadd.f32 0.0, %v2792
      %v2794 = vpop.f32.mrb[0].mxu0
      %v2795 = vpop.f32.mrb[0].mxu0
      %v2796 = vadd.f32 0.0, %v2795
      %v2797 = vpop.f32.mrb[0].mxu0
      %2798 = vmatprep.mubr.bf16.mxu0 0
      %2799 = vmatmul.mubr.bf16.gmra.mrb[0].mxu0 %v2753
      %v2800 = vpop.f32.mrb[0].mxu0
      %v2801 = vadd.f32 0.0, %v2800
      %v2802 = vpop.f32.mrb[0].mxu0
      %v2803 = vpop.f32.mrb[0].mxu0
      %v2804 = vpop.f32.mrb[0].mxu0
      %2805 = vdwg.mxu0
      %2806 = vrot.lane.b32.xlu0 %v1536, 64
      %v2807 = vpop.permute.xlu0 %2806
      %2808 = vrot.lane.b32.xlu0 %v1537, 64
      %v2809 = vpop.permute.xlu0 %2808
      %v2812 = vsel %vm2090, %v2369, 0
      %v2815 = vsel %vm2090, %v2370, 0
      %v2818 = vsel %vm2382, %v2809, 0
      %2820 = vmatprep.subr.bf16.mxu0 0
      %2821 = vmatpush1.bf16.msra.mxu0 %v2807
      %2822 = vmatprep.subr.bf16.mxu0 0
      %2823 = vmatpush1.bf16.msra.mxu0 %v2818
      %2824 = vmatprep.subr.bf16.mxu0 0
      %2825 = vmatpush1.bf16.msra.mxu0 0
      %2826 = vmatprep.subr.bf16.mxu0 0
      %2827 = vmatpush1.bf16.msra.mxu0 0
      %2828 = vmatprep.subr.bf16.mxu0 0
      %2829 = vmatpush1.bf16.msra.mxu0 0
      %2830 = vmatprep.subr.bf16.mxu0 0
      %2831 = vmatpush1.bf16.msra.mxu0 0
      %2832 = vmatprep.subr.bf16.mxu0 0
      %2833 = vmatpush1.bf16.msra.mxu0 0
      %2834 = vmatprep.subr.bf16.mxu0 0
      %2835 = vmatpush1.bf16.msra.mxu0 0
      %2836 = vmatprep.subr.bf16.mxu0 0
      %2837 = vmatpush1.bf16.msra.mxu0 0
      %2838 = vmatprep.subr.bf16.mxu0 0
      %2839 = vmatpush1.bf16.msra.mxu0 0
      %2840 = vmatprep.subr.bf16.mxu0 0
      %2841 = vmatpush1.bf16.msra.mxu0 0
      %2842 = vmatprep.subr.bf16.mxu0 0
      %2843 = vmatpush1.bf16.msra.mxu0 0
      %2844 = vmatprep.subr.bf16.mxu0 0
      %2845 = vmatpush1.bf16.msra.mxu0 0
      %2846 = vmatprep.subr.bf16.mxu0 0
      %2847 = vmatpush1.bf16.msra.mxu0 0
      %2848 = vmatprep.subr.bf16.mxu0 0
      %2849 = vmatpush1.bf16.msra.mxu0 0
      %2850 = vmatprep.subr.bf16.mxu0 0
      %2851 = vmatpush1.bf16.msra.mxu0 0
      %2852 = vmatprep.mubr.bf16.mxu0 0
      %2853 = vmatmul.mubr.bf16.gmra.mrb[0].mxu0 %v2812
      %v2854 = vpop.f32.mrb[0].mxu0
      %v2855 = vadd.f32 0.0, %v2854
      %v2856 = vpop.f32.mrb[0].mxu0
      %v2857 = vpop.f32.mrb[0].mxu0
      %v2858 = vadd.f32 0.0, %v2857
      %v2859 = vpop.f32.mrb[0].mxu0
      %2860 = vmatprep.mubr.bf16.mxu0 0
      %2861 = vmatmul.mubr.bf16.gmra.mrb[0].mxu0 %v2815
      %v2862 = vpop.f32.mrb[0].mxu0
      %v2863 = vadd.f32 0.0, %v2862
      %v2864 = vpop.f32.mrb[0].mxu0
      %v2865 = vpop.f32.mrb[0].mxu0
      %v2866 = vpop.f32.mrb[0].mxu0
      %2867 = vdwg.mxu0
      %v2868 = vld [vmem:[%s7] sm:$0xf]
      %v2869 = vld [vmem:[%s7 + $0x4] sm:$0xf]
      %v2870 = vld [vmem:[%s7 + $0x8] sm:$0xf]
      %v2871 = vld [vmem:[%s7 + $0xc] sm:$0xf]
      %v2872 = vpack.c.bf16 %v2424, %v2421
      %v2873 = vpack.c.bf16 %v2483, %v2429
      %v2874 = vpack.c.bf16 %v2491, %v2486
      %v2875 = vpack.c.bf16 %v2548, %v2545
      %v2876 = vpack.c.bf16 %v2607, %v2553
      %v2877 = vpack.c.bf16 %v2615, %v2610
      %v2878 = vpack.c.bf16 %v2672, %v2669
      %v2879 = vpack.c.bf16 %v2731, %v2677
      %v2880 = vpack.c.bf16 %v2739, %v2734
      %v2881 = vpack.c.bf16 %v2796, %v2793
      %v2882 = vpack.c.bf16 %v2855, %v2801
      %v2883 = vpack.c.bf16 %v2863, %v2858
      %v2884 = vld [vmem:[%s8] sm:$0x1]
      %v2886 = vlaneseq
      %v2887 = vshrl.u32 %v2886, 7
      %v2888 = vsub.s32 0, %v2887
      %v2889 = vrot.slane %v2884, %v2888
      %v2895 = vunpack.c.l.b16 %v2868
      %v2896 = vunpack.c.l.b16 %v2869
      %v2897 = vunpack.c.l.b16 %v2870
      %v2898 = vunpack.c.l.b16 %v2871
      %v2899 = vpack.c.b16 %v2896, %v2895
      %v2900 = vpack.c.b16 %v2898, %v2897
      %v2904 = vsel %vm900, %v2872, 0
      %v2907 = vsel %vm900, %v2873, 0
      %v2910 = vsel %vm900, %v2874, 0
      %v2913 = vsel %vm900, %v2875, 0
      %v2916 = vsel %vm900, %v2876, 0
      %v2919 = vsel %vm900, %v2877, 0
      %v2922 = vsel %vm900, %v2878, 0
      %v2925 = vsel %vm900, %v2879, 0
      %v2928 = vsel %vm900, %v2880, 0
      %v2931 = vsel %vm900, %v2881, 0
      %v2934 = vsel %vm900, %v2882, 0
      %v2937 = vsel %vm900, %v2883, 0
      %2939 = vmatprep.subr.bf16.mxu0 0
      %2940 = vmatpush1.bf16.msra.mxu0 %v2899
      %2941 = vmatprep.subr.bf16.mxu0 0
      %2942 = vmatpush1.bf16.msra.mxu0 %v2900
      %2943 = vmatprep.subr.bf16.mxu0 0
      %2944 = vmatpush1.bf16.msra.mxu0 0
      %2945 = vmatprep.subr.bf16.mxu0 0
      %2946 = vmatpush1.bf16.msra.mxu0 0
      %2947 = vmatprep.subr.bf16.mxu0 0
      %2948 = vmatpush1.bf16.msra.mxu0 0
      %2949 = vmatprep.subr.bf16.mxu0 0
      %2950 = vmatpush1.bf16.msra.mxu0 0
      %2951 = vmatprep.subr.bf16.mxu0 0
      %2952 = vmatpush1.bf16.msra.mxu0 0
      %2953 = vmatprep.subr.bf16.mxu0 0
      %2954 = vmatpush1.bf16.msra.mxu0 0
      %2955 = vmatprep.subr.bf16.mxu0 0
      %2956 = vmatpush1.bf16.msra.mxu0 0
      %2957 = vmatprep.subr.bf16.mxu0 0
      %2958 = vmatpush1.bf16.msra.mxu0 0
      %2959 = vmatprep.subr.bf16.mxu0 0
      %2960 = vmatpush1.bf16.msra.mxu0 0
      %2961 = vmatprep.subr.bf16.mxu0 0
      %2962 = vmatpush1.bf16.msra.mxu0 0
      %2963 = vmatprep.subr.bf16.mxu0 0
      %2964 = vmatpush1.bf16.msra.mxu0 0
      %2965 = vmatprep.subr.bf16.mxu0 0
      %2966 = vmatpush1.bf16.msra.mxu0 0
      %2967 = vmatprep.subr.bf16.mxu0 0
      %2968 = vmatpush1.bf16.msra.mxu0 0
      %2969 = vmatprep.subr.bf16.mxu0 0
      %2970 = vmatpush1.bf16.msra.mxu0 0
      %2971 = vmatprep.mubr.bf16.mxu0 0
      %2972 = vmatmul.mubr.bf16.gmra.mrb[0].mxu0 %v2904
      %v2973 = vpop.f32.mrb[0].mxu0
      %v2974 = vadd.f32 %v2889, %v2973
      %v2975 = vpop.f32.mrb[0].mxu0
      %v2976 = vpop.f32.mrb[0].mxu0
      %v2977 = vadd.f32 %v2889, %v2976
      %v2978 = vpop.f32.mrb[0].mxu0
      %2979 = vmatprep.mubr.bf16.mxu0 0
      %2980 = vmatmul.mubr.bf16.gmra.mrb[0].mxu0 %v2907
      %v2981 = vpop.f32.mrb[0].mxu0
      %v2982 = vadd.f32 %v2889, %v2981
      %v2983 = vpop.f32.mrb[0].mxu0
      %v2984 = vpop.f32.mrb[0].mxu0
      %v2985 = vadd.f32 %v2889, %v2984
      %v2986 = vpop.f32.mrb[0].mxu0
      %2987 = vmatprep.mubr.bf16.mxu0 0
      %2988 = vmatmul.mubr.bf16.gmra.mrb[0].mxu0 %v2910
      %v2989 = vpop.f32.mrb[0].mxu0
      %v2990 = vadd.f32 %v2889, %v2989
      %v2991 = vpop.f32.mrb[0].mxu0
      %v2992 = vpop.f32.mrb[0].mxu0
      %v2993 = vadd.f32 %v2889, %v2992
      %v2994 = vpop.f32.mrb[0].mxu0
      %2995 = vmatprep.mubr.bf16.mxu0 0
      %2996 = vmatmul.mubr.bf16.gmra.mrb[0].mxu0 %v2913
      %v2997 = vpop.f32.mrb[0].mxu0
      %v2998 = vadd.f32 %v2889, %v2997
      %v2999 = vpop.f32.mrb[0].mxu0
      %v3000 = vpop.f32.mrb[0].mxu0
      %v3001 = vadd.f32 %v2889, %v3000
      %v3002 = vpop.f32.mrb[0].mxu0
      %3003 = vmatprep.mubr.bf16.mxu0 0
      %3004 = vmatmul.mubr.bf16.gmra.mrb[0].mxu0 %v2916
      %v3005 = vpop.f32.mrb[0].mxu0
      %v3006 = vadd.f32 %v2889, %v3005
      %v3007 = vpop.f32.mrb[0].mxu0
      %v3008 = vpop.f32.mrb[0].mxu0
      %v3009 = vadd.f32 %v2889, %v3008
      %v3010 = vpop.f32.mrb[0].mxu0
      %3011 = vmatprep.mubr.bf16.mxu0 0
      %3012 = vmatmul.mubr.bf16.gmra.mrb[0].mxu0 %v2919
      %v3013 = vpop.f32.mrb[0].mxu0
      %v3014 = vadd.f32 %v2889, %v3013
      %v3015 = vpop.f32.mrb[0].mxu0
      %v3016 = vpop.f32.mrb[0].mxu0
      %v3017 = vadd.f32 %v2889, %v3016
      %v3018 = vpop.f32.mrb[0].mxu0
      %3019 = vmatprep.mubr.bf16.mxu0 0
      %3020 = vmatmul.mubr.bf16.gmra.mrb[0].mxu0 %v2922
      %v3021 = vpop.f32.mrb[0].mxu0
      %v3022 = vadd.f32 %v2889, %v3021
      %v3023 = vpop.f32.mrb[0].mxu0
      %v3024 = vpop.f32.mrb[0].mxu0
      %v3025 = vadd.f32 %v2889, %v3024
      %v3026 = vpop.f32.mrb[0].mxu0
      %3027 = vmatprep.mubr.bf16.mxu0 0
      %3028 = vmatmul.mubr.bf16.gmra.mrb[0].mxu0 %v2925
      %v3029 = vpop.f32.mrb[0].mxu0
      %v3030 = vadd.f32 %v2889, %v3029
      %v3031 = vpop.f32.mrb[0].mxu0
      %v3032 = vpop.f32.mrb[0].mxu0
      %v3033 = vadd.f32 %v2889, %v3032
      %v3034 = vpop.f32.mrb[0].mxu0
      %3035 = vmatprep.mubr.bf16.mxu0 0
      %3036 = vmatmul.mubr.bf16.gmra.mrb[0].mxu0 %v2928
      %v3037 = vpop.f32.mrb[0].mxu0
      %v3038 = vadd.f32 %v2889, %v3037
      %v3039 = vpop.f32.mrb[0].mxu0
      %v3040 = vpop.f32.mrb[0].mxu0
      %v3041 = vadd.f32 %v2889, %v3040
      %v3042 = vpop.f32.mrb[0].mxu0
      %3043 = vmatprep.mubr.bf16.mxu0 0
      %3044 = vmatmul.mubr.bf16.gmra.mrb[0].mxu0 %v2931
      %v3045 = vpop.f32.mrb[0].mxu0
      %v3046 = vadd.f32 %v2889, %v3045
      %v3047 = vpop.f32.mrb[0].mxu0
      %v3048 = vpop.f32.mrb[0].mxu0
      %v3049 = vadd.f32 %v2889, %v3048
      %v3050 = vpop.f32.mrb[0].mxu0
      %3051 = vmatprep.mubr.bf16.mxu0 0
      %3052 = vmatmul.mubr.bf16.gmra.mrb[0].mxu0 %v2934
      %v3053 = vpop.f32.mrb[0].mxu0
      %v3054 = vadd.f32 %v2889, %v3053
      %v3055 = vpop.f32.mrb[0].mxu0
      %v3056 = vpop.f32.mrb[0].mxu0
      %v3057 = vadd.f32 %v2889, %v3056
      %v3058 = vpop.f32.mrb[0].mxu0
      %3059 = vmatprep.mubr.bf16.mxu0 0
      %3060 = vmatmul.mubr.bf16.gmra.mrb[0].mxu0 %v2937
      %v3061 = vpop.f32.mrb[0].mxu0
      %v3062 = vadd.f32 %v2889, %v3061
      %v3063 = vpop.f32.mrb[0].mxu0
      %v3064 = vpop.f32.mrb[0].mxu0
      %v3065 = vadd.f32 %v2889, %v3064
      %v3066 = vpop.f32.mrb[0].mxu0
      %3067 = vdwg.mxu0
      %v3068 = vadd.f32 %v1298, %v2974
      %v3069 = vadd.f32 %v1299, %v2977
      %v3070 = vadd.f32 %v1300, %v2982
      %v3071 = vadd.f32 %v1301, %v2985
      %v3072 = vadd.f32 %v1302, %v2990
      %v3073 = vadd.f32 %v1303, %v2993
      %v3074 = vadd.f32 %v1304, %v2998
      %v3075 = vadd.f32 %v1305, %v3001
      %v3076 = vadd.f32 %v1306, %v3006
      %v3077 = vadd.f32 %v1307, %v3009
      %v3078 = vadd.f32 %v1308, %v3014
      %v3079 = vadd.f32 %v1309, %v3017
      %v3080 = vadd.f32 %v1310, %v3022
      %v3081 = vadd.f32 %v1311, %v3025
      %v3082 = vadd.f32 %v1312, %v3030
      %v3083 = vadd.f32 %v1313, %v3033
      %v3084 = vadd.f32 %v1314, %v3038
      %v3085 = vadd.f32 %v1315, %v3041
      %v3086 = vadd.f32 %v1316, %v3046
      %v3087 = vadd.f32 %v1317, %v3049
      %v3088 = vadd.f32 %v1318, %v3054
      %v3089 = vadd.f32 %v1319, %v3057
      %v3090 = vadd.f32 %v1320, %v3062
      %v3091 = vadd.f32 %v1321, %v3065
      %v3092 = vld [vmem:[%s9] sm:$0x1]
      %v3093 = vld [vmem:[%s10] sm:$0x1]
      %v3094 = vsel %vm900, %v3068, 0.0
      %3095 = vadd.xlane.f32.xlu0 %v3094
      %v3096 = vpop.xlane.xlu0 %3095
      %v3097 = vsel %vm900, %v3069, 0.0
      %3098 = vadd.xlane.f32.xlu0 %v3097
      %v3099 = vpop.xlane.xlu0 %3098
      %v3100 = vsel %vm900, %v3070, 0.0
      %3101 = vadd.xlane.f32.xlu0 %v3100
      %v3102 = vpop.xlane.xlu0 %3101
      %v3103 = vsel %vm900, %v3071, 0.0
      %3104 = vadd.xlane.f32.xlu0 %v3103
      %v3105 = vpop.xlane.xlu0 %3104
      %v3106 = vsel %vm900, %v3072, 0.0
      %3107 = vadd.xlane.f32.xlu0 %v3106
      %v3108 = vpop.xlane.xlu0 %3107
      %v3109 = vsel %vm900, %v3073, 0.0
      %3110 = vadd.xlane.f32.xlu0 %v3109
      %v3111 = vpop.xlane.xlu0 %3110
      %v3112 = vsel %vm900, %v3074, 0.0
      %3113 = vadd.xlane.f32.xlu0 %v3112
      %v3114 = vpop.xlane.xlu0 %3113
      %v3115 = vsel %vm900, %v3075, 0.0
      %3116 = vadd.xlane.f32.xlu0 %v3115
      %v3117 = vpop.xlane.xlu0 %3116
      %v3118 = vsel %vm900, %v3076, 0.0
      %3119 = vadd.xlane.f32.xlu0 %v3118
      %v3120 = vpop.xlane.xlu0 %3119
      %v3121 = vsel %vm900, %v3077, 0.0
      %3122 = vadd.xlane.f32.xlu0 %v3121
      %v3123 = vpop.xlane.xlu0 %3122
      %v3124 = vsel %vm900, %v3078, 0.0
      %3125 = vadd.xlane.f32.xlu0 %v3124
      %v3126 = vpop.xlane.xlu0 %3125
      %v3127 = vsel %vm900, %v3079, 0.0
      %3128 = vadd.xlane.f32.xlu0 %v3127
      %v3129 = vpop.xlane.xlu0 %3128
      %v3130 = vsel %vm900, %v3080, 0.0
      %3131 = vadd.xlane.f32.xlu0 %v3130
      %v3132 = vpop.xlane.xlu0 %3131
      %v3133 = vsel %vm900, %v3081, 0.0
      %3134 = vadd.xlane.f32.xlu0 %v3133
      %v3135 = vpop.xlane.xlu0 %3134
      %v3136 = vsel %vm900, %v3082, 0.0
      %3137 = vadd.xlane.f32.xlu0 %v3136
      %v3138 = vpop.xlane.xlu0 %3137
      %v3139 = vsel %vm900, %v3083, 0.0
      %3140 = vadd.xlane.f32.xlu0 %v3139
      %v3141 = vpop.xlane.xlu0 %3140
      %v3142 = vsel %vm900, %v3084, 0.0
      %3143 = vadd.xlane.f32.xlu0 %v3142
      %v3144 = vpop.xlane.xlu0 %3143
      %v3145 = vsel %vm900, %v3085, 0.0
      %3146 = vadd.xlane.f32.xlu0 %v3145
      %v3147 = vpop.xlane.xlu0 %3146
      %v3148 = vsel %vm900, %v3086, 0.0
      %3149 = vadd.xlane.f32.xlu0 %v3148
      %v3150 = vpop.xlane.xlu0 %3149
      %v3151 = vsel %vm900, %v3087, 0.0
      %3152 = vadd.xlane.f32.xlu0 %v3151
      %v3153 = vpop.xlane.xlu0 %3152
      %v3154 = vsel %vm900, %v3088, 0.0
      %3155 = vadd.xlane.f32.xlu0 %v3154
      %v3156 = vpop.xlane.xlu0 %3155
      %v3157 = vsel %vm900, %v3089, 0.0
      %3158 = vadd.xlane.f32.xlu0 %v3157
      %v3159 = vpop.xlane.xlu0 %3158
      %v3160 = vsel %vm900, %v3090, 0.0
      %3161 = vadd.xlane.f32.xlu0 %v3160
      %v3162 = vpop.xlane.xlu0 %3161
      %v3163 = vsel %vm900, %v3091, 0.0
      %3164 = vadd.xlane.f32.xlu0 %v3163
      %v3165 = vpop.xlane.xlu0 %3164
      %v3166 = vmul.f32 %v3096, %v973
      %v3167 = vmul.f32 %v3099, %v973
      %v3168 = vmul.f32 %v3102, %v973
      %v3169 = vmul.f32 %v3105, %v973
      %v3170 = vmul.f32 %v3108, %v973
      %v3171 = vmul.f32 %v3111, %v973
      %v3172 = vmul.f32 %v3114, %v973
      %v3173 = vmul.f32 %v3117, %v973
      %v3174 = vmul.f32 %v3120, %v973
      %v3175 = vmul.f32 %v3123, %v973
      %v3176 = vmul.f32 %v3126, %v973
      %v3177 = vmul.f32 %v3129, %v973
      %v3178 = vmul.f32 %v3132, %v973
      %v3179 = vmul.f32 %v3135, %v973
      %v3180 = vmul.f32 %v3138, %v973
      %v3181 = vmul.f32 %v3141, %v973
      %v3182 = vmul.f32 %v3144, %v973
      %v3183 = vmul.f32 %v3147, %v973
      %v3184 = vmul.f32 %v3150, %v973
      %v3185 = vmul.f32 %v3153, %v973
      %v3186 = vmul.f32 %v3156, %v973
      %v3187 = vmul.f32 %v3159, %v973
      %v3188 = vmul.f32 %v3162, %v973
      %v3189 = vmul.f32 %v3165, %v973
      %v3190 = vmul.f32 %v3068, %v3068
      %v3191 = vmul.f32 %v3069, %v3069
      %v3192 = vmul.f32 %v3070, %v3070
      %v3193 = vmul.f32 %v3071, %v3071
      %v3194 = vmul.f32 %v3072, %v3072
      %v3195 = vmul.f32 %v3073, %v3073
      %v3196 = vmul.f32 %v3074, %v3074
      %v3197 = vmul.f32 %v3075, %v3075
      %v3198 = vmul.f32 %v3076, %v3076
      %v3199 = vmul.f32 %v3077, %v3077
      %v3200 = vmul.f32 %v3078, %v3078
      %v3201 = vmul.f32 %v3079, %v3079
      %v3202 = vmul.f32 %v3080, %v3080
      %v3203 = vmul.f32 %v3081, %v3081
      %v3204 = vmul.f32 %v3082, %v3082
      %v3205 = vmul.f32 %v3083, %v3083
      %v3206 = vmul.f32 %v3084, %v3084
      %v3207 = vmul.f32 %v3085, %v3085
      %v3208 = vmul.f32 %v3086, %v3086
      %v3209 = vmul.f32 %v3087, %v3087
      %v3210 = vmul.f32 %v3088, %v3088
      %v3211 = vmul.f32 %v3089, %v3089
      %v3212 = vmul.f32 %v3090, %v3090
      %v3213 = vmul.f32 %v3091, %v3091
      %v3214 = vsel %vm900, %v3190, 0.0
      %3215 = vadd.xlane.f32.xlu0 %v3214
      %v3216 = vpop.xlane.xlu0 %3215
      %v3217 = vsel %vm900, %v3191, 0.0
      %3218 = vadd.xlane.f32.xlu0 %v3217
      %v3219 = vpop.xlane.xlu0 %3218
      %v3220 = vsel %vm900, %v3192, 0.0
      %3221 = vadd.xlane.f32.xlu0 %v3220
      %v3222 = vpop.xlane.xlu0 %3221
      %v3223 = vsel %vm900, %v3193, 0.0
      %3224 = vadd.xlane.f32.xlu0 %v3223
      %v3225 = vpop.xlane.xlu0 %3224
      %v3226 = vsel %vm900, %v3194, 0.0
      %3227 = vadd.xlane.f32.xlu0 %v3226
      %v3228 = vpop.xlane.xlu0 %3227
      %v3229 = vsel %vm900, %v3195, 0.0
      %3230 = vadd.xlane.f32.xlu0 %v3229
      %v3231 = vpop.xlane.xlu0 %3230
      %v3232 = vsel %vm900, %v3196, 0.0
      %3233 = vadd.xlane.f32.xlu0 %v3232
      %v3234 = vpop.xlane.xlu0 %3233
      %v3235 = vsel %vm900, %v3197, 0.0
      %3236 = vadd.xlane.f32.xlu0 %v3235
      %v3237 = vpop.xlane.xlu0 %3236
      %v3238 = vsel %vm900, %v3198, 0.0
      %3239 = vadd.xlane.f32.xlu0 %v3238
      %v3240 = vpop.xlane.xlu0 %3239
      %v3241 = vsel %vm900, %v3199, 0.0
      %3242 = vadd.xlane.f32.xlu0 %v3241
      %v3243 = vpop.xlane.xlu0 %3242
      %v3244 = vsel %vm900, %v3200, 0.0
      %3245 = vadd.xlane.f32.xlu0 %v3244
      %v3246 = vpop.xlane.xlu0 %3245
      %v3247 = vsel %vm900, %v3201, 0.0
      %3248 = vadd.xlane.f32.xlu0 %v3247
      %v3249 = vpop.xlane.xlu0 %3248
      %v3250 = vsel %vm900, %v3202, 0.0
      %3251 = vadd.xlane.f32.xlu0 %v3250
      %v3252 = vpop.xlane.xlu0 %3251
      %v3253 = vsel %vm900, %v3203, 0.0
      %3254 = vadd.xlane.f32.xlu0 %v3253
      %v3255 = vpop.xlane.xlu0 %3254
      %v3256 = vsel %vm900, %v3204, 0.0
      %3257 = vadd.xlane.f32.xlu0 %v3256
      %v3258 = vpop.xlane.xlu0 %3257
      %v3259 = vsel %vm900, %v3205, 0.0
      %3260 = vadd.xlane.f32.xlu0 %v3259
      %v3261 = vpop.xlane.xlu0 %3260
      %v3262 = vsel %vm900, %v3206, 0.0
      %3263 = vadd.xlane.f32.xlu0 %v3262
      %v3264 = vpop.xlane.xlu0 %3263
      %v3265 = vsel %vm900, %v3207, 0.0
      %3266 = vadd.xlane.f32.xlu0 %v3265
      %v3267 = vpop.xlane.xlu0 %3266
      %v3268 = vsel %vm900, %v3208, 0.0
      %3269 = vadd.xlane.f32.xlu0 %v3268
      %v3270 = vpop.xlane.xlu0 %3269
      %v3271 = vsel %vm900, %v3209, 0.0
      %3272 = vadd.xlane.f32.xlu0 %v3271
      %v3273 = vpop.xlane.xlu0 %3272
      %v3274 = vsel %vm900, %v3210, 0.0
      %3275 = vadd.xlane.f32.xlu0 %v3274
      %v3276 = vpop.xlane.xlu0 %3275
      %v3277 = vsel %vm900, %v3211, 0.0
      %3278 = vadd.xlane.f32.xlu0 %v3277
      %v3279 = vpop.xlane.xlu0 %3278
      %v3280 = vsel %vm900, %v3212, 0.0
      %3281 = vadd.xlane.f32.xlu0 %v3280
      %v3282 = vpop.xlane.xlu0 %3281
      %v3283 = vsel %vm900, %v3213, 0.0
      %3284 = vadd.xlane.f32.xlu0 %v3283
      %v3285 = vpop.xlane.xlu0 %3284
      %v3286 = vmul.f32 %v3216, %v973
      %v3287 = vmul.f32 %v3219, %v973
      %v3288 = vmul.f32 %v3222, %v973
      %v3289 = vmul.f32 %v3225, %v973
      %v3290 = vmul.f32 %v3228, %v973
      %v3291 = vmul.f32 %v3231, %v973
      %v3292 = vmul.f32 %v3234, %v973
      %v3293 = vmul.f32 %v3237, %v973
      %v3294 = vmul.f32 %v3240, %v973
      %v3295 = vmul.f32 %v3243, %v973
      %v3296 = vmul.f32 %v3246, %v973
      %v3297 = vmul.f32 %v3249, %v973
      %v3298 = vmul.f32 %v3252, %v973
      %v3299 = vmul.f32 %v3255, %v973
      %v3300 = vmul.f32 %v3258, %v973
      %v3301 = vmul.f32 %v3261, %v973
      %v3302 = vmul.f32 %v3264, %v973
      %v3303 = vmul.f32 %v3267, %v973
      %v3304 = vmul.f32 %v3270, %v973
      %v3305 = vmul.f32 %v3273, %v973
      %v3306 = vmul.f32 %v3276, %v973
      %v3307 = vmul.f32 %v3279, %v973
      %v3308 = vmul.f32 %v3282, %v973
      %v3309 = vmul.f32 %v3285, %v973
      %v3310 = vmul.f32 %v3166, %v3166
      %v3311 = vmul.f32 %v3167, %v3167
      %v3312 = vmul.f32 %v3168, %v3168
      %v3313 = vmul.f32 %v3169, %v3169
      %v3314 = vmul.f32 %v3170, %v3170
      %v3315 = vmul.f32 %v3171, %v3171
      %v3316 = vmul.f32 %v3172, %v3172
      %v3317 = vmul.f32 %v3173, %v3173
      %v3318 = vmul.f32 %v3174, %v3174
      %v3319 = vmul.f32 %v3175, %v3175
      %v3320 = vmul.f32 %v3176, %v3176
      %v3321 = vmul.f32 %v3177, %v3177
      %v3322 = vmul.f32 %v3178, %v3178
      %v3323 = vmul.f32 %v3179, %v3179
      %v3324 = vmul.f32 %v3180, %v3180
      %v3325 = vmul.f32 %v3181, %v3181
      %v3326 = vmul.f32 %v3182, %v3182
      %v3327 = vmul.f32 %v3183, %v3183
      %v3328 = vmul.f32 %v3184, %v3184
      %v3329 = vmul.f32 %v3185, %v3185
      %v3330 = vmul.f32 %v3186, %v3186
      %v3331 = vmul.f32 %v3187, %v3187
      %v3332 = vmul.f32 %v3188, %v3188
      %v3333 = vmul.f32 %v3189, %v3189
      %v3334 = vsub.f32 %v3286, %v3310
      %v3335 = vsub.f32 %v3287, %v3311
      %v3336 = vsub.f32 %v3288, %v3312
      %v3337 = vsub.f32 %v3289, %v3313
      %v3338 = vsub.f32 %v3290, %v3314
      %v3339 = vsub.f32 %v3291, %v3315
      %v3340 = vsub.f32 %v3292, %v3316
      %v3341 = vsub.f32 %v3293, %v3317
      %v3342 = vsub.f32 %v3294, %v3318
      %v3343 = vsub.f32 %v3295, %v3319
      %v3344 = vsub.f32 %v3296, %v3320
      %v3345 = vsub.f32 %v3297, %v3321
      %v3346 = vsub.f32 %v3298, %v3322
      %v3347 = vsub.f32 %v3299, %v3323
      %v3348 = vsub.f32 %v3300, %v3324
      %v3349 = vsub.f32 %v3301, %v3325
      %v3350 = vsub.f32 %v3302, %v3326
      %v3351 = vsub.f32 %v3303, %v3327
      %v3352 = vsub.f32 %v3304, %v3328
      %v3353 = vsub.f32 %v3305, %v3329
      %v3354 = vsub.f32 %v3306, %v3330
      %v3355 = vsub.f32 %v3307, %v3331
      %v3356 = vsub.f32 %v3308, %v3332
      %v3357 = vsub.f32 %v3309, %v3333
      %v3358 = vsub.f32 %v3068, %v3166
      %v3359 = vsub.f32 %v3069, %v3167
      %v3360 = vsub.f32 %v3070, %v3168
      %v3361 = vsub.f32 %v3071, %v3169
      %v3362 = vsub.f32 %v3072, %v3170
      %v3363 = vsub.f32 %v3073, %v3171
      %v3364 = vsub.f32 %v3074, %v3172
      %v3365 = vsub.f32 %v3075, %v3173
      %v3366 = vsub.f32 %v3076, %v3174
      %v3367 = vsub.f32 %v3077, %v3175
      %v3368 = vsub.f32 %v3078, %v3176
      %v3369 = vsub.f32 %v3079, %v3177
      %v3370 = vsub.f32 %v3080, %v3178
      %v3371 = vsub.f32 %v3081, %v3179
      %v3372 = vsub.f32 %v3082, %v3180
      %v3373 = vsub.f32 %v3083, %v3181
      %v3374 = vsub.f32 %v3084, %v3182
      %v3375 = vsub.f32 %v3085, %v3183
      %v3376 = vsub.f32 %v3086, %v3184
      %v3377 = vsub.f32 %v3087, %v3185
      %v3378 = vsub.f32 %v3088, %v3186
      %v3379 = vsub.f32 %v3089, %v3187
      %v3380 = vsub.f32 %v3090, %v3188
      %v3381 = vsub.f32 %v3091, %v3189
      %v3382 = vadd.f32 %v3334, 1e-05
      %v3383 = vadd.f32 %v3335, 1e-05
      %v3384 = vadd.f32 %v3336, 1e-05
      %v3385 = vadd.f32 %v3337, 1e-05
      %v3386 = vadd.f32 %v3338, 1e-05
      %v3387 = vadd.f32 %v3339, 1e-05
      %v3388 = vadd.f32 %v3340, 1e-05
      %v3389 = vadd.f32 %v3341, 1e-05
      %v3390 = vadd.f32 %v3342, 1e-05
      %v3391 = vadd.f32 %v3343, 1e-05
      %v3392 = vadd.f32 %v3344, 1e-05
      %v3393 = vadd.f32 %v3345, 1e-05
      %v3394 = vadd.f32 %v3346, 1e-05
      %v3395 = vadd.f32 %v3347, 1e-05
      %v3396 = vadd.f32 %v3348, 1e-05
      %v3397 = vadd.f32 %v3349, 1e-05
      %v3398 = vadd.f32 %v3350, 1e-05
      %v3399 = vadd.f32 %v3351, 1e-05
      %v3400 = vadd.f32 %v3352, 1e-05
      %v3401 = vadd.f32 %v3353, 1e-05
      %v3402 = vadd.f32 %v3354, 1e-05
      %v3403 = vadd.f32 %v3355, 1e-05
      %v3404 = vadd.f32 %v3356, 1e-05
      %v3405 = vadd.f32 %v3357, 1e-05
      %v3406 = vrsqrt.pop %v3382
      %v3407 = vrsqrt.pop %v3383
      %v3408 = vrsqrt.pop %v3384
      %v3409 = vrsqrt.pop %v3385
      %v3410 = vrsqrt.pop %v3386
      %v3411 = vrsqrt.pop %v3387
      %v3412 = vrsqrt.pop %v3388
      %v3413 = vrsqrt.pop %v3389
      %v3414 = vrsqrt.pop %v3390
      %v3415 = vrsqrt.pop %v3391
      %v3416 = vrsqrt.pop %v3392
      %v3417 = vrsqrt.pop %v3393
      %v3418 = vrsqrt.pop %v3394
      %v3419 = vrsqrt.pop %v3395
      %v3420 = vrsqrt.pop %v3396
      %v3421 = vrsqrt.pop %v3397
      %v3422 = vrsqrt.pop %v3398
      %v3423 = vrsqrt.pop %v3399
      %v3424 = vrsqrt.pop %v3400
      %v3425 = vrsqrt.pop %v3401
      %v3426 = vrsqrt.pop %v3402
      %v3427 = vrsqrt.pop %v3403
      %v3428 = vrsqrt.pop %v3404
      %v3429 = vrsqrt.pop %v3405
      %v3430 = vmul.f32 %v3358, %v3406
      %v3431 = vmul.f32 %v3359, %v3407
      %v3432 = vmul.f32 %v3360, %v3408
      %v3433 = vmul.f32 %v3361, %v3409
      %v3434 = vmul.f32 %v3362, %v3410
      %v3435 = vmul.f32 %v3363, %v3411
      %v3436 = vmul.f32 %v3364, %v3412
      %v3437 = vmul.f32 %v3365, %v3413
      %v3438 = vmul.f32 %v3366, %v3414
      %v3439 = vmul.f32 %v3367, %v3415
      %v3440 = vmul.f32 %v3368, %v3416
      %v3441 = vmul.f32 %v3369, %v3417
      %v3442 = vmul.f32 %v3370, %v3418
      %v3443 = vmul.f32 %v3371, %v3419
      %v3444 = vmul.f32 %v3372, %v3420
      %v3445 = vmul.f32 %v3373, %v3421
      %v3446 = vmul.f32 %v3374, %v3422
      %v3447 = vmul.f32 %v3375, %v3423
      %v3448 = vmul.f32 %v3376, %v3424
      %v3449 = vmul.f32 %v3377, %v3425
      %v3450 = vmul.f32 %v3378, %v3426
      %v3451 = vmul.f32 %v3379, %v3427
      %v3452 = vmul.f32 %v3380, %v3428
      %v3453 = vmul.f32 %v3381, %v3429
      %v3455 = vlaneseq
      %v3456 = vshrl.u32 %v3455, 7
      %v3457 = vsub.s32 0, %v3456
      %v3458 = vrot.slane %v3092, %v3457
      %v3460 = vmul.f32 %v3430, %v3458
      %v3461 = vmul.f32 %v3431, %v3458
      %v3462 = vmul.f32 %v3432, %v3458
      %v3463 = vmul.f32 %v3433, %v3458
      %v3464 = vmul.f32 %v3434, %v3458
      %v3465 = vmul.f32 %v3435, %v3458
      %v3466 = vmul.f32 %v3436, %v3458
      %v3467 = vmul.f32 %v3437, %v3458
      %v3468 = vmul.f32 %v3438, %v3458
      %v3469 = vmul.f32 %v3439, %v3458
      %v3470 = vmul.f32 %v3440, %v3458
      %v3471 = vmul.f32 %v3441, %v3458
      %v3472 = vmul.f32 %v3442, %v3458
      %v3473 = vmul.f32 %v3443, %v3458
      %v3474 = vmul.f32 %v3444, %v3458
      %v3475 = vmul.f32 %v3445, %v3458
      %v3476 = vmul.f32 %v3446, %v3458
      %v3477 = vmul.f32 %v3447, %v3458
      %v3478 = vmul.f32 %v3448, %v3458
      %v3479 = vmul.f32 %v3449, %v3458
      %v3480 = vmul.f32 %v3450, %v3458
      %v3481 = vmul.f32 %v3451, %v3458
      %v3482 = vmul.f32 %v3452, %v3458
      %v3483 = vmul.f32 %v3453, %v3458
      %v3485 = vlaneseq
      %v3486 = vshrl.u32 %v3485, 7
      %v3487 = vsub.s32 0, %v3486
      %v3488 = vrot.slane %v3093, %v3487
      %v3490 = vadd.f32 %v3460, %v3488
      %v3491 = vadd.f32 %v3461, %v3488
      %v3492 = vadd.f32 %v3462, %v3488
      %v3493 = vadd.f32 %v3463, %v3488
      %v3494 = vadd.f32 %v3464, %v3488
      %v3495 = vadd.f32 %v3465, %v3488
      %v3496 = vadd.f32 %v3466, %v3488
      %v3497 = vadd.f32 %v3467, %v3488
      %v3498 = vadd.f32 %v3468, %v3488
      %v3499 = vadd.f32 %v3469, %v3488
      %v3500 = vadd.f32 %v3470, %v3488
      %v3501 = vadd.f32 %v3471, %v3488
      %v3502 = vadd.f32 %v3472, %v3488
      %v3503 = vadd.f32 %v3473, %v3488
      %v3504 = vadd.f32 %v3474, %v3488
      %v3505 = vadd.f32 %v3475, %v3488
      %v3506 = vadd.f32 %v3476, %v3488
      %v3507 = vadd.f32 %v3477, %v3488
      %v3508 = vadd.f32 %v3478, %v3488
      %v3509 = vadd.f32 %v3479, %v3488
      %v3510 = vadd.f32 %v3480, %v3488
      %v3511 = vadd.f32 %v3481, %v3488
      %v3512 = vadd.f32 %v3482, %v3488
      %v3513 = vadd.f32 %v3483, %v3488
      %v3514 = vld [vmem:[%s13] sm:$0xf]
      %v3515 = vld [vmem:[%s13 + $0x4] sm:$0xf]
      %v3516 = vld [vmem:[%s13 + $0x8] sm:$0xf]
      %v3517 = vld [vmem:[%s13 + $0xc] sm:$0xf]
      %v3518 = vpack.c.bf16 %v3491, %v3490
      %v3519 = vpack.c.bf16 %v3493, %v3492
      %v3520 = vpack.c.bf16 %v3495, %v3494
      %v3521 = vpack.c.bf16 %v3497, %v3496
      %v3522 = vpack.c.bf16 %v3499, %v3498
      %v3523 = vpack.c.bf16 %v3501, %v3500
      %v3524 = vpack.c.bf16 %v3503, %v3502
      %v3525 = vpack.c.bf16 %v3505, %v3504
      %v3526 = vpack.c.bf16 %v3507, %v3506
      %v3527 = vpack.c.bf16 %v3509, %v3508
      %v3528 = vpack.c.bf16 %v3511, %v3510
      %v3529 = vpack.c.bf16 %v3513, %v3512
      %v3530 = vld [vmem:[%s14] sm:$0x1]
      %v3532 = vlaneseq
      %v3533 = vshrl.u32 %v3532, 7
      %v3534 = vsub.s32 0, %v3533
      %v3535 = vrot.slane %v3530, %v3534
      %v3541 = vunpack.c.l.b16 %v3514
      %v3542 = vunpack.c.l.b16 %v3515
      %v3543 = vunpack.c.l.b16 %v3516
      %v3544 = vunpack.c.l.b16 %v3517
      %v3545 = vpack.c.b16 %v3542, %v3541
      %v3546 = vpack.c.b16 %v3544, %v3543
      %v3550 = vsel %vm900, %v3518, 0
      %v3553 = vsel %vm900, %v3519, 0
      %v3556 = vsel %vm900, %v3520, 0
      %v3559 = vsel %vm900, %v3521, 0
      %v3562 = vsel %vm900, %v3522, 0
      %v3565 = vsel %vm900, %v3523, 0
      %v3568 = vsel %vm900, %v3524, 0
      %v3571 = vsel %vm900, %v3525, 0
      %v3574 = vsel %vm900, %v3526, 0
      %v3577 = vsel %vm900, %v3527, 0
      %v3580 = vsel %vm900, %v3528, 0
      %v3583 = vsel %vm900, %v3529, 0
      %3585 = vmatprep.subr.bf16.mxu0 0
      %3586 = vmatpush1.bf16.msra.mxu0 %v3545
      %3587 = vmatprep.subr.bf16.mxu0 0
      %3588 = vmatpush1.bf16.msra.mxu0 %v3546
      %3589 = vmatprep.subr.bf16.mxu0 0
      %3590 = vmatpush1.bf16.msra.mxu0 0
      %3591 = vmatprep.subr.bf16.mxu0 0
      %3592 = vmatpush1.bf16.msra.mxu0 0
      %3593 = vmatprep.subr.bf16.mxu0 0
      %3594 = vmatpush1.bf16.msra.mxu0 0
      %3595 = vmatprep.subr.bf16.mxu0 0
      %3596 = vmatpush1.bf16.msra.mxu0 0
      %3597 = vmatprep.subr.bf16.mxu0 0
      %3598 = vmatpush1.bf16.msra.mxu0 0
      %3599 = vmatprep.subr.bf16.mxu0 0
      %3600 = vmatpush1.bf16.msra.mxu0 0
      %3601 = vmatprep.subr.bf16.mxu0 0
      %3602 = vmatpush1.bf16.msra.mxu0 0
      %3603 = vmatprep.subr.bf16.mxu0 0
      %3604 = vmatpush1.bf16.msra.mxu0 0
      %3605 = vmatprep.subr.bf16.mxu0 0
      %3606 = vmatpush1.bf16.msra.mxu0 0
      %3607 = vmatprep.subr.bf16.mxu0 0
      %3608 = vmatpush1.bf16.msra.mxu0 0
      %3609 = vmatprep.subr.bf16.mxu0 0
      %3610 = vmatpush1.bf16.msra.mxu0 0
      %3611 = vmatprep.subr.bf16.mxu0 0
      %3612 = vmatpush1.bf16.msra.mxu0 0
      %3613 = vmatprep.subr.bf16.mxu0 0
      %3614 = vmatpush1.bf16.msra.mxu0 0
      %3615 = vmatprep.subr.bf16.mxu0 0
      %3616 = vmatpush1.bf16.msra.mxu0 0
      %3617 = vmatprep.mubr.bf16.mxu0 0
      %3618 = vmatmul.mubr.bf16.gmra.mrb[0].mxu0 %v3550
      %v3619 = vpop.f32.mrb[0].mxu0
      %v3620 = vadd.f32 %v3535, %v3619
      %v3621 = vpop.f32.mrb[0].mxu0
      %v3622 = vpop.f32.mrb[0].mxu0
      %v3623 = vadd.f32 %v3535, %v3622
      %v3624 = vpop.f32.mrb[0].mxu0
      %3625 = vmatprep.mubr.bf16.mxu0 0
      %3626 = vmatmul.mubr.bf16.gmra.mrb[0].mxu0 %v3553
      %v3627 = vpop.f32.mrb[0].mxu0
      %v3628 = vadd.f32 %v3535, %v3627
      %v3629 = vpop.f32.mrb[0].mxu0
      %v3630 = vpop.f32.mrb[0].mxu0
      %v3631 = vadd.f32 %v3535, %v3630
      %v3632 = vpop.f32.mrb[0].mxu0
      %3633 = vmatprep.mubr.bf16.mxu0 0
      %3634 = vmatmul.mubr.bf16.gmra.mrb[0].mxu0 %v3556
      %v3635 = vpop.f32.mrb[0].mxu0
      %v3636 = vadd.f32 %v3535, %v3635
      %v3637 = vpop.f32.mrb[0].mxu0
      %v3638 = vpop.f32.mrb[0].mxu0
      %v3639 = vadd.f32 %v3535, %v3638
      %v3640 = vpop.f32.mrb[0].mxu0
      %3641 = vmatprep.mubr.bf16.mxu0 0
      %3642 = vmatmul.mubr.bf16.gmra.mrb[0].mxu0 %v3559
      %v3643 = vpop.f32.mrb[0].mxu0
      %v3644 = vadd.f32 %v3535, %v3643
      %v3645 = vpop.f32.mrb[0].mxu0
      %v3646 = vpop.f32.mrb[0].mxu0
      %v3647 = vadd.f32 %v3535, %v3646
      %v3648 = vpop.f32.mrb[0].mxu0
      %3649 = vmatprep.mubr.bf16.mxu0 0
      %3650 = vmatmul.mubr.bf16.gmra.mrb[0].mxu0 %v3562
      %v3651 = vpop.f32.mrb[0].mxu0
      %v3652 = vadd.f32 %v3535, %v3651
      %v3653 = vpop.f32.mrb[0].mxu0
      %v3654 = vpop.f32.mrb[0].mxu0
      %v3655 = vadd.f32 %v3535, %v3654
      %v3656 = vpop.f32.mrb[0].mxu0
      %3657 = vmatprep.mubr.bf16.mxu0 0
      %3658 = vmatmul.mubr.bf16.gmra.mrb[0].mxu0 %v3565
      %v3659 = vpop.f32.mrb[0].mxu0
      %v3660 = vadd.f32 %v3535, %v3659
      %v3661 = vpop.f32.mrb[0].mxu0
      %v3662 = vpop.f32.mrb[0].mxu0
      %v3663 = vadd.f32 %v3535, %v3662
      %v3664 = vpop.f32.mrb[0].mxu0
      %3665 = vmatprep.mubr.bf16.mxu0 0
      %3666 = vmatmul.mubr.bf16.gmra.mrb[0].mxu0 %v3568
      %v3667 = vpop.f32.mrb[0].mxu0
      %v3668 = vadd.f32 %v3535, %v3667
      %v3669 = vpop.f32.mrb[0].mxu0
      %v3670 = vpop.f32.mrb[0].mxu0
      %v3671 = vadd.f32 %v3535, %v3670
      %v3672 = vpop.f32.mrb[0].mxu0
      %3673 = vmatprep.mubr.bf16.mxu0 0
      %3674 = vmatmul.mubr.bf16.gmra.mrb[0].mxu0 %v3571
      %v3675 = vpop.f32.mrb[0].mxu0
      %v3676 = vadd.f32 %v3535, %v3675
      %v3677 = vpop.f32.mrb[0].mxu0
      %v3678 = vpop.f32.mrb[0].mxu0
      %v3679 = vadd.f32 %v3535, %v3678
      %v3680 = vpop.f32.mrb[0].mxu0
      %3681 = vmatprep.mubr.bf16.mxu0 0
      %3682 = vmatmul.mubr.bf16.gmra.mrb[0].mxu0 %v3574
      %v3683 = vpop.f32.mrb[0].mxu0
      %v3684 = vadd.f32 %v3535, %v3683
      %v3685 = vpop.f32.mrb[0].mxu0
      %v3686 = vpop.f32.mrb[0].mxu0
      %v3687 = vadd.f32 %v3535, %v3686
      %v3688 = vpop.f32.mrb[0].mxu0
      %3689 = vmatprep.mubr.bf16.mxu0 0
      %3690 = vmatmul.mubr.bf16.gmra.mrb[0].mxu0 %v3577
      %v3691 = vpop.f32.mrb[0].mxu0
      %v3692 = vadd.f32 %v3535, %v3691
      %v3693 = vpop.f32.mrb[0].mxu0
      %v3694 = vpop.f32.mrb[0].mxu0
      %v3695 = vadd.f32 %v3535, %v3694
      %v3696 = vpop.f32.mrb[0].mxu0
      %3697 = vmatprep.mubr.bf16.mxu0 0
      %3698 = vmatmul.mubr.bf16.gmra.mrb[0].mxu0 %v3580
      %v3699 = vpop.f32.mrb[0].mxu0
      %v3700 = vadd.f32 %v3535, %v3699
      %v3701 = vpop.f32.mrb[0].mxu0
      %v3702 = vpop.f32.mrb[0].mxu0
      %v3703 = vadd.f32 %v3535, %v3702
      %v3704 = vpop.f32.mrb[0].mxu0
      %3705 = vmatprep.mubr.bf16.mxu0 0
      %3706 = vmatmul.mubr.bf16.gmra.mrb[0].mxu0 %v3583
      %v3707 = vpop.f32.mrb[0].mxu0
      %v3708 = vadd.f32 %v3535, %v3707
      %v3709 = vpop.f32.mrb[0].mxu0
      %v3710 = vpop.f32.mrb[0].mxu0
      %v3711 = vadd.f32 %v3535, %v3710
      %v3712 = vpop.f32.mrb[0].mxu0
      %3713 = vdwg.mxu0
      %v3714 = vmax.f32 %v3620, 0.0
      %v3715 = vmax.f32 %v3623, 0.0
      %v3716 = vmax.f32 %v3628, 0.0
      %v3717 = vmax.f32 %v3631, 0.0
      %v3718 = vmax.f32 %v3636, 0.0
      %v3719 = vmax.f32 %v3639, 0.0
      %v3720 = vmax.f32 %v3644, 0.0
      %v3721 = vmax.f32 %v3647, 0.0
      %v3722 = vmax.f32 %v3652, 0.0
      %v3723 = vmax.f32 %v3655, 0.0
      %v3724 = vmax.f32 %v3660, 0.0
      %v3725 = vmax.f32 %v3663, 0.0
      %v3726 = vmax.f32 %v3668, 0.0
      %v3727 = vmax.f32 %v3671, 0.0
      %v3728 = vmax.f32 %v3676, 0.0
      %v3729 = vmax.f32 %v3679, 0.0
      %v3730 = vmax.f32 %v3684, 0.0
      %v3731 = vmax.f32 %v3687, 0.0
      %v3732 = vmax.f32 %v3692, 0.0
      %v3733 = vmax.f32 %v3695, 0.0
      %v3734 = vmax.f32 %v3700, 0.0
      %v3735 = vmax.f32 %v3703, 0.0
      %v3736 = vmax.f32 %v3708, 0.0
      %v3737 = vmax.f32 %v3711, 0.0
      %v3738 = vld [vmem:[%s15] sm:$0xf]
      %v3739 = vld [vmem:[%s15 + $0x4] sm:$0xf]
      %v3740 = vld [vmem:[%s15 + $0x8] sm:$0xf]
      %v3741 = vld [vmem:[%s15 + $0xc] sm:$0xf]
      %v3742 = vld [vmem:[%s15 + $0x10] sm:$0xf]
      %v3743 = vld [vmem:[%s15 + $0x14] sm:$0xf]
      %v3744 = vld [vmem:[%s15 + $0x18] sm:$0xf]
      %v3745 = vld [vmem:[%s15 + $0x1c] sm:$0xf]
      %v3746 = vld [vmem:[%s15 + $0x20] sm:$0xf]
      %v3747 = vld [vmem:[%s15 + $0x24] sm:$0xf]
      %v3748 = vld [vmem:[%s15 + $0x28] sm:$0xf]
      %v3749 = vld [vmem:[%s15 + $0x2c] sm:$0xf]
      %v3750 = vld [vmem:[%s15 + $0x30] sm:$0xf]
      %v3751 = vld [vmem:[%s15 + $0x34] sm:$0xf]
      %v3752 = vld [vmem:[%s15 + $0x38] sm:$0xf]
      %v3753 = vld [vmem:[%s15 + $0x3c] sm:$0xf]
      %v3754 = vpack.c.bf16 %v3715, %v3714
      %v3755 = vpack.c.bf16 %v3717, %v3716
      %v3756 = vpack.c.bf16 %v3719, %v3718
      %v3757 = vpack.c.bf16 %v3721, %v3720
      %v3758 = vpack.c.bf16 %v3723, %v3722
      %v3759 = vpack.c.bf16 %v3725, %v3724
      %v3760 = vpack.c.bf16 %v3727, %v3726
      %v3761 = vpack.c.bf16 %v3729, %v3728
      %v3762 = vpack.c.bf16 %v3731, %v3730
      %v3763 = vpack.c.bf16 %v3733, %v3732
      %v3764 = vpack.c.bf16 %v3735, %v3734
      %v3765 = vpack.c.bf16 %v3737, %v3736
      %v3766 = vld [vmem:[%s16] sm:$0x1]
      %v3768 = vlaneseq
      %v3769 = vshrl.u32 %v3768, 7
      %v3770 = vsub.s32 0, %v3769
      %v3771 = vrot.slane %v3766, %v3770
      %v3789 = vunpack.c.l.b16 %v3738
      %v3790 = vunpack.c.l.b16 %v3739
      %v3791 = vunpack.c.l.b16 %v3740
      %v3792 = vunpack.c.l.b16 %v3741
      %v3793 = vunpack.c.l.b16 %v3742
      %v3794 = vunpack.c.l.b16 %v3743
      %v3795 = vunpack.c.l.b16 %v3744
      %v3796 = vunpack.c.l.b16 %v3745
      %v3797 = vunpack.c.l.b16 %v3746
      %v3798 = vunpack.c.l.b16 %v3747
      %v3799 = vunpack.c.l.b16 %v3748
      %v3800 = vunpack.c.l.b16 %v3749
      %v3801 = vunpack.c.l.b16 %v3750
      %v3802 = vunpack.c.l.b16 %v3751
      %v3803 = vunpack.c.l.b16 %v3752
      %v3804 = vunpack.c.l.b16 %v3753
      %v3805 = vpack.c.b16 %v3790, %v3789
      %v3806 = vpack.c.b16 %v3792, %v3791
      %v3807 = vpack.c.b16 %v3794, %v3793
      %v3808 = vpack.c.b16 %v3796, %v3795
      %v3809 = vpack.c.b16 %v3798, %v3797
      %v3810 = vpack.c.b16 %v3800, %v3799
      %v3811 = vpack.c.b16 %v3802, %v3801
      %v3812 = vpack.c.b16 %v3804, %v3803
      %3821 = vmatprep.subr.bf16.mxu0 0
      %3822 = vmatpush1.bf16.msra.mxu0 %v3805
      %3823 = vmatprep.subr.bf16.mxu0 0
      %3824 = vmatpush1.bf16.msra.mxu0 %v3806
      %3825 = vmatprep.subr.bf16.mxu0 0
      %3826 = vmatpush1.bf16.msra.mxu0 %v3807
      %3827 = vmatprep.subr.bf16.mxu0 0
      %3828 = vmatpush1.bf16.msra.mxu0 %v3808
      %3829 = vmatprep.subr.bf16.mxu0 0
      %3830 = vmatpush1.bf16.msra.mxu0 %v3809
      %3831 = vmatprep.subr.bf16.mxu0 0
      %3832 = vmatpush1.bf16.msra.mxu0 %v3810
      %3833 = vmatprep.subr.bf16.mxu0 0
      %3834 = vmatpush1.bf16.msra.mxu0 %v3811
      %3835 = vmatprep.subr.bf16.mxu0 0
      %3836 = vmatpush1.bf16.msra.mxu0 %v3812
      %3837 = vmatprep.subr.bf16.mxu0 0
      %3838 = vmatpush1.bf16.msra.mxu0 0
      %3839 = vmatprep.subr.bf16.mxu0 0
      %3840 = vmatpush1.bf16.msra.mxu0 0
      %3841 = vmatprep.subr.bf16.mxu0 0
      %3842 = vmatpush1.bf16.msra.mxu0 0
      %3843 = vmatprep.subr.bf16.mxu0 0
      %3844 = vmatpush1.bf16.msra.mxu0 0
      %3845 = vmatprep.subr.bf16.mxu0 0
      %3846 = vmatpush1.bf16.msra.mxu0 0
      %3847 = vmatprep.subr.bf16.mxu0 0
      %3848 = vmatpush1.bf16.msra.mxu0 0
      %3849 = vmatprep.subr.bf16.mxu0 0
      %3850 = vmatpush1.bf16.msra.mxu0 0
      %3851 = vmatprep.subr.bf16.mxu0 0
      %3852 = vmatpush1.bf16.msra.mxu0 0
      %3853 = vmatprep.mubr.bf16.mxu0 0
      %3854 = vmatmul.mubr.bf16.gmra.mrb[0].mxu0 %v3754
      %v3855 = vpop.f32.mrb[0].mxu0
      %v3856 = vadd.f32 %v3771, %v3855
      %v3857 = vpop.f32.mrb[0].mxu0
      %v3858 = vpop.f32.mrb[0].mxu0
      %v3859 = vadd.f32 %v3771, %v3858
      %v3860 = vpop.f32.mrb[0].mxu0
      %3861 = vmatprep.mubr.bf16.mxu0 0
      %3862 = vmatmul.mubr.bf16.gmra.mrb[0].mxu0 %v3755
      %v3863 = vpop.f32.mrb[0].mxu0
      %v3864 = vadd.f32 %v3771, %v3863
      %v3865 = vpop.f32.mrb[0].mxu0
      %v3866 = vpop.f32.mrb[0].mxu0
      %v3867 = vadd.f32 %v3771, %v3866
      %v3868 = vpop.f32.mrb[0].mxu0
      %3869 = vmatprep.mubr.bf16.mxu0 0
      %3870 = vmatmul.mubr.bf16.gmra.mrb[0].mxu0 %v3756
      %v3871 = vpop.f32.mrb[0].mxu0
      %v3872 = vadd.f32 %v3771, %v3871
      %v3873 = vpop.f32.mrb[0].mxu0
      %v3874 = vpop.f32.mrb[0].mxu0
      %v3875 = vadd.f32 %v3771, %v3874
      %v3876 = vpop.f32.mrb[0].mxu0
      %3877 = vmatprep.mubr.bf16.mxu0 0
      %3878 = vmatmul.mubr.bf16.gmra.mrb[0].mxu0 %v3757
      %v3879 = vpop.f32.mrb[0].mxu0
      %v3880 = vadd.f32 %v3771, %v3879
      %v3881 = vpop.f32.mrb[0].mxu0
      %v3882 = vpop.f32.mrb[0].mxu0
      %v3883 = vadd.f32 %v3771, %v3882
      %v3884 = vpop.f32.mrb[0].mxu0
      %3885 = vmatprep.mubr.bf16.mxu0 0
      %3886 = vmatmul.mubr.bf16.gmra.mrb[0].mxu0 %v3758
      %v3887 = vpop.f32.mrb[0].mxu0
      %v3888 = vadd.f32 %v3771, %v3887
      %v3889 = vpop.f32.mrb[0].mxu0
      %v3890 = vpop.f32.mrb[0].mxu0
      %v3891 = vadd.f32 %v3771, %v3890
      %v3892 = vpop.f32.mrb[0].mxu0
      %3893 = vmatprep.mubr.bf16.mxu0 0
      %3894 = vmatmul.mubr.bf16.gmra.mrb[0].mxu0 %v3759
      %v3895 = vpop.f32.mrb[0].mxu0
      %v3896 = vadd.f32 %v3771, %v3895
      %v3897 = vpop.f32.mrb[0].mxu0
      %v3898 = vpop.f32.mrb[0].mxu0
      %v3899 = vadd.f32 %v3771, %v3898
      %v3900 = vpop.f32.mrb[0].mxu0
      %3901 = vmatprep.mubr.bf16.mxu0 0
      %3902 = vmatmul.mubr.bf16.gmra.mrb[0].mxu0 %v3760
      %v3903 = vpop.f32.mrb[0].mxu0
      %v3904 = vadd.f32 %v3771, %v3903
      %v3905 = vpop.f32.mrb[0].mxu0
      %v3906 = vpop.f32.mrb[0].mxu0
      %v3907 = vadd.f32 %v3771, %v3906
      %v3908 = vpop.f32.mrb[0].mxu0
      %3909 = vmatprep.mubr.bf16.mxu0 0
      %3910 = vmatmul.mubr.bf16.gmra.mrb[0].mxu0 %v3761
      %v3911 = vpop.f32.mrb[0].mxu0
      %v3912 = vadd.f32 %v3771, %v3911
      %v3913 = vpop.f32.mrb[0].mxu0
      %v3914 = vpop.f32.mrb[0].mxu0
      %v3915 = vadd.f32 %v3771, %v3914
      %v3916 = vpop.f32.mrb[0].mxu0
      %3917 = vmatprep.mubr.bf16.mxu0 0
      %3918 = vmatmul.mubr.bf16.gmra.mrb[0].mxu0 %v3762
      %v3919 = vpop.f32.mrb[0].mxu0
      %v3920 = vadd.f32 %v3771, %v3919
      %v3921 = vpop.f32.mrb[0].mxu0
      %v3922 = vpop.f32.mrb[0].mxu0
      %v3923 = vadd.f32 %v3771, %v3922
      %v3924 = vpop.f32.mrb[0].mxu0
      %3925 = vmatprep.mubr.bf16.mxu0 0
      %3926 = vmatmul.mubr.bf16.gmra.mrb[0].mxu0 %v3763
      %v3927 = vpop.f32.mrb[0].mxu0
      %v3928 = vadd.f32 %v3771, %v3927
      %v3929 = vpop.f32.mrb[0].mxu0
      %v3930 = vpop.f32.mrb[0].mxu0
      %v3931 = vadd.f32 %v3771, %v3930
      %v3932 = vpop.f32.mrb[0].mxu0
      %3933 = vmatprep.mubr.bf16.mxu0 0
      %3934 = vmatmul.mubr.bf16.gmra.mrb[0].mxu0 %v3764
      %v3935 = vpop.f32.mrb[0].mxu0
      %v3936 = vadd.f32 %v3771, %v3935
      %v3937 = vpop.f32.mrb[0].mxu0
      %v3938 = vpop.f32.mrb[0].mxu0
      %v3939 = vadd.f32 %v3771, %v3938
      %v3940 = vpop.f32.mrb[0].mxu0
      %3941 = vmatprep.mubr.bf16.mxu0 0
      %3942 = vmatmul.mubr.bf16.gmra.mrb[0].mxu0 %v3765
      %v3943 = vpop.f32.mrb[0].mxu0
      %v3944 = vadd.f32 %v3771, %v3943
      %v3945 = vpop.f32.mrb[0].mxu0
      %v3946 = vpop.f32.mrb[0].mxu0
      %v3947 = vadd.f32 %v3771, %v3946
      %v3948 = vpop.f32.mrb[0].mxu0
      %3949 = vdwg.mxu0
      %v3950 = vadd.f32 %v3490, %v3856
      %v3951 = vadd.f32 %v3491, %v3859
      %v3952 = vadd.f32 %v3492, %v3864
      %v3953 = vadd.f32 %v3493, %v3867
      %v3954 = vadd.f32 %v3494, %v3872
      %v3955 = vadd.f32 %v3495, %v3875
      %v3956 = vadd.f32 %v3496, %v3880
      %v3957 = vadd.f32 %v3497, %v3883
      %v3958 = vadd.f32 %v3498, %v3888
      %v3959 = vadd.f32 %v3499, %v3891
      %v3960 = vadd.f32 %v3500, %v3896
      %v3961 = vadd.f32 %v3501, %v3899
      %v3962 = vadd.f32 %v3502, %v3904
      %v3963 = vadd.f32 %v3503, %v3907
      %v3964 = vadd.f32 %v3504, %v3912
      %v3965 = vadd.f32 %v3505, %v3915
      %v3966 = vadd.f32 %v3506, %v3920
      %v3967 = vadd.f32 %v3507, %v3923
      %v3968 = vadd.f32 %v3508, %v3928
      %v3969 = vadd.f32 %v3509, %v3931
      %v3970 = vadd.f32 %v3510, %v3936
      %v3971 = vadd.f32 %v3511, %v3939
      %v3972 = vadd.f32 %v3512, %v3944
      %v3973 = vadd.f32 %v3513, %v3947
      %v3974 = vld [vmem:[%s11] sm:$0x1]
      %v3975 = vld [vmem:[%s12] sm:$0x1]
      %v3976 = vsel %vm900, %v3950, 0.0
      %3977 = vadd.xlane.f32.xlu0 %v3976
      %v3978 = vpop.xlane.xlu0 %3977
      %v3979 = vsel %vm900, %v3951, 0.0
      %3980 = vadd.xlane.f32.xlu0 %v3979
      %v3981 = vpop.xlane.xlu0 %3980
      %v3982 = vsel %vm900, %v3952, 0.0
      %3983 = vadd.xlane.f32.xlu0 %v3982
      %v3984 = vpop.xlane.xlu0 %3983
      %v3985 = vsel %vm900, %v3953, 0.0
      %3986 = vadd.xlane.f32.xlu0 %v3985
      %v3987 = vpop.xlane.xlu0 %3986
      %v3988 = vsel %vm900, %v3954, 0.0
      %3989 = vadd.xlane.f32.xlu0 %v3988
      %v3990 = vpop.xlane.xlu0 %3989
      %v3991 = vsel %vm900, %v3955, 0.0
      %3992 = vadd.xlane.f32.xlu0 %v3991
      %v3993 = vpop.xlane.xlu0 %3992
      %v3994 = vsel %vm900, %v3956, 0.0
      %3995 = vadd.xlane.f32.xlu0 %v3994
      %v3996 = vpop.xlane.xlu0 %3995
      %v3997 = vsel %vm900, %v3957, 0.0
      %3998 = vadd.xlane.f32.xlu0 %v3997
      %v3999 = vpop.xlane.xlu0 %3998
      %v4000 = vsel %vm900, %v3958, 0.0
      %4001 = vadd.xlane.f32.xlu0 %v4000
      %v4002 = vpop.xlane.xlu0 %4001
      %v4003 = vsel %vm900, %v3959, 0.0
      %4004 = vadd.xlane.f32.xlu0 %v4003
      %v4005 = vpop.xlane.xlu0 %4004
      %v4006 = vsel %vm900, %v3960, 0.0
      %4007 = vadd.xlane.f32.xlu0 %v4006
      %v4008 = vpop.xlane.xlu0 %4007
      %v4009 = vsel %vm900, %v3961, 0.0
      %4010 = vadd.xlane.f32.xlu0 %v4009
      %v4011 = vpop.xlane.xlu0 %4010
      %v4012 = vsel %vm900, %v3962, 0.0
      %4013 = vadd.xlane.f32.xlu0 %v4012
      %v4014 = vpop.xlane.xlu0 %4013
      %v4015 = vsel %vm900, %v3963, 0.0
      %4016 = vadd.xlane.f32.xlu0 %v4015
      %v4017 = vpop.xlane.xlu0 %4016
      %v4018 = vsel %vm900, %v3964, 0.0
      %4019 = vadd.xlane.f32.xlu0 %v4018
      %v4020 = vpop.xlane.xlu0 %4019
      %v4021 = vsel %vm900, %v3965, 0.0
      %4022 = vadd.xlane.f32.xlu0 %v4021
      %v4023 = vpop.xlane.xlu0 %4022
      %v4024 = vsel %vm900, %v3966, 0.0
      %4025 = vadd.xlane.f32.xlu0 %v4024
      %v4026 = vpop.xlane.xlu0 %4025
      %v4027 = vsel %vm900, %v3967, 0.0
      %4028 = vadd.xlane.f32.xlu0 %v4027
      %v4029 = vpop.xlane.xlu0 %4028
      %v4030 = vsel %vm900, %v3968, 0.0
      %4031 = vadd.xlane.f32.xlu0 %v4030
      %v4032 = vpop.xlane.xlu0 %4031
      %v4033 = vsel %vm900, %v3969, 0.0
      %4034 = vadd.xlane.f32.xlu0 %v4033
      %v4035 = vpop.xlane.xlu0 %4034
      %v4036 = vsel %vm900, %v3970, 0.0
      %4037 = vadd.xlane.f32.xlu0 %v4036
      %v4038 = vpop.xlane.xlu0 %4037
      %v4039 = vsel %vm900, %v3971, 0.0
      %4040 = vadd.xlane.f32.xlu0 %v4039
      %v4041 = vpop.xlane.xlu0 %4040
      %v4042 = vsel %vm900, %v3972, 0.0
      %4043 = vadd.xlane.f32.xlu0 %v4042
      %v4044 = vpop.xlane.xlu0 %4043
      %v4045 = vsel %vm900, %v3973, 0.0
      %4046 = vadd.xlane.f32.xlu0 %v4045
      %v4047 = vpop.xlane.xlu0 %4046
      %v4048 = vmul.f32 %v3978, %v973
      %v4049 = vmul.f32 %v3981, %v973
      %v4050 = vmul.f32 %v3984, %v973
      %v4051 = vmul.f32 %v3987, %v973
      %v4052 = vmul.f32 %v3990, %v973
      %v4053 = vmul.f32 %v3993, %v973
      %v4054 = vmul.f32 %v3996, %v973
      %v4055 = vmul.f32 %v3999, %v973
      %v4056 = vmul.f32 %v4002, %v973
      %v4057 = vmul.f32 %v4005, %v973
      %v4058 = vmul.f32 %v4008, %v973
      %v4059 = vmul.f32 %v4011, %v973
      %v4060 = vmul.f32 %v4014, %v973
      %v4061 = vmul.f32 %v4017, %v973
      %v4062 = vmul.f32 %v4020, %v973
      %v4063 = vmul.f32 %v4023, %v973
      %v4064 = vmul.f32 %v4026, %v973
      %v4065 = vmul.f32 %v4029, %v973
      %v4066 = vmul.f32 %v4032, %v973
      %v4067 = vmul.f32 %v4035, %v973
      %v4068 = vmul.f32 %v4038, %v973
      %v4069 = vmul.f32 %v4041, %v973
      %v4070 = vmul.f32 %v4044, %v973
      %v4071 = vmul.f32 %v4047, %v973
      %v4072 = vmul.f32 %v3950, %v3950
      %v4073 = vmul.f32 %v3951, %v3951
      %v4074 = vmul.f32 %v3952, %v3952
      %v4075 = vmul.f32 %v3953, %v3953
      %v4076 = vmul.f32 %v3954, %v3954
      %v4077 = vmul.f32 %v3955, %v3955
      %v4078 = vmul.f32 %v3956, %v3956
      %v4079 = vmul.f32 %v3957, %v3957
      %v4080 = vmul.f32 %v3958, %v3958
      %v4081 = vmul.f32 %v3959, %v3959
      %v4082 = vmul.f32 %v3960, %v3960
      %v4083 = vmul.f32 %v3961, %v3961
      %v4084 = vmul.f32 %v3962, %v3962
      %v4085 = vmul.f32 %v3963, %v3963
      %v4086 = vmul.f32 %v3964, %v3964
      %v4087 = vmul.f32 %v3965, %v3965
      %v4088 = vmul.f32 %v3966, %v3966
      %v4089 = vmul.f32 %v3967, %v3967
      %v4090 = vmul.f32 %v3968, %v3968
      %v4091 = vmul.f32 %v3969, %v3969
      %v4092 = vmul.f32 %v3970, %v3970
      %v4093 = vmul.f32 %v3971, %v3971
      %v4094 = vmul.f32 %v3972, %v3972
      %v4095 = vmul.f32 %v3973, %v3973
      %v4096 = vsel %vm900, %v4072, 0.0
      %4097 = vadd.xlane.f32.xlu0 %v4096
      %v4098 = vpop.xlane.xlu0 %4097
      %v4099 = vsel %vm900, %v4073, 0.0
      %4100 = vadd.xlane.f32.xlu0 %v4099
      %v4101 = vpop.xlane.xlu0 %4100
      %v4102 = vsel %vm900, %v4074, 0.0
      %4103 = vadd.xlane.f32.xlu0 %v4102
      %v4104 = vpop.xlane.xlu0 %4103
      %v4105 = vsel %vm900, %v4075, 0.0
      %4106 = vadd.xlane.f32.xlu0 %v4105
      %v4107 = vpop.xlane.xlu0 %4106
      %v4108 = vsel %vm900, %v4076, 0.0
      %4109 = vadd.xlane.f32.xlu0 %v4108
      %v4110 = vpop.xlane.xlu0 %4109
      %v4111 = vsel %vm900, %v4077, 0.0
      %4112 = vadd.xlane.f32.xlu0 %v4111
      %v4113 = vpop.xlane.xlu0 %4112
      %v4114 = vsel %vm900, %v4078, 0.0
      %4115 = vadd.xlane.f32.xlu0 %v4114
      %v4116 = vpop.xlane.xlu0 %4115
      %v4117 = vsel %vm900, %v4079, 0.0
      %4118 = vadd.xlane.f32.xlu0 %v4117
      %v4119 = vpop.xlane.xlu0 %4118
      %v4120 = vsel %vm900, %v4080, 0.0
      %4121 = vadd.xlane.f32.xlu0 %v4120
      %v4122 = vpop.xlane.xlu0 %4121
      %v4123 = vsel %vm900, %v4081, 0.0
      %4124 = vadd.xlane.f32.xlu0 %v4123
      %v4125 = vpop.xlane.xlu0 %4124
      %v4126 = vsel %vm900, %v4082, 0.0
      %4127 = vadd.xlane.f32.xlu0 %v4126
      %v4128 = vpop.xlane.xlu0 %4127
      %v4129 = vsel %vm900, %v4083, 0.0
      %4130 = vadd.xlane.f32.xlu0 %v4129
      %v4131 = vpop.xlane.xlu0 %4130
      %v4132 = vsel %vm900, %v4084, 0.0
      %4133 = vadd.xlane.f32.xlu0 %v4132
      %v4134 = vpop.xlane.xlu0 %4133
      %v4135 = vsel %vm900, %v4085, 0.0
      %4136 = vadd.xlane.f32.xlu0 %v4135
      %v4137 = vpop.xlane.xlu0 %4136
      %v4138 = vsel %vm900, %v4086, 0.0
      %4139 = vadd.xlane.f32.xlu0 %v4138
      %v4140 = vpop.xlane.xlu0 %4139
      %v4141 = vsel %vm900, %v4087, 0.0
      %4142 = vadd.xlane.f32.xlu0 %v4141
      %v4143 = vpop.xlane.xlu0 %4142
      %v4144 = vsel %vm900, %v4088, 0.0
      %4145 = vadd.xlane.f32.xlu0 %v4144
      %v4146 = vpop.xlane.xlu0 %4145
      %v4147 = vsel %vm900, %v4089, 0.0
      %4148 = vadd.xlane.f32.xlu0 %v4147
      %v4149 = vpop.xlane.xlu0 %4148
      %v4150 = vsel %vm900, %v4090, 0.0
      %4151 = vadd.xlane.f32.xlu0 %v4150
      %v4152 = vpop.xlane.xlu0 %4151
      %v4153 = vsel %vm900, %v4091, 0.0
      %4154 = vadd.xlane.f32.xlu0 %v4153
      %v4155 = vpop.xlane.xlu0 %4154
      %v4156 = vsel %vm900, %v4092, 0.0
      %4157 = vadd.xlane.f32.xlu0 %v4156
      %v4158 = vpop.xlane.xlu0 %4157
      %v4159 = vsel %vm900, %v4093, 0.0
      %4160 = vadd.xlane.f32.xlu0 %v4159
      %v4161 = vpop.xlane.xlu0 %4160
      %v4162 = vsel %vm900, %v4094, 0.0
      %4163 = vadd.xlane.f32.xlu0 %v4162
      %v4164 = vpop.xlane.xlu0 %4163
      %v4165 = vsel %vm900, %v4095, 0.0
      %4166 = vadd.xlane.f32.xlu0 %v4165
      %v4167 = vpop.xlane.xlu0 %4166
      %v4168 = vmul.f32 %v4098, %v973
      %v4169 = vmul.f32 %v4101, %v973
      %v4170 = vmul.f32 %v4104, %v973
      %v4171 = vmul.f32 %v4107, %v973
      %v4172 = vmul.f32 %v4110, %v973
      %v4173 = vmul.f32 %v4113, %v973
      %v4174 = vmul.f32 %v4116, %v973
      %v4175 = vmul.f32 %v4119, %v973
      %v4176 = vmul.f32 %v4122, %v973
      %v4177 = vmul.f32 %v4125, %v973
      %v4178 = vmul.f32 %v4128, %v973
      %v4179 = vmul.f32 %v4131, %v973
      %v4180 = vmul.f32 %v4134, %v973
      %v4181 = vmul.f32 %v4137, %v973
      %v4182 = vmul.f32 %v4140, %v973
      %v4183 = vmul.f32 %v4143, %v973
      %v4184 = vmul.f32 %v4146, %v973
      %v4185 = vmul.f32 %v4149, %v973
      %v4186 = vmul.f32 %v4152, %v973
      %v4187 = vmul.f32 %v4155, %v973
      %v4188 = vmul.f32 %v4158, %v973
      %v4189 = vmul.f32 %v4161, %v973
      %v4190 = vmul.f32 %v4164, %v973
      %v4191 = vmul.f32 %v4167, %v973
      %v4192 = vmul.f32 %v4048, %v4048
      %v4193 = vmul.f32 %v4049, %v4049
      %v4194 = vmul.f32 %v4050, %v4050
      %v4195 = vmul.f32 %v4051, %v4051
      %v4196 = vmul.f32 %v4052, %v4052
      %v4197 = vmul.f32 %v4053, %v4053
      %v4198 = vmul.f32 %v4054, %v4054
      %v4199 = vmul.f32 %v4055, %v4055
      %v4200 = vmul.f32 %v4056, %v4056
      %v4201 = vmul.f32 %v4057, %v4057
      %v4202 = vmul.f32 %v4058, %v4058
      %v4203 = vmul.f32 %v4059, %v4059
      %v4204 = vmul.f32 %v4060, %v4060
      %v4205 = vmul.f32 %v4061, %v4061
      %v4206 = vmul.f32 %v4062, %v4062
      %v4207 = vmul.f32 %v4063, %v4063
      %v4208 = vmul.f32 %v4064, %v4064
      %v4209 = vmul.f32 %v4065, %v4065
      %v4210 = vmul.f32 %v4066, %v4066
      %v4211 = vmul.f32 %v4067, %v4067
      %v4212 = vmul.f32 %v4068, %v4068
      %v4213 = vmul.f32 %v4069, %v4069
      %v4214 = vmul.f32 %v4070, %v4070
      %v4215 = vmul.f32 %v4071, %v4071
      %v4216 = vsub.f32 %v4168, %v4192
      %v4217 = vsub.f32 %v4169, %v4193
      %v4218 = vsub.f32 %v4170, %v4194
      %v4219 = vsub.f32 %v4171, %v4195
      %v4220 = vsub.f32 %v4172, %v4196
      %v4221 = vsub.f32 %v4173, %v4197
      %v4222 = vsub.f32 %v4174, %v4198
      %v4223 = vsub.f32 %v4175, %v4199
      %v4224 = vsub.f32 %v4176, %v4200
      %v4225 = vsub.f32 %v4177, %v4201
      %v4226 = vsub.f32 %v4178, %v4202
      %v4227 = vsub.f32 %v4179, %v4203
      %v4228 = vsub.f32 %v4180, %v4204
      %v4229 = vsub.f32 %v4181, %v4205
      %v4230 = vsub.f32 %v4182, %v4206
      %v4231 = vsub.f32 %v4183, %v4207
      %v4232 = vsub.f32 %v4184, %v4208
      %v4233 = vsub.f32 %v4185, %v4209
      %v4234 = vsub.f32 %v4186, %v4210
      %v4235 = vsub.f32 %v4187, %v4211
      %v4236 = vsub.f32 %v4188, %v4212
      %v4237 = vsub.f32 %v4189, %v4213
      %v4238 = vsub.f32 %v4190, %v4214
      %v4239 = vsub.f32 %v4191, %v4215
      %v4240 = vsub.f32 %v3950, %v4048
      %v4241 = vsub.f32 %v3951, %v4049
      %v4242 = vsub.f32 %v3952, %v4050
      %v4243 = vsub.f32 %v3953, %v4051
      %v4244 = vsub.f32 %v3954, %v4052
      %v4245 = vsub.f32 %v3955, %v4053
      %v4246 = vsub.f32 %v3956, %v4054
      %v4247 = vsub.f32 %v3957, %v4055
      %v4248 = vsub.f32 %v3958, %v4056
      %v4249 = vsub.f32 %v3959, %v4057
      %v4250 = vsub.f32 %v3960, %v4058
      %v4251 = vsub.f32 %v3961, %v4059
      %v4252 = vsub.f32 %v3962, %v4060
      %v4253 = vsub.f32 %v3963, %v4061
      %v4254 = vsub.f32 %v3964, %v4062
      %v4255 = vsub.f32 %v3965, %v4063
      %v4256 = vsub.f32 %v3966, %v4064
      %v4257 = vsub.f32 %v3967, %v4065
      %v4258 = vsub.f32 %v3968, %v4066
      %v4259 = vsub.f32 %v3969, %v4067
      %v4260 = vsub.f32 %v3970, %v4068
      %v4261 = vsub.f32 %v3971, %v4069
      %v4262 = vsub.f32 %v3972, %v4070
      %v4263 = vsub.f32 %v3973, %v4071
      %v4264 = vadd.f32 %v4216, 1e-05
      %v4265 = vadd.f32 %v4217, 1e-05
      %v4266 = vadd.f32 %v4218, 1e-05
      %v4267 = vadd.f32 %v4219, 1e-05
      %v4268 = vadd.f32 %v4220, 1e-05
      %v4269 = vadd.f32 %v4221, 1e-05
      %v4270 = vadd.f32 %v4222, 1e-05
      %v4271 = vadd.f32 %v4223, 1e-05
      %v4272 = vadd.f32 %v4224, 1e-05
      %v4273 = vadd.f32 %v4225, 1e-05
      %v4274 = vadd.f32 %v4226, 1e-05
      %v4275 = vadd.f32 %v4227, 1e-05
      %v4276 = vadd.f32 %v4228, 1e-05
      %v4277 = vadd.f32 %v4229, 1e-05
      %v4278 = vadd.f32 %v4230, 1e-05
      %v4279 = vadd.f32 %v4231, 1e-05
      %v4280 = vadd.f32 %v4232, 1e-05
      %v4281 = vadd.f32 %v4233, 1e-05
      %v4282 = vadd.f32 %v4234, 1e-05
      %v4283 = vadd.f32 %v4235, 1e-05
      %v4284 = vadd.f32 %v4236, 1e-05
      %v4285 = vadd.f32 %v4237, 1e-05
      %v4286 = vadd.f32 %v4238, 1e-05
      %v4287 = vadd.f32 %v4239, 1e-05
      %v4288 = vrsqrt.pop %v4264
      %v4289 = vrsqrt.pop %v4265
      %v4290 = vrsqrt.pop %v4266
      %v4291 = vrsqrt.pop %v4267
      %v4292 = vrsqrt.pop %v4268
      %v4293 = vrsqrt.pop %v4269
      %v4294 = vrsqrt.pop %v4270
      %v4295 = vrsqrt.pop %v4271
      %v4296 = vrsqrt.pop %v4272
      %v4297 = vrsqrt.pop %v4273
      %v4298 = vrsqrt.pop %v4274
      %v4299 = vrsqrt.pop %v4275
      %v4300 = vrsqrt.pop %v4276
      %v4301 = vrsqrt.pop %v4277
      %v4302 = vrsqrt.pop %v4278
      %v4303 = vrsqrt.pop %v4279
      %v4304 = vrsqrt.pop %v4280
      %v4305 = vrsqrt.pop %v4281
      %v4306 = vrsqrt.pop %v4282
      %v4307 = vrsqrt.pop %v4283
      %v4308 = vrsqrt.pop %v4284
      %v4309 = vrsqrt.pop %v4285
      %v4310 = vrsqrt.pop %v4286
      %v4311 = vrsqrt.pop %v4287
      %v4312 = vmul.f32 %v4240, %v4288
      %v4313 = vmul.f32 %v4241, %v4289
      %v4314 = vmul.f32 %v4242, %v4290
      %v4315 = vmul.f32 %v4243, %v4291
      %v4316 = vmul.f32 %v4244, %v4292
      %v4317 = vmul.f32 %v4245, %v4293
      %v4318 = vmul.f32 %v4246, %v4294
      %v4319 = vmul.f32 %v4247, %v4295
      %v4320 = vmul.f32 %v4248, %v4296
      %v4321 = vmul.f32 %v4249, %v4297
      %v4322 = vmul.f32 %v4250, %v4298
      %v4323 = vmul.f32 %v4251, %v4299
      %v4324 = vmul.f32 %v4252, %v4300
      %v4325 = vmul.f32 %v4253, %v4301
      %v4326 = vmul.f32 %v4254, %v4302
      %v4327 = vmul.f32 %v4255, %v4303
      %v4328 = vmul.f32 %v4256, %v4304
      %v4329 = vmul.f32 %v4257, %v4305
      %v4330 = vmul.f32 %v4258, %v4306
      %v4331 = vmul.f32 %v4259, %v4307
      %v4332 = vmul.f32 %v4260, %v4308
      %v4333 = vmul.f32 %v4261, %v4309
      %v4334 = vmul.f32 %v4262, %v4310
      %v4335 = vmul.f32 %v4263, %v4311
      %v4337 = vlaneseq
      %v4338 = vshrl.u32 %v4337, 7
      %v4339 = vsub.s32 0, %v4338
      %v4340 = vrot.slane %v3974, %v4339
      %v4342 = vmul.f32 %v4312, %v4340
      %v4343 = vmul.f32 %v4313, %v4340
      %v4344 = vmul.f32 %v4314, %v4340
      %v4345 = vmul.f32 %v4315, %v4340
      %v4346 = vmul.f32 %v4316, %v4340
      %v4347 = vmul.f32 %v4317, %v4340
      %v4348 = vmul.f32 %v4318, %v4340
      %v4349 = vmul.f32 %v4319, %v4340
      %v4350 = vmul.f32 %v4320, %v4340
      %v4351 = vmul.f32 %v4321, %v4340
      %v4352 = vmul.f32 %v4322, %v4340
      %v4353 = vmul.f32 %v4323, %v4340
      %v4354 = vmul.f32 %v4324, %v4340
      %v4355 = vmul.f32 %v4325, %v4340
      %v4356 = vmul.f32 %v4326, %v4340
      %v4357 = vmul.f32 %v4327, %v4340
      %v4358 = vmul.f32 %v4328, %v4340
      %v4359 = vmul.f32 %v4329, %v4340
      %v4360 = vmul.f32 %v4330, %v4340
      %v4361 = vmul.f32 %v4331, %v4340
      %v4362 = vmul.f32 %v4332, %v4340
      %v4363 = vmul.f32 %v4333, %v4340
      %v4364 = vmul.f32 %v4334, %v4340
      %v4365 = vmul.f32 %v4335, %v4340
      %v4367 = vlaneseq
      %v4368 = vshrl.u32 %v4367, 7
      %v4369 = vsub.s32 0, %v4368
      %v4370 = vrot.slane %v3975, %v4369
      %v4372 = vadd.f32 %v4342, %v4370
      %v4373 = vadd.f32 %v4343, %v4370
      %v4374 = vadd.f32 %v4344, %v4370
      %v4375 = vadd.f32 %v4345, %v4370
      %v4376 = vadd.f32 %v4346, %v4370
      %v4377 = vadd.f32 %v4347, %v4370
      %v4378 = vadd.f32 %v4348, %v4370
      %v4379 = vadd.f32 %v4349, %v4370
      %v4380 = vadd.f32 %v4350, %v4370
      %v4381 = vadd.f32 %v4351, %v4370
      %v4382 = vadd.f32 %v4352, %v4370
      %v4383 = vadd.f32 %v4353, %v4370
      %v4384 = vadd.f32 %v4354, %v4370
      %v4385 = vadd.f32 %v4355, %v4370
      %v4386 = vadd.f32 %v4356, %v4370
      %v4387 = vadd.f32 %v4357, %v4370
      %v4388 = vadd.f32 %v4358, %v4370
      %v4389 = vadd.f32 %v4359, %v4370
      %v4390 = vadd.f32 %v4360, %v4370
      %v4391 = vadd.f32 %v4361, %v4370
      %v4392 = vadd.f32 %v4362, %v4370
      %v4393 = vadd.f32 %v4363, %v4370
      %v4394 = vadd.f32 %v4364, %v4370
      %v4395 = vadd.f32 %v4365, %v4370
      %s4396 = scalar_lea.vmem %s5, 16
      %v4397 = vld [vmem:[%s4396] sm:$0xf]
      %v4398 = vld [vmem:[%s4396 + $0x4] sm:$0xf]
      %v4399 = vld [vmem:[%s4396 + $0x8] sm:$0xf]
      %v4400 = vld [vmem:[%s4396 + $0xc] sm:$0xf]
      %v4401 = vpack.c.bf16 %v4373, %v4372
      %v4402 = vpack.c.bf16 %v4375, %v4374
      %v4403 = vpack.c.bf16 %v4377, %v4376
      %v4404 = vpack.c.bf16 %v4379, %v4378
      %v4405 = vpack.c.bf16 %v4381, %v4380
      %v4406 = vpack.c.bf16 %v4383, %v4382
      %v4407 = vpack.c.bf16 %v4385, %v4384
      %v4408 = vpack.c.bf16 %v4387, %v4386
      %v4409 = vpack.c.bf16 %v4389, %v4388
      %v4410 = vpack.c.bf16 %v4391, %v4390
      %v4411 = vpack.c.bf16 %v4393, %v4392
      %v4412 = vpack.c.bf16 %v4395, %v4394
      %s4413 = scalar_lea.vmem %s6, 1
      %v4414 = vld [vmem:[%s4413] sm:$0x1]
      %v4416 = vlaneseq
      %v4417 = vshrl.u32 %v4416, 7
      %v4418 = vsub.s32 0, %v4417
      %v4419 = vrot.slane %v4414, %v4418
      %v4425 = vunpack.c.l.b16 %v4397
      %v4426 = vunpack.c.l.b16 %v4398
      %v4427 = vunpack.c.l.b16 %v4399
      %v4428 = vunpack.c.l.b16 %v4400
      %v4429 = vpack.c.b16 %v4426, %v4425
      %v4430 = vpack.c.b16 %v4428, %v4427
      %v4434 = vsel %vm900, %v4401, 0
      %v4437 = vsel %vm900, %v4402, 0
      %v4440 = vsel %vm900, %v4403, 0
      %v4443 = vsel %vm900, %v4404, 0
      %v4446 = vsel %vm900, %v4405, 0
      %v4449 = vsel %vm900, %v4406, 0
      %v4452 = vsel %vm900, %v4407, 0
      %v4455 = vsel %vm900, %v4408, 0
      %v4458 = vsel %vm900, %v4409, 0
      %v4461 = vsel %vm900, %v4410, 0
      %v4464 = vsel %vm900, %v4411, 0
      %v4467 = vsel %vm900, %v4412, 0
      %4469 = vmatprep.subr.bf16.mxu0 0
      %4470 = vmatpush1.bf16.msra.mxu0 %v4429
      %4471 = vmatprep.subr.bf16.mxu0 0
      %4472 = vmatpush1.bf16.msra.mxu0 %v4430
      %4473 = vmatprep.subr.bf16.mxu0 0
      %4474 = vmatpush1.bf16.msra.mxu0 0
      %4475 = vmatprep.subr.bf16.mxu0 0
      %4476 = vmatpush1.bf16.msra.mxu0 0
      %4477 = vmatprep.subr.bf16.mxu0 0
      %4478 = vmatpush1.bf16.msra.mxu0 0
      %4479 = vmatprep.subr.bf16.mxu0 0
      %4480 = vmatpush1.bf16.msra.mxu0 0
      %4481 = vmatprep.subr.bf16.mxu0 0
      %4482 = vmatpush1.bf16.msra.mxu0 0
      %4483 = vmatprep.subr.bf16.mxu0 0
      %4484 = vmatpush1.bf16.msra.mxu0 0
      %4485 = vmatprep.subr.bf16.mxu0 0
      %4486 = vmatpush1.bf16.msra.mxu0 0
      %4487 = vmatprep.subr.bf16.mxu0 0
      %4488 = vmatpush1.bf16.msra.mxu0 0
      %4489 = vmatprep.subr.bf16.mxu0 0
      %4490 = vmatpush1.bf16.msra.mxu0 0
      %4491 = vmatprep.subr.bf16.mxu0 0
      %4492 = vmatpush1.bf16.msra.mxu0 0
      %4493 = vmatprep.subr.bf16.mxu0 0
      %4494 = vmatpush1.bf16.msra.mxu0 0
      %4495 = vmatprep.subr.bf16.mxu0 0
      %4496 = vmatpush1.bf16.msra.mxu0 0
      %4497 = vmatprep.subr.bf16.mxu0 0
      %4498 = vmatpush1.bf16.msra.mxu0 0
      %4499 = vmatprep.subr.bf16.mxu0 0
      %4500 = vmatpush1.bf16.msra.mxu0 0
      %4501 = vmatprep.mubr.bf16.mxu0 0
      %4502 = vmatmul.mubr.bf16.gmra.mrb[0].mxu0 %v4434
      %v4503 = vpop.f32.mrb[0].mxu0
      %v4504 = vadd.f32 %v4419, %v4503
      %v4505 = vpop.f32.mrb[0].mxu0
      %v4506 = vpop.f32.mrb[0].mxu0
      %v4507 = vadd.f32 %v4419, %v4506
      %v4508 = vpop.f32.mrb[0].mxu0
      %4509 = vmatprep.mubr.bf16.mxu0 0
      %4510 = vmatmul.mubr.bf16.gmra.mrb[0].mxu0 %v4437
      %v4511 = vpop.f32.mrb[0].mxu0
      %v4512 = vadd.f32 %v4419, %v4511
      %v4513 = vpop.f32.mrb[0].mxu0
      %v4514 = vpop.f32.mrb[0].mxu0
      %v4515 = vadd.f32 %v4419, %v4514
      %v4516 = vpop.f32.mrb[0].mxu0
      %4517 = vmatprep.mubr.bf16.mxu0 0
      %4518 = vmatmul.mubr.bf16.gmra.mrb[0].mxu0 %v4440
      %v4519 = vpop.f32.mrb[0].mxu0
      %v4520 = vadd.f32 %v4419, %v4519
      %v4521 = vpop.f32.mrb[0].mxu0
      %v4522 = vpop.f32.mrb[0].mxu0
      %v4523 = vadd.f32 %v4419, %v4522
      %v4524 = vpop.f32.mrb[0].mxu0
      %4525 = vmatprep.mubr.bf16.mxu0 0
      %4526 = vmatmul.mubr.bf16.gmra.mrb[0].mxu0 %v4443
      %v4527 = vpop.f32.mrb[0].mxu0
      %v4528 = vadd.f32 %v4419, %v4527
      %v4529 = vpop.f32.mrb[0].mxu0
      %v4530 = vpop.f32.mrb[0].mxu0
      %v4531 = vadd.f32 %v4419, %v4530
      %v4532 = vpop.f32.mrb[0].mxu0
      %4533 = vmatprep.mubr.bf16.mxu0 0
      %4534 = vmatmul.mubr.bf16.gmra.mrb[0].mxu0 %v4446
      %v4535 = vpop.f32.mrb[0].mxu0
      %v4536 = vadd.f32 %v4419, %v4535
      %v4537 = vpop.f32.mrb[0].mxu0
      %v4538 = vpop.f32.mrb[0].mxu0
      %v4539 = vadd.f32 %v4419, %v4538
      %v4540 = vpop.f32.mrb[0].mxu0
      %4541 = vmatprep.mubr.bf16.mxu0 0
      %4542 = vmatmul.mubr.bf16.gmra.mrb[0].mxu0 %v4449
      %v4543 = vpop.f32.mrb[0].mxu0
      %v4544 = vadd.f32 %v4419, %v4543
      %v4545 = vpop.f32.mrb[0].mxu0
      %v4546 = vpop.f32.mrb[0].mxu0
      %v4547 = vadd.f32 %v4419, %v4546
      %v4548 = vpop.f32.mrb[0].mxu0
      %4549 = vmatprep.mubr.bf16.mxu0 0
      %4550 = vmatmul.mubr.bf16.gmra.mrb[0].mxu0 %v4452
      %v4551 = vpop.f32.mrb[0].mxu0
      %v4552 = vadd.f32 %v4419, %v4551
      %v4553 = vpop.f32.mrb[0].mxu0
      %v4554 = vpop.f32.mrb[0].mxu0
      %v4555 = vadd.f32 %v4419, %v4554
      %v4556 = vpop.f32.mrb[0].mxu0
      %4557 = vmatprep.mubr.bf16.mxu0 0
      %4558 = vmatmul.mubr.bf16.gmra.mrb[0].mxu0 %v4455
      %v4559 = vpop.f32.mrb[0].mxu0
      %v4560 = vadd.f32 %v4419, %v4559
      %v4561 = vpop.f32.mrb[0].mxu0
      %v4562 = vpop.f32.mrb[0].mxu0
      %v4563 = vadd.f32 %v4419, %v4562
      %v4564 = vpop.f32.mrb[0].mxu0
      %4565 = vmatprep.mubr.bf16.mxu0 0
      %4566 = vmatmul.mubr.bf16.gmra.mrb[0].mxu0 %v4458
      %v4567 = vpop.f32.mrb[0].mxu0
      %v4568 = vadd.f32 %v4419, %v4567
      %v4569 = vpop.f32.mrb[0].mxu0
      %v4570 = vpop.f32.mrb[0].mxu0
      %v4571 = vadd.f32 %v4419, %v4570
      %v4572 = vpop.f32.mrb[0].mxu0
      %4573 = vmatprep.mubr.bf16.mxu0 0
      %4574 = vmatmul.mubr.bf16.gmra.mrb[0].mxu0 %v4461
      %v4575 = vpop.f32.mrb[0].mxu0
      %v4576 = vadd.f32 %v4419, %v4575
      %v4577 = vpop.f32.mrb[0].mxu0
      %v4578 = vpop.f32.mrb[0].mxu0
      %v4579 = vadd.f32 %v4419, %v4578
      %v4580 = vpop.f32.mrb[0].mxu0
      %4581 = vmatprep.mubr.bf16.mxu0 0
      %4582 = vmatmul.mubr.bf16.gmra.mrb[0].mxu0 %v4464
      %v4583 = vpop.f32.mrb[0].mxu0
      %v4584 = vadd.f32 %v4419, %v4583
      %v4585 = vpop.f32.mrb[0].mxu0
      %v4586 = vpop.f32.mrb[0].mxu0
      %v4587 = vadd.f32 %v4419, %v4586
      %v4588 = vpop.f32.mrb[0].mxu0
      %4589 = vmatprep.mubr.bf16.mxu0 0
      %4590 = vmatmul.mubr.bf16.gmra.mrb[0].mxu0 %v4467
      %v4591 = vpop.f32.mrb[0].mxu0
      %v4592 = vadd.f32 %v4419, %v4591
      %v4593 = vpop.f32.mrb[0].mxu0
      %v4594 = vpop.f32.mrb[0].mxu0
      %v4595 = vadd.f32 %v4419, %v4594
      %v4596 = vpop.f32.mrb[0].mxu0
      %4597 = vdwg.mxu0
      %v4598 = vpack.c.bf16 %v4507, %v4504
      %v4599 = vpack.c.bf16 %v4512, %v4512
      %v4600 = vpack.c.bf16 %v4520, %v4515
      %v4601 = vpack.c.bf16 %v4523, %v4523
      %v4602 = vpack.c.bf16 %v4531, %v4528
      %v4603 = vpack.c.bf16 %v4536, %v4536
      %v4604 = vpack.c.bf16 %v4544, %v4539
      %v4605 = vpack.c.bf16 %v4547, %v4547
      %v4606 = vpack.c.bf16 %v4555, %v4552
      %v4607 = vpack.c.bf16 %v4560, %v4560
      %v4608 = vpack.c.bf16 %v4568, %v4563
      %v4609 = vpack.c.bf16 %v4571, %v4571
      %v4610 = vpack.c.bf16 %v4579, %v4576
      %v4611 = vpack.c.bf16 %v4584, %v4584
      %v4612 = vpack.c.bf16 %v4592, %v4587
      %v4613 = vpack.c.bf16 %v4595, %v4595
      %4616 = vrot.lane.b32.xlu0 %v4598, 96
      %v4617 = vpop.permute.xlu0 %4616
      %4618 = vrot.lane.b32.xlu0 %v4599, 96
      %v4619 = vpop.permute.xlu0 %4618
      %v4621 = vsel %vm900, %v4598, 0
      %v4624 = vsel %vm900, %v4599, 0
      %v4627 = vsel %vm900, %v4617, 0
      %v4630 = vsel %vm900, %v4619, 0
      %4632 = vmatprep.subr.bf16.mxu0 0
      %4633 = vmatpush1.bf16.xpose.msra.mxu0 %v4627
      %4634 = vmatprep.subr.bf16.mxu0 0
      %4635 = vmatpush1.bf16.xpose.msra.mxu0 %v4630
      %4636 = vmatprep.subr.bf16.mxu0 0
      %4637 = vmatpush1.bf16.xpose.msra.mxu0 0
      %4638 = vmatprep.subr.bf16.mxu0 0
      %4639 = vmatpush1.bf16.xpose.msra.mxu0 0
      %4640 = vmatprep.subr.bf16.mxu0 0
      %4641 = vmatpush1.bf16.xpose.msra.mxu0 0
      %4642 = vmatprep.subr.bf16.mxu0 0
      %4643 = vmatpush1.bf16.xpose.msra.mxu0 0
      %4644 = vmatprep.subr.bf16.mxu0 0
      %4645 = vmatpush1.bf16.xpose.msra.mxu0 0
      %4646 = vmatprep.subr.bf16.mxu0 0
      %4647 = vmatpush1.bf16.xpose.msra.mxu0 0
      %4648 = vmatprep.subr.bf16.mxu0 0
      %4649 = vmatpush1.bf16.xpose.msra.mxu0 0
      %4650 = vmatprep.subr.bf16.mxu0 0
      %4651 = vmatpush1.bf16.xpose.msra.mxu0 0
      %4652 = vmatprep.subr.bf16.mxu0 0
      %4653 = vmatpush1.bf16.xpose.msra.mxu0 0
      %4654 = vmatprep.subr.bf16.mxu0 0
      %4655 = vmatpush1.bf16.xpose.msra.mxu0 0
      %4656 = vmatprep.subr.bf16.mxu0 0
      %4657 = vmatpush1.bf16.xpose.msra.mxu0 0
      %4658 = vmatprep.subr.bf16.mxu0 0
      %4659 = vmatpush1.bf16.xpose.msra.mxu0 0
      %4660 = vmatprep.subr.bf16.mxu0 0
      %4661 = vmatpush1.bf16.xpose.msra.mxu0 0
      %4662 = vmatprep.subr.bf16.mxu0 0
      %4663 = vmatpush1.bf16.xpose.msra.mxu0 0
      %4664 = vmatprep.mubr.bf16.mxu0 0
      %4665 = vmatmul.mubr.bf16.gmra.mrb[0].mxu0 %v4621
      %v4666 = vpop.f32.mrb[0].mxu0
      %v4667 = vadd.f32 0.0, %v4666
      %v4668 = vpop.f32.mrb[0].mxu0
      %v4669 = vpop.f32.mrb[0].mxu0
      %v4670 = vadd.f32 0.0, %v4669
      %v4671 = vpop.f32.mrb[0].mxu0
      %4672 = vmatprep.mubr.bf16.mxu0 0
      %4673 = vmatmul.mubr.bf16.gmra.mrb[0].mxu0 %v4624
      %v4674 = vpop.f32.mrb[0].mxu0
      %v4675 = vadd.f32 0.0, %v4674
      %v4676 = vpop.f32.mrb[0].mxu0
      %v4677 = vpop.f32.mrb[0].mxu0
      %v4678 = vpop.f32.mrb[0].mxu0
      %4679 = vdwg.mxu0
      %4682 = vrot.lane.b32.xlu0 %v4600, 96
      %v4683 = vpop.permute.xlu0 %4682
      %4684 = vrot.lane.b32.xlu0 %v4601, 96
      %v4685 = vpop.permute.xlu0 %4684
      %v4687 = vsel %vm900, %v4600, 0
      %v4690 = vsel %vm900, %v4601, 0
      %v4693 = vsel %vm900, %v4683, 0
      %v4696 = vsel %vm900, %v4685, 0
      %4698 = vmatprep.subr.bf16.mxu0 0
      %4699 = vmatpush1.bf16.xpose.msra.mxu0 %v4693
      %4700 = vmatprep.subr.bf16.mxu0 0
      %4701 = vmatpush1.bf16.xpose.msra.mxu0 %v4696
      %4702 = vmatprep.subr.bf16.mxu0 0
      %4703 = vmatpush1.bf16.xpose.msra.mxu0 0
      %4704 = vmatprep.subr.bf16.mxu0 0
      %4705 = vmatpush1.bf16.xpose.msra.mxu0 0
      %4706 = vmatprep.subr.bf16.mxu0 0
      %4707 = vmatpush1.bf16.xpose.msra.mxu0 0
      %4708 = vmatprep.subr.bf16.mxu0 0
      %4709 = vmatpush1.bf16.xpose.msra.mxu0 0
      %4710 = vmatprep.subr.bf16.mxu0 0
      %4711 = vmatpush1.bf16.xpose.msra.mxu0 0
      %4712 = vmatprep.subr.bf16.mxu0 0
      %4713 = vmatpush1.bf16.xpose.msra.mxu0 0
      %4714 = vmatprep.subr.bf16.mxu0 0
      %4715 = vmatpush1.bf16.xpose.msra.mxu0 0
      %4716 = vmatprep.subr.bf16.mxu0 0
      %4717 = vmatpush1.bf16.xpose.msra.mxu0 0
      %4718 = vmatprep.subr.bf16.mxu0 0
      %4719 = vmatpush1.bf16.xpose.msra.mxu0 0
      %4720 = vmatprep.subr.bf16.mxu0 0
      %4721 = vmatpush1.bf16.xpose.msra.mxu0 0
      %4722 = vmatprep.subr.bf16.mxu0 0
      %4723 = vmatpush1.bf16.xpose.msra.mxu0 0
      %4724 = vmatprep.subr.bf16.mxu0 0
      %4725 = vmatpush1.bf16.xpose.msra.mxu0 0
      %4726 = vmatprep.subr.bf16.mxu0 0
      %4727 = vmatpush1.bf16.xpose.msra.mxu0 0
      %4728 = vmatprep.subr.bf16.mxu0 0
      %4729 = vmatpush1.bf16.xpose.msra.mxu0 0
      %4730 = vmatprep.mubr.bf16.mxu0 0
      %4731 = vmatmul.mubr.bf16.gmra.mrb[0].mxu0 %v4687
      %v4732 = vpop.f32.mrb[0].mxu0
      %v4733 = vadd.f32 0.0, %v4732
      %v4734 = vpop.f32.mrb[0].mxu0
      %v4735 = vpop.f32.mrb[0].mxu0
      %v4736 = vadd.f32 0.0, %v4735
      %v4737 = vpop.f32.mrb[0].mxu0
      %4738 = vmatprep.mubr.bf16.mxu0 0
      %4739 = vmatmul.mubr.bf16.gmra.mrb[0].mxu0 %v4690
      %v4740 = vpop.f32.mrb[0].mxu0
      %v4741 = vadd.f32 0.0, %v4740
      %v4742 = vpop.f32.mrb[0].mxu0
      %v4743 = vpop.f32.mrb[0].mxu0
      %v4744 = vpop.f32.mrb[0].mxu0
      %4745 = vdwg.mxu0
      %4748 = vrot.lane.b32.xlu0 %v4602, 96
      %v4749 = vpop.permute.xlu0 %4748
      %4750 = vrot.lane.b32.xlu0 %v4603, 96
      %v4751 = vpop.permute.xlu0 %4750
      %v4753 = vsel %vm900, %v4602, 0
      %v4756 = vsel %vm900, %v4603, 0
      %v4759 = vsel %vm900, %v4749, 0
      %v4762 = vsel %vm900, %v4751, 0
      %4764 = vmatprep.subr.bf16.mxu0 0
      %4765 = vmatpush1.bf16.xpose.msra.mxu0 %v4759
      %4766 = vmatprep.subr.bf16.mxu0 0
      %4767 = vmatpush1.bf16.xpose.msra.mxu0 %v4762
      %4768 = vmatprep.subr.bf16.mxu0 0
      %4769 = vmatpush1.bf16.xpose.msra.mxu0 0
      %4770 = vmatprep.subr.bf16.mxu0 0
      %4771 = vmatpush1.bf16.xpose.msra.mxu0 0
      %4772 = vmatprep.subr.bf16.mxu0 0
      %4773 = vmatpush1.bf16.xpose.msra.mxu0 0
      %4774 = vmatprep.subr.bf16.mxu0 0
      %4775 = vmatpush1.bf16.xpose.msra.mxu0 0
      %4776 = vmatprep.subr.bf16.mxu0 0
      %4777 = vmatpush1.bf16.xpose.msra.mxu0 0
      %4778 = vmatprep.subr.bf16.mxu0 0
      %4779 = vmatpush1.bf16.xpose.msra.mxu0 0
      %4780 = vmatprep.subr.bf16.mxu0 0
      %4781 = vmatpush1.bf16.xpose.msra.mxu0 0
      %4782 = vmatprep.subr.bf16.mxu0 0
      %4783 = vmatpush1.bf16.xpose.msra.mxu0 0
      %4784 = vmatprep.subr.bf16.mxu0 0
      %4785 = vmatpush1.bf16.xpose.msra.mxu0 0
      %4786 = vmatprep.subr.bf16.mxu0 0
      %4787 = vmatpush1.bf16.xpose.msra.mxu0 0
      %4788 = vmatprep.subr.bf16.mxu0 0
      %4789 = vmatpush1.bf16.xpose.msra.mxu0 0
      %4790 = vmatprep.subr.bf16.mxu0 0
      %4791 = vmatpush1.bf16.xpose.msra.mxu0 0
      %4792 = vmatprep.subr.bf16.mxu0 0
      %4793 = vmatpush1.bf16.xpose.msra.mxu0 0
      %4794 = vmatprep.subr.bf16.mxu0 0
      %4795 = vmatpush1.bf16.xpose.msra.mxu0 0
      %4796 = vmatprep.mubr.bf16.mxu0 0
      %4797 = vmatmul.mubr.bf16.gmra.mrb[0].mxu0 %v4753
      %v4798 = vpop.f32.mrb[0].mxu0
      %v4799 = vadd.f32 0.0, %v4798
      %v4800 = vpop.f32.mrb[0].mxu0
      %v4801 = vpop.f32.mrb[0].mxu0
      %v4802 = vadd.f32 0.0, %v4801
      %v4803 = vpop.f32.mrb[0].mxu0
      %4804 = vmatprep.mubr.bf16.mxu0 0
      %4805 = vmatmul.mubr.bf16.gmra.mrb[0].mxu0 %v4756
      %v4806 = vpop.f32.mrb[0].mxu0
      %v4807 = vadd.f32 0.0, %v4806
      %v4808 = vpop.f32.mrb[0].mxu0
      %v4809 = vpop.f32.mrb[0].mxu0
      %v4810 = vpop.f32.mrb[0].mxu0
      %4811 = vdwg.mxu0
      %4814 = vrot.lane.b32.xlu0 %v4604, 96
      %v4815 = vpop.permute.xlu0 %4814
      %4816 = vrot.lane.b32.xlu0 %v4605, 96
      %v4817 = vpop.permute.xlu0 %4816
      %v4819 = vsel %vm900, %v4604, 0
      %v4822 = vsel %vm900, %v4605, 0
      %v4825 = vsel %vm900, %v4815, 0
      %v4828 = vsel %vm900, %v4817, 0
      %4830 = vmatprep.subr.bf16.mxu0 0
      %4831 = vmatpush1.bf16.xpose.msra.mxu0 %v4825
      %4832 = vmatprep.subr.bf16.mxu0 0
      %4833 = vmatpush1.bf16.xpose.msra.mxu0 %v4828
      %4834 = vmatprep.subr.bf16.mxu0 0
      %4835 = vmatpush1.bf16.xpose.msra.mxu0 0
      %4836 = vmatprep.subr.bf16.mxu0 0
      %4837 = vmatpush1.bf16.xpose.msra.mxu0 0
      %4838 = vmatprep.subr.bf16.mxu0 0
      %4839 = vmatpush1.bf16.xpose.msra.mxu0 0
      %4840 = vmatprep.subr.bf16.mxu0 0
      %4841 = vmatpush1.bf16.xpose.msra.mxu0 0
      %4842 = vmatprep.subr.bf16.mxu0 0
      %4843 = vmatpush1.bf16.xpose.msra.mxu0 0
      %4844 = vmatprep.subr.bf16.mxu0 0
      %4845 = vmatpush1.bf16.xpose.msra.mxu0 0
      %4846 = vmatprep.subr.bf16.mxu0 0
      %4847 = vmatpush1.bf16.xpose.msra.mxu0 0
      %4848 = vmatprep.subr.bf16.mxu0 0
      %4849 = vmatpush1.bf16.xpose.msra.mxu0 0
      %4850 = vmatprep.subr.bf16.mxu0 0
      %4851 = vmatpush1.bf16.xpose.msra.mxu0 0
      %4852 = vmatprep.subr.bf16.mxu0 0
      %4853 = vmatpush1.bf16.xpose.msra.mxu0 0
      %4854 = vmatprep.subr.bf16.mxu0 0
      %4855 = vmatpush1.bf16.xpose.msra.mxu0 0
      %4856 = vmatprep.subr.bf16.mxu0 0
      %4857 = vmatpush1.bf16.xpose.msra.mxu0 0
      %4858 = vmatprep.subr.bf16.mxu0 0
      %4859 = vmatpush1.bf16.xpose.msra.mxu0 0
      %4860 = vmatprep.subr.bf16.mxu0 0
      %4861 = vmatpush1.bf16.xpose.msra.mxu0 0
      %4862 = vmatprep.mubr.bf16.mxu0 0
      %4863 = vmatmul.mubr.bf16.gmra.mrb[0].mxu0 %v4819
      %v4864 = vpop.f32.mrb[0].mxu0
      %v4865 = vadd.f32 0.0, %v4864
      %v4866 = vpop.f32.mrb[0].mxu0
      %v4867 = vpop.f32.mrb[0].mxu0
      %v4868 = vadd.f32 0.0, %v4867
      %v4869 = vpop.f32.mrb[0].mxu0
      %4870 = vmatprep.mubr.bf16.mxu0 0
      %4871 = vmatmul.mubr.bf16.gmra.mrb[0].mxu0 %v4822
      %v4872 = vpop.f32.mrb[0].mxu0
      %v4873 = vadd.f32 0.0, %v4872
      %v4874 = vpop.f32.mrb[0].mxu0
      %v4875 = vpop.f32.mrb[0].mxu0
      %v4876 = vpop.f32.mrb[0].mxu0
      %4877 = vdwg.mxu0
      %4880 = vrot.lane.b32.xlu0 %v4606, 96
      %v4881 = vpop.permute.xlu0 %4880
      %4882 = vrot.lane.b32.xlu0 %v4607, 96
      %v4883 = vpop.permute.xlu0 %4882
      %v4885 = vsel %vm900, %v4606, 0
      %v4888 = vsel %vm900, %v4607, 0
      %v4891 = vsel %vm900, %v4881, 0
      %v4894 = vsel %vm900, %v4883, 0
      %4896 = vmatprep.subr.bf16.mxu0 0
      %4897 = vmatpush1.bf16.xpose.msra.mxu0 %v4891
      %4898 = vmatprep.subr.bf16.mxu0 0
      %4899 = vmatpush1.bf16.xpose.msra.mxu0 %v4894
      %4900 = vmatprep.subr.bf16.mxu0 0
      %4901 = vmatpush1.bf16.xpose.msra.mxu0 0
      %4902 = vmatprep.subr.bf16.mxu0 0
      %4903 = vmatpush1.bf16.xpose.msra.mxu0 0
      %4904 = vmatprep.subr.bf16.mxu0 0
      %4905 = vmatpush1.bf16.xpose.msra.mxu0 0
      %4906 = vmatprep.subr.bf16.mxu0 0
      %4907 = vmatpush1.bf16.xpose.msra.mxu0 0
      %4908 = vmatprep.subr.bf16.mxu0 0
      %4909 = vmatpush1.bf16.xpose.msra.mxu0 0
      %4910 = vmatprep.subr.bf16.mxu0 0
      %4911 = vmatpush1.bf16.xpose.msra.mxu0 0
      %4912 = vmatprep.subr.bf16.mxu0 0
      %4913 = vmatpush1.bf16.xpose.msra.mxu0 0
      %4914 = vmatprep.subr.bf16.mxu0 0
      %4915 = vmatpush1.bf16.xpose.msra.mxu0 0
      %4916 = vmatprep.subr.bf16.mxu0 0
      %4917 = vmatpush1.bf16.xpose.msra.mxu0 0
      %4918 = vmatprep.subr.bf16.mxu0 0
      %4919 = vmatpush1.bf16.xpose.msra.mxu0 0
      %4920 = vmatprep.subr.bf16.mxu0 0
      %4921 = vmatpush1.bf16.xpose.msra.mxu0 0
      %4922 = vmatprep.subr.bf16.mxu0 0
      %4923 = vmatpush1.bf16.xpose.msra.mxu0 0
      %4924 = vmatprep.subr.bf16.mxu0 0
      %4925 = vmatpush1.bf16.xpose.msra.mxu0 0
      %4926 = vmatprep.subr.bf16.mxu0 0
      %4927 = vmatpush1.bf16.xpose.msra.mxu0 0
      %4928 = vmatprep.mubr.bf16.mxu0 0
      %4929 = vmatmul.mubr.bf16.gmra.mrb[0].mxu0 %v4885
      %v4930 = vpop.f32.mrb[0].mxu0
      %v4931 = vadd.f32 0.0, %v4930
      %v4932 = vpop.f32.mrb[0].mxu0
      %v4933 = vpop.f32.mrb[0].mxu0
      %v4934 = vadd.f32 0.0, %v4933
      %v4935 = vpop.f32.mrb[0].mxu0
      %4936 = vmatprep.mubr.bf16.mxu0 0
      %4937 = vmatmul.mubr.bf16.gmra.mrb[0].mxu0 %v4888
      %v4938 = vpop.f32.mrb[0].mxu0
      %v4939 = vadd.f32 0.0, %v4938
      %v4940 = vpop.f32.mrb[0].mxu0
      %v4941 = vpop.f32.mrb[0].mxu0
      %v4942 = vpop.f32.mrb[0].mxu0
      %4943 = vdwg.mxu0
      %4946 = vrot.lane.b32.xlu0 %v4608, 96
      %v4947 = vpop.permute.xlu0 %4946
      %4948 = vrot.lane.b32.xlu0 %v4609, 96
      %v4949 = vpop.permute.xlu0 %4948
      %v4951 = vsel %vm900, %v4608, 0
      %v4954 = vsel %vm900, %v4609, 0
      %v4957 = vsel %vm900, %v4947, 0
      %v4960 = vsel %vm900, %v4949, 0
      %4962 = vmatprep.subr.bf16.mxu0 0
      %4963 = vmatpush1.bf16.xpose.msra.mxu0 %v4957
      %4964 = vmatprep.subr.bf16.mxu0 0
      %4965 = vmatpush1.bf16.xpose.msra.mxu0 %v4960
      %4966 = vmatprep.subr.bf16.mxu0 0
      %4967 = vmatpush1.bf16.xpose.msra.mxu0 0
      %4968 = vmatprep.subr.bf16.mxu0 0
      %4969 = vmatpush1.bf16.xpose.msra.mxu0 0
      %4970 = vmatprep.subr.bf16.mxu0 0
      %4971 = vmatpush1.bf16.xpose.msra.mxu0 0
      %4972 = vmatprep.subr.bf16.mxu0 0
      %4973 = vmatpush1.bf16.xpose.msra.mxu0 0
      %4974 = vmatprep.subr.bf16.mxu0 0
      %4975 = vmatpush1.bf16.xpose.msra.mxu0 0
      %4976 = vmatprep.subr.bf16.mxu0 0
      %4977 = vmatpush1.bf16.xpose.msra.mxu0 0
      %4978 = vmatprep.subr.bf16.mxu0 0
      %4979 = vmatpush1.bf16.xpose.msra.mxu0 0
      %4980 = vmatprep.subr.bf16.mxu0 0
      %4981 = vmatpush1.bf16.xpose.msra.mxu0 0
      %4982 = vmatprep.subr.bf16.mxu0 0
      %4983 = vmatpush1.bf16.xpose.msra.mxu0 0
      %4984 = vmatprep.subr.bf16.mxu0 0
      %4985 = vmatpush1.bf16.xpose.msra.mxu0 0
      %4986 = vmatprep.subr.bf16.mxu0 0
      %4987 = vmatpush1.bf16.xpose.msra.mxu0 0
      %4988 = vmatprep.subr.bf16.mxu0 0
      %4989 = vmatpush1.bf16.xpose.msra.mxu0 0
      %4990 = vmatprep.subr.bf16.mxu0 0
      %4991 = vmatpush1.bf16.xpose.msra.mxu0 0
      %4992 = vmatprep.subr.bf16.mxu0 0
      %4993 = vmatpush1.bf16.xpose.msra.mxu0 0
      %4994 = vmatprep.mubr.bf16.mxu0 0
      %4995 = vmatmul.mubr.bf16.gmra.mrb[0].mxu0 %v4951
      %v4996 = vpop.f32.mrb[0].mxu0
      %v4997 = vadd.f32 0.0, %v4996
      %v4998 = vpop.f32.mrb[0].mxu0
      %v4999 = vpop.f32.mrb[0].mxu0
      %v5000 = vadd.f32 0.0, %v4999
      %v5001 = vpop.f32.mrb[0].mxu0
      %5002 = vmatprep.mubr.bf16.mxu0 0
      %5003 = vmatmul.mubr.bf16.gmra.mrb[0].mxu0 %v4954
      %v5004 = vpop.f32.mrb[0].mxu0
      %v5005 = vadd.f32 0.0, %v5004
      %v5006 = vpop.f32.mrb[0].mxu0
      %v5007 = vpop.f32.mrb[0].mxu0
      %v5008 = vpop.f32.mrb[0].mxu0
      %5009 = vdwg.mxu0
      %5012 = vrot.lane.b32.xlu0 %v4610, 96
      %v5013 = vpop.permute.xlu0 %5012
      %5014 = vrot.lane.b32.xlu0 %v4611, 96
      %v5015 = vpop.permute.xlu0 %5014
      %v5017 = vsel %vm900, %v4610, 0
      %v5020 = vsel %vm900, %v4611, 0
      %v5023 = vsel %vm900, %v5013, 0
      %v5026 = vsel %vm900, %v5015, 0
      %5028 = vmatprep.subr.bf16.mxu0 0
      %5029 = vmatpush1.bf16.xpose.msra.mxu0 %v5023
      %5030 = vmatprep.subr.bf16.mxu0 0
      %5031 = vmatpush1.bf16.xpose.msra.mxu0 %v5026
      %5032 = vmatprep.subr.bf16.mxu0 0
      %5033 = vmatpush1.bf16.xpose.msra.mxu0 0
      %5034 = vmatprep.subr.bf16.mxu0 0
      %5035 = vmatpush1.bf16.xpose.msra.mxu0 0
      %5036 = vmatprep.subr.bf16.mxu0 0
      %5037 = vmatpush1.bf16.xpose.msra.mxu0 0
      %5038 = vmatprep.subr.bf16.mxu0 0
      %5039 = vmatpush1.bf16.xpose.msra.mxu0 0
      %5040 = vmatprep.subr.bf16.mxu0 0
      %5041 = vmatpush1.bf16.xpose.msra.mxu0 0
      %5042 = vmatprep.subr.bf16.mxu0 0
      %5043 = vmatpush1.bf16.xpose.msra.mxu0 0
      %5044 = vmatprep.subr.bf16.mxu0 0
      %5045 = vmatpush1.bf16.xpose.msra.mxu0 0
      %5046 = vmatprep.subr.bf16.mxu0 0
      %5047 = vmatpush1.bf16.xpose.msra.mxu0 0
      %5048 = vmatprep.subr.bf16.mxu0 0
      %5049 = vmatpush1.bf16.xpose.msra.mxu0 0
      %5050 = vmatprep.subr.bf16.mxu0 0
      %5051 = vmatpush1.bf16.xpose.msra.mxu0 0
      %5052 = vmatprep.subr.bf16.mxu0 0
      %5053 = vmatpush1.bf16.xpose.msra.mxu0 0
      %5054 = vmatprep.subr.bf16.mxu0 0
      %5055 = vmatpush1.bf16.xpose.msra.mxu0 0
      %5056 = vmatprep.subr.bf16.mxu0 0
      %5057 = vmatpush1.bf16.xpose.msra.mxu0 0
      %5058 = vmatprep.subr.bf16.mxu0 0
      %5059 = vmatpush1.bf16.xpose.msra.mxu0 0
      %5060 = vmatprep.mubr.bf16.mxu0 0
      %5061 = vmatmul.mubr.bf16.gmra.mrb[0].mxu0 %v5017
      %v5062 = vpop.f32.mrb[0].mxu0
      %v5063 = vadd.f32 0.0, %v5062
      %v5064 = vpop.f32.mrb[0].mxu0
      %v5065 = vpop.f32.mrb[0].mxu0
      %v5066 = vadd.f32 0.0, %v5065
      %v5067 = vpop.f32.mrb[0].mxu0
      %5068 = vmatprep.mubr.bf16.mxu0 0
      %5069 = vmatmul.mubr.bf16.gmra.mrb[0].mxu0 %v5020
      %v5070 = vpop.f32.mrb[0].mxu0
      %v5071 = vadd.f32 0.0, %v5070
      %v5072 = vpop.f32.mrb[0].mxu0
      %v5073 = vpop.f32.mrb[0].mxu0
      %v5074 = vpop.f32.mrb[0].mxu0
      %5075 = vdwg.mxu0
      %5078 = vrot.lane.b32.xlu0 %v4612, 96
      %v5079 = vpop.permute.xlu0 %5078
      %5080 = vrot.lane.b32.xlu0 %v4613, 96
      %v5081 = vpop.permute.xlu0 %5080
      %v5083 = vsel %vm900, %v4612, 0
      %v5086 = vsel %vm900, %v4613, 0
      %v5089 = vsel %vm900, %v5079, 0
      %v5092 = vsel %vm900, %v5081, 0
      %5094 = vmatprep.subr.bf16.mxu0 0
      %5095 = vmatpush1.bf16.xpose.msra.mxu0 %v5089
      %5096 = vmatprep.subr.bf16.mxu0 0
      %5097 = vmatpush1.bf16.xpose.msra.mxu0 %v5092
      %5098 = vmatprep.subr.bf16.mxu0 0
      %5099 = vmatpush1.bf16.xpose.msra.mxu0 0
      %5100 = vmatprep.subr.bf16.mxu0 0
      %5101 = vmatpush1.bf16.xpose.msra.mxu0 0
      %5102 = vmatprep.subr.bf16.mxu0 0
      %5103 = vmatpush1.bf16.xpose.msra.mxu0 0
      %5104 = vmatprep.subr.bf16.mxu0 0
      %5105 = vmatpush1.bf16.xpose.msra.mxu0 0
      %5106 = vmatprep.subr.bf16.mxu0 0
      %5107 = vmatpush1.bf16.xpose.msra.mxu0 0
      %5108 = vmatprep.subr.bf16.mxu0 0
      %5109 = vmatpush1.bf16.xpose.msra.mxu0 0
      %5110 = vmatprep.subr.bf16.mxu0 0
      %5111 = vmatpush1.bf16.xpose.msra.mxu0 0
      %5112 = vmatprep.subr.bf16.mxu0 0
      %5113 = vmatpush1.bf16.xpose.msra.mxu0 0
      %5114 = vmatprep.subr.bf16.mxu0 0
      %5115 = vmatpush1.bf16.xpose.msra.mxu0 0
      %5116 = vmatprep.subr.bf16.mxu0 0
      %5117 = vmatpush1.bf16.xpose.msra.mxu0 0
      %5118 = vmatprep.subr.bf16.mxu0 0
      %5119 = vmatpush1.bf16.xpose.msra.mxu0 0
      %5120 = vmatprep.subr.bf16.mxu0 0
      %5121 = vmatpush1.bf16.xpose.msra.mxu0 0
      %5122 = vmatprep.subr.bf16.mxu0 0
      %5123 = vmatpush1.bf16.xpose.msra.mxu0 0
      %5124 = vmatprep.subr.bf16.mxu0 0
      %5125 = vmatpush1.bf16.xpose.msra.mxu0 0
      %5126 = vmatprep.mubr.bf16.mxu0 0
      %5127 = vmatmul.mubr.bf16.gmra.mrb[0].mxu0 %v5083
      %v5128 = vpop.f32.mrb[0].mxu0
      %v5129 = vadd.f32 0.0, %v5128
      %v5130 = vpop.f32.mrb[0].mxu0
      %v5131 = vpop.f32.mrb[0].mxu0
      %v5132 = vadd.f32 0.0, %v5131
      %v5133 = vpop.f32.mrb[0].mxu0
      %5134 = vmatprep.mubr.bf16.mxu0 0
      %5135 = vmatmul.mubr.bf16.gmra.mrb[0].mxu0 %v5086
      %v5136 = vpop.f32.mrb[0].mxu0
      %v5137 = vadd.f32 0.0, %v5136
      %v5138 = vpop.f32.mrb[0].mxu0
      %v5139 = vpop.f32.mrb[0].mxu0
      %v5140 = vpop.f32.mrb[0].mxu0
      %5141 = vdwg.mxu0
      %v5142 = vmul.f32 %v4667, 0.17677669
      %v5143 = vmul.f32 %v4670, 0.17677669
      %v5144 = vmul.f32 %v4675, 0.17677669
      %v5145 = vmul.f32 %v4733, 0.17677669
      %v5146 = vmul.f32 %v4736, 0.17677669
      %v5147 = vmul.f32 %v4741, 0.17677669
      %v5148 = vmul.f32 %v4799, 0.17677669
      %v5149 = vmul.f32 %v4802, 0.17677669
      %v5150 = vmul.f32 %v4807, 0.17677669
      %v5151 = vmul.f32 %v4865, 0.17677669
      %v5152 = vmul.f32 %v4868, 0.17677669
      %v5153 = vmul.f32 %v4873, 0.17677669
      %v5154 = vmul.f32 %v4931, 0.17677669
      %v5155 = vmul.f32 %v4934, 0.17677669
      %v5156 = vmul.f32 %v4939, 0.17677669
      %v5157 = vmul.f32 %v4997, 0.17677669
      %v5158 = vmul.f32 %v5000, 0.17677669
      %v5159 = vmul.f32 %v5005, 0.17677669
      %v5160 = vmul.f32 %v5063, 0.17677669
      %v5161 = vmul.f32 %v5066, 0.17677669
      %v5162 = vmul.f32 %v5071, 0.17677669
      %v5163 = vmul.f32 %v5129, 0.17677669
      %v5164 = vmul.f32 %v5132, 0.17677669
      %v5165 = vmul.f32 %v5137, 0.17677669
      %v5166 = vsel %vm2090, %v5142, -inf
      %5167 = vmax.xlane.f32.xlu0 %v5166
      %v5168 = vpop.xlane.xlu0 %5167
      %v5169 = vsel %vm2090, %v5143, -inf
      %5170 = vmax.xlane.f32.xlu0 %v5169
      %v5171 = vpop.xlane.xlu0 %5170
      %v5172 = vsel %vm2090, %v5144, -inf
      %5173 = vmax.xlane.f32.xlu0 %v5172
      %v5174 = vpop.xlane.xlu0 %5173
      %v5175 = vsel %vm2090, %v5145, -inf
      %5176 = vmax.xlane.f32.xlu0 %v5175
      %v5177 = vpop.xlane.xlu0 %5176
      %v5178 = vsel %vm2090, %v5146, -inf
      %5179 = vmax.xlane.f32.xlu0 %v5178
      %v5180 = vpop.xlane.xlu0 %5179
      %v5181 = vsel %vm2090, %v5147, -inf
      %5182 = vmax.xlane.f32.xlu0 %v5181
      %v5183 = vpop.xlane.xlu0 %5182
      %v5184 = vsel %vm2090, %v5148, -inf
      %5185 = vmax.xlane.f32.xlu0 %v5184
      %v5186 = vpop.xlane.xlu0 %5185
      %v5187 = vsel %vm2090, %v5149, -inf
      %5188 = vmax.xlane.f32.xlu0 %v5187
      %v5189 = vpop.xlane.xlu0 %5188
      %v5190 = vsel %vm2090, %v5150, -inf
      %5191 = vmax.xlane.f32.xlu0 %v5190
      %v5192 = vpop.xlane.xlu0 %5191
      %v5193 = vsel %vm2090, %v5151, -inf
      %5194 = vmax.xlane.f32.xlu0 %v5193
      %v5195 = vpop.xlane.xlu0 %5194
      %v5196 = vsel %vm2090, %v5152, -inf
      %5197 = vmax.xlane.f32.xlu0 %v5196
      %v5198 = vpop.xlane.xlu0 %5197
      %v5199 = vsel %vm2090, %v5153, -inf
      %5200 = vmax.xlane.f32.xlu0 %v5199
      %v5201 = vpop.xlane.xlu0 %5200
      %v5202 = vsel %vm2090, %v5154, -inf
      %5203 = vmax.xlane.f32.xlu0 %v5202
      %v5204 = vpop.xlane.xlu0 %5203
      %v5205 = vsel %vm2090, %v5155, -inf
      %5206 = vmax.xlane.f32.xlu0 %v5205
      %v5207 = vpop.xlane.xlu0 %5206
      %v5208 = vsel %vm2090, %v5156, -inf
      %5209 = vmax.xlane.f32.xlu0 %v5208
      %v5210 = vpop.xlane.xlu0 %5209
      %v5211 = vsel %vm2090, %v5157, -inf
      %5212 = vmax.xlane.f32.xlu0 %v5211
      %v5213 = vpop.xlane.xlu0 %5212
      %v5214 = vsel %vm2090, %v5158, -inf
      %5215 = vmax.xlane.f32.xlu0 %v5214
      %v5216 = vpop.xlane.xlu0 %5215
      %v5217 = vsel %vm2090, %v5159, -inf
      %5218 = vmax.xlane.f32.xlu0 %v5217
      %v5219 = vpop.xlane.xlu0 %5218
      %v5220 = vsel %vm2090, %v5160, -inf
      %5221 = vmax.xlane.f32.xlu0 %v5220
      %v5222 = vpop.xlane.xlu0 %5221
      %v5223 = vsel %vm2090, %v5161, -inf
      %5224 = vmax.xlane.f32.xlu0 %v5223
      %v5225 = vpop.xlane.xlu0 %5224
      %v5226 = vsel %vm2090, %v5162, -inf
      %5227 = vmax.xlane.f32.xlu0 %v5226
      %v5228 = vpop.xlane.xlu0 %5227
      %v5229 = vsel %vm2090, %v5163, -inf
      %5230 = vmax.xlane.f32.xlu0 %v5229
      %v5231 = vpop.xlane.xlu0 %5230
      %v5232 = vsel %vm2090, %v5164, -inf
      %5233 = vmax.xlane.f32.xlu0 %v5232
      %v5234 = vpop.xlane.xlu0 %5233
      %v5235 = vsel %vm2090, %v5165, -inf
      %5236 = vmax.xlane.f32.xlu0 %v5235
      %v5237 = vpop.xlane.xlu0 %5236
      %v5238 = vsub.f32 %v5142, %v5168
      %v5239 = vsub.f32 %v5143, %v5171
      %v5240 = vsub.f32 %v5144, %v5174
      %v5241 = vsub.f32 %v5145, %v5177
      %v5242 = vsub.f32 %v5146, %v5180
      %v5243 = vsub.f32 %v5147, %v5183
      %v5244 = vsub.f32 %v5148, %v5186
      %v5245 = vsub.f32 %v5149, %v5189
      %v5246 = vsub.f32 %v5150, %v5192
      %v5247 = vsub.f32 %v5151, %v5195
      %v5248 = vsub.f32 %v5152, %v5198
      %v5249 = vsub.f32 %v5153, %v5201
      %v5250 = vsub.f32 %v5154, %v5204
      %v5251 = vsub.f32 %v5155, %v5207
      %v5252 = vsub.f32 %v5156, %v5210
      %v5253 = vsub.f32 %v5157, %v5213
      %v5254 = vsub.f32 %v5158, %v5216
      %v5255 = vsub.f32 %v5159, %v5219
      %v5256 = vsub.f32 %v5160, %v5222
      %v5257 = vsub.f32 %v5161, %v5225
      %v5258 = vsub.f32 %v5162, %v5228
      %v5259 = vsub.f32 %v5163, %v5231
      %v5260 = vsub.f32 %v5164, %v5234
      %v5261 = vsub.f32 %v5165, %v5237
      %v5262 = vmul.f32 %v5238, 1.442695
      %v5263 = vpow.pop %v5262
      %v5264 = vmul.f32 %v5239, 1.442695
      %v5265 = vpow.pop %v5264
      %v5266 = vmul.f32 %v5240, 1.442695
      %v5267 = vpow.pop %v5266
      %v5268 = vmul.f32 %v5241, 1.442695
      %v5269 = vpow.pop %v5268
      %v5270 = vmul.f32 %v5242, 1.442695
      %v5271 = vpow.pop %v5270
      %v5272 = vmul.f32 %v5243, 1.442695
      %v5273 = vpow.pop %v5272
      %v5274 = vmul.f32 %v5244, 1.442695
      %v5275 = vpow.pop %v5274
      %v5276 = vmul.f32 %v5245, 1.442695
      %v5277 = vpow.pop %v5276
      %v5278 = vmul.f32 %v5246, 1.442695
      %v5279 = vpow.pop %v5278
      %v5280 = vmul.f32 %v5247, 1.442695
      %v5281 = vpow.pop %v5280
      %v5282 = vmul.f32 %v5248, 1.442695
      %v5283 = vpow.pop %v5282
      %v5284 = vmul.f32 %v5249, 1.442695
      %v5285 = vpow.pop %v5284
      %v5286 = vmul.f32 %v5250, 1.442695
      %v5287 = vpow.pop %v5286
      %v5288 = vmul.f32 %v5251, 1.442695
      %v5289 = vpow.pop %v5288
      %v5290 = vmul.f32 %v5252, 1.442695
      %v5291 = vpow.pop %v5290
      %v5292 = vmul.f32 %v5253, 1.442695
      %v5293 = vpow.pop %v5292
      %v5294 = vmul.f32 %v5254, 1.442695
      %v5295 = vpow.pop %v5294
      %v5296 = vmul.f32 %v5255, 1.442695
      %v5297 = vpow.pop %v5296
      %v5298 = vmul.f32 %v5256, 1.442695
      %v5299 = vpow.pop %v5298
      %v5300 = vmul.f32 %v5257, 1.442695
      %v5301 = vpow.pop %v5300
      %v5302 = vmul.f32 %v5258, 1.442695
      %v5303 = vpow.pop %v5302
      %v5304 = vmul.f32 %v5259, 1.442695
      %v5305 = vpow.pop %v5304
      %v5306 = vmul.f32 %v5260, 1.442695
      %v5307 = vpow.pop %v5306
      %v5308 = vmul.f32 %v5261, 1.442695
      %v5309 = vpow.pop %v5308
      %v5310 = vsel %vm2090, %v5263, 0.0
      %5311 = vadd.xlane.f32.xlu0 %v5310
      %v5312 = vpop.xlane.xlu0 %5311
      %v5313 = vsel %vm2090, %v5265, 0.0
      %5314 = vadd.xlane.f32.xlu0 %v5313
      %v5315 = vpop.xlane.xlu0 %5314
      %v5316 = vsel %vm2090, %v5267, 0.0
      %5317 = vadd.xlane.f32.xlu0 %v5316
      %v5318 = vpop.xlane.xlu0 %5317
      %v5319 = vsel %vm2090, %v5269, 0.0
      %5320 = vadd.xlane.f32.xlu0 %v5319
      %v5321 = vpop.xlane.xlu0 %5320
      %v5322 = vsel %vm2090, %v5271, 0.0
      %5323 = vadd.xlane.f32.xlu0 %v5322
      %v5324 = vpop.xlane.xlu0 %5323
      %v5325 = vsel %vm2090, %v5273, 0.0
      %5326 = vadd.xlane.f32.xlu0 %v5325
      %v5327 = vpop.xlane.xlu0 %5326
      %v5328 = vsel %vm2090, %v5275, 0.0
      %5329 = vadd.xlane.f32.xlu0 %v5328
      %v5330 = vpop.xlane.xlu0 %5329
      %v5331 = vsel %vm2090, %v5277, 0.0
      %5332 = vadd.xlane.f32.xlu0 %v5331
      %v5333 = vpop.xlane.xlu0 %5332
      %v5334 = vsel %vm2090, %v5279, 0.0
      %5335 = vadd.xlane.f32.xlu0 %v5334
      %v5336 = vpop.xlane.xlu0 %5335
      %v5337 = vsel %vm2090, %v5281, 0.0
      %5338 = vadd.xlane.f32.xlu0 %v5337
      %v5339 = vpop.xlane.xlu0 %5338
      %v5340 = vsel %vm2090, %v5283, 0.0
      %5341 = vadd.xlane.f32.xlu0 %v5340
      %v5342 = vpop.xlane.xlu0 %5341
      %v5343 = vsel %vm2090, %v5285, 0.0
      %5344 = vadd.xlane.f32.xlu0 %v5343
      %v5345 = vpop.xlane.xlu0 %5344
      %v5346 = vsel %vm2090, %v5287, 0.0
      %5347 = vadd.xlane.f32.xlu0 %v5346
      %v5348 = vpop.xlane.xlu0 %5347
      %v5349 = vsel %vm2090, %v5289, 0.0
      %5350 = vadd.xlane.f32.xlu0 %v5349
      %v5351 = vpop.xlane.xlu0 %5350
      %v5352 = vsel %vm2090, %v5291, 0.0
      %5353 = vadd.xlane.f32.xlu0 %v5352
      %v5354 = vpop.xlane.xlu0 %5353
      %v5355 = vsel %vm2090, %v5293, 0.0
      %5356 = vadd.xlane.f32.xlu0 %v5355
      %v5357 = vpop.xlane.xlu0 %5356
      %v5358 = vsel %vm2090, %v5295, 0.0
      %5359 = vadd.xlane.f32.xlu0 %v5358
      %v5360 = vpop.xlane.xlu0 %5359
      %v5361 = vsel %vm2090, %v5297, 0.0
      %5362 = vadd.xlane.f32.xlu0 %v5361
      %v5363 = vpop.xlane.xlu0 %5362
      %v5364 = vsel %vm2090, %v5299, 0.0
      %5365 = vadd.xlane.f32.xlu0 %v5364
      %v5366 = vpop.xlane.xlu0 %5365
      %v5367 = vsel %vm2090, %v5301, 0.0
      %5368 = vadd.xlane.f32.xlu0 %v5367
      %v5369 = vpop.xlane.xlu0 %5368
      %v5370 = vsel %vm2090, %v5303, 0.0
      %5371 = vadd.xlane.f32.xlu0 %v5370
      %v5372 = vpop.xlane.xlu0 %5371
      %v5373 = vsel %vm2090, %v5305, 0.0
      %5374 = vadd.xlane.f32.xlu0 %v5373
      %v5375 = vpop.xlane.xlu0 %5374
      %v5376 = vsel %vm2090, %v5307, 0.0
      %5377 = vadd.xlane.f32.xlu0 %v5376
      %v5378 = vpop.xlane.xlu0 %5377
      %v5379 = vsel %vm2090, %v5309, 0.0
      %5380 = vadd.xlane.f32.xlu0 %v5379
      %v5381 = vpop.xlane.xlu0 %5380
      %v5382 = vrcp.pop %v5312
      %v5383 = vrcp.pop %v5315
      %v5384 = vrcp.pop %v5318
      %v5385 = vrcp.pop %v5321
      %v5386 = vrcp.pop %v5324
      %v5387 = vrcp.pop %v5327
      %v5388 = vrcp.pop %v5330
      %v5389 = vrcp.pop %v5333
      %v5390 = vrcp.pop %v5336
      %v5391 = vrcp.pop %v5339
      %v5392 = vrcp.pop %v5342
      %v5393 = vrcp.pop %v5345
      %v5394 = vrcp.pop %v5348
      %v5395 = vrcp.pop %v5351
      %v5396 = vrcp.pop %v5354
      %v5397 = vrcp.pop %v5357
      %v5398 = vrcp.pop %v5360
      %v5399 = vrcp.pop %v5363
      %v5400 = vrcp.pop %v5366
      %v5401 = vrcp.pop %v5369
      %v5402 = vrcp.pop %v5372
      %v5403 = vrcp.pop %v5375
      %v5404 = vrcp.pop %v5378
      %v5405 = vrcp.pop %v5381
      %v5406 = vmul.f32 %v5263, %v5382
      %v5407 = vmul.f32 %v5265, %v5383
      %v5408 = vmul.f32 %v5267, %v5384
      %v5409 = vmul.f32 %v5269, %v5385
      %v5410 = vmul.f32 %v5271, %v5386
      %v5411 = vmul.f32 %v5273, %v5387
      %v5412 = vmul.f32 %v5275, %v5388
      %v5413 = vmul.f32 %v5277, %v5389
      %v5414 = vmul.f32 %v5279, %v5390
      %v5415 = vmul.f32 %v5281, %v5391
      %v5416 = vmul.f32 %v5283, %v5392
      %v5417 = vmul.f32 %v5285, %v5393
      %v5418 = vmul.f32 %v5287, %v5394
      %v5419 = vmul.f32 %v5289, %v5395
      %v5420 = vmul.f32 %v5291, %v5396
      %v5421 = vmul.f32 %v5293, %v5397
      %v5422 = vmul.f32 %v5295, %v5398
      %v5423 = vmul.f32 %v5297, %v5399
      %v5424 = vmul.f32 %v5299, %v5400
      %v5425 = vmul.f32 %v5301, %v5401
      %v5426 = vmul.f32 %v5303, %v5402
      %v5427 = vmul.f32 %v5305, %v5403
      %v5428 = vmul.f32 %v5307, %v5404
      %v5429 = vmul.f32 %v5309, %v5405
      %v5430 = vpack.c.bf16 %v5407, %v5406
      %v5431 = vpack.c.bf16 %v5408, %v5408
      %v5432 = vpack.c.bf16 %v5410, %v5409
      %v5433 = vpack.c.bf16 %v5411, %v5411
      %v5434 = vpack.c.bf16 %v5413, %v5412
      %v5435 = vpack.c.bf16 %v5414, %v5414
      %v5436 = vpack.c.bf16 %v5416, %v5415
      %v5437 = vpack.c.bf16 %v5417, %v5417
      %v5438 = vpack.c.bf16 %v5419, %v5418
      %v5439 = vpack.c.bf16 %v5420, %v5420
      %v5440 = vpack.c.bf16 %v5422, %v5421
      %v5441 = vpack.c.bf16 %v5423, %v5423
      %v5442 = vpack.c.bf16 %v5425, %v5424
      %v5443 = vpack.c.bf16 %v5426, %v5426
      %v5444 = vpack.c.bf16 %v5428, %v5427
      %v5445 = vpack.c.bf16 %v5429, %v5429
      %5446 = vrot.lane.b32.xlu0 %v4598, 64
      %v5447 = vpop.permute.xlu0 %5446
      %5448 = vrot.lane.b32.xlu0 %v4599, 64
      %v5449 = vpop.permute.xlu0 %5448
      %v5452 = vsel %vm2090, %v5430, 0
      %v5455 = vsel %vm2090, %v5431, 0
      %v5458 = vsel %vm2382, %v5449, 0
      %5460 = vmatprep.subr.bf16.mxu0 0
      %5461 = vmatpush1.bf16.msra.mxu0 %v5447
      %5462 = vmatprep.subr.bf16.mxu0 0
      %5463 = vmatpush1.bf16.msra.mxu0 %v5458
      %5464 = vmatprep.subr.bf16.mxu0 0
      %5465 = vmatpush1.bf16.msra.mxu0 0
      %5466 = vmatprep.subr.bf16.mxu0 0
      %5467 = vmatpush1.bf16.msra.mxu0 0
      %5468 = vmatprep.subr.bf16.mxu0 0
      %5469 = vmatpush1.bf16.msra.mxu0 0
      %5470 = vmatprep.subr.bf16.mxu0 0
      %5471 = vmatpush1.bf16.msra.mxu0 0
      %5472 = vmatprep.subr.bf16.mxu0 0
      %5473 = vmatpush1.bf16.msra.mxu0 0
      %5474 = vmatprep.subr.bf16.mxu0 0
      %5475 = vmatpush1.bf16.msra.mxu0 0
      %5476 = vmatprep.subr.bf16.mxu0 0
      %5477 = vmatpush1.bf16.msra.mxu0 0
      %5478 = vmatprep.subr.bf16.mxu0 0
      %5479 = vmatpush1.bf16.msra.mxu0 0
      %5480 = vmatprep.subr.bf16.mxu0 0
      %5481 = vmatpush1.bf16.msra.mxu0 0
      %5482 = vmatprep.subr.bf16.mxu0 0
      %5483 = vmatpush1.bf16.msra.mxu0 0
      %5484 = vmatprep.subr.bf16.mxu0 0
      %5485 = vmatpush1.bf16.msra.mxu0 0
      %5486 = vmatprep.subr.bf16.mxu0 0
      %5487 = vmatpush1.bf16.msra.mxu0 0
      %5488 = vmatprep.subr.bf16.mxu0 0
      %5489 = vmatpush1.bf16.msra.mxu0 0
      %5490 = vmatprep.subr.bf16.mxu0 0
      %5491 = vmatpush1.bf16.msra.mxu0 0
      %5492 = vmatprep.mubr.bf16.mxu0 0
      %5493 = vmatmul.mubr.bf16.gmra.mrb[0].mxu0 %v5452
      %v5494 = vpop.f32.mrb[0].mxu0
      %v5495 = vadd.f32 0.0, %v5494
      %v5496 = vpop.f32.mrb[0].mxu0
      %v5497 = vpop.f32.mrb[0].mxu0
      %v5498 = vadd.f32 0.0, %v5497
      %v5499 = vpop.f32.mrb[0].mxu0
      %5500 = vmatprep.mubr.bf16.mxu0 0
      %5501 = vmatmul.mubr.bf16.gmra.mrb[0].mxu0 %v5455
      %v5502 = vpop.f32.mrb[0].mxu0
      %v5503 = vadd.f32 0.0, %v5502
      %v5504 = vpop.f32.mrb[0].mxu0
      %v5505 = vpop.f32.mrb[0].mxu0
      %v5506 = vpop.f32.mrb[0].mxu0
      %5507 = vdwg.mxu0
      %5508 = vrot.lane.b32.xlu0 %v4600, 64
      %v5509 = vpop.permute.xlu0 %5508
      %5510 = vrot.lane.b32.xlu0 %v4601, 64
      %v5511 = vpop.permute.xlu0 %5510
      %v5514 = vsel %vm2090, %v5432, 0
      %v5517 = vsel %vm2090, %v5433, 0
      %v5520 = vsel %vm2382, %v5511, 0
      %5522 = vmatprep.subr.bf16.mxu0 0
      %5523 = vmatpush1.bf16.msra.mxu0 %v5509
      %5524 = vmatprep.subr.bf16.mxu0 0
      %5525 = vmatpush1.bf16.msra.mxu0 %v5520
      %5526 = vmatprep.subr.bf16.mxu0 0
      %5527 = vmatpush1.bf16.msra.mxu0 0
      %5528 = vmatprep.subr.bf16.mxu0 0
      %5529 = vmatpush1.bf16.msra.mxu0 0
      %5530 = vmatprep.subr.bf16.mxu0 0
      %5531 = vmatpush1.bf16.msra.mxu0 0
      %5532 = vmatprep.subr.bf16.mxu0 0
      %5533 = vmatpush1.bf16.msra.mxu0 0
      %5534 = vmatprep.subr.bf16.mxu0 0
      %5535 = vmatpush1.bf16.msra.mxu0 0
      %5536 = vmatprep.subr.bf16.mxu0 0
      %5537 = vmatpush1.bf16.msra.mxu0 0
      %5538 = vmatprep.subr.bf16.mxu0 0
      %5539 = vmatpush1.bf16.msra.mxu0 0
      %5540 = vmatprep.subr.bf16.mxu0 0
      %5541 = vmatpush1.bf16.msra.mxu0 0
      %5542 = vmatprep.subr.bf16.mxu0 0
      %5543 = vmatpush1.bf16.msra.mxu0 0
      %5544 = vmatprep.subr.bf16.mxu0 0
      %5545 = vmatpush1.bf16.msra.mxu0 0
      %5546 = vmatprep.subr.bf16.mxu0 0
      %5547 = vmatpush1.bf16.msra.mxu0 0
      %5548 = vmatprep.subr.bf16.mxu0 0
      %5549 = vmatpush1.bf16.msra.mxu0 0
      %5550 = vmatprep.subr.bf16.mxu0 0
      %5551 = vmatpush1.bf16.msra.mxu0 0
      %5552 = vmatprep.subr.bf16.mxu0 0
      %5553 = vmatpush1.bf16.msra.mxu0 0
      %5554 = vmatprep.mubr.bf16.mxu0 0
      %5555 = vmatmul.mubr.bf16.gmra.mrb[0].mxu0 %v5514
      %v5556 = vpop.f32.mrb[0].mxu0
      %v5557 = vadd.f32 0.0, %v5556
      %v5558 = vpop.f32.mrb[0].mxu0
      %v5559 = vpop.f32.mrb[0].mxu0
      %v5560 = vadd.f32 0.0, %v5559
      %v5561 = vpop.f32.mrb[0].mxu0
      %5562 = vmatprep.mubr.bf16.mxu0 0
      %5563 = vmatmul.mubr.bf16.gmra.mrb[0].mxu0 %v5517
      %v5564 = vpop.f32.mrb[0].mxu0
      %v5565 = vadd.f32 0.0, %v5564
      %v5566 = vpop.f32.mrb[0].mxu0
      %v5567 = vpop.f32.mrb[0].mxu0
      %v5568 = vpop.f32.mrb[0].mxu0
      %5569 = vdwg.mxu0
      %5570 = vrot.lane.b32.xlu0 %v4602, 64
      %v5571 = vpop.permute.xlu0 %5570
      %5572 = vrot.lane.b32.xlu0 %v4603, 64
      %v5573 = vpop.permute.xlu0 %5572
      %v5576 = vsel %vm2090, %v5434, 0
      %v5579 = vsel %vm2090, %v5435, 0
      %v5582 = vsel %vm2382, %v5573, 0
      %5584 = vmatprep.subr.bf16.mxu0 0
      %5585 = vmatpush1.bf16.msra.mxu0 %v5571
      %5586 = vmatprep.subr.bf16.mxu0 0
      %5587 = vmatpush1.bf16.msra.mxu0 %v5582
      %5588 = vmatprep.subr.bf16.mxu0 0
      %5589 = vmatpush1.bf16.msra.mxu0 0
      %5590 = vmatprep.subr.bf16.mxu0 0
      %5591 = vmatpush1.bf16.msra.mxu0 0
      %5592 = vmatprep.subr.bf16.mxu0 0
      %5593 = vmatpush1.bf16.msra.mxu0 0
      %5594 = vmatprep.subr.bf16.mxu0 0
      %5595 = vmatpush1.bf16.msra.mxu0 0
      %5596 = vmatprep.subr.bf16.mxu0 0
      %5597 = vmatpush1.bf16.msra.mxu0 0
      %5598 = vmatprep.subr.bf16.mxu0 0
      %5599 = vmatpush1.bf16.msra.mxu0 0
      %5600 = vmatprep.subr.bf16.mxu0 0
      %5601 = vmatpush1.bf16.msra.mxu0 0
      %5602 = vmatprep.subr.bf16.mxu0 0
      %5603 = vmatpush1.bf16.msra.mxu0 0
      %5604 = vmatprep.subr.bf16.mxu0 0
      %5605 = vmatpush1.bf16.msra.mxu0 0
      %5606 = vmatprep.subr.bf16.mxu0 0
      %5607 = vmatpush1.bf16.msra.mxu0 0
      %5608 = vmatprep.subr.bf16.mxu0 0
      %5609 = vmatpush1.bf16.msra.mxu0 0
      %5610 = vmatprep.subr.bf16.mxu0 0
      %5611 = vmatpush1.bf16.msra.mxu0 0
      %5612 = vmatprep.subr.bf16.mxu0 0
      %5613 = vmatpush1.bf16.msra.mxu0 0
      %5614 = vmatprep.subr.bf16.mxu0 0
      %5615 = vmatpush1.bf16.msra.mxu0 0
      %5616 = vmatprep.mubr.bf16.mxu0 0
      %5617 = vmatmul.mubr.bf16.gmra.mrb[0].mxu0 %v5576
      %v5618 = vpop.f32.mrb[0].mxu0
      %v5619 = vadd.f32 0.0, %v5618
      %v5620 = vpop.f32.mrb[0].mxu0
      %v5621 = vpop.f32.mrb[0].mxu0
      %v5622 = vadd.f32 0.0, %v5621
      %v5623 = vpop.f32.mrb[0].mxu0
      %5624 = vmatprep.mubr.bf16.mxu0 0
      %5625 = vmatmul.mubr.bf16.gmra.mrb[0].mxu0 %v5579
      %v5626 = vpop.f32.mrb[0].mxu0
      %v5627 = vadd.f32 0.0, %v5626
      %v5628 = vpop.f32.mrb[0].mxu0
      %v5629 = vpop.f32.mrb[0].mxu0
      %v5630 = vpop.f32.mrb[0].mxu0
      %5631 = vdwg.mxu0
      %5632 = vrot.lane.b32.xlu0 %v4604, 64
      %v5633 = vpop.permute.xlu0 %5632
      %5634 = vrot.lane.b32.xlu0 %v4605, 64
      %v5635 = vpop.permute.xlu0 %5634
      %v5638 = vsel %vm2090, %v5436, 0
      %v5641 = vsel %vm2090, %v5437, 0
      %v5644 = vsel %vm2382, %v5635, 0
      %5646 = vmatprep.subr.bf16.mxu0 0
      %5647 = vmatpush1.bf16.msra.mxu0 %v5633
      %5648 = vmatprep.subr.bf16.mxu0 0
      %5649 = vmatpush1.bf16.msra.mxu0 %v5644
      %5650 = vmatprep.subr.bf16.mxu0 0
      %5651 = vmatpush1.bf16.msra.mxu0 0
      %5652 = vmatprep.subr.bf16.mxu0 0
      %5653 = vmatpush1.bf16.msra.mxu0 0
      %5654 = vmatprep.subr.bf16.mxu0 0
      %5655 = vmatpush1.bf16.msra.mxu0 0
      %5656 = vmatprep.subr.bf16.mxu0 0
      %5657 = vmatpush1.bf16.msra.mxu0 0
      %5658 = vmatprep.subr.bf16.mxu0 0
      %5659 = vmatpush1.bf16.msra.mxu0 0
      %5660 = vmatprep.subr.bf16.mxu0 0
      %5661 = vmatpush1.bf16.msra.mxu0 0
      %5662 = vmatprep.subr.bf16.mxu0 0
      %5663 = vmatpush1.bf16.msra.mxu0 0
      %5664 = vmatprep.subr.bf16.mxu0 0
      %5665 = vmatpush1.bf16.msra.mxu0 0
      %5666 = vmatprep.subr.bf16.mxu0 0
      %5667 = vmatpush1.bf16.msra.mxu0 0
      %5668 = vmatprep.subr.bf16.mxu0 0
      %5669 = vmatpush1.bf16.msra.mxu0 0
      %5670 = vmatprep.subr.bf16.mxu0 0
      %5671 = vmatpush1.bf16.msra.mxu0 0
      %5672 = vmatprep.subr.bf16.mxu0 0
      %5673 = vmatpush1.bf16.msra.mxu0 0
      %5674 = vmatprep.subr.bf16.mxu0 0
      %5675 = vmatpush1.bf16.msra.mxu0 0
      %5676 = vmatprep.subr.bf16.mxu0 0
      %5677 = vmatpush1.bf16.msra.mxu0 0
      %5678 = vmatprep.mubr.bf16.mxu0 0
      %5679 = vmatmul.mubr.bf16.gmra.mrb[0].mxu0 %v5638
      %v5680 = vpop.f32.mrb[0].mxu0
      %v5681 = vadd.f32 0.0, %v5680
      %v5682 = vpop.f32.mrb[0].mxu0
      %v5683 = vpop.f32.mrb[0].mxu0
      %v5684 = vadd.f32 0.0, %v5683
      %v5685 = vpop.f32.mrb[0].mxu0
      %5686 = vmatprep.mubr.bf16.mxu0 0
      %5687 = vmatmul.mubr.bf16.gmra.mrb[0].mxu0 %v5641
      %v5688 = vpop.f32.mrb[0].mxu0
      %v5689 = vadd.f32 0.0, %v5688
      %v5690 = vpop.f32.mrb[0].mxu0
      %v5691 = vpop.f32.mrb[0].mxu0
      %v5692 = vpop.f32.mrb[0].mxu0
      %5693 = vdwg.mxu0
      %5694 = vrot.lane.b32.xlu0 %v4606, 64
      %v5695 = vpop.permute.xlu0 %5694
      %5696 = vrot.lane.b32.xlu0 %v4607, 64
      %v5697 = vpop.permute.xlu0 %5696
      %v5700 = vsel %vm2090, %v5438, 0
      %v5703 = vsel %vm2090, %v5439, 0
      %v5706 = vsel %vm2382, %v5697, 0
      %5708 = vmatprep.subr.bf16.mxu0 0
      %5709 = vmatpush1.bf16.msra.mxu0 %v5695
      %5710 = vmatprep.subr.bf16.mxu0 0
      %5711 = vmatpush1.bf16.msra.mxu0 %v5706
      %5712 = vmatprep.subr.bf16.mxu0 0
      %5713 = vmatpush1.bf16.msra.mxu0 0
      %5714 = vmatprep.subr.bf16.mxu0 0
      %5715 = vmatpush1.bf16.msra.mxu0 0
      %5716 = vmatprep.subr.bf16.mxu0 0
      %5717 = vmatpush1.bf16.msra.mxu0 0
      %5718 = vmatprep.subr.bf16.mxu0 0
      %5719 = vmatpush1.bf16.msra.mxu0 0
      %5720 = vmatprep.subr.bf16.mxu0 0
      %5721 = vmatpush1.bf16.msra.mxu0 0
      %5722 = vmatprep.subr.bf16.mxu0 0
      %5723 = vmatpush1.bf16.msra.mxu0 0
      %5724 = vmatprep.subr.bf16.mxu0 0
      %5725 = vmatpush1.bf16.msra.mxu0 0
      %5726 = vmatprep.subr.bf16.mxu0 0
      %5727 = vmatpush1.bf16.msra.mxu0 0
      %5728 = vmatprep.subr.bf16.mxu0 0
      %5729 = vmatpush1.bf16.msra.mxu0 0
      %5730 = vmatprep.subr.bf16.mxu0 0
      %5731 = vmatpush1.bf16.msra.mxu0 0
      %5732 = vmatprep.subr.bf16.mxu0 0
      %5733 = vmatpush1.bf16.msra.mxu0 0
      %5734 = vmatprep.subr.bf16.mxu0 0
      %5735 = vmatpush1.bf16.msra.mxu0 0
      %5736 = vmatprep.subr.bf16.mxu0 0
      %5737 = vmatpush1.bf16.msra.mxu0 0
      %5738 = vmatprep.subr.bf16.mxu0 0
      %5739 = vmatpush1.bf16.msra.mxu0 0
      %5740 = vmatprep.mubr.bf16.mxu0 0
      %5741 = vmatmul.mubr.bf16.gmra.mrb[0].mxu0 %v5700
      %v5742 = vpop.f32.mrb[0].mxu0
      %v5743 = vadd.f32 0.0, %v5742
      %v5744 = vpop.f32.mrb[0].mxu0
      %v5745 = vpop.f32.mrb[0].mxu0
      %v5746 = vadd.f32 0.0, %v5745
      %v5747 = vpop.f32.mrb[0].mxu0
      %5748 = vmatprep.mubr.bf16.mxu0 0
      %5749 = vmatmul.mubr.bf16.gmra.mrb[0].mxu0 %v5703
      %v5750 = vpop.f32.mrb[0].mxu0
      %v5751 = vadd.f32 0.0, %v5750
      %v5752 = vpop.f32.mrb[0].mxu0
      %v5753 = vpop.f32.mrb[0].mxu0
      %v5754 = vpop.f32.mrb[0].mxu0
      %5755 = vdwg.mxu0
      %5756 = vrot.lane.b32.xlu0 %v4608, 64
      %v5757 = vpop.permute.xlu0 %5756
      %5758 = vrot.lane.b32.xlu0 %v4609, 64
      %v5759 = vpop.permute.xlu0 %5758
      %v5762 = vsel %vm2090, %v5440, 0
      %v5765 = vsel %vm2090, %v5441, 0
      %v5768 = vsel %vm2382, %v5759, 0
      %5770 = vmatprep.subr.bf16.mxu0 0
      %5771 = vmatpush1.bf16.msra.mxu0 %v5757
      %5772 = vmatprep.subr.bf16.mxu0 0
      %5773 = vmatpush1.bf16.msra.mxu0 %v5768
      %5774 = vmatprep.subr.bf16.mxu0 0
      %5775 = vmatpush1.bf16.msra.mxu0 0
      %5776 = vmatprep.subr.bf16.mxu0 0
      %5777 = vmatpush1.bf16.msra.mxu0 0
      %5778 = vmatprep.subr.bf16.mxu0 0
      %5779 = vmatpush1.bf16.msra.mxu0 0
      %5780 = vmatprep.subr.bf16.mxu0 0
      %5781 = vmatpush1.bf16.msra.mxu0 0
      %5782 = vmatprep.subr.bf16.mxu0 0
      %5783 = vmatpush1.bf16.msra.mxu0 0
      %5784 = vmatprep.subr.bf16.mxu0 0
      %5785 = vmatpush1.bf16.msra.mxu0 0
      %5786 = vmatprep.subr.bf16.mxu0 0
      %5787 = vmatpush1.bf16.msra.mxu0 0
      %5788 = vmatprep.subr.bf16.mxu0 0
      %5789 = vmatpush1.bf16.msra.mxu0 0
      %5790 = vmatprep.subr.bf16.mxu0 0
      %5791 = vmatpush1.bf16.msra.mxu0 0
      %5792 = vmatprep.subr.bf16.mxu0 0
      %5793 = vmatpush1.bf16.msra.mxu0 0
      %5794 = vmatprep.subr.bf16.mxu0 0
      %5795 = vmatpush1.bf16.msra.mxu0 0
      %5796 = vmatprep.subr.bf16.mxu0 0
      %5797 = vmatpush1.bf16.msra.mxu0 0
      %5798 = vmatprep.subr.bf16.mxu0 0
      %5799 = vmatpush1.bf16.msra.mxu0 0
      %5800 = vmatprep.subr.bf16.mxu0 0
      %5801 = vmatpush1.bf16.msra.mxu0 0
      %5802 = vmatprep.mubr.bf16.mxu0 0
      %5803 = vmatmul.mubr.bf16.gmra.mrb[0].mxu0 %v5762
      %v5804 = vpop.f32.mrb[0].mxu0
      %v5805 = vadd.f32 0.0, %v5804
      %v5806 = vpop.f32.mrb[0].mxu0
      %v5807 = vpop.f32.mrb[0].mxu0
      %v5808 = vadd.f32 0.0, %v5807
      %v5809 = vpop.f32.mrb[0].mxu0
      %5810 = vmatprep.mubr.bf16.mxu0 0
      %5811 = vmatmul.mubr.bf16.gmra.mrb[0].mxu0 %v5765
      %v5812 = vpop.f32.mrb[0].mxu0
      %v5813 = vadd.f32 0.0, %v5812
      %v5814 = vpop.f32.mrb[0].mxu0
      %v5815 = vpop.f32.mrb[0].mxu0
      %v5816 = vpop.f32.mrb[0].mxu0
      %5817 = vdwg.mxu0
      %5818 = vrot.lane.b32.xlu0 %v4610, 64
      %v5819 = vpop.permute.xlu0 %5818
      %5820 = vrot.lane.b32.xlu0 %v4611, 64
      %v5821 = vpop.permute.xlu0 %5820
      %v5824 = vsel %vm2090, %v5442, 0
      %v5827 = vsel %vm2090, %v5443, 0
      %v5830 = vsel %vm2382, %v5821, 0
      %5832 = vmatprep.subr.bf16.mxu0 0
      %5833 = vmatpush1.bf16.msra.mxu0 %v5819
      %5834 = vmatprep.subr.bf16.mxu0 0
      %5835 = vmatpush1.bf16.msra.mxu0 %v5830
      %5836 = vmatprep.subr.bf16.mxu0 0
      %5837 = vmatpush1.bf16.msra.mxu0 0
      %5838 = vmatprep.subr.bf16.mxu0 0
      %5839 = vmatpush1.bf16.msra.mxu0 0
      %5840 = vmatprep.subr.bf16.mxu0 0
      %5841 = vmatpush1.bf16.msra.mxu0 0
      %5842 = vmatprep.subr.bf16.mxu0 0
      %5843 = vmatpush1.bf16.msra.mxu0 0
      %5844 = vmatprep.subr.bf16.mxu0 0
      %5845 = vmatpush1.bf16.msra.mxu0 0
      %5846 = vmatprep.subr.bf16.mxu0 0
      %5847 = vmatpush1.bf16.msra.mxu0 0
      %5848 = vmatprep.subr.bf16.mxu0 0
      %5849 = vmatpush1.bf16.msra.mxu0 0
      %5850 = vmatprep.subr.bf16.mxu0 0
      %5851 = vmatpush1.bf16.msra.mxu0 0
      %5852 = vmatprep.subr.bf16.mxu0 0
      %5853 = vmatpush1.bf16.msra.mxu0 0
      %5854 = vmatprep.subr.bf16.mxu0 0
      %5855 = vmatpush1.bf16.msra.mxu0 0
      %5856 = vmatprep.subr.bf16.mxu0 0
      %5857 = vmatpush1.bf16.msra.mxu0 0
      %5858 = vmatprep.subr.bf16.mxu0 0
      %5859 = vmatpush1.bf16.msra.mxu0 0
      %5860 = vmatprep.subr.bf16.mxu0 0
      %5861 = vmatpush1.bf16.msra.mxu0 0
      %5862 = vmatprep.subr.bf16.mxu0 0
      %5863 = vmatpush1.bf16.msra.mxu0 0
      %5864 = vmatprep.mubr.bf16.mxu0 0
      %5865 = vmatmul.mubr.bf16.gmra.mrb[0].mxu0 %v5824
      %v5866 = vpop.f32.mrb[0].mxu0
      %v5867 = vadd.f32 0.0, %v5866
      %v5868 = vpop.f32.mrb[0].mxu0
      %v5869 = vpop.f32.mrb[0].mxu0
      %v5870 = vadd.f32 0.0, %v5869
      %v5871 = vpop.f32.mrb[0].mxu0
      %5872 = vmatprep.mubr.bf16.mxu0 0
      %5873 = vmatmul.mubr.bf16.gmra.mrb[0].mxu0 %v5827
      %v5874 = vpop.f32.mrb[0].mxu0
      %v5875 = vadd.f32 0.0, %v5874
      %v5876 = vpop.f32.mrb[0].mxu0
      %v5877 = vpop.f32.mrb[0].mxu0
      %v5878 = vpop.f32.mrb[0].mxu0
      %5879 = vdwg.mxu0
      %5880 = vrot.lane.b32.xlu0 %v4612, 64
      %v5881 = vpop.permute.xlu0 %5880
      %5882 = vrot.lane.b32.xlu0 %v4613, 64
      %v5883 = vpop.permute.xlu0 %5882
      %v5886 = vsel %vm2090, %v5444, 0
      %v5889 = vsel %vm2090, %v5445, 0
      %v5892 = vsel %vm2382, %v5883, 0
      %5894 = vmatprep.subr.bf16.mxu0 0
      %5895 = vmatpush1.bf16.msra.mxu0 %v5881
      %5896 = vmatprep.subr.bf16.mxu0 0
      %5897 = vmatpush1.bf16.msra.mxu0 %v5892
      %5898 = vmatprep.subr.bf16.mxu0 0
      %5899 = vmatpush1.bf16.msra.mxu0 0
      %5900 = vmatprep.subr.bf16.mxu0 0
      %5901 = vmatpush1.bf16.msra.mxu0 0
      %5902 = vmatprep.subr.bf16.mxu0 0
      %5903 = vmatpush1.bf16.msra.mxu0 0
      %5904 = vmatprep.subr.bf16.mxu0 0
      %5905 = vmatpush1.bf16.msra.mxu0 0
      %5906 = vmatprep.subr.bf16.mxu0 0
      %5907 = vmatpush1.bf16.msra.mxu0 0
      %5908 = vmatprep.subr.bf16.mxu0 0
      %5909 = vmatpush1.bf16.msra.mxu0 0
      %5910 = vmatprep.subr.bf16.mxu0 0
      %5911 = vmatpush1.bf16.msra.mxu0 0
      %5912 = vmatprep.subr.bf16.mxu0 0
      %5913 = vmatpush1.bf16.msra.mxu0 0
      %5914 = vmatprep.subr.bf16.mxu0 0
      %5915 = vmatpush1.bf16.msra.mxu0 0
      %5916 = vmatprep.subr.bf16.mxu0 0
      %5917 = vmatpush1.bf16.msra.mxu0 0
      %5918 = vmatprep.subr.bf16.mxu0 0
      %5919 = vmatpush1.bf16.msra.mxu0 0
      %5920 = vmatprep.subr.bf16.mxu0 0
      %5921 = vmatpush1.bf16.msra.mxu0 0
      %5922 = vmatprep.subr.bf16.mxu0 0
      %5923 = vmatpush1.bf16.msra.mxu0 0
      %5924 = vmatprep.subr.bf16.mxu0 0
      %5925 = vmatpush1.bf16.msra.mxu0 0
      %5926 = vmatprep.mubr.bf16.mxu0 0
      %5927 = vmatmul.mubr.bf16.gmra.mrb[0].mxu0 %v5886
      %v5928 = vpop.f32.mrb[0].mxu0
      %v5929 = vadd.f32 0.0, %v5928
      %v5930 = vpop.f32.mrb[0].mxu0
      %v5931 = vpop.f32.mrb[0].mxu0
      %v5932 = vadd.f32 0.0, %v5931
      %v5933 = vpop.f32.mrb[0].mxu0
      %5934 = vmatprep.mubr.bf16.mxu0 0
      %5935 = vmatmul.mubr.bf16.gmra.mrb[0].mxu0 %v5889
      %v5936 = vpop.f32.mrb[0].mxu0
      %v5937 = vadd.f32 0.0, %v5936
      %v5938 = vpop.f32.mrb[0].mxu0
      %v5939 = vpop.f32.mrb[0].mxu0
      %v5940 = vpop.f32.mrb[0].mxu0
      %5941 = vdwg.mxu0
      %s5942 = scalar_lea.vmem %s7, 16
      %v5943 = vld [vmem:[%s5942] sm:$0xf]
      %v5944 = vld [vmem:[%s5942 + $0x4] sm:$0xf]
      %v5945 = vld [vmem:[%s5942 + $0x8] sm:$0xf]
      %v5946 = vld [vmem:[%s5942 + $0xc] sm:$0xf]
      %v5947 = vpack.c.bf16 %v5498, %v5495
      %v5948 = vpack.c.bf16 %v5557, %v5503
      %v5949 = vpack.c.bf16 %v5565, %v5560
      %v5950 = vpack.c.bf16 %v5622, %v5619
      %v5951 = vpack.c.bf16 %v5681, %v5627
      %v5952 = vpack.c.bf16 %v5689, %v5684
      %v5953 = vpack.c.bf16 %v5746, %v5743
      %v5954 = vpack.c.bf16 %v5805, %v5751
      %v5955 = vpack.c.bf16 %v5813, %v5808
      %v5956 = vpack.c.bf16 %v5870, %v5867
      %v5957 = vpack.c.bf16 %v5929, %v5875
      %v5958 = vpack.c.bf16 %v5937, %v5932
      %s5959 = scalar_lea.vmem %s8, 1
      %v5960 = vld [vmem:[%s5959] sm:$0x1]
      %v5962 = vlaneseq
      %v5963 = vshrl.u32 %v5962, 7
      %v5964 = vsub.s32 0, %v5963
      %v5965 = vrot.slane %v5960, %v5964
      %v5971 = vunpack.c.l.b16 %v5943
      %v5972 = vunpack.c.l.b16 %v5944
      %v5973 = vunpack.c.l.b16 %v5945
      %v5974 = vunpack.c.l.b16 %v5946
      %v5975 = vpack.c.b16 %v5972, %v5971
      %v5976 = vpack.c.b16 %v5974, %v5973
      %v5980 = vsel %vm900, %v5947, 0
      %v5983 = vsel %vm900, %v5948, 0
      %v5986 = vsel %vm900, %v5949, 0
      %v5989 = vsel %vm900, %v5950, 0
      %v5992 = vsel %vm900, %v5951, 0
      %v5995 = vsel %vm900, %v5952, 0
      %v5998 = vsel %vm900, %v5953, 0
      %v6001 = vsel %vm900, %v5954, 0
      %v6004 = vsel %vm900, %v5955, 0
      %v6007 = vsel %vm900, %v5956, 0
      %v6010 = vsel %vm900, %v5957, 0
      %v6013 = vsel %vm900, %v5958, 0
      %6015 = vmatprep.subr.bf16.mxu0 0
      %6016 = vmatpush1.bf16.msra.mxu0 %v5975
      %6017 = vmatprep.subr.bf16.mxu0 0
      %6018 = vmatpush1.bf16.msra.mxu0 %v5976
      %6019 = vmatprep.subr.bf16.mxu0 0
      %6020 = vmatpush1.bf16.msra.mxu0 0
      %6021 = vmatprep.subr.bf16.mxu0 0
      %6022 = vmatpush1.bf16.msra.mxu0 0
      %6023 = vmatprep.subr.bf16.mxu0 0
      %6024 = vmatpush1.bf16.msra.mxu0 0
      %6025 = vmatprep.subr.bf16.mxu0 0
      %6026 = vmatpush1.bf16.msra.mxu0 0
      %6027 = vmatprep.subr.bf16.mxu0 0
      %6028 = vmatpush1.bf16.msra.mxu0 0
      %6029 = vmatprep.subr.bf16.mxu0 0
      %6030 = vmatpush1.bf16.msra.mxu0 0
      %6031 = vmatprep.subr.bf16.mxu0 0
      %6032 = vmatpush1.bf16.msra.mxu0 0
      %6033 = vmatprep.subr.bf16.mxu0 0
      %6034 = vmatpush1.bf16.msra.mxu0 0
      %6035 = vmatprep.subr.bf16.mxu0 0
      %6036 = vmatpush1.bf16.msra.mxu0 0
      %6037 = vmatprep.subr.bf16.mxu0 0
      %6038 = vmatpush1.bf16.msra.mxu0 0
      %6039 = vmatprep.subr.bf16.mxu0 0
      %6040 = vmatpush1.bf16.msra.mxu0 0
      %6041 = vmatprep.subr.bf16.mxu0 0
      %6042 = vmatpush1.bf16.msra.mxu0 0
      %6043 = vmatprep.subr.bf16.mxu0 0
      %6044 = vmatpush1.bf16.msra.mxu0 0
      %6045 = vmatprep.subr.bf16.mxu0 0
      %6046 = vmatpush1.bf16.msra.mxu0 0
      %6047 = vmatprep.mubr.bf16.mxu0 0
      %6048 = vmatmul.mubr.bf16.gmra.mrb[0].mxu0 %v5980
      %v6049 = vpop.f32.mrb[0].mxu0
      %v6050 = vadd.f32 %v5965, %v6049
      %v6051 = vpop.f32.mrb[0].mxu0
      %v6052 = vpop.f32.mrb[0].mxu0
      %v6053 = vadd.f32 %v5965, %v6052
      %v6054 = vpop.f32.mrb[0].mxu0
      %6055 = vmatprep.mubr.bf16.mxu0 0
      %6056 = vmatmul.mubr.bf16.gmra.mrb[0].mxu0 %v5983
      %v6057 = vpop.f32.mrb[0].mxu0
      %v6058 = vadd.f32 %v5965, %v6057
      %v6059 = vpop.f32.mrb[0].mxu0
      %v6060 = vpop.f32.mrb[0].mxu0
      %v6061 = vadd.f32 %v5965, %v6060
      %v6062 = vpop.f32.mrb[0].mxu0
      %6063 = vmatprep.mubr.bf16.mxu0 0
      %6064 = vmatmul.mubr.bf16.gmra.mrb[0].mxu0 %v5986
      %v6065 = vpop.f32.mrb[0].mxu0
      %v6066 = vadd.f32 %v5965, %v6065
      %v6067 = vpop.f32.mrb[0].mxu0
      %v6068 = vpop.f32.mrb[0].mxu0
      %v6069 = vadd.f32 %v5965, %v6068
      %v6070 = vpop.f32.mrb[0].mxu0
      %6071 = vmatprep.mubr.bf16.mxu0 0
      %6072 = vmatmul.mubr.bf16.gmra.mrb[0].mxu0 %v5989
      %v6073 = vpop.f32.mrb[0].mxu0
      %v6074 = vadd.f32 %v5965, %v6073
      %v6075 = vpop.f32.mrb[0].mxu0
      %v6076 = vpop.f32.mrb[0].mxu0
      %v6077 = vadd.f32 %v5965, %v6076
      %v6078 = vpop.f32.mrb[0].mxu0
      %6079 = vmatprep.mubr.bf16.mxu0 0
      %6080 = vmatmul.mubr.bf16.gmra.mrb[0].mxu0 %v5992
      %v6081 = vpop.f32.mrb[0].mxu0
      %v6082 = vadd.f32 %v5965, %v6081
      %v6083 = vpop.f32.mrb[0].mxu0
      %v6084 = vpop.f32.mrb[0].mxu0
      %v6085 = vadd.f32 %v5965, %v6084
      %v6086 = vpop.f32.mrb[0].mxu0
      %6087 = vmatprep.mubr.bf16.mxu0 0
      %6088 = vmatmul.mubr.bf16.gmra.mrb[0].mxu0 %v5995
      %v6089 = vpop.f32.mrb[0].mxu0
      %v6090 = vadd.f32 %v5965, %v6089
      %v6091 = vpop.f32.mrb[0].mxu0
      %v6092 = vpop.f32.mrb[0].mxu0
      %v6093 = vadd.f32 %v5965, %v6092
      %v6094 = vpop.f32.mrb[0].mxu0
      %6095 = vmatprep.mubr.bf16.mxu0 0
      %6096 = vmatmul.mubr.bf16.gmra.mrb[0].mxu0 %v5998
      %v6097 = vpop.f32.mrb[0].mxu0
      %v6098 = vadd.f32 %v5965, %v6097
      %v6099 = vpop.f32.mrb[0].mxu0
      %v6100 = vpop.f32.mrb[0].mxu0
      %v6101 = vadd.f32 %v5965, %v6100
      %v6102 = vpop.f32.mrb[0].mxu0
      %6103 = vmatprep.mubr.bf16.mxu0 0
      %6104 = vmatmul.mubr.bf16.gmra.mrb[0].mxu0 %v6001
      %v6105 = vpop.f32.mrb[0].mxu0
      %v6106 = vadd.f32 %v5965, %v6105
      %v6107 = vpop.f32.mrb[0].mxu0
      %v6108 = vpop.f32.mrb[0].mxu0
      %v6109 = vadd.f32 %v5965, %v6108
      %v6110 = vpop.f32.mrb[0].mxu0
      %6111 = vmatprep.mubr.bf16.mxu0 0
      %6112 = vmatmul.mubr.bf16.gmra.mrb[0].mxu0 %v6004
      %v6113 = vpop.f32.mrb[0].mxu0
      %v6114 = vadd.f32 %v5965, %v6113
      %v6115 = vpop.f32.mrb[0].mxu0
      %v6116 = vpop.f32.mrb[0].mxu0
      %v6117 = vadd.f32 %v5965, %v6116
      %v6118 = vpop.f32.mrb[0].mxu0
      %6119 = vmatprep.mubr.bf16.mxu0 0
      %6120 = vmatmul.mubr.bf16.gmra.mrb[0].mxu0 %v6007
      %v6121 = vpop.f32.mrb[0].mxu0
      %v6122 = vadd.f32 %v5965, %v6121
      %v6123 = vpop.f32.mrb[0].mxu0
      %v6124 = vpop.f32.mrb[0].mxu0
      %v6125 = vadd.f32 %v5965, %v6124
      %v6126 = vpop.f32.mrb[0].mxu0
      %6127 = vmatprep.mubr.bf16.mxu0 0
      %6128 = vmatmul.mubr.bf16.gmra.mrb[0].mxu0 %v6010
      %v6129 = vpop.f32.mrb[0].mxu0
      %v6130 = vadd.f32 %v5965, %v6129
      %v6131 = vpop.f32.mrb[0].mxu0
      %v6132 = vpop.f32.mrb[0].mxu0
      %v6133 = vadd.f32 %v5965, %v6132
      %v6134 = vpop.f32.mrb[0].mxu0
      %6135 = vmatprep.mubr.bf16.mxu0 0
      %6136 = vmatmul.mubr.bf16.gmra.mrb[0].mxu0 %v6013
      %v6137 = vpop.f32.mrb[0].mxu0
      %v6138 = vadd.f32 %v5965, %v6137
      %v6139 = vpop.f32.mrb[0].mxu0
      %v6140 = vpop.f32.mrb[0].mxu0
      %v6141 = vadd.f32 %v5965, %v6140
      %v6142 = vpop.f32.mrb[0].mxu0
      %6143 = vdwg.mxu0
      %v6144 = vadd.f32 %v4372, %v6050
      %v6145 = vadd.f32 %v4373, %v6053
      %v6146 = vadd.f32 %v4374, %v6058
      %v6147 = vadd.f32 %v4375, %v6061
      %v6148 = vadd.f32 %v4376, %v6066
      %v6149 = vadd.f32 %v4377, %v6069
      %v6150 = vadd.f32 %v4378, %v6074
      %v6151 = vadd.f32 %v4379, %v6077
      %v6152 = vadd.f32 %v4380, %v6082
      %v6153 = vadd.f32 %v4381, %v6085
      %v6154 = vadd.f32 %v4382, %v6090
      %v6155 = vadd.f32 %v4383, %v6093
      %v6156 = vadd.f32 %v4384, %v6098
      %v6157 = vadd.f32 %v4385, %v6101
      %v6158 = vadd.f32 %v4386, %v6106
      %v6159 = vadd.f32 %v4387, %v6109
      %v6160 = vadd.f32 %v4388, %v6114
      %v6161 = vadd.f32 %v4389, %v6117
      %v6162 = vadd.f32 %v4390, %v6122
      %v6163 = vadd.f32 %v4391, %v6125
      %v6164 = vadd.f32 %v4392, %v6130
      %v6165 = vadd.f32 %v4393, %v6133
      %v6166 = vadd.f32 %v4394, %v6138
      %v6167 = vadd.f32 %v4395, %v6141
      %s6168 = scalar_lea.vmem %s9, 1
      %v6169 = vld [vmem:[%s6168] sm:$0x1]
      %s6170 = scalar_lea.vmem %s10, 1
      %v6171 = vld [vmem:[%s6170] sm:$0x1]
      %v6172 = vsel %vm900, %v6144, 0.0
      %6173 = vadd.xlane.f32.xlu0 %v6172
      %v6174 = vpop.xlane.xlu0 %6173
      %v6175 = vsel %vm900, %v6145, 0.0
      %6176 = vadd.xlane.f32.xlu0 %v6175
      %v6177 = vpop.xlane.xlu0 %6176
      %v6178 = vsel %vm900, %v6146, 0.0
      %6179 = vadd.xlane.f32.xlu0 %v6178
      %v6180 = vpop.xlane.xlu0 %6179
      %v6181 = vsel %vm900, %v6147, 0.0
      %6182 = vadd.xlane.f32.xlu0 %v6181
      %v6183 = vpop.xlane.xlu0 %6182
      %v6184 = vsel %vm900, %v6148, 0.0
      %6185 = vadd.xlane.f32.xlu0 %v6184
      %v6186 = vpop.xlane.xlu0 %6185
      %v6187 = vsel %vm900, %v6149, 0.0
      %6188 = vadd.xlane.f32.xlu0 %v6187
      %v6189 = vpop.xlane.xlu0 %6188
      %v6190 = vsel %vm900, %v6150, 0.0
      %6191 = vadd.xlane.f32.xlu0 %v6190
      %v6192 = vpop.xlane.xlu0 %6191
      %v6193 = vsel %vm900, %v6151, 0.0
      %6194 = vadd.xlane.f32.xlu0 %v6193
      %v6195 = vpop.xlane.xlu0 %6194
      %v6196 = vsel %vm900, %v6152, 0.0
      %6197 = vadd.xlane.f32.xlu0 %v6196
      %v6198 = vpop.xlane.xlu0 %6197
      %v6199 = vsel %vm900, %v6153, 0.0
      %6200 = vadd.xlane.f32.xlu0 %v6199
      %v6201 = vpop.xlane.xlu0 %6200
      %v6202 = vsel %vm900, %v6154, 0.0
      %6203 = vadd.xlane.f32.xlu0 %v6202
      %v6204 = vpop.xlane.xlu0 %6203
      %v6205 = vsel %vm900, %v6155, 0.0
      %6206 = vadd.xlane.f32.xlu0 %v6205
      %v6207 = vpop.xlane.xlu0 %6206
      %v6208 = vsel %vm900, %v6156, 0.0
      %6209 = vadd.xlane.f32.xlu0 %v6208
      %v6210 = vpop.xlane.xlu0 %6209
      %v6211 = vsel %vm900, %v6157, 0.0
      %6212 = vadd.xlane.f32.xlu0 %v6211
      %v6213 = vpop.xlane.xlu0 %6212
      %v6214 = vsel %vm900, %v6158, 0.0
      %6215 = vadd.xlane.f32.xlu0 %v6214
      %v6216 = vpop.xlane.xlu0 %6215
      %v6217 = vsel %vm900, %v6159, 0.0
      %6218 = vadd.xlane.f32.xlu0 %v6217
      %v6219 = vpop.xlane.xlu0 %6218
      %v6220 = vsel %vm900, %v6160, 0.0
      %6221 = vadd.xlane.f32.xlu0 %v6220
      %v6222 = vpop.xlane.xlu0 %6221
      %v6223 = vsel %vm900, %v6161, 0.0
      %6224 = vadd.xlane.f32.xlu0 %v6223
      %v6225 = vpop.xlane.xlu0 %6224
      %v6226 = vsel %vm900, %v6162, 0.0
      %6227 = vadd.xlane.f32.xlu0 %v6226
      %v6228 = vpop.xlane.xlu0 %6227
      %v6229 = vsel %vm900, %v6163, 0.0
      %6230 = vadd.xlane.f32.xlu0 %v6229
      %v6231 = vpop.xlane.xlu0 %6230
      %v6232 = vsel %vm900, %v6164, 0.0
      %6233 = vadd.xlane.f32.xlu0 %v6232
      %v6234 = vpop.xlane.xlu0 %6233
      %v6235 = vsel %vm900, %v6165, 0.0
      %6236 = vadd.xlane.f32.xlu0 %v6235
      %v6237 = vpop.xlane.xlu0 %6236
      %v6238 = vsel %vm900, %v6166, 0.0
      %6239 = vadd.xlane.f32.xlu0 %v6238
      %v6240 = vpop.xlane.xlu0 %6239
      %v6241 = vsel %vm900, %v6167, 0.0
      %6242 = vadd.xlane.f32.xlu0 %v6241
      %v6243 = vpop.xlane.xlu0 %6242
      %v6244 = vmul.f32 %v6174, %v973
      %v6245 = vmul.f32 %v6177, %v973
      %v6246 = vmul.f32 %v6180, %v973
      %v6247 = vmul.f32 %v6183, %v973
      %v6248 = vmul.f32 %v6186, %v973
      %v6249 = vmul.f32 %v6189, %v973
      %v6250 = vmul.f32 %v6192, %v973
      %v6251 = vmul.f32 %v6195, %v973
      %v6252 = vmul.f32 %v6198, %v973
      %v6253 = vmul.f32 %v6201, %v973
      %v6254 = vmul.f32 %v6204, %v973
      %v6255 = vmul.f32 %v6207, %v973
      %v6256 = vmul.f32 %v6210, %v973
      %v6257 = vmul.f32 %v6213, %v973
      %v6258 = vmul.f32 %v6216, %v973
      %v6259 = vmul.f32 %v6219, %v973
      %v6260 = vmul.f32 %v6222, %v973
      %v6261 = vmul.f32 %v6225, %v973
      %v6262 = vmul.f32 %v6228, %v973
      %v6263 = vmul.f32 %v6231, %v973
      %v6264 = vmul.f32 %v6234, %v973
      %v6265 = vmul.f32 %v6237, %v973
      %v6266 = vmul.f32 %v6240, %v973
      %v6267 = vmul.f32 %v6243, %v973
      %v6268 = vmul.f32 %v6144, %v6144
      %v6269 = vmul.f32 %v6145, %v6145
      %v6270 = vmul.f32 %v6146, %v6146
      %v6271 = vmul.f32 %v6147, %v6147
      %v6272 = vmul.f32 %v6148, %v6148
      %v6273 = vmul.f32 %v6149, %v6149
      %v6274 = vmul.f32 %v6150, %v6150
      %v6275 = vmul.f32 %v6151, %v6151
      %v6276 = vmul.f32 %v6152, %v6152
      %v6277 = vmul.f32 %v6153, %v6153
      %v6278 = vmul.f32 %v6154, %v6154
      %v6279 = vmul.f32 %v6155, %v6155
      %v6280 = vmul.f32 %v6156, %v6156
      %v6281 = vmul.f32 %v6157, %v6157
      %v6282 = vmul.f32 %v6158, %v6158
      %v6283 = vmul.f32 %v6159, %v6159
      %v6284 = vmul.f32 %v6160, %v6160
      %v6285 = vmul.f32 %v6161, %v6161
      %v6286 = vmul.f32 %v6162, %v6162
      %v6287 = vmul.f32 %v6163, %v6163
      %v6288 = vmul.f32 %v6164, %v6164
      %v6289 = vmul.f32 %v6165, %v6165
      %v6290 = vmul.f32 %v6166, %v6166
      %v6291 = vmul.f32 %v6167, %v6167
      %v6292 = vsel %vm900, %v6268, 0.0
      %6293 = vadd.xlane.f32.xlu0 %v6292
      %v6294 = vpop.xlane.xlu0 %6293
      %v6295 = vsel %vm900, %v6269, 0.0
      %6296 = vadd.xlane.f32.xlu0 %v6295
      %v6297 = vpop.xlane.xlu0 %6296
      %v6298 = vsel %vm900, %v6270, 0.0
      %6299 = vadd.xlane.f32.xlu0 %v6298
      %v6300 = vpop.xlane.xlu0 %6299
      %v6301 = vsel %vm900, %v6271, 0.0
      %6302 = vadd.xlane.f32.xlu0 %v6301
      %v6303 = vpop.xlane.xlu0 %6302
      %v6304 = vsel %vm900, %v6272, 0.0
      %6305 = vadd.xlane.f32.xlu0 %v6304
      %v6306 = vpop.xlane.xlu0 %6305
      %v6307 = vsel %vm900, %v6273, 0.0
      %6308 = vadd.xlane.f32.xlu0 %v6307
      %v6309 = vpop.xlane.xlu0 %6308
      %v6310 = vsel %vm900, %v6274, 0.0
      %6311 = vadd.xlane.f32.xlu0 %v6310
      %v6312 = vpop.xlane.xlu0 %6311
      %v6313 = vsel %vm900, %v6275, 0.0
      %6314 = vadd.xlane.f32.xlu0 %v6313
      %v6315 = vpop.xlane.xlu0 %6314
      %v6316 = vsel %vm900, %v6276, 0.0
      %6317 = vadd.xlane.f32.xlu0 %v6316
      %v6318 = vpop.xlane.xlu0 %6317
      %v6319 = vsel %vm900, %v6277, 0.0
      %6320 = vadd.xlane.f32.xlu0 %v6319
      %v6321 = vpop.xlane.xlu0 %6320
      %v6322 = vsel %vm900, %v6278, 0.0
      %6323 = vadd.xlane.f32.xlu0 %v6322
      %v6324 = vpop.xlane.xlu0 %6323
      %v6325 = vsel %vm900, %v6279, 0.0
      %6326 = vadd.xlane.f32.xlu0 %v6325
      %v6327 = vpop.xlane.xlu0 %6326
      %v6328 = vsel %vm900, %v6280, 0.0
      %6329 = vadd.xlane.f32.xlu0 %v6328
      %v6330 = vpop.xlane.xlu0 %6329
      %v6331 = vsel %vm900, %v6281, 0.0
      %6332 = vadd.xlane.f32.xlu0 %v6331
      %v6333 = vpop.xlane.xlu0 %6332
      %v6334 = vsel %vm900, %v6282, 0.0
      %6335 = vadd.xlane.f32.xlu0 %v6334
      %v6336 = vpop.xlane.xlu0 %6335
      %v6337 = vsel %vm900, %v6283, 0.0
      %6338 = vadd.xlane.f32.xlu0 %v6337
      %v6339 = vpop.xlane.xlu0 %6338
      %v6340 = vsel %vm900, %v6284, 0.0
      %6341 = vadd.xlane.f32.xlu0 %v6340
      %v6342 = vpop.xlane.xlu0 %6341
      %v6343 = vsel %vm900, %v6285, 0.0
      %6344 = vadd.xlane.f32.xlu0 %v6343
      %v6345 = vpop.xlane.xlu0 %6344
      %v6346 = vsel %vm900, %v6286, 0.0
      %6347 = vadd.xlane.f32.xlu0 %v6346
      %v6348 = vpop.xlane.xlu0 %6347
      %v6349 = vsel %vm900, %v6287, 0.0
      %6350 = vadd.xlane.f32.xlu0 %v6349
      %v6351 = vpop.xlane.xlu0 %6350
      %v6352 = vsel %vm900, %v6288, 0.0
      %6353 = vadd.xlane.f32.xlu0 %v6352
      %v6354 = vpop.xlane.xlu0 %6353
      %v6355 = vsel %vm900, %v6289, 0.0
      %6356 = vadd.xlane.f32.xlu0 %v6355
      %v6357 = vpop.xlane.xlu0 %6356
      %v6358 = vsel %vm900, %v6290, 0.0
      %6359 = vadd.xlane.f32.xlu0 %v6358
      %v6360 = vpop.xlane.xlu0 %6359
      %v6361 = vsel %vm900, %v6291, 0.0
      %6362 = vadd.xlane.f32.xlu0 %v6361
      %v6363 = vpop.xlane.xlu0 %6362
      %v6364 = vmul.f32 %v6294, %v973
      %v6365 = vmul.f32 %v6297, %v973
      %v6366 = vmul.f32 %v6300, %v973
      %v6367 = vmul.f32 %v6303, %v973
      %v6368 = vmul.f32 %v6306, %v973
      %v6369 = vmul.f32 %v6309, %v973
      %v6370 = vmul.f32 %v6312, %v973
      %v6371 = vmul.f32 %v6315, %v973
      %v6372 = vmul.f32 %v6318, %v973
      %v6373 = vmul.f32 %v6321, %v973
      %v6374 = vmul.f32 %v6324, %v973
      %v6375 = vmul.f32 %v6327, %v973
      %v6376 = vmul.f32 %v6330, %v973
      %v6377 = vmul.f32 %v6333, %v973
      %v6378 = vmul.f32 %v6336, %v973
      %v6379 = vmul.f32 %v6339, %v973
      %v6380 = vmul.f32 %v6342, %v973
      %v6381 = vmul.f32 %v6345, %v973
      %v6382 = vmul.f32 %v6348, %v973
      %v6383 = vmul.f32 %v6351, %v973
      %v6384 = vmul.f32 %v6354, %v973
      %v6385 = vmul.f32 %v6357, %v973
      %v6386 = vmul.f32 %v6360, %v973
      %v6387 = vmul.f32 %v6363, %v973
      %v6388 = vmul.f32 %v6244, %v6244
      %v6389 = vmul.f32 %v6245, %v6245
      %v6390 = vmul.f32 %v6246, %v6246
      %v6391 = vmul.f32 %v6247, %v6247
      %v6392 = vmul.f32 %v6248, %v6248
      %v6393 = vmul.f32 %v6249, %v6249
      %v6394 = vmul.f32 %v6250, %v6250
      %v6395 = vmul.f32 %v6251, %v6251
      %v6396 = vmul.f32 %v6252, %v6252
      %v6397 = vmul.f32 %v6253, %v6253
      %v6398 = vmul.f32 %v6254, %v6254
      %v6399 = vmul.f32 %v6255, %v6255
      %v6400 = vmul.f32 %v6256, %v6256
      %v6401 = vmul.f32 %v6257, %v6257
      %v6402 = vmul.f32 %v6258, %v6258
      %v6403 = vmul.f32 %v6259, %v6259
      %v6404 = vmul.f32 %v6260, %v6260
      %v6405 = vmul.f32 %v6261, %v6261
      %v6406 = vmul.f32 %v6262, %v6262
      %v6407 = vmul.f32 %v6263, %v6263
      %v6408 = vmul.f32 %v6264, %v6264
      %v6409 = vmul.f32 %v6265, %v6265
      %v6410 = vmul.f32 %v6266, %v6266
      %v6411 = vmul.f32 %v6267, %v6267
      %v6412 = vsub.f32 %v6364, %v6388
      %v6413 = vsub.f32 %v6365, %v6389
      %v6414 = vsub.f32 %v6366, %v6390
      %v6415 = vsub.f32 %v6367, %v6391
      %v6416 = vsub.f32 %v6368, %v6392
      %v6417 = vsub.f32 %v6369, %v6393
      %v6418 = vsub.f32 %v6370, %v6394
      %v6419 = vsub.f32 %v6371, %v6395
      %v6420 = vsub.f32 %v6372, %v6396
      %v6421 = vsub.f32 %v6373, %v6397
      %v6422 = vsub.f32 %v6374, %v6398
      %v6423 = vsub.f32 %v6375, %v6399
      %v6424 = vsub.f32 %v6376, %v6400
      %v6425 = vsub.f32 %v6377, %v6401
      %v6426 = vsub.f32 %v6378, %v6402
      %v6427 = vsub.f32 %v6379, %v6403
      %v6428 = vsub.f32 %v6380, %v6404
      %v6429 = vsub.f32 %v6381, %v6405
      %v6430 = vsub.f32 %v6382, %v6406
      %v6431 = vsub.f32 %v6383, %v6407
      %v6432 = vsub.f32 %v6384, %v6408
      %v6433 = vsub.f32 %v6385, %v6409
      %v6434 = vsub.f32 %v6386, %v6410
      %v6435 = vsub.f32 %v6387, %v6411
      %v6436 = vsub.f32 %v6144, %v6244
      %v6437 = vsub.f32 %v6145, %v6245
      %v6438 = vsub.f32 %v6146, %v6246
      %v6439 = vsub.f32 %v6147, %v6247
      %v6440 = vsub.f32 %v6148, %v6248
      %v6441 = vsub.f32 %v6149, %v6249
      %v6442 = vsub.f32 %v6150, %v6250
      %v6443 = vsub.f32 %v6151, %v6251
      %v6444 = vsub.f32 %v6152, %v6252
      %v6445 = vsub.f32 %v6153, %v6253
      %v6446 = vsub.f32 %v6154, %v6254
      %v6447 = vsub.f32 %v6155, %v6255
      %v6448 = vsub.f32 %v6156, %v6256
      %v6449 = vsub.f32 %v6157, %v6257
      %v6450 = vsub.f32 %v6158, %v6258
      %v6451 = vsub.f32 %v6159, %v6259
      %v6452 = vsub.f32 %v6160, %v6260
      %v6453 = vsub.f32 %v6161, %v6261
      %v6454 = vsub.f32 %v6162, %v6262
      %v6455 = vsub.f32 %v6163, %v6263
      %v6456 = vsub.f32 %v6164, %v6264
      %v6457 = vsub.f32 %v6165, %v6265
      %v6458 = vsub.f32 %v6166, %v6266
      %v6459 = vsub.f32 %v6167, %v6267
      %v6460 = vadd.f32 %v6412, 1e-05
      %v6461 = vadd.f32 %v6413, 1e-05
      %v6462 = vadd.f32 %v6414, 1e-05
      %v6463 = vadd.f32 %v6415, 1e-05
      %v6464 = vadd.f32 %v6416, 1e-05
      %v6465 = vadd.f32 %v6417, 1e-05
      %v6466 = vadd.f32 %v6418, 1e-05
      %v6467 = vadd.f32 %v6419, 1e-05
      %v6468 = vadd.f32 %v6420, 1e-05
      %v6469 = vadd.f32 %v6421, 1e-05
      %v6470 = vadd.f32 %v6422, 1e-05
      %v6471 = vadd.f32 %v6423, 1e-05
      %v6472 = vadd.f32 %v6424, 1e-05
      %v6473 = vadd.f32 %v6425, 1e-05
      %v6474 = vadd.f32 %v6426, 1e-05
      %v6475 = vadd.f32 %v6427, 1e-05
      %v6476 = vadd.f32 %v6428, 1e-05
      %v6477 = vadd.f32 %v6429, 1e-05
      %v6478 = vadd.f32 %v6430, 1e-05
      %v6479 = vadd.f32 %v6431, 1e-05
      %v6480 = vadd.f32 %v6432, 1e-05
      %v6481 = vadd.f32 %v6433, 1e-05
      %v6482 = vadd.f32 %v6434, 1e-05
      %v6483 = vadd.f32 %v6435, 1e-05
      %v6484 = vrsqrt.pop %v6460
      %v6485 = vrsqrt.pop %v6461
      %v6486 = vrsqrt.pop %v6462
      %v6487 = vrsqrt.pop %v6463
      %v6488 = vrsqrt.pop %v6464
      %v6489 = vrsqrt.pop %v6465
      %v6490 = vrsqrt.pop %v6466
      %v6491 = vrsqrt.pop %v6467
      %v6492 = vrsqrt.pop %v6468
      %v6493 = vrsqrt.pop %v6469
      %v6494 = vrsqrt.pop %v6470
      %v6495 = vrsqrt.pop %v6471
      %v6496 = vrsqrt.pop %v6472
      %v6497 = vrsqrt.pop %v6473
      %v6498 = vrsqrt.pop %v6474
      %v6499 = vrsqrt.pop %v6475
      %v6500 = vrsqrt.pop %v6476
      %v6501 = vrsqrt.pop %v6477
      %v6502 = vrsqrt.pop %v6478
      %v6503 = vrsqrt.pop %v6479
      %v6504 = vrsqrt.pop %v6480
      %v6505 = vrsqrt.pop %v6481
      %v6506 = vrsqrt.pop %v6482
      %v6507 = vrsqrt.pop %v6483
      %v6508 = vmul.f32 %v6436, %v6484
      %v6509 = vmul.f32 %v6437, %v6485
      %v6510 = vmul.f32 %v6438, %v6486
      %v6511 = vmul.f32 %v6439, %v6487
      %v6512 = vmul.f32 %v6440, %v6488
      %v6513 = vmul.f32 %v6441, %v6489
      %v6514 = vmul.f32 %v6442, %v6490
      %v6515 = vmul.f32 %v6443, %v6491
      %v6516 = vmul.f32 %v6444, %v6492
      %v6517 = vmul.f32 %v6445, %v6493
      %v6518 = vmul.f32 %v6446, %v6494
      %v6519 = vmul.f32 %v6447, %v6495
      %v6520 = vmul.f32 %v6448, %v6496
      %v6521 = vmul.f32 %v6449, %v6497
      %v6522 = vmul.f32 %v6450, %v6498
      %v6523 = vmul.f32 %v6451, %v6499
      %v6524 = vmul.f32 %v6452, %v6500
      %v6525 = vmul.f32 %v6453, %v6501
      %v6526 = vmul.f32 %v6454, %v6502
      %v6527 = vmul.f32 %v6455, %v6503
      %v6528 = vmul.f32 %v6456, %v6504
      %v6529 = vmul.f32 %v6457, %v6505
      %v6530 = vmul.f32 %v6458, %v6506
      %v6531 = vmul.f32 %v6459, %v6507
      %v6533 = vlaneseq
      %v6534 = vshrl.u32 %v6533, 7
      %v6535 = vsub.s32 0, %v6534
      %v6536 = vrot.slane %v6169, %v6535
      %v6538 = vmul.f32 %v6508, %v6536
      %v6539 = vmul.f32 %v6509, %v6536
      %v6540 = vmul.f32 %v6510, %v6536
      %v6541 = vmul.f32 %v6511, %v6536
      %v6542 = vmul.f32 %v6512, %v6536
      %v6543 = vmul.f32 %v6513, %v6536
      %v6544 = vmul.f32 %v6514, %v6536
      %v6545 = vmul.f32 %v6515, %v6536
      %v6546 = vmul.f32 %v6516, %v6536
      %v6547 = vmul.f32 %v6517, %v6536
      %v6548 = vmul.f32 %v6518, %v6536
      %v6549 = vmul.f32 %v6519, %v6536
      %v6550 = vmul.f32 %v6520, %v6536
      %v6551 = vmul.f32 %v6521, %v6536
      %v6552 = vmul.f32 %v6522, %v6536
      %v6553 = vmul.f32 %v6523, %v6536
      %v6554 = vmul.f32 %v6524, %v6536
      %v6555 = vmul.f32 %v6525, %v6536
      %v6556 = vmul.f32 %v6526, %v6536
      %v6557 = vmul.f32 %v6527, %v6536
      %v6558 = vmul.f32 %v6528, %v6536
      %v6559 = vmul.f32 %v6529, %v6536
      %v6560 = vmul.f32 %v6530, %v6536
      %v6561 = vmul.f32 %v6531, %v6536
      %v6563 = vlaneseq
      %v6564 = vshrl.u32 %v6563, 7
      %v6565 = vsub.s32 0, %v6564
      %v6566 = vrot.slane %v6171, %v6565
      %v6568 = vadd.f32 %v6538, %v6566
      %v6569 = vadd.f32 %v6539, %v6566
      %v6570 = vadd.f32 %v6540, %v6566
      %v6571 = vadd.f32 %v6541, %v6566
      %v6572 = vadd.f32 %v6542, %v6566
      %v6573 = vadd.f32 %v6543, %v6566
      %v6574 = vadd.f32 %v6544, %v6566
      %v6575 = vadd.f32 %v6545, %v6566
      %v6576 = vadd.f32 %v6546, %v6566
      %v6577 = vadd.f32 %v6547, %v6566
      %v6578 = vadd.f32 %v6548, %v6566
      %v6579 = vadd.f32 %v6549, %v6566
      %v6580 = vadd.f32 %v6550, %v6566
      %v6581 = vadd.f32 %v6551, %v6566
      %v6582 = vadd.f32 %v6552, %v6566
      %v6583 = vadd.f32 %v6553, %v6566
      %v6584 = vadd.f32 %v6554, %v6566
      %v6585 = vadd.f32 %v6555, %v6566
      %v6586 = vadd.f32 %v6556, %v6566
      %v6587 = vadd.f32 %v6557, %v6566
      %v6588 = vadd.f32 %v6558, %v6566
      %v6589 = vadd.f32 %v6559, %v6566
      %v6590 = vadd.f32 %v6560, %v6566
      %v6591 = vadd.f32 %v6561, %v6566
      %s6592 = scalar_lea.vmem %s13, 16
      %v6593 = vld [vmem:[%s6592] sm:$0xf]
      %v6594 = vld [vmem:[%s6592 + $0x4] sm:$0xf]
      %v6595 = vld [vmem:[%s6592 + $0x8] sm:$0xf]
      %v6596 = vld [vmem:[%s6592 + $0xc] sm:$0xf]
      %v6597 = vpack.c.bf16 %v6569, %v6568
      %v6598 = vpack.c.bf16 %v6571, %v6570
      %v6599 = vpack.c.bf16 %v6573, %v6572
      %v6600 = vpack.c.bf16 %v6575, %v6574
      %v6601 = vpack.c.bf16 %v6577, %v6576
      %v6602 = vpack.c.bf16 %v6579, %v6578
      %v6603 = vpack.c.bf16 %v6581, %v6580
      %v6604 = vpack.c.bf16 %v6583, %v6582
      %v6605 = vpack.c.bf16 %v6585, %v6584
      %v6606 = vpack.c.bf16 %v6587, %v6586
      %v6607 = vpack.c.bf16 %v6589, %v6588
      %v6608 = vpack.c.bf16 %v6591, %v6590
      %s6609 = scalar_lea.vmem %s14, 1
      %v6610 = vld [vmem:[%s6609] sm:$0x1]
      %v6612 = vlaneseq
      %v6613 = vshrl.u32 %v6612, 7
      %v6614 = vsub.s32 0, %v6613
      %v6615 = vrot.slane %v6610, %v6614
      %v6621 = vunpack.c.l.b16 %v6593
      %v6622 = vunpack.c.l.b16 %v6594
      %v6623 = vunpack.c.l.b16 %v6595
      %v6624 = vunpack.c.l.b16 %v6596
      %v6625 = vpack.c.b16 %v6622, %v6621
      %v6626 = vpack.c.b16 %v6624, %v6623
      %v6630 = vsel %vm900, %v6597, 0
      %v6633 = vsel %vm900, %v6598, 0
      %v6636 = vsel %vm900, %v6599, 0
      %v6639 = vsel %vm900, %v6600, 0
      %v6642 = vsel %vm900, %v6601, 0
      %v6645 = vsel %vm900, %v6602, 0
      %v6648 = vsel %vm900, %v6603, 0
      %v6651 = vsel %vm900, %v6604, 0
      %v6654 = vsel %vm900, %v6605, 0
      %v6657 = vsel %vm900, %v6606, 0
      %v6660 = vsel %vm900, %v6607, 0
      %v6663 = vsel %vm900, %v6608, 0
      %6665 = vmatprep.subr.bf16.mxu0 0
      %6666 = vmatpush1.bf16.msra.mxu0 %v6625
      %6667 = vmatprep.subr.bf16.mxu0 0
      %6668 = vmatpush1.bf16.msra.mxu0 %v6626
      %6669 = vmatprep.subr.bf16.mxu0 0
      %6670 = vmatpush1.bf16.msra.mxu0 0
      %6671 = vmatprep.subr.bf16.mxu0 0
      %6672 = vmatpush1.bf16.msra.mxu0 0
      %6673 = vmatprep.subr.bf16.mxu0 0
      %6674 = vmatpush1.bf16.msra.mxu0 0
      %6675 = vmatprep.subr.bf16.mxu0 0
      %6676 = vmatpush1.bf16.msra.mxu0 0
      %6677 = vmatprep.subr.bf16.mxu0 0
      %6678 = vmatpush1.bf16.msra.mxu0 0
      %6679 = vmatprep.subr.bf16.mxu0 0
      %6680 = vmatpush1.bf16.msra.mxu0 0
      %6681 = vmatprep.subr.bf16.mxu0 0
      %6682 = vmatpush1.bf16.msra.mxu0 0
      %6683 = vmatprep.subr.bf16.mxu0 0
      %6684 = vmatpush1.bf16.msra.mxu0 0
      %6685 = vmatprep.subr.bf16.mxu0 0
      %6686 = vmatpush1.bf16.msra.mxu0 0
      %6687 = vmatprep.subr.bf16.mxu0 0
      %6688 = vmatpush1.bf16.msra.mxu0 0
      %6689 = vmatprep.subr.bf16.mxu0 0
      %6690 = vmatpush1.bf16.msra.mxu0 0
      %6691 = vmatprep.subr.bf16.mxu0 0
      %6692 = vmatpush1.bf16.msra.mxu0 0
      %6693 = vmatprep.subr.bf16.mxu0 0
      %6694 = vmatpush1.bf16.msra.mxu0 0
      %6695 = vmatprep.subr.bf16.mxu0 0
      %6696 = vmatpush1.bf16.msra.mxu0 0
      %6697 = vmatprep.mubr.bf16.mxu0 0
      %6698 = vmatmul.mubr.bf16.gmra.mrb[0].mxu0 %v6630
      %v6699 = vpop.f32.mrb[0].mxu0
      %v6700 = vadd.f32 %v6615, %v6699
      %v6701 = vpop.f32.mrb[0].mxu0
      %v6702 = vpop.f32.mrb[0].mxu0
      %v6703 = vadd.f32 %v6615, %v6702
      %v6704 = vpop.f32.mrb[0].mxu0
      %6705 = vmatprep.mubr.bf16.mxu0 0
      %6706 = vmatmul.mubr.bf16.gmra.mrb[0].mxu0 %v6633
      %v6707 = vpop.f32.mrb[0].mxu0
      %v6708 = vadd.f32 %v6615, %v6707
      %v6709 = vpop.f32.mrb[0].mxu0
      %v6710 = vpop.f32.mrb[0].mxu0
      %v6711 = vadd.f32 %v6615, %v6710
      %v6712 = vpop.f32.mrb[0].mxu0
      %6713 = vmatprep.mubr.bf16.mxu0 0
      %6714 = vmatmul.mubr.bf16.gmra.mrb[0].mxu0 %v6636
      %v6715 = vpop.f32.mrb[0].mxu0
      %v6716 = vadd.f32 %v6615, %v6715
      %v6717 = vpop.f32.mrb[0].mxu0
      %v6718 = vpop.f32.mrb[0].mxu0
      %v6719 = vadd.f32 %v6615, %v6718
      %v6720 = vpop.f32.mrb[0].mxu0
      %6721 = vmatprep.mubr.bf16.mxu0 0
      %6722 = vmatmul.mubr.bf16.gmra.mrb[0].mxu0 %v6639
      %v6723 = vpop.f32.mrb[0].mxu0
      %v6724 = vadd.f32 %v6615, %v6723
      %v6725 = vpop.f32.mrb[0].mxu0
      %v6726 = vpop.f32.mrb[0].mxu0
      %v6727 = vadd.f32 %v6615, %v6726
      %v6728 = vpop.f32.mrb[0].mxu0
      %6729 = vmatprep.mubr.bf16.mxu0 0
      %6730 = vmatmul.mubr.bf16.gmra.mrb[0].mxu0 %v6642
      %v6731 = vpop.f32.mrb[0].mxu0
      %v6732 = vadd.f32 %v6615, %v6731
      %v6733 = vpop.f32.mrb[0].mxu0
      %v6734 = vpop.f32.mrb[0].mxu0
      %v6735 = vadd.f32 %v6615, %v6734
      %v6736 = vpop.f32.mrb[0].mxu0
      %6737 = vmatprep.mubr.bf16.mxu0 0
      %6738 = vmatmul.mubr.bf16.gmra.mrb[0].mxu0 %v6645
      %v6739 = vpop.f32.mrb[0].mxu0
      %v6740 = vadd.f32 %v6615, %v6739
      %v6741 = vpop.f32.mrb[0].mxu0
      %v6742 = vpop.f32.mrb[0].mxu0
      %v6743 = vadd.f32 %v6615, %v6742
      %v6744 = vpop.f32.mrb[0].mxu0
      %6745 = vmatprep.mubr.bf16.mxu0 0
      %6746 = vmatmul.mubr.bf16.gmra.mrb[0].mxu0 %v6648
      %v6747 = vpop.f32.mrb[0].mxu0
      %v6748 = vadd.f32 %v6615, %v6747
      %v6749 = vpop.f32.mrb[0].mxu0
      %v6750 = vpop.f32.mrb[0].mxu0
      %v6751 = vadd.f32 %v6615, %v6750
      %v6752 = vpop.f32.mrb[0].mxu0
      %6753 = vmatprep.mubr.bf16.mxu0 0
      %6754 = vmatmul.mubr.bf16.gmra.mrb[0].mxu0 %v6651
      %v6755 = vpop.f32.mrb[0].mxu0
      %v6756 = vadd.f32 %v6615, %v6755
      %v6757 = vpop.f32.mrb[0].mxu0
      %v6758 = vpop.f32.mrb[0].mxu0
      %v6759 = vadd.f32 %v6615, %v6758
      %v6760 = vpop.f32.mrb[0].mxu0
      %6761 = vmatprep.mubr.bf16.mxu0 0
      %6762 = vmatmul.mubr.bf16.gmra.mrb[0].mxu0 %v6654
      %v6763 = vpop.f32.mrb[0].mxu0
      %v6764 = vadd.f32 %v6615, %v6763
      %v6765 = vpop.f32.mrb[0].mxu0
      %v6766 = vpop.f32.mrb[0].mxu0
      %v6767 = vadd.f32 %v6615, %v6766
      %v6768 = vpop.f32.mrb[0].mxu0
      %6769 = vmatprep.mubr.bf16.mxu0 0
      %6770 = vmatmul.mubr.bf16.gmra.mrb[0].mxu0 %v6657
      %v6771 = vpop.f32.mrb[0].mxu0
      %v6772 = vadd.f32 %v6615, %v6771
      %v6773 = vpop.f32.mrb[0].mxu0
      %v6774 = vpop.f32.mrb[0].mxu0
      %v6775 = vadd.f32 %v6615, %v6774
      %v6776 = vpop.f32.mrb[0].mxu0
      %6777 = vmatprep.mubr.bf16.mxu0 0
      %6778 = vmatmul.mubr.bf16.gmra.mrb[0].mxu0 %v6660
      %v6779 = vpop.f32.mrb[0].mxu0
      %v6780 = vadd.f32 %v6615, %v6779
      %v6781 = vpop.f32.mrb[0].mxu0
      %v6782 = vpop.f32.mrb[0].mxu0
      %v6783 = vadd.f32 %v6615, %v6782
      %v6784 = vpop.f32.mrb[0].mxu0
      %6785 = vmatprep.mubr.bf16.mxu0 0
      %6786 = vmatmul.mubr.bf16.gmra.mrb[0].mxu0 %v6663
      %v6787 = vpop.f32.mrb[0].mxu0
      %v6788 = vadd.f32 %v6615, %v6787
      %v6789 = vpop.f32.mrb[0].mxu0
      %v6790 = vpop.f32.mrb[0].mxu0
      %v6791 = vadd.f32 %v6615, %v6790
      %v6792 = vpop.f32.mrb[0].mxu0
      %6793 = vdwg.mxu0
      %v6794 = vmax.f32 %v6700, 0.0
      %v6795 = vmax.f32 %v6703, 0.0
      %v6796 = vmax.f32 %v6708, 0.0
      %v6797 = vmax.f32 %v6711, 0.0
      %v6798 = vmax.f32 %v6716, 0.0
      %v6799 = vmax.f32 %v6719, 0.0
      %v6800 = vmax.f32 %v6724, 0.0
      %v6801 = vmax.f32 %v6727, 0.0
      %v6802 = vmax.f32 %v6732, 0.0
      %v6803 = vmax.f32 %v6735, 0.0
      %v6804 = vmax.f32 %v6740, 0.0
      %v6805 = vmax.f32 %v6743, 0.0
      %v6806 = vmax.f32 %v6748, 0.0
      %v6807 = vmax.f32 %v6751, 0.0
      %v6808 = vmax.f32 %v6756, 0.0
      %v6809 = vmax.f32 %v6759, 0.0
      %v6810 = vmax.f32 %v6764, 0.0
      %v6811 = vmax.f32 %v6767, 0.0
      %v6812 = vmax.f32 %v6772, 0.0
      %v6813 = vmax.f32 %v6775, 0.0
      %v6814 = vmax.f32 %v6780, 0.0
      %v6815 = vmax.f32 %v6783, 0.0
      %v6816 = vmax.f32 %v6788, 0.0
      %v6817 = vmax.f32 %v6791, 0.0
      %s6818 = scalar_lea.vmem %s15, 64
      %v6819 = vld [vmem:[%s6818] sm:$0xf]
      %v6820 = vld [vmem:[%s6818 + $0x4] sm:$0xf]
      %v6821 = vld [vmem:[%s6818 + $0x8] sm:$0xf]
      %v6822 = vld [vmem:[%s6818 + $0xc] sm:$0xf]
      %v6823 = vld [vmem:[%s6818 + $0x10] sm:$0xf]
      %v6824 = vld [vmem:[%s6818 + $0x14] sm:$0xf]
      %v6825 = vld [vmem:[%s6818 + $0x18] sm:$0xf]
      %v6826 = vld [vmem:[%s6818 + $0x1c] sm:$0xf]
      %v6827 = vld [vmem:[%s6818 + $0x20] sm:$0xf]
      %v6828 = vld [vmem:[%s6818 + $0x24] sm:$0xf]
      %v6829 = vld [vmem:[%s6818 + $0x28] sm:$0xf]
      %v6830 = vld [vmem:[%s6818 + $0x2c] sm:$0xf]
      %v6831 = vld [vmem:[%s6818 + $0x30] sm:$0xf]
      %v6832 = vld [vmem:[%s6818 + $0x34] sm:$0xf]
      %v6833 = vld [vmem:[%s6818 + $0x38] sm:$0xf]
      %v6834 = vld [vmem:[%s6818 + $0x3c] sm:$0xf]
      %v6835 = vpack.c.bf16 %v6795, %v6794
      %v6836 = vpack.c.bf16 %v6797, %v6796
      %v6837 = vpack.c.bf16 %v6799, %v6798
      %v6838 = vpack.c.bf16 %v6801, %v6800
      %v6839 = vpack.c.bf16 %v6803, %v6802
      %v6840 = vpack.c.bf16 %v6805, %v6804
      %v6841 = vpack.c.bf16 %v6807, %v6806
      %v6842 = vpack.c.bf16 %v6809, %v6808
      %v6843 = vpack.c.bf16 %v6811, %v6810
      %v6844 = vpack.c.bf16 %v6813, %v6812
      %v6845 = vpack.c.bf16 %v6815, %v6814
      %v6846 = vpack.c.bf16 %v6817, %v6816
      %s6847 = scalar_lea.vmem %s16, 1
      %v6848 = vld [vmem:[%s6847] sm:$0x1]
      %v6850 = vlaneseq
      %v6851 = vshrl.u32 %v6850, 7
      %v6852 = vsub.s32 0, %v6851
      %v6853 = vrot.slane %v6848, %v6852
      %v6871 = vunpack.c.l.b16 %v6819
      %v6872 = vunpack.c.l.b16 %v6820
      %v6873 = vunpack.c.l.b16 %v6821
      %v6874 = vunpack.c.l.b16 %v6822
      %v6875 = vunpack.c.l.b16 %v6823
      %v6876 = vunpack.c.l.b16 %v6824
      %v6877 = vunpack.c.l.b16 %v6825
      %v6878 = vunpack.c.l.b16 %v6826
      %v6879 = vunpack.c.l.b16 %v6827
      %v6880 = vunpack.c.l.b16 %v6828
      %v6881 = vunpack.c.l.b16 %v6829
      %v6882 = vunpack.c.l.b16 %v6830
      %v6883 = vunpack.c.l.b16 %v6831
      %v6884 = vunpack.c.l.b16 %v6832
      %v6885 = vunpack.c.l.b16 %v6833
      %v6886 = vunpack.c.l.b16 %v6834
      %v6887 = vpack.c.b16 %v6872, %v6871
      %v6888 = vpack.c.b16 %v6874, %v6873
      %v6889 = vpack.c.b16 %v6876, %v6875
      %v6890 = vpack.c.b16 %v6878, %v6877
      %v6891 = vpack.c.b16 %v6880, %v6879
      %v6892 = vpack.c.b16 %v6882, %v6881
      %v6893 = vpack.c.b16 %v6884, %v6883
      %v6894 = vpack.c.b16 %v6886, %v6885
      %6903 = vmatprep.subr.bf16.mxu0 0
      %6904 = vmatpush1.bf16.msra.mxu0 %v6887
      %6905 = vmatprep.subr.bf16.mxu0 0
      %6906 = vmatpush1.bf16.msra.mxu0 %v6888
      %6907 = vmatprep.subr.bf16.mxu0 0
      %6908 = vmatpush1.bf16.msra.mxu0 %v6889
      %6909 = vmatprep.subr.bf16.mxu0 0
      %6910 = vmatpush1.bf16.msra.mxu0 %v6890
      %6911 = vmatprep.subr.bf16.mxu0 0
      %6912 = vmatpush1.bf16.msra.mxu0 %v6891
      %6913 = vmatprep.subr.bf16.mxu0 0
      %6914 = vmatpush1.bf16.msra.mxu0 %v6892
      %6915 = vmatprep.subr.bf16.mxu0 0
      %6916 = vmatpush1.bf16.msra.mxu0 %v6893
      %6917 = vmatprep.subr.bf16.mxu0 0
      %6918 = vmatpush1.bf16.msra.mxu0 %v6894
      %6919 = vmatprep.subr.bf16.mxu0 0
      %6920 = vmatpush1.bf16.msra.mxu0 0
      %6921 = vmatprep.subr.bf16.mxu0 0
      %6922 = vmatpush1.bf16.msra.mxu0 0
      %6923 = vmatprep.subr.bf16.mxu0 0
      %6924 = vmatpush1.bf16.msra.mxu0 0
      %6925 = vmatprep.subr.bf16.mxu0 0
      %6926 = vmatpush1.bf16.msra.mxu0 0
      %6927 = vmatprep.subr.bf16.mxu0 0
      %6928 = vmatpush1.bf16.msra.mxu0 0
      %6929 = vmatprep.subr.bf16.mxu0 0
      %6930 = vmatpush1.bf16.msra.mxu0 0
      %6931 = vmatprep.subr.bf16.mxu0 0
      %6932 = vmatpush1.bf16.msra.mxu0 0
      %6933 = vmatprep.subr.bf16.mxu0 0
      %6934 = vmatpush1.bf16.msra.mxu0 0
      %6935 = vmatprep.mubr.bf16.mxu0 0
      %6936 = vmatmul.mubr.bf16.gmra.mrb[0].mxu0 %v6835
      %v6937 = vpop.f32.mrb[0].mxu0
      %v6938 = vadd.f32 %v6853, %v6937
      %v6939 = vpop.f32.mrb[0].mxu0
      %v6940 = vpop.f32.mrb[0].mxu0
      %v6941 = vadd.f32 %v6853, %v6940
      %v6942 = vpop.f32.mrb[0].mxu0
      %6943 = vmatprep.mubr.bf16.mxu0 0
      %6944 = vmatmul.mubr.bf16.gmra.mrb[0].mxu0 %v6836
      %v6945 = vpop.f32.mrb[0].mxu0
      %v6946 = vadd.f32 %v6853, %v6945
      %v6947 = vpop.f32.mrb[0].mxu0
      %v6948 = vpop.f32.mrb[0].mxu0
      %v6949 = vadd.f32 %v6853, %v6948
      %v6950 = vpop.f32.mrb[0].mxu0
      %6951 = vmatprep.mubr.bf16.mxu0 0
      %6952 = vmatmul.mubr.bf16.gmra.mrb[0].mxu0 %v6837
      %v6953 = vpop.f32.mrb[0].mxu0
      %v6954 = vadd.f32 %v6853, %v6953
      %v6955 = vpop.f32.mrb[0].mxu0
      %v6956 = vpop.f32.mrb[0].mxu0
      %v6957 = vadd.f32 %v6853, %v6956
      %v6958 = vpop.f32.mrb[0].mxu0
      %6959 = vmatprep.mubr.bf16.mxu0 0
      %6960 = vmatmul.mubr.bf16.gmra.mrb[0].mxu0 %v6838
      %v6961 = vpop.f32.mrb[0].mxu0
      %v6962 = vadd.f32 %v6853, %v6961
      %v6963 = vpop.f32.mrb[0].mxu0
      %v6964 = vpop.f32.mrb[0].mxu0
      %v6965 = vadd.f32 %v6853, %v6964
      %v6966 = vpop.f32.mrb[0].mxu0
      %6967 = vmatprep.mubr.bf16.mxu0 0
      %6968 = vmatmul.mubr.bf16.gmra.mrb[0].mxu0 %v6839
      %v6969 = vpop.f32.mrb[0].mxu0
      %v6970 = vadd.f32 %v6853, %v6969
      %v6971 = vpop.f32.mrb[0].mxu0
      %v6972 = vpop.f32.mrb[0].mxu0
      %v6973 = vadd.f32 %v6853, %v6972
      %v6974 = vpop.f32.mrb[0].mxu0
      %6975 = vmatprep.mubr.bf16.mxu0 0
      %6976 = vmatmul.mubr.bf16.gmra.mrb[0].mxu0 %v6840
      %v6977 = vpop.f32.mrb[0].mxu0
      %v6978 = vadd.f32 %v6853, %v6977
      %v6979 = vpop.f32.mrb[0].mxu0
      %v6980 = vpop.f32.mrb[0].mxu0
      %v6981 = vadd.f32 %v6853, %v6980
      %v6982 = vpop.f32.mrb[0].mxu0
      %6983 = vmatprep.mubr.bf16.mxu0 0
      %6984 = vmatmul.mubr.bf16.gmra.mrb[0].mxu0 %v6841
      %v6985 = vpop.f32.mrb[0].mxu0
      %v6986 = vadd.f32 %v6853, %v6985
      %v6987 = vpop.f32.mrb[0].mxu0
      %v6988 = vpop.f32.mrb[0].mxu0
      %v6989 = vadd.f32 %v6853, %v6988
      %v6990 = vpop.f32.mrb[0].mxu0
      %6991 = vmatprep.mubr.bf16.mxu0 0
      %6992 = vmatmul.mubr.bf16.gmra.mrb[0].mxu0 %v6842
      %v6993 = vpop.f32.mrb[0].mxu0
      %v6994 = vadd.f32 %v6853, %v6993
      %v6995 = vpop.f32.mrb[0].mxu0
      %v6996 = vpop.f32.mrb[0].mxu0
      %v6997 = vadd.f32 %v6853, %v6996
      %v6998 = vpop.f32.mrb[0].mxu0
      %6999 = vmatprep.mubr.bf16.mxu0 0
      %7000 = vmatmul.mubr.bf16.gmra.mrb[0].mxu0 %v6843
      %v7001 = vpop.f32.mrb[0].mxu0
      %v7002 = vadd.f32 %v6853, %v7001
      %v7003 = vpop.f32.mrb[0].mxu0
      %v7004 = vpop.f32.mrb[0].mxu0
      %v7005 = vadd.f32 %v6853, %v7004
      %v7006 = vpop.f32.mrb[0].mxu0
      %7007 = vmatprep.mubr.bf16.mxu0 0
      %7008 = vmatmul.mubr.bf16.gmra.mrb[0].mxu0 %v6844
      %v7009 = vpop.f32.mrb[0].mxu0
      %v7010 = vadd.f32 %v6853, %v7009
      %v7011 = vpop.f32.mrb[0].mxu0
      %v7012 = vpop.f32.mrb[0].mxu0
      %v7013 = vadd.f32 %v6853, %v7012
      %v7014 = vpop.f32.mrb[0].mxu0
      %7015 = vmatprep.mubr.bf16.mxu0 0
      %7016 = vmatmul.mubr.bf16.gmra.mrb[0].mxu0 %v6845
      %v7017 = vpop.f32.mrb[0].mxu0
      %v7018 = vadd.f32 %v6853, %v7017
      %v7019 = vpop.f32.mrb[0].mxu0
      %v7020 = vpop.f32.mrb[0].mxu0
      %v7021 = vadd.f32 %v6853, %v7020
      %v7022 = vpop.f32.mrb[0].mxu0
      %7023 = vmatprep.mubr.bf16.mxu0 0
      %7024 = vmatmul.mubr.bf16.gmra.mrb[0].mxu0 %v6846
      %v7025 = vpop.f32.mrb[0].mxu0
      %v7026 = vadd.f32 %v6853, %v7025
      %v7027 = vpop.f32.mrb[0].mxu0
      %v7028 = vpop.f32.mrb[0].mxu0
      %v7029 = vadd.f32 %v6853, %v7028
      %v7030 = vpop.f32.mrb[0].mxu0
      %7031 = vdwg.mxu0
      %v7032 = vadd.f32 %v6568, %v6938
      %v7033 = vadd.f32 %v6569, %v6941
      %v7034 = vadd.f32 %v6570, %v6946
      %v7035 = vadd.f32 %v6571, %v6949
      %v7036 = vadd.f32 %v6572, %v6954
      %v7037 = vadd.f32 %v6573, %v6957
      %v7038 = vadd.f32 %v6574, %v6962
      %v7039 = vadd.f32 %v6575, %v6965
      %v7040 = vadd.f32 %v6576, %v6970
      %v7041 = vadd.f32 %v6577, %v6973
      %v7042 = vadd.f32 %v6578, %v6978
      %v7043 = vadd.f32 %v6579, %v6981
      %v7044 = vadd.f32 %v6580, %v6986
      %v7045 = vadd.f32 %v6581, %v6989
      %v7046 = vadd.f32 %v6582, %v6994
      %v7047 = vadd.f32 %v6583, %v6997
      %v7048 = vadd.f32 %v6584, %v7002
      %v7049 = vadd.f32 %v6585, %v7005
      %v7050 = vadd.f32 %v6586, %v7010
      %v7051 = vadd.f32 %v6587, %v7013
      %v7052 = vadd.f32 %v6588, %v7018
      %v7053 = vadd.f32 %v6589, %v7021
      %v7054 = vadd.f32 %v6590, %v7026
      %v7055 = vadd.f32 %v6591, %v7029
      %s7056 = scalar_lea.vmem %s11, 1
      %v7057 = vld [vmem:[%s7056] sm:$0x1]
      %s7058 = scalar_lea.vmem %s12, 1
      %v7059 = vld [vmem:[%s7058] sm:$0x1]
      %v7060 = vsel %vm900, %v7032, 0.0
      %7061 = vadd.xlane.f32.xlu0 %v7060
      %v7062 = vpop.xlane.xlu0 %7061
      %v7063 = vsel %vm900, %v7033, 0.0
      %7064 = vadd.xlane.f32.xlu0 %v7063
      %v7065 = vpop.xlane.xlu0 %7064
      %v7066 = vsel %vm900, %v7034, 0.0
      %7067 = vadd.xlane.f32.xlu0 %v7066
      %v7068 = vpop.xlane.xlu0 %7067
      %v7069 = vsel %vm900, %v7035, 0.0
      %7070 = vadd.xlane.f32.xlu0 %v7069
      %v7071 = vpop.xlane.xlu0 %7070
      %v7072 = vsel %vm900, %v7036, 0.0
      %7073 = vadd.xlane.f32.xlu0 %v7072
      %v7074 = vpop.xlane.xlu0 %7073
      %v7075 = vsel %vm900, %v7037, 0.0
      %7076 = vadd.xlane.f32.xlu0 %v7075
      %v7077 = vpop.xlane.xlu0 %7076
      %v7078 = vsel %vm900, %v7038, 0.0
      %7079 = vadd.xlane.f32.xlu0 %v7078
      %v7080 = vpop.xlane.xlu0 %7079
      %v7081 = vsel %vm900, %v7039, 0.0
      %7082 = vadd.xlane.f32.xlu0 %v7081
      %v7083 = vpop.xlane.xlu0 %7082
      %v7084 = vsel %vm900, %v7040, 0.0
      %7085 = vadd.xlane.f32.xlu0 %v7084
      %v7086 = vpop.xlane.xlu0 %7085
      %v7087 = vsel %vm900, %v7041, 0.0
      %7088 = vadd.xlane.f32.xlu0 %v7087
      %v7089 = vpop.xlane.xlu0 %7088
      %v7090 = vsel %vm900, %v7042, 0.0
      %7091 = vadd.xlane.f32.xlu0 %v7090
      %v7092 = vpop.xlane.xlu0 %7091
      %v7093 = vsel %vm900, %v7043, 0.0
      %7094 = vadd.xlane.f32.xlu0 %v7093
      %v7095 = vpop.xlane.xlu0 %7094
      %v7096 = vsel %vm900, %v7044, 0.0
      %7097 = vadd.xlane.f32.xlu0 %v7096
      %v7098 = vpop.xlane.xlu0 %7097
      %v7099 = vsel %vm900, %v7045, 0.0
      %7100 = vadd.xlane.f32.xlu0 %v7099
      %v7101 = vpop.xlane.xlu0 %7100
      %v7102 = vsel %vm900, %v7046, 0.0
      %7103 = vadd.xlane.f32.xlu0 %v7102
      %v7104 = vpop.xlane.xlu0 %7103
      %v7105 = vsel %vm900, %v7047, 0.0
      %7106 = vadd.xlane.f32.xlu0 %v7105
      %v7107 = vpop.xlane.xlu0 %7106
      %v7108 = vsel %vm900, %v7048, 0.0
      %7109 = vadd.xlane.f32.xlu0 %v7108
      %v7110 = vpop.xlane.xlu0 %7109
      %v7111 = vsel %vm900, %v7049, 0.0
      %7112 = vadd.xlane.f32.xlu0 %v7111
      %v7113 = vpop.xlane.xlu0 %7112
      %v7114 = vsel %vm900, %v7050, 0.0
      %7115 = vadd.xlane.f32.xlu0 %v7114
      %v7116 = vpop.xlane.xlu0 %7115
      %v7117 = vsel %vm900, %v7051, 0.0
      %7118 = vadd.xlane.f32.xlu0 %v7117
      %v7119 = vpop.xlane.xlu0 %7118
      %v7120 = vsel %vm900, %v7052, 0.0
      %7121 = vadd.xlane.f32.xlu0 %v7120
      %v7122 = vpop.xlane.xlu0 %7121
      %v7123 = vsel %vm900, %v7053, 0.0
      %7124 = vadd.xlane.f32.xlu0 %v7123
      %v7125 = vpop.xlane.xlu0 %7124
      %v7126 = vsel %vm900, %v7054, 0.0
      %7127 = vadd.xlane.f32.xlu0 %v7126
      %v7128 = vpop.xlane.xlu0 %7127
      %v7129 = vsel %vm900, %v7055, 0.0
      %7130 = vadd.xlane.f32.xlu0 %v7129
      %v7131 = vpop.xlane.xlu0 %7130
      %v7132 = vmul.f32 %v7062, %v973
      %v7133 = vmul.f32 %v7065, %v973
      %v7134 = vmul.f32 %v7068, %v973
      %v7135 = vmul.f32 %v7071, %v973
      %v7136 = vmul.f32 %v7074, %v973
      %v7137 = vmul.f32 %v7077, %v973
      %v7138 = vmul.f32 %v7080, %v973
      %v7139 = vmul.f32 %v7083, %v973
      %v7140 = vmul.f32 %v7086, %v973
      %v7141 = vmul.f32 %v7089, %v973
      %v7142 = vmul.f32 %v7092, %v973
      %v7143 = vmul.f32 %v7095, %v973
      %v7144 = vmul.f32 %v7098, %v973
      %v7145 = vmul.f32 %v7101, %v973
      %v7146 = vmul.f32 %v7104, %v973
      %v7147 = vmul.f32 %v7107, %v973
      %v7148 = vmul.f32 %v7110, %v973
      %v7149 = vmul.f32 %v7113, %v973
      %v7150 = vmul.f32 %v7116, %v973
      %v7151 = vmul.f32 %v7119, %v973
      %v7152 = vmul.f32 %v7122, %v973
      %v7153 = vmul.f32 %v7125, %v973
      %v7154 = vmul.f32 %v7128, %v973
      %v7155 = vmul.f32 %v7131, %v973
      %v7156 = vmul.f32 %v7032, %v7032
      %v7157 = vmul.f32 %v7033, %v7033
      %v7158 = vmul.f32 %v7034, %v7034
      %v7159 = vmul.f32 %v7035, %v7035
      %v7160 = vmul.f32 %v7036, %v7036
      %v7161 = vmul.f32 %v7037, %v7037
      %v7162 = vmul.f32 %v7038, %v7038
      %v7163 = vmul.f32 %v7039, %v7039
      %v7164 = vmul.f32 %v7040, %v7040
      %v7165 = vmul.f32 %v7041, %v7041
      %v7166 = vmul.f32 %v7042, %v7042
      %v7167 = vmul.f32 %v7043, %v7043
      %v7168 = vmul.f32 %v7044, %v7044
      %v7169 = vmul.f32 %v7045, %v7045
      %v7170 = vmul.f32 %v7046, %v7046
      %v7171 = vmul.f32 %v7047, %v7047
      %v7172 = vmul.f32 %v7048, %v7048
      %v7173 = vmul.f32 %v7049, %v7049
      %v7174 = vmul.f32 %v7050, %v7050
      %v7175 = vmul.f32 %v7051, %v7051
      %v7176 = vmul.f32 %v7052, %v7052
      %v7177 = vmul.f32 %v7053, %v7053
      %v7178 = vmul.f32 %v7054, %v7054
      %v7179 = vmul.f32 %v7055, %v7055
      %v7180 = vsel %vm900, %v7156, 0.0
      %7181 = vadd.xlane.f32.xlu0 %v7180
      %v7182 = vpop.xlane.xlu0 %7181
      %v7183 = vsel %vm900, %v7157, 0.0
      %7184 = vadd.xlane.f32.xlu0 %v7183
      %v7185 = vpop.xlane.xlu0 %7184
      %v7186 = vsel %vm900, %v7158, 0.0
      %7187 = vadd.xlane.f32.xlu0 %v7186
      %v7188 = vpop.xlane.xlu0 %7187
      %v7189 = vsel %vm900, %v7159, 0.0
      %7190 = vadd.xlane.f32.xlu0 %v7189
      %v7191 = vpop.xlane.xlu0 %7190
      %v7192 = vsel %vm900, %v7160, 0.0
      %7193 = vadd.xlane.f32.xlu0 %v7192
      %v7194 = vpop.xlane.xlu0 %7193
      %v7195 = vsel %vm900, %v7161, 0.0
      %7196 = vadd.xlane.f32.xlu0 %v7195
      %v7197 = vpop.xlane.xlu0 %7196
      %v7198 = vsel %vm900, %v7162, 0.0
      %7199 = vadd.xlane.f32.xlu0 %v7198
      %v7200 = vpop.xlane.xlu0 %7199
      %v7201 = vsel %vm900, %v7163, 0.0
      %7202 = vadd.xlane.f32.xlu0 %v7201
      %v7203 = vpop.xlane.xlu0 %7202
      %v7204 = vsel %vm900, %v7164, 0.0
      %7205 = vadd.xlane.f32.xlu0 %v7204
      %v7206 = vpop.xlane.xlu0 %7205
      %v7207 = vsel %vm900, %v7165, 0.0
      %7208 = vadd.xlane.f32.xlu0 %v7207
      %v7209 = vpop.xlane.xlu0 %7208
      %v7210 = vsel %vm900, %v7166, 0.0
      %7211 = vadd.xlane.f32.xlu0 %v7210
      %v7212 = vpop.xlane.xlu0 %7211
      %v7213 = vsel %vm900, %v7167, 0.0
      %7214 = vadd.xlane.f32.xlu0 %v7213
      %v7215 = vpop.xlane.xlu0 %7214
      %v7216 = vsel %vm900, %v7168, 0.0
      %7217 = vadd.xlane.f32.xlu0 %v7216
      %v7218 = vpop.xlane.xlu0 %7217
      %v7219 = vsel %vm900, %v7169, 0.0
      %7220 = vadd.xlane.f32.xlu0 %v7219
      %v7221 = vpop.xlane.xlu0 %7220
      %v7222 = vsel %vm900, %v7170, 0.0
      %7223 = vadd.xlane.f32.xlu0 %v7222
      %v7224 = vpop.xlane.xlu0 %7223
      %v7225 = vsel %vm900, %v7171, 0.0
      %7226 = vadd.xlane.f32.xlu0 %v7225
      %v7227 = vpop.xlane.xlu0 %7226
      %v7228 = vsel %vm900, %v7172, 0.0
      %7229 = vadd.xlane.f32.xlu0 %v7228
      %v7230 = vpop.xlane.xlu0 %7229
      %v7231 = vsel %vm900, %v7173, 0.0
      %7232 = vadd.xlane.f32.xlu0 %v7231
      %v7233 = vpop.xlane.xlu0 %7232
      %v7234 = vsel %vm900, %v7174, 0.0
      %7235 = vadd.xlane.f32.xlu0 %v7234
      %v7236 = vpop.xlane.xlu0 %7235
      %v7237 = vsel %vm900, %v7175, 0.0
      %7238 = vadd.xlane.f32.xlu0 %v7237
      %v7239 = vpop.xlane.xlu0 %7238
      %v7240 = vsel %vm900, %v7176, 0.0
      %7241 = vadd.xlane.f32.xlu0 %v7240
      %v7242 = vpop.xlane.xlu0 %7241
      %v7243 = vsel %vm900, %v7177, 0.0
      %7244 = vadd.xlane.f32.xlu0 %v7243
      %v7245 = vpop.xlane.xlu0 %7244
      %v7246 = vsel %vm900, %v7178, 0.0
      %7247 = vadd.xlane.f32.xlu0 %v7246
      %v7248 = vpop.xlane.xlu0 %7247
      %v7249 = vsel %vm900, %v7179, 0.0
      %7250 = vadd.xlane.f32.xlu0 %v7249
      %v7251 = vpop.xlane.xlu0 %7250
      %v7252 = vmul.f32 %v7182, %v973
      %v7253 = vmul.f32 %v7185, %v973
      %v7254 = vmul.f32 %v7188, %v973
      %v7255 = vmul.f32 %v7191, %v973
      %v7256 = vmul.f32 %v7194, %v973
      %v7257 = vmul.f32 %v7197, %v973
      %v7258 = vmul.f32 %v7200, %v973
      %v7259 = vmul.f32 %v7203, %v973
      %v7260 = vmul.f32 %v7206, %v973
      %v7261 = vmul.f32 %v7209, %v973
      %v7262 = vmul.f32 %v7212, %v973
      %v7263 = vmul.f32 %v7215, %v973
      %v7264 = vmul.f32 %v7218, %v973
      %v7265 = vmul.f32 %v7221, %v973
      %v7266 = vmul.f32 %v7224, %v973
      %v7267 = vmul.f32 %v7227, %v973
      %v7268 = vmul.f32 %v7230, %v973
      %v7269 = vmul.f32 %v7233, %v973
      %v7270 = vmul.f32 %v7236, %v973
      %v7271 = vmul.f32 %v7239, %v973
      %v7272 = vmul.f32 %v7242, %v973
      %v7273 = vmul.f32 %v7245, %v973
      %v7274 = vmul.f32 %v7248, %v973
      %v7275 = vmul.f32 %v7251, %v973
      %v7276 = vmul.f32 %v7132, %v7132
      %v7277 = vmul.f32 %v7133, %v7133
      %v7278 = vmul.f32 %v7134, %v7134
      %v7279 = vmul.f32 %v7135, %v7135
      %v7280 = vmul.f32 %v7136, %v7136
      %v7281 = vmul.f32 %v7137, %v7137
      %v7282 = vmul.f32 %v7138, %v7138
      %v7283 = vmul.f32 %v7139, %v7139
      %v7284 = vmul.f32 %v7140, %v7140
      %v7285 = vmul.f32 %v7141, %v7141
      %v7286 = vmul.f32 %v7142, %v7142
      %v7287 = vmul.f32 %v7143, %v7143
      %v7288 = vmul.f32 %v7144, %v7144
      %v7289 = vmul.f32 %v7145, %v7145
      %v7290 = vmul.f32 %v7146, %v7146
      %v7291 = vmul.f32 %v7147, %v7147
      %v7292 = vmul.f32 %v7148, %v7148
      %v7293 = vmul.f32 %v7149, %v7149
      %v7294 = vmul.f32 %v7150, %v7150
      %v7295 = vmul.f32 %v7151, %v7151
      %v7296 = vmul.f32 %v7152, %v7152
      %v7297 = vmul.f32 %v7153, %v7153
      %v7298 = vmul.f32 %v7154, %v7154
      %v7299 = vmul.f32 %v7155, %v7155
      %v7300 = vsub.f32 %v7252, %v7276
      %v7301 = vsub.f32 %v7253, %v7277
      %v7302 = vsub.f32 %v7254, %v7278
      %v7303 = vsub.f32 %v7255, %v7279
      %v7304 = vsub.f32 %v7256, %v7280
      %v7305 = vsub.f32 %v7257, %v7281
      %v7306 = vsub.f32 %v7258, %v7282
      %v7307 = vsub.f32 %v7259, %v7283
      %v7308 = vsub.f32 %v7260, %v7284
      %v7309 = vsub.f32 %v7261, %v7285
      %v7310 = vsub.f32 %v7262, %v7286
      %v7311 = vsub.f32 %v7263, %v7287
      %v7312 = vsub.f32 %v7264, %v7288
      %v7313 = vsub.f32 %v7265, %v7289
      %v7314 = vsub.f32 %v7266, %v7290
      %v7315 = vsub.f32 %v7267, %v7291
      %v7316 = vsub.f32 %v7268, %v7292
      %v7317 = vsub.f32 %v7269, %v7293
      %v7318 = vsub.f32 %v7270, %v7294
      %v7319 = vsub.f32 %v7271, %v7295
      %v7320 = vsub.f32 %v7272, %v7296
      %v7321 = vsub.f32 %v7273, %v7297
      %v7322 = vsub.f32 %v7274, %v7298
      %v7323 = vsub.f32 %v7275, %v7299
      %v7324 = vsub.f32 %v7032, %v7132
      %v7325 = vsub.f32 %v7033, %v7133
      %v7326 = vsub.f32 %v7034, %v7134
      %v7327 = vsub.f32 %v7035, %v7135
      %v7328 = vsub.f32 %v7036, %v7136
      %v7329 = vsub.f32 %v7037, %v7137
      %v7330 = vsub.f32 %v7038, %v7138
      %v7331 = vsub.f32 %v7039, %v7139
      %v7332 = vsub.f32 %v7040, %v7140
      %v7333 = vsub.f32 %v7041, %v7141
      %v7334 = vsub.f32 %v7042, %v7142
      %v7335 = vsub.f32 %v7043, %v7143
      %v7336 = vsub.f32 %v7044, %v7144
      %v7337 = vsub.f32 %v7045, %v7145
      %v7338 = vsub.f32 %v7046, %v7146
      %v7339 = vsub.f32 %v7047, %v7147
      %v7340 = vsub.f32 %v7048, %v7148
      %v7341 = vsub.f32 %v7049, %v7149
      %v7342 = vsub.f32 %v7050, %v7150
      %v7343 = vsub.f32 %v7051, %v7151
      %v7344 = vsub.f32 %v7052, %v7152
      %v7345 = vsub.f32 %v7053, %v7153
      %v7346 = vsub.f32 %v7054, %v7154
      %v7347 = vsub.f32 %v7055, %v7155
      %v7348 = vadd.f32 %v7300, 1e-05
      %v7349 = vadd.f32 %v7301, 1e-05
      %v7350 = vadd.f32 %v7302, 1e-05
      %v7351 = vadd.f32 %v7303, 1e-05
      %v7352 = vadd.f32 %v7304, 1e-05
      %v7353 = vadd.f32 %v7305, 1e-05
      %v7354 = vadd.f32 %v7306, 1e-05
      %v7355 = vadd.f32 %v7307, 1e-05
      %v7356 = vadd.f32 %v7308, 1e-05
      %v7357 = vadd.f32 %v7309, 1e-05
      %v7358 = vadd.f32 %v7310, 1e-05
      %v7359 = vadd.f32 %v7311, 1e-05
      %v7360 = vadd.f32 %v7312, 1e-05
      %v7361 = vadd.f32 %v7313, 1e-05
      %v7362 = vadd.f32 %v7314, 1e-05
      %v7363 = vadd.f32 %v7315, 1e-05
      %v7364 = vadd.f32 %v7316, 1e-05
      %v7365 = vadd.f32 %v7317, 1e-05
      %v7366 = vadd.f32 %v7318, 1e-05
      %v7367 = vadd.f32 %v7319, 1e-05
      %v7368 = vadd.f32 %v7320, 1e-05
      %v7369 = vadd.f32 %v7321, 1e-05
      %v7370 = vadd.f32 %v7322, 1e-05
      %v7371 = vadd.f32 %v7323, 1e-05
      %v7372 = vrsqrt.pop %v7348
      %v7373 = vrsqrt.pop %v7349
      %v7374 = vrsqrt.pop %v7350
      %v7375 = vrsqrt.pop %v7351
      %v7376 = vrsqrt.pop %v7352
      %v7377 = vrsqrt.pop %v7353
      %v7378 = vrsqrt.pop %v7354
      %v7379 = vrsqrt.pop %v7355
      %v7380 = vrsqrt.pop %v7356
      %v7381 = vrsqrt.pop %v7357
      %v7382 = vrsqrt.pop %v7358
      %v7383 = vrsqrt.pop %v7359
      %v7384 = vrsqrt.pop %v7360
      %v7385 = vrsqrt.pop %v7361
      %v7386 = vrsqrt.pop %v7362
      %v7387 = vrsqrt.pop %v7363
      %v7388 = vrsqrt.pop %v7364
      %v7389 = vrsqrt.pop %v7365
      %v7390 = vrsqrt.pop %v7366
      %v7391 = vrsqrt.pop %v7367
      %v7392 = vrsqrt.pop %v7368
      %v7393 = vrsqrt.pop %v7369
      %v7394 = vrsqrt.pop %v7370
      %v7395 = vrsqrt.pop %v7371
      %v7396 = vmul.f32 %v7324, %v7372
      %v7397 = vmul.f32 %v7325, %v7373
      %v7398 = vmul.f32 %v7326, %v7374
      %v7399 = vmul.f32 %v7327, %v7375
      %v7400 = vmul.f32 %v7328, %v7376
      %v7401 = vmul.f32 %v7329, %v7377
      %v7402 = vmul.f32 %v7330, %v7378
      %v7403 = vmul.f32 %v7331, %v7379
      %v7404 = vmul.f32 %v7332, %v7380
      %v7405 = vmul.f32 %v7333, %v7381
      %v7406 = vmul.f32 %v7334, %v7382
      %v7407 = vmul.f32 %v7335, %v7383
      %v7408 = vmul.f32 %v7336, %v7384
      %v7409 = vmul.f32 %v7337, %v7385
      %v7410 = vmul.f32 %v7338, %v7386
      %v7411 = vmul.f32 %v7339, %v7387
      %v7412 = vmul.f32 %v7340, %v7388
      %v7413 = vmul.f32 %v7341, %v7389
      %v7414 = vmul.f32 %v7342, %v7390
      %v7415 = vmul.f32 %v7343, %v7391
      %v7416 = vmul.f32 %v7344, %v7392
      %v7417 = vmul.f32 %v7345, %v7393
      %v7418 = vmul.f32 %v7346, %v7394
      %v7419 = vmul.f32 %v7347, %v7395
      %v7421 = vlaneseq
      %v7422 = vshrl.u32 %v7421, 7
      %v7423 = vsub.s32 0, %v7422
      %v7424 = vrot.slane %v7057, %v7423
      %v7426 = vmul.f32 %v7396, %v7424
      %v7427 = vmul.f32 %v7397, %v7424
      %v7428 = vmul.f32 %v7398, %v7424
      %v7429 = vmul.f32 %v7399, %v7424
      %v7430 = vmul.f32 %v7400, %v7424
      %v7431 = vmul.f32 %v7401, %v7424
      %v7432 = vmul.f32 %v7402, %v7424
      %v7433 = vmul.f32 %v7403, %v7424
      %v7434 = vmul.f32 %v7404, %v7424
      %v7435 = vmul.f32 %v7405, %v7424
      %v7436 = vmul.f32 %v7406, %v7424
      %v7437 = vmul.f32 %v7407, %v7424
      %v7438 = vmul.f32 %v7408, %v7424
      %v7439 = vmul.f32 %v7409, %v7424
      %v7440 = vmul.f32 %v7410, %v7424
      %v7441 = vmul.f32 %v7411, %v7424
      %v7442 = vmul.f32 %v7412, %v7424
      %v7443 = vmul.f32 %v7413, %v7424
      %v7444 = vmul.f32 %v7414, %v7424
      %v7445 = vmul.f32 %v7415, %v7424
      %v7446 = vmul.f32 %v7416, %v7424
      %v7447 = vmul.f32 %v7417, %v7424
      %v7448 = vmul.f32 %v7418, %v7424
      %v7449 = vmul.f32 %v7419, %v7424
      %v7451 = vlaneseq
      %v7452 = vshrl.u32 %v7451, 7
      %v7453 = vsub.s32 0, %v7452
      %v7454 = vrot.slane %v7059, %v7453
      %v7456 = vadd.f32 %v7426, %v7454
      %v7457 = vadd.f32 %v7427, %v7454
      %v7458 = vadd.f32 %v7428, %v7454
      %v7459 = vadd.f32 %v7429, %v7454
      %v7460 = vadd.f32 %v7430, %v7454
      %v7461 = vadd.f32 %v7431, %v7454
      %v7462 = vadd.f32 %v7432, %v7454
      %v7463 = vadd.f32 %v7433, %v7454
      %v7464 = vadd.f32 %v7434, %v7454
      %v7465 = vadd.f32 %v7435, %v7454
      %v7466 = vadd.f32 %v7436, %v7454
      %v7467 = vadd.f32 %v7437, %v7454
      %v7468 = vadd.f32 %v7438, %v7454
      %v7469 = vadd.f32 %v7439, %v7454
      %v7470 = vadd.f32 %v7440, %v7454
      %v7471 = vadd.f32 %v7441, %v7454
      %v7472 = vadd.f32 %v7442, %v7454
      %v7473 = vadd.f32 %v7443, %v7454
      %v7474 = vadd.f32 %v7444, %v7454
      %v7475 = vadd.f32 %v7445, %v7454
      %v7476 = vadd.f32 %v7446, %v7454
      %v7477 = vadd.f32 %v7447, %v7454
      %v7478 = vadd.f32 %v7448, %v7454
      %v7479 = vadd.f32 %v7449, %v7454
      %s7480 = scalar_lea.vmem %s5, 32
      %v7481 = vld [vmem:[%s7480] sm:$0xf]
      %v7482 = vld [vmem:[%s7480 + $0x4] sm:$0xf]
      %v7483 = vld [vmem:[%s7480 + $0x8] sm:$0xf]
      %v7484 = vld [vmem:[%s7480 + $0xc] sm:$0xf]
      %v7485 = vpack.c.bf16 %v7457, %v7456
      %v7486 = vpack.c.bf16 %v7459, %v7458
      %v7487 = vpack.c.bf16 %v7461, %v7460
      %v7488 = vpack.c.bf16 %v7463, %v7462
      %v7489 = vpack.c.bf16 %v7465, %v7464
      %v7490 = vpack.c.bf16 %v7467, %v7466
      %v7491 = vpack.c.bf16 %v7469, %v7468
      %v7492 = vpack.c.bf16 %v7471, %v7470
      %v7493 = vpack.c.bf16 %v7473, %v7472
      %v7494 = vpack.c.bf16 %v7475, %v7474
      %v7495 = vpack.c.bf16 %v7477, %v7476
      %v7496 = vpack.c.bf16 %v7479, %v7478
      %s7497 = scalar_lea.vmem %s6, 2
      %v7498 = vld [vmem:[%s7497] sm:$0x1]
      %v7500 = vlaneseq
      %v7501 = vshrl.u32 %v7500, 7
      %v7502 = vsub.s32 0, %v7501
      %v7503 = vrot.slane %v7498, %v7502
      %v7509 = vunpack.c.l.b16 %v7481
      %v7510 = vunpack.c.l.b16 %v7482
      %v7511 = vunpack.c.l.b16 %v7483
      %v7512 = vunpack.c.l.b16 %v7484
      %v7513 = vpack.c.b16 %v7510, %v7509
      %v7514 = vpack.c.b16 %v7512, %v7511
      %v7518 = vsel %vm900, %v7485, 0
      %v7521 = vsel %vm900, %v7486, 0
      %v7524 = vsel %vm900, %v7487, 0
      %v7527 = vsel %vm900, %v7488, 0
      %v7530 = vsel %vm900, %v7489, 0
      %v7533 = vsel %vm900, %v7490, 0
      %v7536 = vsel %vm900, %v7491, 0
      %v7539 = vsel %vm900, %v7492, 0
      %v7542 = vsel %vm900, %v7493, 0
      %v7545 = vsel %vm900, %v7494, 0
      %v7548 = vsel %vm900, %v7495, 0
      %v7551 = vsel %vm900, %v7496, 0
      %7553 = vmatprep.subr.bf16.mxu0 0
      %7554 = vmatpush1.bf16.msra.mxu0 %v7513
      %7555 = vmatprep.subr.bf16.mxu0 0
      %7556 = vmatpush1.bf16.msra.mxu0 %v7514
      %7557 = vmatprep.subr.bf16.mxu0 0
      %7558 = vmatpush1.bf16.msra.mxu0 0
      %7559 = vmatprep.subr.bf16.mxu0 0
      %7560 = vmatpush1.bf16.msra.mxu0 0
      %7561 = vmatprep.subr.bf16.mxu0 0
      %7562 = vmatpush1.bf16.msra.mxu0 0
      %7563 = vmatprep.subr.bf16.mxu0 0
      %7564 = vmatpush1.bf16.msra.mxu0 0
      %7565 = vmatprep.subr.bf16.mxu0 0
      %7566 = vmatpush1.bf16.msra.mxu0 0
      %7567 = vmatprep.subr.bf16.mxu0 0
      %7568 = vmatpush1.bf16.msra.mxu0 0
      %7569 = vmatprep.subr.bf16.mxu0 0
      %7570 = vmatpush1.bf16.msra.mxu0 0
      %7571 = vmatprep.subr.bf16.mxu0 0
      %7572 = vmatpush1.bf16.msra.mxu0 0
      %7573 = vmatprep.subr.bf16.mxu0 0
      %7574 = vmatpush1.bf16.msra.mxu0 0
      %7575 = vmatprep.subr.bf16.mxu0 0
      %7576 = vmatpush1.bf16.msra.mxu0 0
      %7577 = vmatprep.subr.bf16.mxu0 0
      %7578 = vmatpush1.bf16.msra.mxu0 0
      %7579 = vmatprep.subr.bf16.mxu0 0
      %7580 = vmatpush1.bf16.msra.mxu0 0
      %7581 = vmatprep.subr.bf16.mxu0 0
      %7582 = vmatpush1.bf16.msra.mxu0 0
      %7583 = vmatprep.subr.bf16.mxu0 0
      %7584 = vmatpush1.bf16.msra.mxu0 0
      %7585 = vmatprep.mubr.bf16.mxu0 0
      %7586 = vmatmul.mubr.bf16.gmra.mrb[0].mxu0 %v7518
      %v7587 = vpop.f32.mrb[0].mxu0
      %v7588 = vadd.f32 %v7503, %v7587
      %v7589 = vpop.f32.mrb[0].mxu0
      %v7590 = vpop.f32.mrb[0].mxu0
      %v7591 = vadd.f32 %v7503, %v7590
      %v7592 = vpop.f32.mrb[0].mxu0
      %7593 = vmatprep.mubr.bf16.mxu0 0
      %7594 = vmatmul.mubr.bf16.gmra.mrb[0].mxu0 %v7521
      %v7595 = vpop.f32.mrb[0].mxu0
      %v7596 = vadd.f32 %v7503, %v7595
      %v7597 = vpop.f32.mrb[0].mxu0
      %v7598 = vpop.f32.mrb[0].mxu0
      %v7599 = vadd.f32 %v7503, %v7598
      %v7600 = vpop.f32.mrb[0].mxu0
      %7601 = vmatprep.mubr.bf16.mxu0 0
      %7602 = vmatmul.mubr.bf16.gmra.mrb[0].mxu0 %v7524
      %v7603 = vpop.f32.mrb[0].mxu0
      %v7604 = vadd.f32 %v7503, %v7603
      %v7605 = vpop.f32.mrb[0].mxu0
      %v7606 = vpop.f32.mrb[0].mxu0
      %v7607 = vadd.f32 %v7503, %v7606
      %v7608 = vpop.f32.mrb[0].mxu0
      %7609 = vmatprep.mubr.bf16.mxu0 0
      %7610 = vmatmul.mubr.bf16.gmra.mrb[0].mxu0 %v7527
      %v7611 = vpop.f32.mrb[0].mxu0
      %v7612 = vadd.f32 %v7503, %v7611
      %v7613 = vpop.f32.mrb[0].mxu0
      %v7614 = vpop.f32.mrb[0].mxu0
      %v7615 = vadd.f32 %v7503, %v7614
      %v7616 = vpop.f32.mrb[0].mxu0
      %7617 = vmatprep.mubr.bf16.mxu0 0
      %7618 = vmatmul.mubr.bf16.gmra.mrb[0].mxu0 %v7530
      %v7619 = vpop.f32.mrb[0].mxu0
      %v7620 = vadd.f32 %v7503, %v7619
      %v7621 = vpop.f32.mrb[0].mxu0
      %v7622 = vpop.f32.mrb[0].mxu0
      %v7623 = vadd.f32 %v7503, %v7622
      %v7624 = vpop.f32.mrb[0].mxu0
      %7625 = vmatprep.mubr.bf16.mxu0 0
      %7626 = vmatmul.mubr.bf16.gmra.mrb[0].mxu0 %v7533
      %v7627 = vpop.f32.mrb[0].mxu0
      %v7628 = vadd.f32 %v7503, %v7627
      %v7629 = vpop.f32.mrb[0].mxu0
      %v7630 = vpop.f32.mrb[0].mxu0
      %v7631 = vadd.f32 %v7503, %v7630
      %v7632 = vpop.f32.mrb[0].mxu0
      %7633 = vmatprep.mubr.bf16.mxu0 0
      %7634 = vmatmul.mubr.bf16.gmra.mrb[0].mxu0 %v7536
      %v7635 = vpop.f32.mrb[0].mxu0
      %v7636 = vadd.f32 %v7503, %v7635
      %v7637 = vpop.f32.mrb[0].mxu0
      %v7638 = vpop.f32.mrb[0].mxu0
      %v7639 = vadd.f32 %v7503, %v7638
      %v7640 = vpop.f32.mrb[0].mxu0
      %7641 = vmatprep.mubr.bf16.mxu0 0
      %7642 = vmatmul.mubr.bf16.gmra.mrb[0].mxu0 %v7539
      %v7643 = vpop.f32.mrb[0].mxu0
      %v7644 = vadd.f32 %v7503, %v7643
      %v7645 = vpop.f32.mrb[0].mxu0
      %v7646 = vpop.f32.mrb[0].mxu0
      %v7647 = vadd.f32 %v7503, %v7646
      %v7648 = vpop.f32.mrb[0].mxu0
      %7649 = vmatprep.mubr.bf16.mxu0 0
      %7650 = vmatmul.mubr.bf16.gmra.mrb[0].mxu0 %v7542
      %v7651 = vpop.f32.mrb[0].mxu0
      %v7652 = vadd.f32 %v7503, %v7651
      %v7653 = vpop.f32.mrb[0].mxu0
      %v7654 = vpop.f32.mrb[0].mxu0
      %v7655 = vadd.f32 %v7503, %v7654
      %v7656 = vpop.f32.mrb[0].mxu0
      %7657 = vmatprep.mubr.bf16.mxu0 0
      %7658 = vmatmul.mubr.bf16.gmra.mrb[0].mxu0 %v7545
      %v7659 = vpop.f32.mrb[0].mxu0
      %v7660 = vadd.f32 %v7503, %v7659
      %v7661 = vpop.f32.mrb[0].mxu0
      %v7662 = vpop.f32.mrb[0].mxu0
      %v7663 = vadd.f32 %v7503, %v7662
      %v7664 = vpop.f32.mrb[0].mxu0
      %7665 = vmatprep.mubr.bf16.mxu0 0
      %7666 = vmatmul.mubr.bf16.gmra.mrb[0].mxu0 %v7548
      %v7667 = vpop.f32.mrb[0].mxu0
      %v7668 = vadd.f32 %v7503, %v7667
      %v7669 = vpop.f32.mrb[0].mxu0
      %v7670 = vpop.f32.mrb[0].mxu0
      %v7671 = vadd.f32 %v7503, %v7670
      %v7672 = vpop.f32.mrb[0].mxu0
      %7673 = vmatprep.mubr.bf16.mxu0 0
      %7674 = vmatmul.mubr.bf16.gmra.mrb[0].mxu0 %v7551
      %v7675 = vpop.f32.mrb[0].mxu0
      %v7676 = vadd.f32 %v7503, %v7675
      %v7677 = vpop.f32.mrb[0].mxu0
      %v7678 = vpop.f32.mrb[0].mxu0
      %v7679 = vadd.f32 %v7503, %v7678
      %v7680 = vpop.f32.mrb[0].mxu0
      %7681 = vdwg.mxu0
      %v7682 = vpack.c.bf16 %v7591, %v7588
      %v7683 = vpack.c.bf16 %v7596, %v7596
      %v7684 = vpack.c.bf16 %v7604, %v7599
      %v7685 = vpack.c.bf16 %v7607, %v7607
      %v7686 = vpack.c.bf16 %v7615, %v7612
      %v7687 = vpack.c.bf16 %v7620, %v7620
      %v7688 = vpack.c.bf16 %v7628, %v7623
      %v7689 = vpack.c.bf16 %v7631, %v7631
      %v7690 = vpack.c.bf16 %v7639, %v7636
      %v7691 = vpack.c.bf16 %v7644, %v7644
      %v7692 = vpack.c.bf16 %v7652, %v7647
      %v7693 = vpack.c.bf16 %v7655, %v7655
      %v7694 = vpack.c.bf16 %v7663, %v7660
      %v7695 = vpack.c.bf16 %v7668, %v7668
      %v7696 = vpack.c.bf16 %v7676, %v7671
      %v7697 = vpack.c.bf16 %v7679, %v7679
      %7700 = vrot.lane.b32.xlu0 %v7682, 96
      %v7701 = vpop.permute.xlu0 %7700
      %7702 = vrot.lane.b32.xlu0 %v7683, 96
      %v7703 = vpop.permute.xlu0 %7702
      %v7705 = vsel %vm900, %v7682, 0
      %v7708 = vsel %vm900, %v7683, 0
      %v7711 = vsel %vm900, %v7701, 0
      %v7714 = vsel %vm900, %v7703, 0
      %7716 = vmatprep.subr.bf16.mxu0 0
      %7717 = vmatpush1.bf16.xpose.msra.mxu0 %v7711
      %7718 = vmatprep.subr.bf16.mxu0 0
      %7719 = vmatpush1.bf16.xpose.msra.mxu0 %v7714
      %7720 = vmatprep.subr.bf16.mxu0 0
      %7721 = vmatpush1.bf16.xpose.msra.mxu0 0
      %7722 = vmatprep.subr.bf16.mxu0 0
      %7723 = vmatpush1.bf16.xpose.msra.mxu0 0
      %7724 = vmatprep.subr.bf16.mxu0 0
      %7725 = vmatpush1.bf16.xpose.msra.mxu0 0
      %7726 = vmatprep.subr.bf16.mxu0 0
      %7727 = vmatpush1.bf16.xpose.msra.mxu0 0
      %7728 = vmatprep.subr.bf16.mxu0 0
      %7729 = vmatpush1.bf16.xpose.msra.mxu0 0
      %7730 = vmatprep.subr.bf16.mxu0 0
      %7731 = vmatpush1.bf16.xpose.msra.mxu0 0
      %7732 = vmatprep.subr.bf16.mxu0 0
      %7733 = vmatpush1.bf16.xpose.msra.mxu0 0
      %7734 = vmatprep.subr.bf16.mxu0 0
      %7735 = vmatpush1.bf16.xpose.msra.mxu0 0
      %7736 = vmatprep.subr.bf16.mxu0 0
      %7737 = vmatpush1.bf16.xpose.msra.mxu0 0
      %7738 = vmatprep.subr.bf16.mxu0 0
      %7739 = vmatpush1.bf16.xpose.msra.mxu0 0
      %7740 = vmatprep.subr.bf16.mxu0 0
      %7741 = vmatpush1.bf16.xpose.msra.mxu0 0
      %7742 = vmatprep.subr.bf16.mxu0 0
      %7743 = vmatpush1.bf16.xpose.msra.mxu0 0
      %7744 = vmatprep.subr.bf16.mxu0 0
      %7745 = vmatpush1.bf16.xpose.msra.mxu0 0
      %7746 = vmatprep.subr.bf16.mxu0 0
      %7747 = vmatpush1.bf16.xpose.msra.mxu0 0
      %7748 = vmatprep.mubr.bf16.mxu0 0
      %7749 = vmatmul.mubr.bf16.gmra.mrb[0].mxu0 %v7705
      %v7750 = vpop.f32.mrb[0].mxu0
      %v7751 = vadd.f32 0.0, %v7750
      %v7752 = vpop.f32.mrb[0].mxu0
      %v7753 = vpop.f32.mrb[0].mxu0
      %v7754 = vadd.f32 0.0, %v7753
      %v7755 = vpop.f32.mrb[0].mxu0
      %7756 = vmatprep.mubr.bf16.mxu0 0
      %7757 = vmatmul.mubr.bf16.gmra.mrb[0].mxu0 %v7708
      %v7758 = vpop.f32.mrb[0].mxu0
      %v7759 = vadd.f32 0.0, %v7758
      %v7760 = vpop.f32.mrb[0].mxu0
      %v7761 = vpop.f32.mrb[0].mxu0
      %v7762 = vpop.f32.mrb[0].mxu0
      %7763 = vdwg.mxu0
      %7766 = vrot.lane.b32.xlu0 %v7684, 96
      %v7767 = vpop.permute.xlu0 %7766
      %7768 = vrot.lane.b32.xlu0 %v7685, 96
      %v7769 = vpop.permute.xlu0 %7768
      %v7771 = vsel %vm900, %v7684, 0
      %v7774 = vsel %vm900, %v7685, 0
      %v7777 = vsel %vm900, %v7767, 0
      %v7780 = vsel %vm900, %v7769, 0
      %7782 = vmatprep.subr.bf16.mxu0 0
      %7783 = vmatpush1.bf16.xpose.msra.mxu0 %v7777
      %7784 = vmatprep.subr.bf16.mxu0 0
      %7785 = vmatpush1.bf16.xpose.msra.mxu0 %v7780
      %7786 = vmatprep.subr.bf16.mxu0 0
      %7787 = vmatpush1.bf16.xpose.msra.mxu0 0
      %7788 = vmatprep.subr.bf16.mxu0 0
      %7789 = vmatpush1.bf16.xpose.msra.mxu0 0
      %7790 = vmatprep.subr.bf16.mxu0 0
      %7791 = vmatpush1.bf16.xpose.msra.mxu0 0
      %7792 = vmatprep.subr.bf16.mxu0 0
      %7793 = vmatpush1.bf16.xpose.msra.mxu0 0
      %7794 = vmatprep.subr.bf16.mxu0 0
      %7795 = vmatpush1.bf16.xpose.msra.mxu0 0
      %7796 = vmatprep.subr.bf16.mxu0 0
      %7797 = vmatpush1.bf16.xpose.msra.mxu0 0
      %7798 = vmatprep.subr.bf16.mxu0 0
      %7799 = vmatpush1.bf16.xpose.msra.mxu0 0
      %7800 = vmatprep.subr.bf16.mxu0 0
      %7801 = vmatpush1.bf16.xpose.msra.mxu0 0
      %7802 = vmatprep.subr.bf16.mxu0 0
      %7803 = vmatpush1.bf16.xpose.msra.mxu0 0
      %7804 = vmatprep.subr.bf16.mxu0 0
      %7805 = vmatpush1.bf16.xpose.msra.mxu0 0
      %7806 = vmatprep.subr.bf16.mxu0 0
      %7807 = vmatpush1.bf16.xpose.msra.mxu0 0
      %7808 = vmatprep.subr.bf16.mxu0 0
      %7809 = vmatpush1.bf16.xpose.msra.mxu0 0
      %7810 = vmatprep.subr.bf16.mxu0 0
      %7811 = vmatpush1.bf16.xpose.msra.mxu0 0
      %7812 = vmatprep.subr.bf16.mxu0 0
      %7813 = vmatpush1.bf16.xpose.msra.mxu0 0
      %7814 = vmatprep.mubr.bf16.mxu0 0
      %7815 = vmatmul.mubr.bf16.gmra.mrb[0].mxu0 %v7771
      %v7816 = vpop.f32.mrb[0].mxu0
      %v7817 = vadd.f32 0.0, %v7816
      %v7818 = vpop.f32.mrb[0].mxu0
      %v7819 = vpop.f32.mrb[0].mxu0
      %v7820 = vadd.f32 0.0, %v7819
      %v7821 = vpop.f32.mrb[0].mxu0
      %7822 = vmatprep.mubr.bf16.mxu0 0
      %7823 = vmatmul.mubr.bf16.gmra.mrb[0].mxu0 %v7774
      %v7824 = vpop.f32.mrb[0].mxu0
      %v7825 = vadd.f32 0.0, %v7824
      %v7826 = vpop.f32.mrb[0].mxu0
      %v7827 = vpop.f32.mrb[0].mxu0
      %v7828 = vpop.f32.mrb[0].mxu0
      %7829 = vdwg.mxu0
      %7832 = vrot.lane.b32.xlu0 %v7686, 96
      %v7833 = vpop.permute.xlu0 %7832
      %7834 = vrot.lane.b32.xlu0 %v7687, 96
      %v7835 = vpop.permute.xlu0 %7834
      %v7837 = vsel %vm900, %v7686, 0
      %v7840 = vsel %vm900, %v7687, 0
      %v7843 = vsel %vm900, %v7833, 0
      %v7846 = vsel %vm900, %v7835, 0
      %7848 = vmatprep.subr.bf16.mxu0 0
      %7849 = vmatpush1.bf16.xpose.msra.mxu0 %v7843
      %7850 = vmatprep.subr.bf16.mxu0 0
      %7851 = vmatpush1.bf16.xpose.msra.mxu0 %v7846
      %7852 = vmatprep.subr.bf16.mxu0 0
      %7853 = vmatpush1.bf16.xpose.msra.mxu0 0
      %7854 = vmatprep.subr.bf16.mxu0 0
      %7855 = vmatpush1.bf16.xpose.msra.mxu0 0
      %7856 = vmatprep.subr.bf16.mxu0 0
      %7857 = vmatpush1.bf16.xpose.msra.mxu0 0
      %7858 = vmatprep.subr.bf16.mxu0 0
      %7859 = vmatpush1.bf16.xpose.msra.mxu0 0
      %7860 = vmatprep.subr.bf16.mxu0 0
      %7861 = vmatpush1.bf16.xpose.msra.mxu0 0
      %7862 = vmatprep.subr.bf16.mxu0 0
      %7863 = vmatpush1.bf16.xpose.msra.mxu0 0
      %7864 = vmatprep.subr.bf16.mxu0 0
      %7865 = vmatpush1.bf16.xpose.msra.mxu0 0
      %7866 = vmatprep.subr.bf16.mxu0 0
      %7867 = vmatpush1.bf16.xpose.msra.mxu0 0
      %7868 = vmatprep.subr.bf16.mxu0 0
      %7869 = vmatpush1.bf16.xpose.msra.mxu0 0
      %7870 = vmatprep.subr.bf16.mxu0 0
      %7871 = vmatpush1.bf16.xpose.msra.mxu0 0
      %7872 = vmatprep.subr.bf16.mxu0 0
      %7873 = vmatpush1.bf16.xpose.msra.mxu0 0
      %7874 = vmatprep.subr.bf16.mxu0 0
      %7875 = vmatpush1.bf16.xpose.msra.mxu0 0
      %7876 = vmatprep.subr.bf16.mxu0 0
      %7877 = vmatpush1.bf16.xpose.msra.mxu0 0
      %7878 = vmatprep.subr.bf16.mxu0 0
      %7879 = vmatpush1.bf16.xpose.msra.mxu0 0
      %7880 = vmatprep.mubr.bf16.mxu0 0
      %7881 = vmatmul.mubr.bf16.gmra.mrb[0].mxu0 %v7837
      %v7882 = vpop.f32.mrb[0].mxu0
      %v7883 = vadd.f32 0.0, %v7882
      %v7884 = vpop.f32.mrb[0].mxu0
      %v7885 = vpop.f32.mrb[0].mxu0
      %v7886 = vadd.f32 0.0, %v7885
      %v7887 = vpop.f32.mrb[0].mxu0
      %7888 = vmatprep.mubr.bf16.mxu0 0
      %7889 = vmatmul.mubr.bf16.gmra.mrb[0].mxu0 %v7840
      %v7890 = vpop.f32.mrb[0].mxu0
      %v7891 = vadd.f32 0.0, %v7890
      %v7892 = vpop.f32.mrb[0].mxu0
      %v7893 = vpop.f32.mrb[0].mxu0
      %v7894 = vpop.f32.mrb[0].mxu0
      %7895 = vdwg.mxu0
      %7898 = vrot.lane.b32.xlu0 %v7688, 96
      %v7899 = vpop.permute.xlu0 %7898
      %7900 = vrot.lane.b32.xlu0 %v7689, 96
      %v7901 = vpop.permute.xlu0 %7900
      %v7903 = vsel %vm900, %v7688, 0
      %v7906 = vsel %vm900, %v7689, 0
      %v7909 = vsel %vm900, %v7899, 0
      %v7912 = vsel %vm900, %v7901, 0
      %7914 = vmatprep.subr.bf16.mxu0 0
      %7915 = vmatpush1.bf16.xpose.msra.mxu0 %v7909
      %7916 = vmatprep.subr.bf16.mxu0 0
      %7917 = vmatpush1.bf16.xpose.msra.mxu0 %v7912
      %7918 = vmatprep.subr.bf16.mxu0 0
      %7919 = vmatpush1.bf16.xpose.msra.mxu0 0
      %7920 = vmatprep.subr.bf16.mxu0 0
      %7921 = vmatpush1.bf16.xpose.msra.mxu0 0
      %7922 = vmatprep.subr.bf16.mxu0 0
      %7923 = vmatpush1.bf16.xpose.msra.mxu0 0
      %7924 = vmatprep.subr.bf16.mxu0 0
      %7925 = vmatpush1.bf16.xpose.msra.mxu0 0
      %7926 = vmatprep.subr.bf16.mxu0 0
      %7927 = vmatpush1.bf16.xpose.msra.mxu0 0
      %7928 = vmatprep.subr.bf16.mxu0 0
      %7929 = vmatpush1.bf16.xpose.msra.mxu0 0
      %7930 = vmatprep.subr.bf16.mxu0 0
      %7931 = vmatpush1.bf16.xpose.msra.mxu0 0
      %7932 = vmatprep.subr.bf16.mxu0 0
      %7933 = vmatpush1.bf16.xpose.msra.mxu0 0
      %7934 = vmatprep.subr.bf16.mxu0 0
      %7935 = vmatpush1.bf16.xpose.msra.mxu0 0
      %7936 = vmatprep.subr.bf16.mxu0 0
      %7937 = vmatpush1.bf16.xpose.msra.mxu0 0
      %7938 = vmatprep.subr.bf16.mxu0 0
      %7939 = vmatpush1.bf16.xpose.msra.mxu0 0
      %7940 = vmatprep.subr.bf16.mxu0 0
      %7941 = vmatpush1.bf16.xpose.msra.mxu0 0
      %7942 = vmatprep.subr.bf16.mxu0 0
      %7943 = vmatpush1.bf16.xpose.msra.mxu0 0
      %7944 = vmatprep.subr.bf16.mxu0 0
      %7945 = vmatpush1.bf16.xpose.msra.mxu0 0
      %7946 = vmatprep.mubr.bf16.mxu0 0
      %7947 = vmatmul.mubr.bf16.gmra.mrb[0].mxu0 %v7903
      %v7948 = vpop.f32.mrb[0].mxu0
      %v7949 = vadd.f32 0.0, %v7948
      %v7950 = vpop.f32.mrb[0].mxu0
      %v7951 = vpop.f32.mrb[0].mxu0
      %v7952 = vadd.f32 0.0, %v7951
      %v7953 = vpop.f32.mrb[0].mxu0
      %7954 = vmatprep.mubr.bf16.mxu0 0
      %7955 = vmatmul.mubr.bf16.gmra.mrb[0].mxu0 %v7906
      %v7956 = vpop.f32.mrb[0].mxu0
      %v7957 = vadd.f32 0.0, %v7956
      %v7958 = vpop.f32.mrb[0].mxu0
      %v7959 = vpop.f32.mrb[0].mxu0
      %v7960 = vpop.f32.mrb[0].mxu0
      %7961 = vdwg.mxu0
      %7964 = vrot.lane.b32.xlu0 %v7690, 96
      %v7965 = vpop.permute.xlu0 %7964
      %7966 = vrot.lane.b32.xlu0 %v7691, 96
      %v7967 = vpop.permute.xlu0 %7966
      %v7969 = vsel %vm900, %v7690, 0
      %v7972 = vsel %vm900, %v7691, 0
      %v7975 = vsel %vm900, %v7965, 0
      %v7978 = vsel %vm900, %v7967, 0
      %7980 = vmatprep.subr.bf16.mxu0 0
      %7981 = vmatpush1.bf16.xpose.msra.mxu0 %v7975
      %7982 = vmatprep.subr.bf16.mxu0 0
      %7983 = vmatpush1.bf16.xpose.msra.mxu0 %v7978
      %7984 = vmatprep.subr.bf16.mxu0 0
      %7985 = vmatpush1.bf16.xpose.msra.mxu0 0
      %7986 = vmatprep.subr.bf16.mxu0 0
      %7987 = vmatpush1.bf16.xpose.msra.mxu0 0
      %7988 = vmatprep.subr.bf16.mxu0 0
      %7989 = vmatpush1.bf16.xpose.msra.mxu0 0
      %7990 = vmatprep.subr.bf16.mxu0 0
      %7991 = vmatpush1.bf16.xpose.msra.mxu0 0
      %7992 = vmatprep.subr.bf16.mxu0 0
      %7993 = vmatpush1.bf16.xpose.msra.mxu0 0
      %7994 = vmatprep.subr.bf16.mxu0 0
      %7995 = vmatpush1.bf16.xpose.msra.mxu0 0
      %7996 = vmatprep.subr.bf16.mxu0 0
      %7997 = vmatpush1.bf16.xpose.msra.mxu0 0
      %7998 = vmatprep.subr.bf16.mxu0 0
      %7999 = vmatpush1.bf16.xpose.msra.mxu0 0
      %8000 = vmatprep.subr.bf16.mxu0 0
      %8001 = vmatpush1.bf16.xpose.msra.mxu0 0
      %8002 = vmatprep.subr.bf16.mxu0 0
      %8003 = vmatpush1.bf16.xpose.msra.mxu0 0
      %8004 = vmatprep.subr.bf16.mxu0 0
      %8005 = vmatpush1.bf16.xpose.msra.mxu0 0
      %8006 = vmatprep.subr.bf16.mxu0 0
      %8007 = vmatpush1.bf16.xpose.msra.mxu0 0
      %8008 = vmatprep.subr.bf16.mxu0 0
      %8009 = vmatpush1.bf16.xpose.msra.mxu0 0
      %8010 = vmatprep.subr.bf16.mxu0 0
      %8011 = vmatpush1.bf16.xpose.msra.mxu0 0
      %8012 = vmatprep.mubr.bf16.mxu0 0
      %8013 = vmatmul.mubr.bf16.gmra.mrb[0].mxu0 %v7969
      %v8014 = vpop.f32.mrb[0].mxu0
      %v8015 = vadd.f32 0.0, %v8014
      %v8016 = vpop.f32.mrb[0].mxu0
      %v8017 = vpop.f32.mrb[0].mxu0
      %v8018 = vadd.f32 0.0, %v8017
      %v8019 = vpop.f32.mrb[0].mxu0
      %8020 = vmatprep.mubr.bf16.mxu0 0
      %8021 = vmatmul.mubr.bf16.gmra.mrb[0].mxu0 %v7972
      %v8022 = vpop.f32.mrb[0].mxu0
      %v8023 = vadd.f32 0.0, %v8022
      %v8024 = vpop.f32.mrb[0].mxu0
      %v8025 = vpop.f32.mrb[0].mxu0
      %v8026 = vpop.f32.mrb[0].mxu0
      %8027 = vdwg.mxu0
      %8030 = vrot.lane.b32.xlu0 %v7692, 96
      %v8031 = vpop.permute.xlu0 %8030
      %8032 = vrot.lane.b32.xlu0 %v7693, 96
      %v8033 = vpop.permute.xlu0 %8032
      %v8035 = vsel %vm900, %v7692, 0
      %v8038 = vsel %vm900, %v7693, 0
      %v8041 = vsel %vm900, %v8031, 0
      %v8044 = vsel %vm900, %v8033, 0
      %8046 = vmatprep.subr.bf16.mxu0 0
      %8047 = vmatpush1.bf16.xpose.msra.mxu0 %v8041
      %8048 = vmatprep.subr.bf16.mxu0 0
      %8049 = vmatpush1.bf16.xpose.msra.mxu0 %v8044
      %8050 = vmatprep.subr.bf16.mxu0 0
      %8051 = vmatpush1.bf16.xpose.msra.mxu0 0
      %8052 = vmatprep.subr.bf16.mxu0 0
      %8053 = vmatpush1.bf16.xpose.msra.mxu0 0
      %8054 = vmatprep.subr.bf16.mxu0 0
      %8055 = vmatpush1.bf16.xpose.msra.mxu0 0
      %8056 = vmatprep.subr.bf16.mxu0 0
      %8057 = vmatpush1.bf16.xpose.msra.mxu0 0
      %8058 = vmatprep.subr.bf16.mxu0 0
      %8059 = vmatpush1.bf16.xpose.msra.mxu0 0
      %8060 = vmatprep.subr.bf16.mxu0 0
      %8061 = vmatpush1.bf16.xpose.msra.mxu0 0
      %8062 = vmatprep.subr.bf16.mxu0 0
      %8063 = vmatpush1.bf16.xpose.msra.mxu0 0
      %8064 = vmatprep.subr.bf16.mxu0 0
      %8065 = vmatpush1.bf16.xpose.msra.mxu0 0
      %8066 = vmatprep.subr.bf16.mxu0 0
      %8067 = vmatpush1.bf16.xpose.msra.mxu0 0
      %8068 = vmatprep.subr.bf16.mxu0 0
      %8069 = vmatpush1.bf16.xpose.msra.mxu0 0
      %8070 = vmatprep.subr.bf16.mxu0 0
      %8071 = vmatpush1.bf16.xpose.msra.mxu0 0
      %8072 = vmatprep.subr.bf16.mxu0 0
      %8073 = vmatpush1.bf16.xpose.msra.mxu0 0
      %8074 = vmatprep.subr.bf16.mxu0 0
      %8075 = vmatpush1.bf16.xpose.msra.mxu0 0
      %8076 = vmatprep.subr.bf16.mxu0 0
      %8077 = vmatpush1.bf16.xpose.msra.mxu0 0
      %8078 = vmatprep.mubr.bf16.mxu0 0
      %8079 = vmatmul.mubr.bf16.gmra.mrb[0].mxu0 %v8035
      %v8080 = vpop.f32.mrb[0].mxu0
      %v8081 = vadd.f32 0.0, %v8080
      %v8082 = vpop.f32.mrb[0].mxu0
      %v8083 = vpop.f32.mrb[0].mxu0
      %v8084 = vadd.f32 0.0, %v8083
      %v8085 = vpop.f32.mrb[0].mxu0
      %8086 = vmatprep.mubr.bf16.mxu0 0
      %8087 = vmatmul.mubr.bf16.gmra.mrb[0].mxu0 %v8038
      %v8088 = vpop.f32.mrb[0].mxu0
      %v8089 = vadd.f32 0.0, %v8088
      %v8090 = vpop.f32.mrb[0].mxu0
      %v8091 = vpop.f32.mrb[0].mxu0
      %v8092 = vpop.f32.mrb[0].mxu0
      %8093 = vdwg.mxu0
      %8096 = vrot.lane.b32.xlu0 %v7694, 96
      %v8097 = vpop.permute.xlu0 %8096
      %8098 = vrot.lane.b32.xlu0 %v7695, 96
      %v8099 = vpop.permute.xlu0 %8098
      %v8101 = vsel %vm900, %v7694, 0
      %v8104 = vsel %vm900, %v7695, 0
      %v8107 = vsel %vm900, %v8097, 0
      %v8110 = vsel %vm900, %v8099, 0
      %8112 = vmatprep.subr.bf16.mxu0 0
      %8113 = vmatpush1.bf16.xpose.msra.mxu0 %v8107
      %8114 = vmatprep.subr.bf16.mxu0 0
      %8115 = vmatpush1.bf16.xpose.msra.mxu0 %v8110
      %8116 = vmatprep.subr.bf16.mxu0 0
      %8117 = vmatpush1.bf16.xpose.msra.mxu0 0
      %8118 = vmatprep.subr.bf16.mxu0 0
      %8119 = vmatpush1.bf16.xpose.msra.mxu0 0
      %8120 = vmatprep.subr.bf16.mxu0 0
      %8121 = vmatpush1.bf16.xpose.msra.mxu0 0
      %8122 = vmatprep.subr.bf16.mxu0 0
      %8123 = vmatpush1.bf16.xpose.msra.mxu0 0
      %8124 = vmatprep.subr.bf16.mxu0 0
      %8125 = vmatpush1.bf16.xpose.msra.mxu0 0
      %8126 = vmatprep.subr.bf16.mxu0 0
      %8127 = vmatpush1.bf16.xpose.msra.mxu0 0
      %8128 = vmatprep.subr.bf16.mxu0 0
      %8129 = vmatpush1.bf16.xpose.msra.mxu0 0
      %8130 = vmatprep.subr.bf16.mxu0 0
      %8131 = vmatpush1.bf16.xpose.msra.mxu0 0
      %8132 = vmatprep.subr.bf16.mxu0 0
      %8133 = vmatpush1.bf16.xpose.msra.mxu0 0
      %8134 = vmatprep.subr.bf16.mxu0 0
      %8135 = vmatpush1.bf16.xpose.msra.mxu0 0
      %8136 = vmatprep.subr.bf16.mxu0 0
      %8137 = vmatpush1.bf16.xpose.msra.mxu0 0
      %8138 = vmatprep.subr.bf16.mxu0 0
      %8139 = vmatpush1.bf16.xpose.msra.mxu0 0
      %8140 = vmatprep.subr.bf16.mxu0 0
      %8141 = vmatpush1.bf16.xpose.msra.mxu0 0
      %8142 = vmatprep.subr.bf16.mxu0 0
      %8143 = vmatpush1.bf16.xpose.msra.mxu0 0
      %8144 = vmatprep.mubr.bf16.mxu0 0
      %8145 = vmatmul.mubr.bf16.gmra.mrb[0].mxu0 %v8101
      %v8146 = vpop.f32.mrb[0].mxu0
      %v8147 = vadd.f32 0.0, %v8146
      %v8148 = vpop.f32.mrb[0].mxu0
      %v8149 = vpop.f32.mrb[0].mxu0
      %v8150 = vadd.f32 0.0, %v8149
      %v8151 = vpop.f32.mrb[0].mxu0
      %8152 = vmatprep.mubr.bf16.mxu0 0
      %8153 = vmatmul.mubr.bf16.gmra.mrb[0].mxu0 %v8104
      %v8154 = vpop.f32.mrb[0].mxu0
      %v8155 = vadd.f32 0.0, %v8154
      %v8156 = vpop.f32.mrb[0].mxu0
      %v8157 = vpop.f32.mrb[0].mxu0
      %v8158 = vpop.f32.mrb[0].mxu0
      %8159 = vdwg.mxu0
      %8162 = vrot.lane.b32.xlu0 %v7696, 96
      %v8163 = vpop.permute.xlu0 %8162
      %8164 = vrot.lane.b32.xlu0 %v7697, 96
      %v8165 = vpop.permute.xlu0 %8164
      %v8167 = vsel %vm900, %v7696, 0
      %v8170 = vsel %vm900, %v7697, 0
      %v8173 = vsel %vm900, %v8163, 0
      %v8176 = vsel %vm900, %v8165, 0
      %8178 = vmatprep.subr.bf16.mxu0 0
      %8179 = vmatpush1.bf16.xpose.msra.mxu0 %v8173
      %8180 = vmatprep.subr.bf16.mxu0 0
      %8181 = vmatpush1.bf16.xpose.msra.mxu0 %v8176
      %8182 = vmatprep.subr.bf16.mxu0 0
      %8183 = vmatpush1.bf16.xpose.msra.mxu0 0
      %8184 = vmatprep.subr.bf16.mxu0 0
      %8185 = vmatpush1.bf16.xpose.msra.mxu0 0
      %8186 = vmatprep.subr.bf16.mxu0 0
      %8187 = vmatpush1.bf16.xpose.msra.mxu0 0
      %8188 = vmatprep.subr.bf16.mxu0 0
      %8189 = vmatpush1.bf16.xpose.msra.mxu0 0
      %8190 = vmatprep.subr.bf16.mxu0 0
      %8191 = vmatpush1.bf16.xpose.msra.mxu0 0
      %8192 = vmatprep.subr.bf16.mxu0 0
      %8193 = vmatpush1.bf16.xpose.msra.mxu0 0
      %8194 = vmatprep.subr.bf16.mxu0 0
      %8195 = vmatpush1.bf16.xpose.msra.mxu0 0
      %8196 = vmatprep.subr.bf16.mxu0 0
      %8197 = vmatpush1.bf16.xpose.msra.mxu0 0
      %8198 = vmatprep.subr.bf16.mxu0 0
      %8199 = vmatpush1.bf16.xpose.msra.mxu0 0
      %8200 = vmatprep.subr.bf16.mxu0 0
      %8201 = vmatpush1.bf16.xpose.msra.mxu0 0
      %8202 = vmatprep.subr.bf16.mxu0 0
      %8203 = vmatpush1.bf16.xpose.msra.mxu0 0
      %8204 = vmatprep.subr.bf16.mxu0 0
      %8205 = vmatpush1.bf16.xpose.msra.mxu0 0
      %8206 = vmatprep.subr.bf16.mxu0 0
      %8207 = vmatpush1.bf16.xpose.msra.mxu0 0
      %8208 = vmatprep.subr.bf16.mxu0 0
      %8209 = vmatpush1.bf16.xpose.msra.mxu0 0
      %8210 = vmatprep.mubr.bf16.mxu0 0
      %8211 = vmatmul.mubr.bf16.gmra.mrb[0].mxu0 %v8167
      %v8212 = vpop.f32.mrb[0].mxu0
      %v8213 = vadd.f32 0.0, %v8212
      %v8214 = vpop.f32.mrb[0].mxu0
      %v8215 = vpop.f32.mrb[0].mxu0
      %v8216 = vadd.f32 0.0, %v8215
      %v8217 = vpop.f32.mrb[0].mxu0
      %8218 = vmatprep.mubr.bf16.mxu0 0
      %8219 = vmatmul.mubr.bf16.gmra.mrb[0].mxu0 %v8170
      %v8220 = vpop.f32.mrb[0].mxu0
      %v8221 = vadd.f32 0.0, %v8220
      %v8222 = vpop.f32.mrb[0].mxu0
      %v8223 = vpop.f32.mrb[0].mxu0
      %v8224 = vpop.f32.mrb[0].mxu0
      %8225 = vdwg.mxu0
      %v8226 = vmul.f32 %v7751, 0.17677669
      %v8227 = vmul.f32 %v7754, 0.17677669
      %v8228 = vmul.f32 %v7759, 0.17677669
      %v8229 = vmul.f32 %v7817, 0.17677669
      %v8230 = vmul.f32 %v7820, 0.17677669
      %v8231 = vmul.f32 %v7825, 0.17677669
      %v8232 = vmul.f32 %v7883, 0.17677669
      %v8233 = vmul.f32 %v7886, 0.17677669
      %v8234 = vmul.f32 %v7891, 0.17677669
      %v8235 = vmul.f32 %v7949, 0.17677669
      %v8236 = vmul.f32 %v7952, 0.17677669
      %v8237 = vmul.f32 %v7957, 0.17677669
      %v8238 = vmul.f32 %v8015, 0.17677669
      %v8239 = vmul.f32 %v8018, 0.17677669
      %v8240 = vmul.f32 %v8023, 0.17677669
      %v8241 = vmul.f32 %v8081, 0.17677669
      %v8242 = vmul.f32 %v8084, 0.17677669
      %v8243 = vmul.f32 %v8089, 0.17677669
      %v8244 = vmul.f32 %v8147, 0.17677669
      %v8245 = vmul.f32 %v8150, 0.17677669
      %v8246 = vmul.f32 %v8155, 0.17677669
      %v8247 = vmul.f32 %v8213, 0.17677669
      %v8248 = vmul.f32 %v8216, 0.17677669
      %v8249 = vmul.f32 %v8221, 0.17677669
      %v8250 = vsel %vm2090, %v8226, -inf
      %8251 = vmax.xlane.f32.xlu0 %v8250
      %v8252 = vpop.xlane.xlu0 %8251
      %v8253 = vsel %vm2090, %v8227, -inf
      %8254 = vmax.xlane.f32.xlu0 %v8253
      %v8255 = vpop.xlane.xlu0 %8254
      %v8256 = vsel %vm2090, %v8228, -inf
      %8257 = vmax.xlane.f32.xlu0 %v8256
      %v8258 = vpop.xlane.xlu0 %8257
      %v8259 = vsel %vm2090, %v8229, -inf
      %8260 = vmax.xlane.f32.xlu0 %v8259
      %v8261 = vpop.xlane.xlu0 %8260
      %v8262 = vsel %vm2090, %v8230, -inf
      %8263 = vmax.xlane.f32.xlu0 %v8262
      %v8264 = vpop.xlane.xlu0 %8263
      %v8265 = vsel %vm2090, %v8231, -inf
      %8266 = vmax.xlane.f32.xlu0 %v8265
      %v8267 = vpop.xlane.xlu0 %8266
      %v8268 = vsel %vm2090, %v8232, -inf
      %8269 = vmax.xlane.f32.xlu0 %v8268
      %v8270 = vpop.xlane.xlu0 %8269
      %v8271 = vsel %vm2090, %v8233, -inf
      %8272 = vmax.xlane.f32.xlu0 %v8271
      %v8273 = vpop.xlane.xlu0 %8272
      %v8274 = vsel %vm2090, %v8234, -inf
      %8275 = vmax.xlane.f32.xlu0 %v8274
      %v8276 = vpop.xlane.xlu0 %8275
      %v8277 = vsel %vm2090, %v8235, -inf
      %8278 = vmax.xlane.f32.xlu0 %v8277
      %v8279 = vpop.xlane.xlu0 %8278
      %v8280 = vsel %vm2090, %v8236, -inf
      %8281 = vmax.xlane.f32.xlu0 %v8280
      %v8282 = vpop.xlane.xlu0 %8281
      %v8283 = vsel %vm2090, %v8237, -inf
      %8284 = vmax.xlane.f32.xlu0 %v8283
      %v8285 = vpop.xlane.xlu0 %8284
      %v8286 = vsel %vm2090, %v8238, -inf
      %8287 = vmax.xlane.f32.xlu0 %v8286
      %v8288 = vpop.xlane.xlu0 %8287
      %v8289 = vsel %vm2090, %v8239, -inf
      %8290 = vmax.xlane.f32.xlu0 %v8289
      %v8291 = vpop.xlane.xlu0 %8290
      %v8292 = vsel %vm2090, %v8240, -inf
      %8293 = vmax.xlane.f32.xlu0 %v8292
      %v8294 = vpop.xlane.xlu0 %8293
      %v8295 = vsel %vm2090, %v8241, -inf
      %8296 = vmax.xlane.f32.xlu0 %v8295
      %v8297 = vpop.xlane.xlu0 %8296
      %v8298 = vsel %vm2090, %v8242, -inf
      %8299 = vmax.xlane.f32.xlu0 %v8298
      %v8300 = vpop.xlane.xlu0 %8299
      %v8301 = vsel %vm2090, %v8243, -inf
      %8302 = vmax.xlane.f32.xlu0 %v8301
      %v8303 = vpop.xlane.xlu0 %8302
      %v8304 = vsel %vm2090, %v8244, -inf
      %8305 = vmax.xlane.f32.xlu0 %v8304
      %v8306 = vpop.xlane.xlu0 %8305
      %v8307 = vsel %vm2090, %v8245, -inf
      %8308 = vmax.xlane.f32.xlu0 %v8307
      %v8309 = vpop.xlane.xlu0 %8308
      %v8310 = vsel %vm2090, %v8246, -inf
      %8311 = vmax.xlane.f32.xlu0 %v8310
      %v8312 = vpop.xlane.xlu0 %8311
      %v8313 = vsel %vm2090, %v8247, -inf
      %8314 = vmax.xlane.f32.xlu0 %v8313
      %v8315 = vpop.xlane.xlu0 %8314
      %v8316 = vsel %vm2090, %v8248, -inf
      %8317 = vmax.xlane.f32.xlu0 %v8316
      %v8318 = vpop.xlane.xlu0 %8317
      %v8319 = vsel %vm2090, %v8249, -inf
      %8320 = vmax.xlane.f32.xlu0 %v8319
      %v8321 = vpop.xlane.xlu0 %8320
      %v8322 = vsub.f32 %v8226, %v8252
      %v8323 = vsub.f32 %v8227, %v8255
      %v8324 = vsub.f32 %v8228, %v8258
      %v8325 = vsub.f32 %v8229, %v8261
      %v8326 = vsub.f32 %v8230, %v8264
      %v8327 = vsub.f32 %v8231, %v8267
      %v8328 = vsub.f32 %v8232, %v8270
      %v8329 = vsub.f32 %v8233, %v8273
      %v8330 = vsub.f32 %v8234, %v8276
      %v8331 = vsub.f32 %v8235, %v8279
      %v8332 = vsub.f32 %v8236, %v8282
      %v8333 = vsub.f32 %v8237, %v8285
      %v8334 = vsub.f32 %v8238, %v8288
      %v8335 = vsub.f32 %v8239, %v8291
      %v8336 = vsub.f32 %v8240, %v8294
      %v8337 = vsub.f32 %v8241, %v8297
      %v8338 = vsub.f32 %v8242, %v8300
      %v8339 = vsub.f32 %v8243, %v8303
      %v8340 = vsub.f32 %v8244, %v8306
      %v8341 = vsub.f32 %v8245, %v8309
      %v8342 = vsub.f32 %v8246, %v8312
      %v8343 = vsub.f32 %v8247, %v8315
      %v8344 = vsub.f32 %v8248, %v8318
      %v8345 = vsub.f32 %v8249, %v8321
      %v8346 = vmul.f32 %v8322, 1.442695
      %v8347 = vpow.pop %v8346
      %v8348 = vmul.f32 %v8323, 1.442695
      %v8349 = vpow.pop %v8348
      %v8350 = vmul.f32 %v8324, 1.442695
      %v8351 = vpow.pop %v8350
      %v8352 = vmul.f32 %v8325, 1.442695
      %v8353 = vpow.pop %v8352
      %v8354 = vmul.f32 %v8326, 1.442695
      %v8355 = vpow.pop %v8354
      %v8356 = vmul.f32 %v8327, 1.442695
      %v8357 = vpow.pop %v8356
      %v8358 = vmul.f32 %v8328, 1.442695
      %v8359 = vpow.pop %v8358
      %v8360 = vmul.f32 %v8329, 1.442695
      %v8361 = vpow.pop %v8360
      %v8362 = vmul.f32 %v8330, 1.442695
      %v8363 = vpow.pop %v8362
      %v8364 = vmul.f32 %v8331, 1.442695
      %v8365 = vpow.pop %v8364
      %v8366 = vmul.f32 %v8332, 1.442695
      %v8367 = vpow.pop %v8366
      %v8368 = vmul.f32 %v8333, 1.442695
      %v8369 = vpow.pop %v8368
      %v8370 = vmul.f32 %v8334, 1.442695
      %v8371 = vpow.pop %v8370
      %v8372 = vmul.f32 %v8335, 1.442695
      %v8373 = vpow.pop %v8372
      %v8374 = vmul.f32 %v8336, 1.442695
      %v8375 = vpow.pop %v8374
      %v8376 = vmul.f32 %v8337, 1.442695
      %v8377 = vpow.pop %v8376
      %v8378 = vmul.f32 %v8338, 1.442695
      %v8379 = vpow.pop %v8378
      %v8380 = vmul.f32 %v8339, 1.442695
      %v8381 = vpow.pop %v8380
      %v8382 = vmul.f32 %v8340, 1.442695
      %v8383 = vpow.pop %v8382
      %v8384 = vmul.f32 %v8341, 1.442695
      %v8385 = vpow.pop %v8384
      %v8386 = vmul.f32 %v8342, 1.442695
      %v8387 = vpow.pop %v8386
      %v8388 = vmul.f32 %v8343, 1.442695
      %v8389 = vpow.pop %v8388
      %v8390 = vmul.f32 %v8344, 1.442695
      %v8391 = vpow.pop %v8390
      %v8392 = vmul.f32 %v8345, 1.442695
      %v8393 = vpow.pop %v8392
      %v8394 = vsel %vm2090, %v8347, 0.0
      %8395 = vadd.xlane.f32.xlu0 %v8394
      %v8396 = vpop.xlane.xlu0 %8395
      %v8397 = vsel %vm2090, %v8349, 0.0
      %8398 = vadd.xlane.f32.xlu0 %v8397
      %v8399 = vpop.xlane.xlu0 %8398
      %v8400 = vsel %vm2090, %v8351, 0.0
      %8401 = vadd.xlane.f32.xlu0 %v8400
      %v8402 = vpop.xlane.xlu0 %8401
      %v8403 = vsel %vm2090, %v8353, 0.0
      %8404 = vadd.xlane.f32.xlu0 %v8403
      %v8405 = vpop.xlane.xlu0 %8404
      %v8406 = vsel %vm2090, %v8355, 0.0
      %8407 = vadd.xlane.f32.xlu0 %v8406
      %v8408 = vpop.xlane.xlu0 %8407
      %v8409 = vsel %vm2090, %v8357, 0.0
      %8410 = vadd.xlane.f32.xlu0 %v8409
      %v8411 = vpop.xlane.xlu0 %8410
      %v8412 = vsel %vm2090, %v8359, 0.0
      %8413 = vadd.xlane.f32.xlu0 %v8412
      %v8414 = vpop.xlane.xlu0 %8413
      %v8415 = vsel %vm2090, %v8361, 0.0
      %8416 = vadd.xlane.f32.xlu0 %v8415
      %v8417 = vpop.xlane.xlu0 %8416
      %v8418 = vsel %vm2090, %v8363, 0.0
      %8419 = vadd.xlane.f32.xlu0 %v8418
      %v8420 = vpop.xlane.xlu0 %8419
      %v8421 = vsel %vm2090, %v8365, 0.0
      %8422 = vadd.xlane.f32.xlu0 %v8421
      %v8423 = vpop.xlane.xlu0 %8422
      %v8424 = vsel %vm2090, %v8367, 0.0
      %8425 = vadd.xlane.f32.xlu0 %v8424
      %v8426 = vpop.xlane.xlu0 %8425
      %v8427 = vsel %vm2090, %v8369, 0.0
      %8428 = vadd.xlane.f32.xlu0 %v8427
      %v8429 = vpop.xlane.xlu0 %8428
      %v8430 = vsel %vm2090, %v8371, 0.0
      %8431 = vadd.xlane.f32.xlu0 %v8430
      %v8432 = vpop.xlane.xlu0 %8431
      %v8433 = vsel %vm2090, %v8373, 0.0
      %8434 = vadd.xlane.f32.xlu0 %v8433
      %v8435 = vpop.xlane.xlu0 %8434
      %v8436 = vsel %vm2090, %v8375, 0.0
      %8437 = vadd.xlane.f32.xlu0 %v8436
      %v8438 = vpop.xlane.xlu0 %8437
      %v8439 = vsel %vm2090, %v8377, 0.0
      %8440 = vadd.xlane.f32.xlu0 %v8439
      %v8441 = vpop.xlane.xlu0 %8440
      %v8442 = vsel %vm2090, %v8379, 0.0
      %8443 = vadd.xlane.f32.xlu0 %v8442
      %v8444 = vpop.xlane.xlu0 %8443
      %v8445 = vsel %vm2090, %v8381, 0.0
      %8446 = vadd.xlane.f32.xlu0 %v8445
      %v8447 = vpop.xlane.xlu0 %8446
      %v8448 = vsel %vm2090, %v8383, 0.0
      %8449 = vadd.xlane.f32.xlu0 %v8448
      %v8450 = vpop.xlane.xlu0 %8449
      %v8451 = vsel %vm2090, %v8385, 0.0
      %8452 = vadd.xlane.f32.xlu0 %v8451
      %v8453 = vpop.xlane.xlu0 %8452
      %v8454 = vsel %vm2090, %v8387, 0.0
      %8455 = vadd.xlane.f32.xlu0 %v8454
      %v8456 = vpop.xlane.xlu0 %8455
      %v8457 = vsel %vm2090, %v8389, 0.0
      %8458 = vadd.xlane.f32.xlu0 %v8457
      %v8459 = vpop.xlane.xlu0 %8458
      %v8460 = vsel %vm2090, %v8391, 0.0
      %8461 = vadd.xlane.f32.xlu0 %v8460
      %v8462 = vpop.xlane.xlu0 %8461
      %v8463 = vsel %vm2090, %v8393, 0.0
      %8464 = vadd.xlane.f32.xlu0 %v8463
      %v8465 = vpop.xlane.xlu0 %8464
      %v8466 = vrcp.pop %v8396
      %v8467 = vrcp.pop %v8399
      %v8468 = vrcp.pop %v8402
      %v8469 = vrcp.pop %v8405
      %v8470 = vrcp.pop %v8408
      %v8471 = vrcp.pop %v8411
      %v8472 = vrcp.pop %v8414
      %v8473 = vrcp.pop %v8417
      %v8474 = vrcp.pop %v8420
      %v8475 = vrcp.pop %v8423
      %v8476 = vrcp.pop %v8426
      %v8477 = vrcp.pop %v8429
      %v8478 = vrcp.pop %v8432
      %v8479 = vrcp.pop %v8435
      %v8480 = vrcp.pop %v8438
      %v8481 = vrcp.pop %v8441
      %v8482 = vrcp.pop %v8444
      %v8483 = vrcp.pop %v8447
      %v8484 = vrcp.pop %v8450
      %v8485 = vrcp.pop %v8453
      %v8486 = vrcp.pop %v8456
      %v8487 = vrcp.pop %v8459
      %v8488 = vrcp.pop %v8462
      %v8489 = vrcp.pop %v8465
      %v8490 = vmul.f32 %v8347, %v8466
      %v8491 = vmul.f32 %v8349, %v8467
      %v8492 = vmul.f32 %v8351, %v8468
      %v8493 = vmul.f32 %v8353, %v8469
      %v8494 = vmul.f32 %v8355, %v8470
      %v8495 = vmul.f32 %v8357, %v8471
      %v8496 = vmul.f32 %v8359, %v8472
      %v8497 = vmul.f32 %v8361, %v8473
      %v8498 = vmul.f32 %v8363, %v8474
      %v8499 = vmul.f32 %v8365, %v8475
      %v8500 = vmul.f32 %v8367, %v8476
      %v8501 = vmul.f32 %v8369, %v8477
      %v8502 = vmul.f32 %v8371, %v8478
      %v8503 = vmul.f32 %v8373, %v8479
      %v8504 = vmul.f32 %v8375, %v8480
      %v8505 = vmul.f32 %v8377, %v8481
      %v8506 = vmul.f32 %v8379, %v8482
      %v8507 = vmul.f32 %v8381, %v8483
      %v8508 = vmul.f32 %v8383, %v8484
      %v8509 = vmul.f32 %v8385, %v8485
      %v8510 = vmul.f32 %v8387, %v8486
      %v8511 = vmul.f32 %v8389, %v8487
      %v8512 = vmul.f32 %v8391, %v8488
      %v8513 = vmul.f32 %v8393, %v8489
      %v8514 = vpack.c.bf16 %v8491, %v8490
      %v8515 = vpack.c.bf16 %v8492, %v8492
      %v8516 = vpack.c.bf16 %v8494, %v8493
      %v8517 = vpack.c.bf16 %v8495, %v8495
      %v8518 = vpack.c.bf16 %v8497, %v8496
      %v8519 = vpack.c.bf16 %v8498, %v8498
      %v8520 = vpack.c.bf16 %v8500, %v8499
      %v8521 = vpack.c.bf16 %v8501, %v8501
      %v8522 = vpack.c.bf16 %v8503, %v8502
      %v8523 = vpack.c.bf16 %v8504, %v8504
      %v8524 = vpack.c.bf16 %v8506, %v8505
      %v8525 = vpack.c.bf16 %v8507, %v8507
      %v8526 = vpack.c.bf16 %v8509, %v8508
      %v8527 = vpack.c.bf16 %v8510, %v8510
      %v8528 = vpack.c.bf16 %v8512, %v8511
      %v8529 = vpack.c.bf16 %v8513, %v8513
      %8530 = vrot.lane.b32.xlu0 %v7682, 64
      %v8531 = vpop.permute.xlu0 %8530
      %8532 = vrot.lane.b32.xlu0 %v7683, 64
      %v8533 = vpop.permute.xlu0 %8532
      %v8536 = vsel %vm2090, %v8514, 0
      %v8539 = vsel %vm2090, %v8515, 0
      %v8542 = vsel %vm2382, %v8533, 0
      %8544 = vmatprep.subr.bf16.mxu0 0
      %8545 = vmatpush1.bf16.msra.mxu0 %v8531
      %8546 = vmatprep.subr.bf16.mxu0 0
      %8547 = vmatpush1.bf16.msra.mxu0 %v8542
      %8548 = vmatprep.subr.bf16.mxu0 0
      %8549 = vmatpush1.bf16.msra.mxu0 0
      %8550 = vmatprep.subr.bf16.mxu0 0
      %8551 = vmatpush1.bf16.msra.mxu0 0
      %8552 = vmatprep.subr.bf16.mxu0 0
      %8553 = vmatpush1.bf16.msra.mxu0 0
      %8554 = vmatprep.subr.bf16.mxu0 0
      %8555 = vmatpush1.bf16.msra.mxu0 0
      %8556 = vmatprep.subr.bf16.mxu0 0
      %8557 = vmatpush1.bf16.msra.mxu0 0
      %8558 = vmatprep.subr.bf16.mxu0 0
      %8559 = vmatpush1.bf16.msra.mxu0 0
      %8560 = vmatprep.subr.bf16.mxu0 0
      %8561 = vmatpush1.bf16.msra.mxu0 0
      %8562 = vmatprep.subr.bf16.mxu0 0
      %8563 = vmatpush1.bf16.msra.mxu0 0
      %8564 = vmatprep.subr.bf16.mxu0 0
      %8565 = vmatpush1.bf16.msra.mxu0 0
      %8566 = vmatprep.subr.bf16.mxu0 0
      %8567 = vmatpush1.bf16.msra.mxu0 0
      %8568 = vmatprep.subr.bf16.mxu0 0
      %8569 = vmatpush1.bf16.msra.mxu0 0
      %8570 = vmatprep.subr.bf16.mxu0 0
      %8571 = vmatpush1.bf16.msra.mxu0 0
      %8572 = vmatprep.subr.bf16.mxu0 0
      %8573 = vmatpush1.bf16.msra.mxu0 0
      %8574 = vmatprep.subr.bf16.mxu0 0
      %8575 = vmatpush1.bf16.msra.mxu0 0
      %8576 = vmatprep.mubr.bf16.mxu0 0
      %8577 = vmatmul.mubr.bf16.gmra.mrb[0].mxu0 %v8536
      %v8578 = vpop.f32.mrb[0].mxu0
      %v8579 = vadd.f32 0.0, %v8578
      %v8580 = vpop.f32.mrb[0].mxu0
      %v8581 = vpop.f32.mrb[0].mxu0
      %v8582 = vadd.f32 0.0, %v8581
      %v8583 = vpop.f32.mrb[0].mxu0
      %8584 = vmatprep.mubr.bf16.mxu0 0
      %8585 = vmatmul.mubr.bf16.gmra.mrb[0].mxu0 %v8539
      %v8586 = vpop.f32.mrb[0].mxu0
      %v8587 = vadd.f32 0.0, %v8586
      %v8588 = vpop.f32.mrb[0].mxu0
      %v8589 = vpop.f32.mrb[0].mxu0
      %v8590 = vpop.f32.mrb[0].mxu0
      %8591 = vdwg.mxu0
      %8592 = vrot.lane.b32.xlu0 %v7684, 64
      %v8593 = vpop.permute.xlu0 %8592
      %8594 = vrot.lane.b32.xlu0 %v7685, 64
      %v8595 = vpop.permute.xlu0 %8594
      %v8598 = vsel %vm2090, %v8516, 0
      %v8601 = vsel %vm2090, %v8517, 0
      %v8604 = vsel %vm2382, %v8595, 0
      %8606 = vmatprep.subr.bf16.mxu0 0
      %8607 = vmatpush1.bf16.msra.mxu0 %v8593
      %8608 = vmatprep.subr.bf16.mxu0 0
      %8609 = vmatpush1.bf16.msra.mxu0 %v8604
      %8610 = vmatprep.subr.bf16.mxu0 0
      %8611 = vmatpush1.bf16.msra.mxu0 0
      %8612 = vmatprep.subr.bf16.mxu0 0
      %8613 = vmatpush1.bf16.msra.mxu0 0
      %8614 = vmatprep.subr.bf16.mxu0 0
      %8615 = vmatpush1.bf16.msra.mxu0 0
      %8616 = vmatprep.subr.bf16.mxu0 0
      %8617 = vmatpush1.bf16.msra.mxu0 0
      %8618 = vmatprep.subr.bf16.mxu0 0
      %8619 = vmatpush1.bf16.msra.mxu0 0
      %8620 = vmatprep.subr.bf16.mxu0 0
      %8621 = vmatpush1.bf16.msra.mxu0 0
      %8622 = vmatprep.subr.bf16.mxu0 0
      %8623 = vmatpush1.bf16.msra.mxu0 0
      %8624 = vmatprep.subr.bf16.mxu0 0
      %8625 = vmatpush1.bf16.msra.mxu0 0
      %8626 = vmatprep.subr.bf16.mxu0 0
      %8627 = vmatpush1.bf16.msra.mxu0 0
      %8628 = vmatprep.subr.bf16.mxu0 0
      %8629 = vmatpush1.bf16.msra.mxu0 0
      %8630 = vmatprep.subr.bf16.mxu0 0
      %8631 = vmatpush1.bf16.msra.mxu0 0
      %8632 = vmatprep.subr.bf16.mxu0 0
      %8633 = vmatpush1.bf16.msra.mxu0 0
      %8634 = vmatprep.subr.bf16.mxu0 0
      %8635 = vmatpush1.bf16.msra.mxu0 0
      %8636 = vmatprep.subr.bf16.mxu0 0
      %8637 = vmatpush1.bf16.msra.mxu0 0
      %8638 = vmatprep.mubr.bf16.mxu0 0
      %8639 = vmatmul.mubr.bf16.gmra.mrb[0].mxu0 %v8598
      %v8640 = vpop.f32.mrb[0].mxu0
      %v8641 = vadd.f32 0.0, %v8640
      %v8642 = vpop.f32.mrb[0].mxu0
      %v8643 = vpop.f32.mrb[0].mxu0
      %v8644 = vadd.f32 0.0, %v8643
      %v8645 = vpop.f32.mrb[0].mxu0
      %8646 = vmatprep.mubr.bf16.mxu0 0
      %8647 = vmatmul.mubr.bf16.gmra.mrb[0].mxu0 %v8601
      %v8648 = vpop.f32.mrb[0].mxu0
      %v8649 = vadd.f32 0.0, %v8648
      %v8650 = vpop.f32.mrb[0].mxu0
      %v8651 = vpop.f32.mrb[0].mxu0
      %v8652 = vpop.f32.mrb[0].mxu0
      %8653 = vdwg.mxu0
      %8654 = vrot.lane.b32.xlu0 %v7686, 64
      %v8655 = vpop.permute.xlu0 %8654
      %8656 = vrot.lane.b32.xlu0 %v7687, 64
      %v8657 = vpop.permute.xlu0 %8656
      %v8660 = vsel %vm2090, %v8518, 0
      %v8663 = vsel %vm2090, %v8519, 0
      %v8666 = vsel %vm2382, %v8657, 0
      %8668 = vmatprep.subr.bf16.mxu0 0
      %8669 = vmatpush1.bf16.msra.mxu0 %v8655
      %8670 = vmatprep.subr.bf16.mxu0 0
      %8671 = vmatpush1.bf16.msra.mxu0 %v8666
      %8672 = vmatprep.subr.bf16.mxu0 0
      %8673 = vmatpush1.bf16.msra.mxu0 0
      %8674 = vmatprep.subr.bf16.mxu0 0
      %8675 = vmatpush1.bf16.msra.mxu0 0
      %8676 = vmatprep.subr.bf16.mxu0 0
      %8677 = vmatpush1.bf16.msra.mxu0 0
      %8678 = vmatprep.subr.bf16.mxu0 0
      %8679 = vmatpush1.bf16.msra.mxu0 0
      %8680 = vmatprep.subr.bf16.mxu0 0
      %8681 = vmatpush1.bf16.msra.mxu0 0
      %8682 = vmatprep.subr.bf16.mxu0 0
      %8683 = vmatpush1.bf16.msra.mxu0 0
      %8684 = vmatprep.subr.bf16.mxu0 0
      %8685 = vmatpush1.bf16.msra.mxu0 0
      %8686 = vmatprep.subr.bf16.mxu0 0
      %8687 = vmatpush1.bf16.msra.mxu0 0
      %8688 = vmatprep.subr.bf16.mxu0 0
      %8689 = vmatpush1.bf16.msra.mxu0 0
      %8690 = vmatprep.subr.bf16.mxu0 0
      %8691 = vmatpush1.bf16.msra.mxu0 0
      %8692 = vmatprep.subr.bf16.mxu0 0
      %8693 = vmatpush1.bf16.msra.mxu0 0
      %8694 = vmatprep.subr.bf16.mxu0 0
      %8695 = vmatpush1.bf16.msra.mxu0 0
      %8696 = vmatprep.subr.bf16.mxu0 0
      %8697 = vmatpush1.bf16.msra.mxu0 0
      %8698 = vmatprep.subr.bf16.mxu0 0
      %8699 = vmatpush1.bf16.msra.mxu0 0
      %8700 = vmatprep.mubr.bf16.mxu0 0
      %8701 = vmatmul.mubr.bf16.gmra.mrb[0].mxu0 %v8660
      %v8702 = vpop.f32.mrb[0].mxu0
      %v8703 = vadd.f32 0.0, %v8702
      %v8704 = vpop.f32.mrb[0].mxu0
      %v8705 = vpop.f32.mrb[0].mxu0
      %v8706 = vadd.f32 0.0, %v8705
      %v8707 = vpop.f32.mrb[0].mxu0
      %8708 = vmatprep.mubr.bf16.mxu0 0
      %8709 = vmatmul.mubr.bf16.gmra.mrb[0].mxu0 %v8663
      %v8710 = vpop.f32.mrb[0].mxu0
      %v8711 = vadd.f32 0.0, %v8710
      %v8712 = vpop.f32.mrb[0].mxu0
      %v8713 = vpop.f32.mrb[0].mxu0
      %v8714 = vpop.f32.mrb[0].mxu0
      %8715 = vdwg.mxu0
      %8716 = vrot.lane.b32.xlu0 %v7688, 64
      %v8717 = vpop.permute.xlu0 %8716
      %8718 = vrot.lane.b32.xlu0 %v7689, 64
      %v8719 = vpop.permute.xlu0 %8718
      %v8722 = vsel %vm2090, %v8520, 0
      %v8725 = vsel %vm2090, %v8521, 0
      %v8728 = vsel %vm2382, %v8719, 0
      %8730 = vmatprep.subr.bf16.mxu0 0
      %8731 = vmatpush1.bf16.msra.mxu0 %v8717
      %8732 = vmatprep.subr.bf16.mxu0 0
      %8733 = vmatpush1.bf16.msra.mxu0 %v8728
      %8734 = vmatprep.subr.bf16.mxu0 0
      %8735 = vmatpush1.bf16.msra.mxu0 0
      %8736 = vmatprep.subr.bf16.mxu0 0
      %8737 = vmatpush1.bf16.msra.mxu0 0
      %8738 = vmatprep.subr.bf16.mxu0 0
      %8739 = vmatpush1.bf16.msra.mxu0 0
      %8740 = vmatprep.subr.bf16.mxu0 0
      %8741 = vmatpush1.bf16.msra.mxu0 0
      %8742 = vmatprep.subr.bf16.mxu0 0
      %8743 = vmatpush1.bf16.msra.mxu0 0
      %8744 = vmatprep.subr.bf16.mxu0 0
      %8745 = vmatpush1.bf16.msra.mxu0 0
      %8746 = vmatprep.subr.bf16.mxu0 0
      %8747 = vmatpush1.bf16.msra.mxu0 0
      %8748 = vmatprep.subr.bf16.mxu0 0
      %8749 = vmatpush1.bf16.msra.mxu0 0
      %8750 = vmatprep.subr.bf16.mxu0 0
      %8751 = vmatpush1.bf16.msra.mxu0 0
      %8752 = vmatprep.subr.bf16.mxu0 0
      %8753 = vmatpush1.bf16.msra.mxu0 0
      %8754 = vmatprep.subr.bf16.mxu0 0
      %8755 = vmatpush1.bf16.msra.mxu0 0
      %8756 = vmatprep.subr.bf16.mxu0 0
      %8757 = vmatpush1.bf16.msra.mxu0 0
      %8758 = vmatprep.subr.bf16.mxu0 0
      %8759 = vmatpush1.bf16.msra.mxu0 0
      %8760 = vmatprep.subr.bf16.mxu0 0
      %8761 = vmatpush1.bf16.msra.mxu0 0
      %8762 = vmatprep.mubr.bf16.mxu0 0
      %8763 = vmatmul.mubr.bf16.gmra.mrb[0].mxu0 %v8722
      %v8764 = vpop.f32.mrb[0].mxu0
      %v8765 = vadd.f32 0.0, %v8764
      %v8766 = vpop.f32.mrb[0].mxu0
      %v8767 = vpop.f32.mrb[0].mxu0
      %v8768 = vadd.f32 0.0, %v8767
      %v8769 = vpop.f32.mrb[0].mxu0
      %8770 = vmatprep.mubr.bf16.mxu0 0
      %8771 = vmatmul.mubr.bf16.gmra.mrb[0].mxu0 %v8725
      %v8772 = vpop.f32.mrb[0].mxu0
      %v8773 = vadd.f32 0.0, %v8772
      %v8774 = vpop.f32.mrb[0].mxu0
      %v8775 = vpop.f32.mrb[0].mxu0
      %v8776 = vpop.f32.mrb[0].mxu0
      %8777 = vdwg.mxu0
      %8778 = vrot.lane.b32.xlu0 %v7690, 64
      %v8779 = vpop.permute.xlu0 %8778
      %8780 = vrot.lane.b32.xlu0 %v7691, 64
      %v8781 = vpop.permute.xlu0 %8780
      %v8784 = vsel %vm2090, %v8522, 0
      %v8787 = vsel %vm2090, %v8523, 0
      %v8790 = vsel %vm2382, %v8781, 0
      %8792 = vmatprep.subr.bf16.mxu0 0
      %8793 = vmatpush1.bf16.msra.mxu0 %v8779
      %8794 = vmatprep.subr.bf16.mxu0 0
      %8795 = vmatpush1.bf16.msra.mxu0 %v8790
      %8796 = vmatprep.subr.bf16.mxu0 0
      %8797 = vmatpush1.bf16.msra.mxu0 0
      %8798 = vmatprep.subr.bf16.mxu0 0
      %8799 = vmatpush1.bf16.msra.mxu0 0
      %8800 = vmatprep.subr.bf16.mxu0 0
      %8801 = vmatpush1.bf16.msra.mxu0 0
      %8802 = vmatprep.subr.bf16.mxu0 0
      %8803 = vmatpush1.bf16.msra.mxu0 0
      %8804 = vmatprep.subr.bf16.mxu0 0
      %8805 = vmatpush1.bf16.msra.mxu0 0
      %8806 = vmatprep.subr.bf16.mxu0 0
      %8807 = vmatpush1.bf16.msra.mxu0 0
      %8808 = vmatprep.subr.bf16.mxu0 0
      %8809 = vmatpush1.bf16.msra.mxu0 0
      %8810 = vmatprep.subr.bf16.mxu0 0
      %8811 = vmatpush1.bf16.msra.mxu0 0
      %8812 = vmatprep.subr.bf16.mxu0 0
      %8813 = vmatpush1.bf16.msra.mxu0 0
      %8814 = vmatprep.subr.bf16.mxu0 0
      %8815 = vmatpush1.bf16.msra.mxu0 0
      %8816 = vmatprep.subr.bf16.mxu0 0
      %8817 = vmatpush1.bf16.msra.mxu0 0
      %8818 = vmatprep.subr.bf16.mxu0 0
      %8819 = vmatpush1.bf16.msra.mxu0 0
      %8820 = vmatprep.subr.bf16.mxu0 0
      %8821 = vmatpush1.bf16.msra.mxu0 0
      %8822 = vmatprep.subr.bf16.mxu0 0
      %8823 = vmatpush1.bf16.msra.mxu0 0
      %8824 = vmatprep.mubr.bf16.mxu0 0
      %8825 = vmatmul.mubr.bf16.gmra.mrb[0].mxu0 %v8784
      %v8826 = vpop.f32.mrb[0].mxu0
      %v8827 = vadd.f32 0.0, %v8826
      %v8828 = vpop.f32.mrb[0].mxu0
      %v8829 = vpop.f32.mrb[0].mxu0
      %v8830 = vadd.f32 0.0, %v8829
      %v8831 = vpop.f32.mrb[0].mxu0
      %8832 = vmatprep.mubr.bf16.mxu0 0
      %8833 = vmatmul.mubr.bf16.gmra.mrb[0].mxu0 %v8787
      %v8834 = vpop.f32.mrb[0].mxu0
      %v8835 = vadd.f32 0.0, %v8834
      %v8836 = vpop.f32.mrb[0].mxu0
      %v8837 = vpop.f32.mrb[0].mxu0
      %v8838 = vpop.f32.mrb[0].mxu0
      %8839 = vdwg.mxu0
      %8840 = vrot.lane.b32.xlu0 %v7692, 64
      %v8841 = vpop.permute.xlu0 %8840
      %8842 = vrot.lane.b32.xlu0 %v7693, 64
      %v8843 = vpop.permute.xlu0 %8842
      %v8846 = vsel %vm2090, %v8524, 0
      %v8849 = vsel %vm2090, %v8525, 0
      %v8852 = vsel %vm2382, %v8843, 0
      %8854 = vmatprep.subr.bf16.mxu0 0
      %8855 = vmatpush1.bf16.msra.mxu0 %v8841
      %8856 = vmatprep.subr.bf16.mxu0 0
      %8857 = vmatpush1.bf16.msra.mxu0 %v8852
      %8858 = vmatprep.subr.bf16.mxu0 0
      %8859 = vmatpush1.bf16.msra.mxu0 0
      %8860 = vmatprep.subr.bf16.mxu0 0
      %8861 = vmatpush1.bf16.msra.mxu0 0
      %8862 = vmatprep.subr.bf16.mxu0 0
      %8863 = vmatpush1.bf16.msra.mxu0 0
      %8864 = vmatprep.subr.bf16.mxu0 0
      %8865 = vmatpush1.bf16.msra.mxu0 0
      %8866 = vmatprep.subr.bf16.mxu0 0
      %8867 = vmatpush1.bf16.msra.mxu0 0
      %8868 = vmatprep.subr.bf16.mxu0 0
      %8869 = vmatpush1.bf16.msra.mxu0 0
      %8870 = vmatprep.subr.bf16.mxu0 0
      %8871 = vmatpush1.bf16.msra.mxu0 0
      %8872 = vmatprep.subr.bf16.mxu0 0
      %8873 = vmatpush1.bf16.msra.mxu0 0
      %8874 = vmatprep.subr.bf16.mxu0 0
      %8875 = vmatpush1.bf16.msra.mxu0 0
      %8876 = vmatprep.subr.bf16.mxu0 0
      %8877 = vmatpush1.bf16.msra.mxu0 0
      %8878 = vmatprep.subr.bf16.mxu0 0
      %8879 = vmatpush1.bf16.msra.mxu0 0
      %8880 = vmatprep.subr.bf16.mxu0 0
      %8881 = vmatpush1.bf16.msra.mxu0 0
      %8882 = vmatprep.subr.bf16.mxu0 0
      %8883 = vmatpush1.bf16.msra.mxu0 0
      %8884 = vmatprep.subr.bf16.mxu0 0
      %8885 = vmatpush1.bf16.msra.mxu0 0
      %8886 = vmatprep.mubr.bf16.mxu0 0
      %8887 = vmatmul.mubr.bf16.gmra.mrb[0].mxu0 %v8846
      %v8888 = vpop.f32.mrb[0].mxu0
      %v8889 = vadd.f32 0.0, %v8888
      %v8890 = vpop.f32.mrb[0].mxu0
      %v8891 = vpop.f32.mrb[0].mxu0
      %v8892 = vadd.f32 0.0, %v8891
      %v8893 = vpop.f32.mrb[0].mxu0
      %8894 = vmatprep.mubr.bf16.mxu0 0
      %8895 = vmatmul.mubr.bf16.gmra.mrb[0].mxu0 %v8849
      %v8896 = vpop.f32.mrb[0].mxu0
      %v8897 = vadd.f32 0.0, %v8896
      %v8898 = vpop.f32.mrb[0].mxu0
      %v8899 = vpop.f32.mrb[0].mxu0
      %v8900 = vpop.f32.mrb[0].mxu0
      %8901 = vdwg.mxu0
      %8902 = vrot.lane.b32.xlu0 %v7694, 64
      %v8903 = vpop.permute.xlu0 %8902
      %8904 = vrot.lane.b32.xlu0 %v7695, 64
      %v8905 = vpop.permute.xlu0 %8904
      %v8908 = vsel %vm2090, %v8526, 0
      %v8911 = vsel %vm2090, %v8527, 0
      %v8914 = vsel %vm2382, %v8905, 0
      %8916 = vmatprep.subr.bf16.mxu0 0
      %8917 = vmatpush1.bf16.msra.mxu0 %v8903
      %8918 = vmatprep.subr.bf16.mxu0 0
      %8919 = vmatpush1.bf16.msra.mxu0 %v8914
      %8920 = vmatprep.subr.bf16.mxu0 0
      %8921 = vmatpush1.bf16.msra.mxu0 0
      %8922 = vmatprep.subr.bf16.mxu0 0
      %8923 = vmatpush1.bf16.msra.mxu0 0
      %8924 = vmatprep.subr.bf16.mxu0 0
      %8925 = vmatpush1.bf16.msra.mxu0 0
      %8926 = vmatprep.subr.bf16.mxu0 0
      %8927 = vmatpush1.bf16.msra.mxu0 0
      %8928 = vmatprep.subr.bf16.mxu0 0
      %8929 = vmatpush1.bf16.msra.mxu0 0
      %8930 = vmatprep.subr.bf16.mxu0 0
      %8931 = vmatpush1.bf16.msra.mxu0 0
      %8932 = vmatprep.subr.bf16.mxu0 0
      %8933 = vmatpush1.bf16.msra.mxu0 0
      %8934 = vmatprep.subr.bf16.mxu0 0
      %8935 = vmatpush1.bf16.msra.mxu0 0
      %8936 = vmatprep.subr.bf16.mxu0 0
      %8937 = vmatpush1.bf16.msra.mxu0 0
      %8938 = vmatprep.subr.bf16.mxu0 0
      %8939 = vmatpush1.bf16.msra.mxu0 0
      %8940 = vmatprep.subr.bf16.mxu0 0
      %8941 = vmatpush1.bf16.msra.mxu0 0
      %8942 = vmatprep.subr.bf16.mxu0 0
      %8943 = vmatpush1.bf16.msra.mxu0 0
      %8944 = vmatprep.subr.bf16.mxu0 0
      %8945 = vmatpush1.bf16.msra.mxu0 0
      %8946 = vmatprep.subr.bf16.mxu0 0
      %8947 = vmatpush1.bf16.msra.mxu0 0
      %8948 = vmatprep.mubr.bf16.mxu0 0
      %8949 = vmatmul.mubr.bf16.gmra.mrb[0].mxu0 %v8908
      %v8950 = vpop.f32.mrb[0].mxu0
      %v8951 = vadd.f32 0.0, %v8950
      %v8952 = vpop.f32.mrb[0].mxu0
      %v8953 = vpop.f32.mrb[0].mxu0
      %v8954 = vadd.f32 0.0, %v8953
      %v8955 = vpop.f32.mrb[0].mxu0
      %8956 = vmatprep.mubr.bf16.mxu0 0
      %8957 = vmatmul.mubr.bf16.gmra.mrb[0].mxu0 %v8911
      %v8958 = vpop.f32.mrb[0].mxu0
      %v8959 = vadd.f32 0.0, %v8958
      %v8960 = vpop.f32.mrb[0].mxu0
      %v8961 = vpop.f32.mrb[0].mxu0
      %v8962 = vpop.f32.mrb[0].mxu0
      %8963 = vdwg.mxu0
      %8964 = vrot.lane.b32.xlu0 %v7696, 64
      %v8965 = vpop.permute.xlu0 %8964
      %8966 = vrot.lane.b32.xlu0 %v7697, 64
      %v8967 = vpop.permute.xlu0 %8966
      %v8970 = vsel %vm2090, %v8528, 0
      %v8973 = vsel %vm2090, %v8529, 0
      %v8976 = vsel %vm2382, %v8967, 0
      %8978 = vmatprep.subr.bf16.mxu0 0
      %8979 = vmatpush1.bf16.msra.mxu0 %v8965
      %8980 = vmatprep.subr.bf16.mxu0 0
      %8981 = vmatpush1.bf16.msra.mxu0 %v8976
      %8982 = vmatprep.subr.bf16.mxu0 0
      %8983 = vmatpush1.bf16.msra.mxu0 0
      %8984 = vmatprep.subr.bf16.mxu0 0
      %8985 = vmatpush1.bf16.msra.mxu0 0
      %8986 = vmatprep.subr.bf16.mxu0 0
      %8987 = vmatpush1.bf16.msra.mxu0 0
      %8988 = vmatprep.subr.bf16.mxu0 0
      %8989 = vmatpush1.bf16.msra.mxu0 0
      %8990 = vmatprep.subr.bf16.mxu0 0
      %8991 = vmatpush1.bf16.msra.mxu0 0
      %8992 = vmatprep.subr.bf16.mxu0 0
      %8993 = vmatpush1.bf16.msra.mxu0 0
      %8994 = vmatprep.subr.bf16.mxu0 0
      %8995 = vmatpush1.bf16.msra.mxu0 0
      %8996 = vmatprep.subr.bf16.mxu0 0
      %8997 = vmatpush1.bf16.msra.mxu0 0
      %8998 = vmatprep.subr.bf16.mxu0 0
      %8999 = vmatpush1.bf16.msra.mxu0 0
      %9000 = vmatprep.subr.bf16.mxu0 0
      %9001 = vmatpush1.bf16.msra.mxu0 0
      %9002 = vmatprep.subr.bf16.mxu0 0
      %9003 = vmatpush1.bf16.msra.mxu0 0
      %9004 = vmatprep.subr.bf16.mxu0 0
      %9005 = vmatpush1.bf16.msra.mxu0 0
      %9006 = vmatprep.subr.bf16.mxu0 0
      %9007 = vmatpush1.bf16.msra.mxu0 0
      %9008 = vmatprep.subr.bf16.mxu0 0
      %9009 = vmatpush1.bf16.msra.mxu0 0
      %9010 = vmatprep.mubr.bf16.mxu0 0
      %9011 = vmatmul.mubr.bf16.gmra.mrb[0].mxu0 %v8970
      %v9012 = vpop.f32.mrb[0].mxu0
      %v9013 = vadd.f32 0.0, %v9012
      %v9014 = vpop.f32.mrb[0].mxu0
      %v9015 = vpop.f32.mrb[0].mxu0
      %v9016 = vadd.f32 0.0, %v9015
      %v9017 = vpop.f32.mrb[0].mxu0
      %9018 = vmatprep.mubr.bf16.mxu0 0
      %9019 = vmatmul.mubr.bf16.gmra.mrb[0].mxu0 %v8973
      %v9020 = vpop.f32.mrb[0].mxu0
      %v9021 = vadd.f32 0.0, %v9020
      %v9022 = vpop.f32.mrb[0].mxu0
      %v9023 = vpop.f32.mrb[0].mxu0
      %v9024 = vpop.f32.mrb[0].mxu0
      %9025 = vdwg.mxu0
      %s9026 = scalar_lea.vmem %s7, 32
      %v9027 = vld [vmem:[%s9026] sm:$0xf]
      %v9028 = vld [vmem:[%s9026 + $0x4] sm:$0xf]
      %v9029 = vld [vmem:[%s9026 + $0x8] sm:$0xf]
      %v9030 = vld [vmem:[%s9026 + $0xc] sm:$0xf]
      %v9031 = vpack.c.bf16 %v8582, %v8579
      %v9032 = vpack.c.bf16 %v8641, %v8587
      %v9033 = vpack.c.bf16 %v8649, %v8644
      %v9034 = vpack.c.bf16 %v8706, %v8703
      %v9035 = vpack.c.bf16 %v8765, %v8711
      %v9036 = vpack.c.bf16 %v8773, %v8768
      %v9037 = vpack.c.bf16 %v8830, %v8827
      %v9038 = vpack.c.bf16 %v8889, %v8835
      %v9039 = vpack.c.bf16 %v8897, %v8892
      %v9040 = vpack.c.bf16 %v8954, %v8951
      %v9041 = vpack.c.bf16 %v9013, %v8959
      %v9042 = vpack.c.bf16 %v9021, %v9016
      %s9043 = scalar_lea.vmem %s8, 2
      %v9044 = vld [vmem:[%s9043] sm:$0x1]
      %v9046 = vlaneseq
      %v9047 = vshrl.u32 %v9046, 7
      %v9048 = vsub.s32 0, %v9047
      %v9049 = vrot.slane %v9044, %v9048
      %v9055 = vunpack.c.l.b16 %v9027
      %v9056 = vunpack.c.l.b16 %v9028
      %v9057 = vunpack.c.l.b16 %v9029
      %v9058 = vunpack.c.l.b16 %v9030
      %v9059 = vpack.c.b16 %v9056, %v9055
      %v9060 = vpack.c.b16 %v9058, %v9057
      %v9064 = vsel %vm900, %v9031, 0
      %v9067 = vsel %vm900, %v9032, 0
      %v9070 = vsel %vm900, %v9033, 0
      %v9073 = vsel %vm900, %v9034, 0
      %v9076 = vsel %vm900, %v9035, 0
      %v9079 = vsel %vm900, %v9036, 0
      %v9082 = vsel %vm900, %v9037, 0
      %v9085 = vsel %vm900, %v9038, 0
      %v9088 = vsel %vm900, %v9039, 0
      %v9091 = vsel %vm900, %v9040, 0
      %v9094 = vsel %vm900, %v9041, 0
      %v9097 = vsel %vm900, %v9042, 0
      %9099 = vmatprep.subr.bf16.mxu0 0
      %9100 = vmatpush1.bf16.msra.mxu0 %v9059
      %9101 = vmatprep.subr.bf16.mxu0 0
      %9102 = vmatpush1.bf16.msra.mxu0 %v9060
      %9103 = vmatprep.subr.bf16.mxu0 0
      %9104 = vmatpush1.bf16.msra.mxu0 0
      %9105 = vmatprep.subr.bf16.mxu0 0
      %9106 = vmatpush1.bf16.msra.mxu0 0
      %9107 = vmatprep.subr.bf16.mxu0 0
      %9108 = vmatpush1.bf16.msra.mxu0 0
      %9109 = vmatprep.subr.bf16.mxu0 0
      %9110 = vmatpush1.bf16.msra.mxu0 0
      %9111 = vmatprep.subr.bf16.mxu0 0
      %9112 = vmatpush1.bf16.msra.mxu0 0
      %9113 = vmatprep.subr.bf16.mxu0 0
      %9114 = vmatpush1.bf16.msra.mxu0 0
      %9115 = vmatprep.subr.bf16.mxu0 0
      %9116 = vmatpush1.bf16.msra.mxu0 0
      %9117 = vmatprep.subr.bf16.mxu0 0
      %9118 = vmatpush1.bf16.msra.mxu0 0
      %9119 = vmatprep.subr.bf16.mxu0 0
      %9120 = vmatpush1.bf16.msra.mxu0 0
      %9121 = vmatprep.subr.bf16.mxu0 0
      %9122 = vmatpush1.bf16.msra.mxu0 0
      %9123 = vmatprep.subr.bf16.mxu0 0
      %9124 = vmatpush1.bf16.msra.mxu0 0
      %9125 = vmatprep.subr.bf16.mxu0 0
      %9126 = vmatpush1.bf16.msra.mxu0 0
      %9127 = vmatprep.subr.bf16.mxu0 0
      %9128 = vmatpush1.bf16.msra.mxu0 0
      %9129 = vmatprep.subr.bf16.mxu0 0
      %9130 = vmatpush1.bf16.msra.mxu0 0
      %9131 = vmatprep.mubr.bf16.mxu0 0
      %9132 = vmatmul.mubr.bf16.gmra.mrb[0].mxu0 %v9064
      %v9133 = vpop.f32.mrb[0].mxu0
      %v9134 = vadd.f32 %v9049, %v9133
      %v9135 = vpop.f32.mrb[0].mxu0
      %v9136 = vpop.f32.mrb[0].mxu0
      %v9137 = vadd.f32 %v9049, %v9136
      %v9138 = vpop.f32.mrb[0].mxu0
      %9139 = vmatprep.mubr.bf16.mxu0 0
      %9140 = vmatmul.mubr.bf16.gmra.mrb[0].mxu0 %v9067
      %v9141 = vpop.f32.mrb[0].mxu0
      %v9142 = vadd.f32 %v9049, %v9141
      %v9143 = vpop.f32.mrb[0].mxu0
      %v9144 = vpop.f32.mrb[0].mxu0
      %v9145 = vadd.f32 %v9049, %v9144
      %v9146 = vpop.f32.mrb[0].mxu0
      %9147 = vmatprep.mubr.bf16.mxu0 0
      %9148 = vmatmul.mubr.bf16.gmra.mrb[0].mxu0 %v9070
      %v9149 = vpop.f32.mrb[0].mxu0
      %v9150 = vadd.f32 %v9049, %v9149
      %v9151 = vpop.f32.mrb[0].mxu0
      %v9152 = vpop.f32.mrb[0].mxu0
      %v9153 = vadd.f32 %v9049, %v9152
      %v9154 = vpop.f32.mrb[0].mxu0
      %9155 = vmatprep.mubr.bf16.mxu0 0
      %9156 = vmatmul.mubr.bf16.gmra.mrb[0].mxu0 %v9073
      %v9157 = vpop.f32.mrb[0].mxu0
      %v9158 = vadd.f32 %v9049, %v9157
      %v9159 = vpop.f32.mrb[0].mxu0
      %v9160 = vpop.f32.mrb[0].mxu0
      %v9161 = vadd.f32 %v9049, %v9160
      %v9162 = vpop.f32.mrb[0].mxu0
      %9163 = vmatprep.mubr.bf16.mxu0 0
      %9164 = vmatmul.mubr.bf16.gmra.mrb[0].mxu0 %v9076
      %v9165 = vpop.f32.mrb[0].mxu0
      %v9166 = vadd.f32 %v9049, %v9165
      %v9167 = vpop.f32.mrb[0].mxu0
      %v9168 = vpop.f32.mrb[0].mxu0
      %v9169 = vadd.f32 %v9049, %v9168
      %v9170 = vpop.f32.mrb[0].mxu0
      %9171 = vmatprep.mubr.bf16.mxu0 0
      %9172 = vmatmul.mubr.bf16.gmra.mrb[0].mxu0 %v9079
      %v9173 = vpop.f32.mrb[0].mxu0
      %v9174 = vadd.f32 %v9049, %v9173
      %v9175 = vpop.f32.mrb[0].mxu0
      %v9176 = vpop.f32.mrb[0].mxu0
      %v9177 = vadd.f32 %v9049, %v9176
      %v9178 = vpop.f32.mrb[0].mxu0
      %9179 = vmatprep.mubr.bf16.mxu0 0
      %9180 = vmatmul.mubr.bf16.gmra.mrb[0].mxu0 %v9082
      %v9181 = vpop.f32.mrb[0].mxu0
      %v9182 = vadd.f32 %v9049, %v9181
      %v9183 = vpop.f32.mrb[0].mxu0
      %v9184 = vpop.f32.mrb[0].mxu0
      %v9185 = vadd.f32 %v9049, %v9184
      %v9186 = vpop.f32.mrb[0].mxu0
      %9187 = vmatprep.mubr.bf16.mxu0 0
      %9188 = vmatmul.mubr.bf16.gmra.mrb[0].mxu0 %v9085
      %v9189 = vpop.f32.mrb[0].mxu0
      %v9190 = vadd.f32 %v9049, %v9189
      %v9191 = vpop.f32.mrb[0].mxu0
      %v9192 = vpop.f32.mrb[0].mxu0
      %v9193 = vadd.f32 %v9049, %v9192
      %v9194 = vpop.f32.mrb[0].mxu0
      %9195 = vmatprep.mubr.bf16.mxu0 0
      %9196 = vmatmul.mubr.bf16.gmra.mrb[0].mxu0 %v9088
      %v9197 = vpop.f32.mrb[0].mxu0
      %v9198 = vadd.f32 %v9049, %v9197
      %v9199 = vpop.f32.mrb[0].mxu0
      %v9200 = vpop.f32.mrb[0].mxu0
      %v9201 = vadd.f32 %v9049, %v9200
      %v9202 = vpop.f32.mrb[0].mxu0
      %9203 = vmatprep.mubr.bf16.mxu0 0
      %9204 = vmatmul.mubr.bf16.gmra.mrb[0].mxu0 %v9091
      %v9205 = vpop.f32.mrb[0].mxu0
      %v9206 = vadd.f32 %v9049, %v9205
      %v9207 = vpop.f32.mrb[0].mxu0
      %v9208 = vpop.f32.mrb[0].mxu0
      %v9209 = vadd.f32 %v9049, %v9208
      %v9210 = vpop.f32.mrb[0].mxu0
      %9211 = vmatprep.mubr.bf16.mxu0 0
      %9212 = vmatmul.mubr.bf16.gmra.mrb[0].mxu0 %v9094
      %v9213 = vpop.f32.mrb[0].mxu0
      %v9214 = vadd.f32 %v9049, %v9213
      %v9215 = vpop.f32.mrb[0].mxu0
      %v9216 = vpop.f32.mrb[0].mxu0
      %v9217 = vadd.f32 %v9049, %v9216
      %v9218 = vpop.f32.mrb[0].mxu0
      %9219 = vmatprep.mubr.bf16.mxu0 0
      %9220 = vmatmul.mubr.bf16.gmra.mrb[0].mxu0 %v9097
      %v9221 = vpop.f32.mrb[0].mxu0
      %v9222 = vadd.f32 %v9049, %v9221
      %v9223 = vpop.f32.mrb[0].mxu0
      %v9224 = vpop.f32.mrb[0].mxu0
      %v9225 = vadd.f32 %v9049, %v9224
      %v9226 = vpop.f32.mrb[0].mxu0
      %9227 = vdwg.mxu0
      %v9228 = vadd.f32 %v7456, %v9134
      %v9229 = vadd.f32 %v7457, %v9137
      %v9230 = vadd.f32 %v7458, %v9142
      %v9231 = vadd.f32 %v7459, %v9145
      %v9232 = vadd.f32 %v7460, %v9150
      %v9233 = vadd.f32 %v7461, %v9153
      %v9234 = vadd.f32 %v7462, %v9158
      %v9235 = vadd.f32 %v7463, %v9161
      %v9236 = vadd.f32 %v7464, %v9166
      %v9237 = vadd.f32 %v7465, %v9169
      %v9238 = vadd.f32 %v7466, %v9174
      %v9239 = vadd.f32 %v7467, %v9177
      %v9240 = vadd.f32 %v7468, %v9182
      %v9241 = vadd.f32 %v7469, %v9185
      %v9242 = vadd.f32 %v7470, %v9190
      %v9243 = vadd.f32 %v7471, %v9193
      %v9244 = vadd.f32 %v7472, %v9198
      %v9245 = vadd.f32 %v7473, %v9201
      %v9246 = vadd.f32 %v7474, %v9206
      %v9247 = vadd.f32 %v7475, %v9209
      %v9248 = vadd.f32 %v7476, %v9214
      %v9249 = vadd.f32 %v7477, %v9217
      %v9250 = vadd.f32 %v7478, %v9222
      %v9251 = vadd.f32 %v7479, %v9225
      %s9252 = scalar_lea.vmem %s9, 2
      %v9253 = vld [vmem:[%s9252] sm:$0x1]
      %s9254 = scalar_lea.vmem %s10, 2
      %v9255 = vld [vmem:[%s9254] sm:$0x1]
      %v9256 = vsel %vm900, %v9228, 0.0
      %9257 = vadd.xlane.f32.xlu0 %v9256
      %v9258 = vpop.xlane.xlu0 %9257
      %v9259 = vsel %vm900, %v9229, 0.0
      %9260 = vadd.xlane.f32.xlu0 %v9259
      %v9261 = vpop.xlane.xlu0 %9260
      %v9262 = vsel %vm900, %v9230, 0.0
      %9263 = vadd.xlane.f32.xlu0 %v9262
      %v9264 = vpop.xlane.xlu0 %9263
      %v9265 = vsel %vm900, %v9231, 0.0
      %9266 = vadd.xlane.f32.xlu0 %v9265
      %v9267 = vpop.xlane.xlu0 %9266
      %v9268 = vsel %vm900, %v9232, 0.0
      %9269 = vadd.xlane.f32.xlu0 %v9268
      %v9270 = vpop.xlane.xlu0 %9269
      %v9271 = vsel %vm900, %v9233, 0.0
      %9272 = vadd.xlane.f32.xlu0 %v9271
      %v9273 = vpop.xlane.xlu0 %9272
      %v9274 = vsel %vm900, %v9234, 0.0
      %9275 = vadd.xlane.f32.xlu0 %v9274
      %v9276 = vpop.xlane.xlu0 %9275
      %v9277 = vsel %vm900, %v9235, 0.0
      %9278 = vadd.xlane.f32.xlu0 %v9277
      %v9279 = vpop.xlane.xlu0 %9278
      %v9280 = vsel %vm900, %v9236, 0.0
      %9281 = vadd.xlane.f32.xlu0 %v9280
      %v9282 = vpop.xlane.xlu0 %9281
      %v9283 = vsel %vm900, %v9237, 0.0
      %9284 = vadd.xlane.f32.xlu0 %v9283
      %v9285 = vpop.xlane.xlu0 %9284
      %v9286 = vsel %vm900, %v9238, 0.0
      %9287 = vadd.xlane.f32.xlu0 %v9286
      %v9288 = vpop.xlane.xlu0 %9287
      %v9289 = vsel %vm900, %v9239, 0.0
      %9290 = vadd.xlane.f32.xlu0 %v9289
      %v9291 = vpop.xlane.xlu0 %9290
      %v9292 = vsel %vm900, %v9240, 0.0
      %9293 = vadd.xlane.f32.xlu0 %v9292
      %v9294 = vpop.xlane.xlu0 %9293
      %v9295 = vsel %vm900, %v9241, 0.0
      %9296 = vadd.xlane.f32.xlu0 %v9295
      %v9297 = vpop.xlane.xlu0 %9296
      %v9298 = vsel %vm900, %v9242, 0.0
      %9299 = vadd.xlane.f32.xlu0 %v9298
      %v9300 = vpop.xlane.xlu0 %9299
      %v9301 = vsel %vm900, %v9243, 0.0
      %9302 = vadd.xlane.f32.xlu0 %v9301
      %v9303 = vpop.xlane.xlu0 %9302
      %v9304 = vsel %vm900, %v9244, 0.0
      %9305 = vadd.xlane.f32.xlu0 %v9304
      %v9306 = vpop.xlane.xlu0 %9305
      %v9307 = vsel %vm900, %v9245, 0.0
      %9308 = vadd.xlane.f32.xlu0 %v9307
      %v9309 = vpop.xlane.xlu0 %9308
      %v9310 = vsel %vm900, %v9246, 0.0
      %9311 = vadd.xlane.f32.xlu0 %v9310
      %v9312 = vpop.xlane.xlu0 %9311
      %v9313 = vsel %vm900, %v9247, 0.0
      %9314 = vadd.xlane.f32.xlu0 %v9313
      %v9315 = vpop.xlane.xlu0 %9314
      %v9316 = vsel %vm900, %v9248, 0.0
      %9317 = vadd.xlane.f32.xlu0 %v9316
      %v9318 = vpop.xlane.xlu0 %9317
      %v9319 = vsel %vm900, %v9249, 0.0
      %9320 = vadd.xlane.f32.xlu0 %v9319
      %v9321 = vpop.xlane.xlu0 %9320
      %v9322 = vsel %vm900, %v9250, 0.0
      %9323 = vadd.xlane.f32.xlu0 %v9322
      %v9324 = vpop.xlane.xlu0 %9323
      %v9325 = vsel %vm900, %v9251, 0.0
      %9326 = vadd.xlane.f32.xlu0 %v9325
      %v9327 = vpop.xlane.xlu0 %9326
      %v9328 = vmul.f32 %v9258, %v973
      %v9329 = vmul.f32 %v9261, %v973
      %v9330 = vmul.f32 %v9264, %v973
      %v9331 = vmul.f32 %v9267, %v973
      %v9332 = vmul.f32 %v9270, %v973
      %v9333 = vmul.f32 %v9273, %v973
      %v9334 = vmul.f32 %v9276, %v973
      %v9335 = vmul.f32 %v9279, %v973
      %v9336 = vmul.f32 %v9282, %v973
      %v9337 = vmul.f32 %v9285, %v973
      %v9338 = vmul.f32 %v9288, %v973
      %v9339 = vmul.f32 %v9291, %v973
      %v9340 = vmul.f32 %v9294, %v973
      %v9341 = vmul.f32 %v9297, %v973
      %v9342 = vmul.f32 %v9300, %v973
      %v9343 = vmul.f32 %v9303, %v973
      %v9344 = vmul.f32 %v9306, %v973
      %v9345 = vmul.f32 %v9309, %v973
      %v9346 = vmul.f32 %v9312, %v973
      %v9347 = vmul.f32 %v9315, %v973
      %v9348 = vmul.f32 %v9318, %v973
      %v9349 = vmul.f32 %v9321, %v973
      %v9350 = vmul.f32 %v9324, %v973
      %v9351 = vmul.f32 %v9327, %v973
      %v9352 = vmul.f32 %v9228, %v9228
      %v9353 = vmul.f32 %v9229, %v9229
      %v9354 = vmul.f32 %v9230, %v9230
      %v9355 = vmul.f32 %v9231, %v9231
      %v9356 = vmul.f32 %v9232, %v9232
      %v9357 = vmul.f32 %v9233, %v9233
      %v9358 = vmul.f32 %v9234, %v9234
      %v9359 = vmul.f32 %v9235, %v9235
      %v9360 = vmul.f32 %v9236, %v9236
      %v9361 = vmul.f32 %v9237, %v9237
      %v9362 = vmul.f32 %v9238, %v9238
      %v9363 = vmul.f32 %v9239, %v9239
      %v9364 = vmul.f32 %v9240, %v9240
      %v9365 = vmul.f32 %v9241, %v9241
      %v9366 = vmul.f32 %v9242, %v9242
      %v9367 = vmul.f32 %v9243, %v9243
      %v9368 = vmul.f32 %v9244, %v9244
      %v9369 = vmul.f32 %v9245, %v9245
      %v9370 = vmul.f32 %v9246, %v9246
      %v9371 = vmul.f32 %v9247, %v9247
      %v9372 = vmul.f32 %v9248, %v9248
      %v9373 = vmul.f32 %v9249, %v9249
      %v9374 = vmul.f32 %v9250, %v9250
      %v9375 = vmul.f32 %v9251, %v9251
      %v9376 = vsel %vm900, %v9352, 0.0
      %9377 = vadd.xlane.f32.xlu0 %v9376
      %v9378 = vpop.xlane.xlu0 %9377
      %v9379 = vsel %vm900, %v9353, 0.0
      %9380 = vadd.xlane.f32.xlu0 %v9379
      %v9381 = vpop.xlane.xlu0 %9380
      %v9382 = vsel %vm900, %v9354, 0.0
      %9383 = vadd.xlane.f32.xlu0 %v9382
      %v9384 = vpop.xlane.xlu0 %9383
      %v9385 = vsel %vm900, %v9355, 0.0
      %9386 = vadd.xlane.f32.xlu0 %v9385
      %v9387 = vpop.xlane.xlu0 %9386
      %v9388 = vsel %vm900, %v9356, 0.0
      %9389 = vadd.xlane.f32.xlu0 %v9388
      %v9390 = vpop.xlane.xlu0 %9389
      %v9391 = vsel %vm900, %v9357, 0.0
      %9392 = vadd.xlane.f32.xlu0 %v9391
      %v9393 = vpop.xlane.xlu0 %9392
      %v9394 = vsel %vm900, %v9358, 0.0
      %9395 = vadd.xlane.f32.xlu0 %v9394
      %v9396 = vpop.xlane.xlu0 %9395
      %v9397 = vsel %vm900, %v9359, 0.0
      %9398 = vadd.xlane.f32.xlu0 %v9397
      %v9399 = vpop.xlane.xlu0 %9398
      %v9400 = vsel %vm900, %v9360, 0.0
      %9401 = vadd.xlane.f32.xlu0 %v9400
      %v9402 = vpop.xlane.xlu0 %9401
      %v9403 = vsel %vm900, %v9361, 0.0
      %9404 = vadd.xlane.f32.xlu0 %v9403
      %v9405 = vpop.xlane.xlu0 %9404
      %v9406 = vsel %vm900, %v9362, 0.0
      %9407 = vadd.xlane.f32.xlu0 %v9406
      %v9408 = vpop.xlane.xlu0 %9407
      %v9409 = vsel %vm900, %v9363, 0.0
      %9410 = vadd.xlane.f32.xlu0 %v9409
      %v9411 = vpop.xlane.xlu0 %9410
      %v9412 = vsel %vm900, %v9364, 0.0
      %9413 = vadd.xlane.f32.xlu0 %v9412
      %v9414 = vpop.xlane.xlu0 %9413
      %v9415 = vsel %vm900, %v9365, 0.0
      %9416 = vadd.xlane.f32.xlu0 %v9415
      %v9417 = vpop.xlane.xlu0 %9416
      %v9418 = vsel %vm900, %v9366, 0.0
      %9419 = vadd.xlane.f32.xlu0 %v9418
      %v9420 = vpop.xlane.xlu0 %9419
      %v9421 = vsel %vm900, %v9367, 0.0
      %9422 = vadd.xlane.f32.xlu0 %v9421
      %v9423 = vpop.xlane.xlu0 %9422
      %v9424 = vsel %vm900, %v9368, 0.0
      %9425 = vadd.xlane.f32.xlu0 %v9424
      %v9426 = vpop.xlane.xlu0 %9425
      %v9427 = vsel %vm900, %v9369, 0.0
      %9428 = vadd.xlane.f32.xlu0 %v9427
      %v9429 = vpop.xlane.xlu0 %9428
      %v9430 = vsel %vm900, %v9370, 0.0
      %9431 = vadd.xlane.f32.xlu0 %v9430
      %v9432 = vpop.xlane.xlu0 %9431
      %v9433 = vsel %vm900, %v9371, 0.0
      %9434 = vadd.xlane.f32.xlu0 %v9433
      %v9435 = vpop.xlane.xlu0 %9434
      %v9436 = vsel %vm900, %v9372, 0.0
      %9437 = vadd.xlane.f32.xlu0 %v9436
      %v9438 = vpop.xlane.xlu0 %9437
      %v9439 = vsel %vm900, %v9373, 0.0
      %9440 = vadd.xlane.f32.xlu0 %v9439
      %v9441 = vpop.xlane.xlu0 %9440
      %v9442 = vsel %vm900, %v9374, 0.0
      %9443 = vadd.xlane.f32.xlu0 %v9442
      %v9444 = vpop.xlane.xlu0 %9443
      %v9445 = vsel %vm900, %v9375, 0.0
      %9446 = vadd.xlane.f32.xlu0 %v9445
      %v9447 = vpop.xlane.xlu0 %9446
      %v9448 = vmul.f32 %v9378, %v973
      %v9449 = vmul.f32 %v9381, %v973
      %v9450 = vmul.f32 %v9384, %v973
      %v9451 = vmul.f32 %v9387, %v973
      %v9452 = vmul.f32 %v9390, %v973
      %v9453 = vmul.f32 %v9393, %v973
      %v9454 = vmul.f32 %v9396, %v973
      %v9455 = vmul.f32 %v9399, %v973
      %v9456 = vmul.f32 %v9402, %v973
      %v9457 = vmul.f32 %v9405, %v973
      %v9458 = vmul.f32 %v9408, %v973
      %v9459 = vmul.f32 %v9411, %v973
      %v9460 = vmul.f32 %v9414, %v973
      %v9461 = vmul.f32 %v9417, %v973
      %v9462 = vmul.f32 %v9420, %v973
      %v9463 = vmul.f32 %v9423, %v973
      %v9464 = vmul.f32 %v9426, %v973
      %v9465 = vmul.f32 %v9429, %v973
      %v9466 = vmul.f32 %v9432, %v973
      %v9467 = vmul.f32 %v9435, %v973
      %v9468 = vmul.f32 %v9438, %v973
      %v9469 = vmul.f32 %v9441, %v973
      %v9470 = vmul.f32 %v9444, %v973
      %v9471 = vmul.f32 %v9447, %v973
      %v9472 = vmul.f32 %v9328, %v9328
      %v9473 = vmul.f32 %v9329, %v9329
      %v9474 = vmul.f32 %v9330, %v9330
      %v9475 = vmul.f32 %v9331, %v9331
      %v9476 = vmul.f32 %v9332, %v9332
      %v9477 = vmul.f32 %v9333, %v9333
      %v9478 = vmul.f32 %v9334, %v9334
      %v9479 = vmul.f32 %v9335, %v9335
      %v9480 = vmul.f32 %v9336, %v9336
      %v9481 = vmul.f32 %v9337, %v9337
      %v9482 = vmul.f32 %v9338, %v9338
      %v9483 = vmul.f32 %v9339, %v9339
      %v9484 = vmul.f32 %v9340, %v9340
      %v9485 = vmul.f32 %v9341, %v9341
      %v9486 = vmul.f32 %v9342, %v9342
      %v9487 = vmul.f32 %v9343, %v9343
      %v9488 = vmul.f32 %v9344, %v9344
      %v9489 = vmul.f32 %v9345, %v9345
      %v9490 = vmul.f32 %v9346, %v9346
      %v9491 = vmul.f32 %v9347, %v9347
      %v9492 = vmul.f32 %v9348, %v9348
      %v9493 = vmul.f32 %v9349, %v9349
      %v9494 = vmul.f32 %v9350, %v9350
      %v9495 = vmul.f32 %v9351, %v9351
      %v9496 = vsub.f32 %v9448, %v9472
      %v9497 = vsub.f32 %v9449, %v9473
      %v9498 = vsub.f32 %v9450, %v9474
      %v9499 = vsub.f32 %v9451, %v9475
      %v9500 = vsub.f32 %v9452, %v9476
      %v9501 = vsub.f32 %v9453, %v9477
      %v9502 = vsub.f32 %v9454, %v9478
      %v9503 = vsub.f32 %v9455, %v9479
      %v9504 = vsub.f32 %v9456, %v9480
      %v9505 = vsub.f32 %v9457, %v9481
      %v9506 = vsub.f32 %v9458, %v9482
      %v9507 = vsub.f32 %v9459, %v9483
      %v9508 = vsub.f32 %v9460, %v9484
      %v9509 = vsub.f32 %v9461, %v9485
      %v9510 = vsub.f32 %v9462, %v9486
      %v9511 = vsub.f32 %v9463, %v9487
      %v9512 = vsub.f32 %v9464, %v9488
      %v9513 = vsub.f32 %v9465, %v9489
      %v9514 = vsub.f32 %v9466, %v9490
      %v9515 = vsub.f32 %v9467, %v9491
      %v9516 = vsub.f32 %v9468, %v9492
      %v9517 = vsub.f32 %v9469, %v9493
      %v9518 = vsub.f32 %v9470, %v9494
      %v9519 = vsub.f32 %v9471, %v9495
      %v9520 = vsub.f32 %v9228, %v9328
      %v9521 = vsub.f32 %v9229, %v9329
      %v9522 = vsub.f32 %v9230, %v9330
      %v9523 = vsub.f32 %v9231, %v9331
      %v9524 = vsub.f32 %v9232, %v9332
      %v9525 = vsub.f32 %v9233, %v9333
      %v9526 = vsub.f32 %v9234, %v9334
      %v9527 = vsub.f32 %v9235, %v9335
      %v9528 = vsub.f32 %v9236, %v9336
      %v9529 = vsub.f32 %v9237, %v9337
      %v9530 = vsub.f32 %v9238, %v9338
      %v9531 = vsub.f32 %v9239, %v9339
      %v9532 = vsub.f32 %v9240, %v9340
      %v9533 = vsub.f32 %v9241, %v9341
      %v9534 = vsub.f32 %v9242, %v9342
      %v9535 = vsub.f32 %v9243, %v9343
      %v9536 = vsub.f32 %v9244, %v9344
      %v9537 = vsub.f32 %v9245, %v9345
      %v9538 = vsub.f32 %v9246, %v9346
      %v9539 = vsub.f32 %v9247, %v9347
      %v9540 = vsub.f32 %v9248, %v9348
      %v9541 = vsub.f32 %v9249, %v9349
      %v9542 = vsub.f32 %v9250, %v9350
      %v9543 = vsub.f32 %v9251, %v9351
      %v9544 = vadd.f32 %v9496, 1e-05
      %v9545 = vadd.f32 %v9497, 1e-05
      %v9546 = vadd.f32 %v9498, 1e-05
      %v9547 = vadd.f32 %v9499, 1e-05
      %v9548 = vadd.f32 %v9500, 1e-05
      %v9549 = vadd.f32 %v9501, 1e-05
      %v9550 = vadd.f32 %v9502, 1e-05
      %v9551 = vadd.f32 %v9503, 1e-05
      %v9552 = vadd.f32 %v9504, 1e-05
      %v9553 = vadd.f32 %v9505, 1e-05
      %v9554 = vadd.f32 %v9506, 1e-05
      %v9555 = vadd.f32 %v9507, 1e-05
      %v9556 = vadd.f32 %v9508, 1e-05
      %v9557 = vadd.f32 %v9509, 1e-05
      %v9558 = vadd.f32 %v9510, 1e-05
      %v9559 = vadd.f32 %v9511, 1e-05
      %v9560 = vadd.f32 %v9512, 1e-05
      %v9561 = vadd.f32 %v9513, 1e-05
      %v9562 = vadd.f32 %v9514, 1e-05
      %v9563 = vadd.f32 %v9515, 1e-05
      %v9564 = vadd.f32 %v9516, 1e-05
      %v9565 = vadd.f32 %v9517, 1e-05
      %v9566 = vadd.f32 %v9518, 1e-05
      %v9567 = vadd.f32 %v9519, 1e-05
      %v9568 = vrsqrt.pop %v9544
      %v9569 = vrsqrt.pop %v9545
      %v9570 = vrsqrt.pop %v9546
      %v9571 = vrsqrt.pop %v9547
      %v9572 = vrsqrt.pop %v9548
      %v9573 = vrsqrt.pop %v9549
      %v9574 = vrsqrt.pop %v9550
      %v9575 = vrsqrt.pop %v9551
      %v9576 = vrsqrt.pop %v9552
      %v9577 = vrsqrt.pop %v9553
      %v9578 = vrsqrt.pop %v9554
      %v9579 = vrsqrt.pop %v9555
      %v9580 = vrsqrt.pop %v9556
      %v9581 = vrsqrt.pop %v9557
      %v9582 = vrsqrt.pop %v9558
      %v9583 = vrsqrt.pop %v9559
      %v9584 = vrsqrt.pop %v9560
      %v9585 = vrsqrt.pop %v9561
      %v9586 = vrsqrt.pop %v9562
      %v9587 = vrsqrt.pop %v9563
      %v9588 = vrsqrt.pop %v9564
      %v9589 = vrsqrt.pop %v9565
      %v9590 = vrsqrt.pop %v9566
      %v9591 = vrsqrt.pop %v9567
      %v9592 = vmul.f32 %v9520, %v9568
      %v9593 = vmul.f32 %v9521, %v9569
      %v9594 = vmul.f32 %v9522, %v9570
      %v9595 = vmul.f32 %v9523, %v9571
      %v9596 = vmul.f32 %v9524, %v9572
      %v9597 = vmul.f32 %v9525, %v9573
      %v9598 = vmul.f32 %v9526, %v9574
      %v9599 = vmul.f32 %v9527, %v9575
      %v9600 = vmul.f32 %v9528, %v9576
      %v9601 = vmul.f32 %v9529, %v9577
      %v9602 = vmul.f32 %v9530, %v9578
      %v9603 = vmul.f32 %v9531, %v9579
      %v9604 = vmul.f32 %v9532, %v9580
      %v9605 = vmul.f32 %v9533, %v9581
      %v9606 = vmul.f32 %v9534, %v9582
      %v9607 = vmul.f32 %v9535, %v9583
      %v9608 = vmul.f32 %v9536, %v9584
      %v9609 = vmul.f32 %v9537, %v9585
      %v9610 = vmul.f32 %v9538, %v9586
      %v9611 = vmul.f32 %v9539, %v9587
      %v9612 = vmul.f32 %v9540, %v9588
      %v9613 = vmul.f32 %v9541, %v9589
      %v9614 = vmul.f32 %v9542, %v9590
      %v9615 = vmul.f32 %v9543, %v9591
      %v9617 = vlaneseq
      %v9618 = vshrl.u32 %v9617, 7
      %v9619 = vsub.s32 0, %v9618
      %v9620 = vrot.slane %v9253, %v9619
      %v9622 = vmul.f32 %v9592, %v9620
      %v9623 = vmul.f32 %v9593, %v9620
      %v9624 = vmul.f32 %v9594, %v9620
      %v9625 = vmul.f32 %v9595, %v9620
      %v9626 = vmul.f32 %v9596, %v9620
      %v9627 = vmul.f32 %v9597, %v9620
      %v9628 = vmul.f32 %v9598, %v9620
      %v9629 = vmul.f32 %v9599, %v9620
      %v9630 = vmul.f32 %v9600, %v9620
      %v9631 = vmul.f32 %v9601, %v9620
      %v9632 = vmul.f32 %v9602, %v9620
      %v9633 = vmul.f32 %v9603, %v9620
      %v9634 = vmul.f32 %v9604, %v9620
      %v9635 = vmul.f32 %v9605, %v9620
      %v9636 = vmul.f32 %v9606, %v9620
      %v9637 = vmul.f32 %v9607, %v9620
      %v9638 = vmul.f32 %v9608, %v9620
      %v9639 = vmul.f32 %v9609, %v9620
      %v9640 = vmul.f32 %v9610, %v9620
      %v9641 = vmul.f32 %v9611, %v9620
      %v9642 = vmul.f32 %v9612, %v9620
      %v9643 = vmul.f32 %v9613, %v9620
      %v9644 = vmul.f32 %v9614, %v9620
      %v9645 = vmul.f32 %v9615, %v9620
      %v9647 = vlaneseq
      %v9648 = vshrl.u32 %v9647, 7
      %v9649 = vsub.s32 0, %v9648
      %v9650 = vrot.slane %v9255, %v9649
      %v9652 = vadd.f32 %v9622, %v9650
      %v9653 = vadd.f32 %v9623, %v9650
      %v9654 = vadd.f32 %v9624, %v9650
      %v9655 = vadd.f32 %v9625, %v9650
      %v9656 = vadd.f32 %v9626, %v9650
      %v9657 = vadd.f32 %v9627, %v9650
      %v9658 = vadd.f32 %v9628, %v9650
      %v9659 = vadd.f32 %v9629, %v9650
      %v9660 = vadd.f32 %v9630, %v9650
      %v9661 = vadd.f32 %v9631, %v9650
      %v9662 = vadd.f32 %v9632, %v9650
      %v9663 = vadd.f32 %v9633, %v9650
      %v9664 = vadd.f32 %v9634, %v9650
      %v9665 = vadd.f32 %v9635, %v9650
      %v9666 = vadd.f32 %v9636, %v9650
      %v9667 = vadd.f32 %v9637, %v9650
      %v9668 = vadd.f32 %v9638, %v9650
      %v9669 = vadd.f32 %v9639, %v9650
      %v9670 = vadd.f32 %v9640, %v9650
      %v9671 = vadd.f32 %v9641, %v9650
      %v9672 = vadd.f32 %v9642, %v9650
      %v9673 = vadd.f32 %v9643, %v9650
      %v9674 = vadd.f32 %v9644, %v9650
      %v9675 = vadd.f32 %v9645, %v9650
      %s9676 = scalar_lea.vmem %s13, 32
      %v9677 = vld [vmem:[%s9676] sm:$0xf]
      %v9678 = vld [vmem:[%s9676 + $0x4] sm:$0xf]
      %v9679 = vld [vmem:[%s9676 + $0x8] sm:$0xf]
      %v9680 = vld [vmem:[%s9676 + $0xc] sm:$0xf]
      %v9681 = vpack.c.bf16 %v9653, %v9652
      %v9682 = vpack.c.bf16 %v9655, %v9654
      %v9683 = vpack.c.bf16 %v9657, %v9656
      %v9684 = vpack.c.bf16 %v9659, %v9658
      %v9685 = vpack.c.bf16 %v9661, %v9660
      %v9686 = vpack.c.bf16 %v9663, %v9662
      %v9687 = vpack.c.bf16 %v9665, %v9664
      %v9688 = vpack.c.bf16 %v9667, %v9666
      %v9689 = vpack.c.bf16 %v9669, %v9668
      %v9690 = vpack.c.bf16 %v9671, %v9670
      %v9691 = vpack.c.bf16 %v9673, %v9672
      %v9692 = vpack.c.bf16 %v9675, %v9674
      %s9693 = scalar_lea.vmem %s14, 2
      %v9694 = vld [vmem:[%s9693] sm:$0x1]
      %v9696 = vlaneseq
      %v9697 = vshrl.u32 %v9696, 7
      %v9698 = vsub.s32 0, %v9697
      %v9699 = vrot.slane %v9694, %v9698
      %v9705 = vunpack.c.l.b16 %v9677
      %v9706 = vunpack.c.l.b16 %v9678
      %v9707 = vunpack.c.l.b16 %v9679
      %v9708 = vunpack.c.l.b16 %v9680
      %v9709 = vpack.c.b16 %v9706, %v9705
      %v9710 = vpack.c.b16 %v9708, %v9707
      %v9714 = vsel %vm900, %v9681, 0
      %v9717 = vsel %vm900, %v9682, 0
      %v9720 = vsel %vm900, %v9683, 0
      %v9723 = vsel %vm900, %v9684, 0
      %v9726 = vsel %vm900, %v9685, 0
      %v9729 = vsel %vm900, %v9686, 0
      %v9732 = vsel %vm900, %v9687, 0
      %v9735 = vsel %vm900, %v9688, 0
      %v9738 = vsel %vm900, %v9689, 0
      %v9741 = vsel %vm900, %v9690, 0
      %v9744 = vsel %vm900, %v9691, 0
      %v9747 = vsel %vm900, %v9692, 0
      %9749 = vmatprep.subr.bf16.mxu0 0
      %9750 = vmatpush1.bf16.msra.mxu0 %v9709
      %9751 = vmatprep.subr.bf16.mxu0 0
      %9752 = vmatpush1.bf16.msra.mxu0 %v9710
      %9753 = vmatprep.subr.bf16.mxu0 0
      %9754 = vmatpush1.bf16.msra.mxu0 0
      %9755 = vmatprep.subr.bf16.mxu0 0
      %9756 = vmatpush1.bf16.msra.mxu0 0
      %9757 = vmatprep.subr.bf16.mxu0 0
      %9758 = vmatpush1.bf16.msra.mxu0 0
      %9759 = vmatprep.subr.bf16.mxu0 0
      %9760 = vmatpush1.bf16.msra.mxu0 0
      %9761 = vmatprep.subr.bf16.mxu0 0
      %9762 = vmatpush1.bf16.msra.mxu0 0
      %9763 = vmatprep.subr.bf16.mxu0 0
      %9764 = vmatpush1.bf16.msra.mxu0 0
      %9765 = vmatprep.subr.bf16.mxu0 0
      %9766 = vmatpush1.bf16.msra.mxu0 0
      %9767 = vmatprep.subr.bf16.mxu0 0
      %9768 = vmatpush1.bf16.msra.mxu0 0
      %9769 = vmatprep.subr.bf16.mxu0 0
      %9770 = vmatpush1.bf16.msra.mxu0 0
      %9771 = vmatprep.subr.bf16.mxu0 0
      %9772 = vmatpush1.bf16.msra.mxu0 0
      %9773 = vmatprep.subr.bf16.mxu0 0
      %9774 = vmatpush1.bf16.msra.mxu0 0
      %9775 = vmatprep.subr.bf16.mxu0 0
      %9776 = vmatpush1.bf16.msra.mxu0 0
      %9777 = vmatprep.subr.bf16.mxu0 0
      %9778 = vmatpush1.bf16.msra.mxu0 0
      %9779 = vmatprep.subr.bf16.mxu0 0
      %9780 = vmatpush1.bf16.msra.mxu0 0
      %9781 = vmatprep.mubr.bf16.mxu0 0
      %9782 = vmatmul.mubr.bf16.gmra.mrb[0].mxu0 %v9714
      %v9783 = vpop.f32.mrb[0].mxu0
      %v9784 = vadd.f32 %v9699, %v9783
      %v9785 = vpop.f32.mrb[0].mxu0
      %v9786 = vpop.f32.mrb[0].mxu0
      %v9787 = vadd.f32 %v9699, %v9786
      %v9788 = vpop.f32.mrb[0].mxu0
      %9789 = vmatprep.mubr.bf16.mxu0 0
      %9790 = vmatmul.mubr.bf16.gmra.mrb[0].mxu0 %v9717
      %v9791 = vpop.f32.mrb[0].mxu0
      %v9792 = vadd.f32 %v9699, %v9791
      %v9793 = vpop.f32.mrb[0].mxu0
      %v9794 = vpop.f32.mrb[0].mxu0
      %v9795 = vadd.f32 %v9699, %v9794
      %v9796 = vpop.f32.mrb[0].mxu0
      %9797 = vmatprep.mubr.bf16.mxu0 0
      %9798 = vmatmul.mubr.bf16.gmra.mrb[0].mxu0 %v9720
      %v9799 = vpop.f32.mrb[0].mxu0
      %v9800 = vadd.f32 %v9699, %v9799
      %v9801 = vpop.f32.mrb[0].mxu0
      %v9802 = vpop.f32.mrb[0].mxu0
      %v9803 = vadd.f32 %v9699, %v9802
      %v9804 = vpop.f32.mrb[0].mxu0
      %9805 = vmatprep.mubr.bf16.mxu0 0
      %9806 = vmatmul.mubr.bf16.gmra.mrb[0].mxu0 %v9723
      %v9807 = vpop.f32.mrb[0].mxu0
      %v9808 = vadd.f32 %v9699, %v9807
      %v9809 = vpop.f32.mrb[0].mxu0
      %v9810 = vpop.f32.mrb[0].mxu0
      %v9811 = vadd.f32 %v9699, %v9810
      %v9812 = vpop.f32.mrb[0].mxu0
      %9813 = vmatprep.mubr.bf16.mxu0 0
      %9814 = vmatmul.mubr.bf16.gmra.mrb[0].mxu0 %v9726
      %v9815 = vpop.f32.mrb[0].mxu0
      %v9816 = vadd.f32 %v9699, %v9815
      %v9817 = vpop.f32.mrb[0].mxu0
      %v9818 = vpop.f32.mrb[0].mxu0
      %v9819 = vadd.f32 %v9699, %v9818
      %v9820 = vpop.f32.mrb[0].mxu0
      %9821 = vmatprep.mubr.bf16.mxu0 0
      %9822 = vmatmul.mubr.bf16.gmra.mrb[0].mxu0 %v9729
      %v9823 = vpop.f32.mrb[0].mxu0
      %v9824 = vadd.f32 %v9699, %v9823
      %v9825 = vpop.f32.mrb[0].mxu0
      %v9826 = vpop.f32.mrb[0].mxu0
      %v9827 = vadd.f32 %v9699, %v9826
      %v9828 = vpop.f32.mrb[0].mxu0
      %9829 = vmatprep.mubr.bf16.mxu0 0
      %9830 = vmatmul.mubr.bf16.gmra.mrb[0].mxu0 %v9732
      %v9831 = vpop.f32.mrb[0].mxu0
      %v9832 = vadd.f32 %v9699, %v9831
      %v9833 = vpop.f32.mrb[0].mxu0
      %v9834 = vpop.f32.mrb[0].mxu0
      %v9835 = vadd.f32 %v9699, %v9834
      %v9836 = vpop.f32.mrb[0].mxu0
      %9837 = vmatprep.mubr.bf16.mxu0 0
      %9838 = vmatmul.mubr.bf16.gmra.mrb[0].mxu0 %v9735
      %v9839 = vpop.f32.mrb[0].mxu0
      %v9840 = vadd.f32 %v9699, %v9839
      %v9841 = vpop.f32.mrb[0].mxu0
      %v9842 = vpop.f32.mrb[0].mxu0
      %v9843 = vadd.f32 %v9699, %v9842
      %v9844 = vpop.f32.mrb[0].mxu0
      %9845 = vmatprep.mubr.bf16.mxu0 0
      %9846 = vmatmul.mubr.bf16.gmra.mrb[0].mxu0 %v9738
      %v9847 = vpop.f32.mrb[0].mxu0
      %v9848 = vadd.f32 %v9699, %v9847
      %v9849 = vpop.f32.mrb[0].mxu0
      %v9850 = vpop.f32.mrb[0].mxu0
      %v9851 = vadd.f32 %v9699, %v9850
      %v9852 = vpop.f32.mrb[0].mxu0
      %9853 = vmatprep.mubr.bf16.mxu0 0
      %9854 = vmatmul.mubr.bf16.gmra.mrb[0].mxu0 %v9741
      %v9855 = vpop.f32.mrb[0].mxu0
      %v9856 = vadd.f32 %v9699, %v9855
      %v9857 = vpop.f32.mrb[0].mxu0
      %v9858 = vpop.f32.mrb[0].mxu0
      %v9859 = vadd.f32 %v9699, %v9858
      %v9860 = vpop.f32.mrb[0].mxu0
      %9861 = vmatprep.mubr.bf16.mxu0 0
      %9862 = vmatmul.mubr.bf16.gmra.mrb[0].mxu0 %v9744
      %v9863 = vpop.f32.mrb[0].mxu0
      %v9864 = vadd.f32 %v9699, %v9863
      %v9865 = vpop.f32.mrb[0].mxu0
      %v9866 = vpop.f32.mrb[0].mxu0
      %v9867 = vadd.f32 %v9699, %v9866
      %v9868 = vpop.f32.mrb[0].mxu0
      %9869 = vmatprep.mubr.bf16.mxu0 0
      %9870 = vmatmul.mubr.bf16.gmra.mrb[0].mxu0 %v9747
      %v9871 = vpop.f32.mrb[0].mxu0
      %v9872 = vadd.f32 %v9699, %v9871
      %v9873 = vpop.f32.mrb[0].mxu0
      %v9874 = vpop.f32.mrb[0].mxu0
      %v9875 = vadd.f32 %v9699, %v9874
      %v9876 = vpop.f32.mrb[0].mxu0
      %9877 = vdwg.mxu0
      %v9878 = vmax.f32 %v9784, 0.0
      %v9879 = vmax.f32 %v9787, 0.0
      %v9880 = vmax.f32 %v9792, 0.0
      %v9881 = vmax.f32 %v9795, 0.0
      %v9882 = vmax.f32 %v9800, 0.0
      %v9883 = vmax.f32 %v9803, 0.0
      %v9884 = vmax.f32 %v9808, 0.0
      %v9885 = vmax.f32 %v9811, 0.0
      %v9886 = vmax.f32 %v9816, 0.0
      %v9887 = vmax.f32 %v9819, 0.0
      %v9888 = vmax.f32 %v9824, 0.0
      %v9889 = vmax.f32 %v9827, 0.0
      %v9890 = vmax.f32 %v9832, 0.0
      %v9891 = vmax.f32 %v9835, 0.0
      %v9892 = vmax.f32 %v9840, 0.0
      %v9893 = vmax.f32 %v9843, 0.0
      %v9894 = vmax.f32 %v9848, 0.0
      %v9895 = vmax.f32 %v9851, 0.0
      %v9896 = vmax.f32 %v9856, 0.0
      %v9897 = vmax.f32 %v9859, 0.0
      %v9898 = vmax.f32 %v9864, 0.0
      %v9899 = vmax.f32 %v9867, 0.0
      %v9900 = vmax.f32 %v9872, 0.0
      %v9901 = vmax.f32 %v9875, 0.0
      %s9902 = scalar_lea.vmem %s15, 128
      %v9903 = vld [vmem:[%s9902] sm:$0xf]
      %v9904 = vld [vmem:[%s9902 + $0x4] sm:$0xf]
      %v9905 = vld [vmem:[%s9902 + $0x8] sm:$0xf]
      %v9906 = vld [vmem:[%s9902 + $0xc] sm:$0xf]
      %v9907 = vld [vmem:[%s9902 + $0x10] sm:$0xf]
      %v9908 = vld [vmem:[%s9902 + $0x14] sm:$0xf]
      %v9909 = vld [vmem:[%s9902 + $0x18] sm:$0xf]
      %v9910 = vld [vmem:[%s9902 + $0x1c] sm:$0xf]
      %v9911 = vld [vmem:[%s9902 + $0x20] sm:$0xf]
      %v9912 = vld [vmem:[%s9902 + $0x24] sm:$0xf]
      %v9913 = vld [vmem:[%s9902 + $0x28] sm:$0xf]
      %v9914 = vld [vmem:[%s9902 + $0x2c] sm:$0xf]
      %v9915 = vld [vmem:[%s9902 + $0x30] sm:$0xf]
      %v9916 = vld [vmem:[%s9902 + $0x34] sm:$0xf]
      %v9917 = vld [vmem:[%s9902 + $0x38] sm:$0xf]
      %v9918 = vld [vmem:[%s9902 + $0x3c] sm:$0xf]
      %v9919 = vpack.c.bf16 %v9879, %v9878
      %v9920 = vpack.c.bf16 %v9881, %v9880
      %v9921 = vpack.c.bf16 %v9883, %v9882
      %v9922 = vpack.c.bf16 %v9885, %v9884
      %v9923 = vpack.c.bf16 %v9887, %v9886
      %v9924 = vpack.c.bf16 %v9889, %v9888
      %v9925 = vpack.c.bf16 %v9891, %v9890
      %v9926 = vpack.c.bf16 %v9893, %v9892
      %v9927 = vpack.c.bf16 %v9895, %v9894
      %v9928 = vpack.c.bf16 %v9897, %v9896
      %v9929 = vpack.c.bf16 %v9899, %v9898
      %v9930 = vpack.c.bf16 %v9901, %v9900
      %s9931 = scalar_lea.vmem %s16, 2
      %v9932 = vld [vmem:[%s9931] sm:$0x1]
      %v9934 = vlaneseq
      %v9935 = vshrl.u32 %v9934, 7
      %v9936 = vsub.s32 0, %v9935
      %v9937 = vrot.slane %v9932, %v9936
      %v9955 = vunpack.c.l.b16 %v9903
      %v9956 = vunpack.c.l.b16 %v9904
      %v9957 = vunpack.c.l.b16 %v9905
      %v9958 = vunpack.c.l.b16 %v9906
      %v9959 = vunpack.c.l.b16 %v9907
      %v9960 = vunpack.c.l.b16 %v9908
      %v9961 = vunpack.c.l.b16 %v9909
      %v9962 = vunpack.c.l.b16 %v9910
      %v9963 = vunpack.c.l.b16 %v9911
      %v9964 = vunpack.c.l.b16 %v9912
      %v9965 = vunpack.c.l.b16 %v9913
      %v9966 = vunpack.c.l.b16 %v9914
      %v9967 = vunpack.c.l.b16 %v9915
      %v9968 = vunpack.c.l.b16 %v9916
      %v9969 = vunpack.c.l.b16 %v9917
      %v9970 = vunpack.c.l.b16 %v9918
      %v9971 = vpack.c.b16 %v9956, %v9955
      %v9972 = vpack.c.b16 %v9958, %v9957
      %v9973 = vpack.c.b16 %v9960, %v9959
      %v9974 = vpack.c.b16 %v9962, %v9961
      %v9975 = vpack.c.b16 %v9964, %v9963
      %v9976 = vpack.c.b16 %v9966, %v9965
      %v9977 = vpack.c.b16 %v9968, %v9967
      %v9978 = vpack.c.b16 %v9970, %v9969
      %9987 = vmatprep.subr.bf16.mxu0 0
      %9988 = vmatpush1.bf16.msra.mxu0 %v9971
      %9989 = vmatprep.subr.bf16.mxu0 0
      %9990 = vmatpush1.bf16.msra.mxu0 %v9972
      %9991 = vmatprep.subr.bf16.mxu0 0
      %9992 = vmatpush1.bf16.msra.mxu0 %v9973
      %9993 = vmatprep.subr.bf16.mxu0 0
      %9994 = vmatpush1.bf16.msra.mxu0 %v9974
      %9995 = vmatprep.subr.bf16.mxu0 0
      %9996 = vmatpush1.bf16.msra.mxu0 %v9975
      %9997 = vmatprep.subr.bf16.mxu0 0
      %9998 = vmatpush1.bf16.msra.mxu0 %v9976
      %9999 = vmatprep.subr.bf16.mxu0 0
      %10000 = vmatpush1.bf16.msra.mxu0 %v9977
      %10001 = vmatprep.subr.bf16.mxu0 0
      %10002 = vmatpush1.bf16.msra.mxu0 %v9978
      %10003 = vmatprep.subr.bf16.mxu0 0
      %10004 = vmatpush1.bf16.msra.mxu0 0
      %10005 = vmatprep.subr.bf16.mxu0 0
      %10006 = vmatpush1.bf16.msra.mxu0 0
      %10007 = vmatprep.subr.bf16.mxu0 0
      %10008 = vmatpush1.bf16.msra.mxu0 0
      %10009 = vmatprep.subr.bf16.mxu0 0
      %10010 = vmatpush1.bf16.msra.mxu0 0
      %10011 = vmatprep.subr.bf16.mxu0 0
      %10012 = vmatpush1.bf16.msra.mxu0 0
      %10013 = vmatprep.subr.bf16.mxu0 0
      %10014 = vmatpush1.bf16.msra.mxu0 0
      %10015 = vmatprep.subr.bf16.mxu0 0
      %10016 = vmatpush1.bf16.msra.mxu0 0
      %10017 = vmatprep.subr.bf16.mxu0 0
      %10018 = vmatpush1.bf16.msra.mxu0 0
      %10019 = vmatprep.mubr.bf16.mxu0 0
      %10020 = vmatmul.mubr.bf16.gmra.mrb[0].mxu0 %v9919
      %v10021 = vpop.f32.mrb[0].mxu0
      %v10022 = vadd.f32 %v9937, %v10021
      %v10023 = vpop.f32.mrb[0].mxu0
      %v10024 = vpop.f32.mrb[0].mxu0
      %v10025 = vpop.f32.mrb[0].mxu0
      %10026 = vmatprep.mubr.bf16.mxu0 0
      %10027 = vmatmul.mubr.bf16.gmra.mrb[0].mxu0 %v9920
      %v10028 = vpop.f32.mrb[0].mxu0
      %v10029 = vpop.f32.mrb[0].mxu0
      %v10030 = vpop.f32.mrb[0].mxu0
      %v10031 = vadd.f32 %v9937, %v10030
      %v10032 = vpop.f32.mrb[0].mxu0
      %10033 = vmatprep.mubr.bf16.mxu0 0
      %10034 = vmatmul.mubr.bf16.gmra.mrb[0].mxu0 %v9921
      %v10035 = vpop.f32.mrb[0].mxu0
      %v10036 = vpop.f32.mrb[0].mxu0
      %v10037 = vpop.f32.mrb[0].mxu0
      %v10038 = vpop.f32.mrb[0].mxu0
      %10039 = vmatprep.mubr.bf16.mxu0 0
      %10040 = vmatmul.mubr.bf16.gmra.mrb[0].mxu0 %v9922
      %v10041 = vpop.f32.mrb[0].mxu0
      %v10042 = vadd.f32 %v9937, %v10041
      %v10043 = vpop.f32.mrb[0].mxu0
      %v10044 = vpop.f32.mrb[0].mxu0
      %v10045 = vpop.f32.mrb[0].mxu0
      %10046 = vmatprep.mubr.bf16.mxu0 0
      %10047 = vmatmul.mubr.bf16.gmra.mrb[0].mxu0 %v9923
      %v10048 = vpop.f32.mrb[0].mxu0
      %v10049 = vpop.f32.mrb[0].mxu0
      %v10050 = vpop.f32.mrb[0].mxu0
      %v10051 = vadd.f32 %v9937, %v10050
      %v10052 = vpop.f32.mrb[0].mxu0
      %10053 = vmatprep.mubr.bf16.mxu0 0
      %10054 = vmatmul.mubr.bf16.gmra.mrb[0].mxu0 %v9924
      %v10055 = vpop.f32.mrb[0].mxu0
      %v10056 = vpop.f32.mrb[0].mxu0
      %v10057 = vpop.f32.mrb[0].mxu0
      %v10058 = vpop.f32.mrb[0].mxu0
      %10059 = vmatprep.mubr.bf16.mxu0 0
      %10060 = vmatmul.mubr.bf16.gmra.mrb[0].mxu0 %v9925
      %v10061 = vpop.f32.mrb[0].mxu0
      %v10062 = vadd.f32 %v9937, %v10061
      %v10063 = vpop.f32.mrb[0].mxu0
      %v10064 = vpop.f32.mrb[0].mxu0
      %v10065 = vpop.f32.mrb[0].mxu0
      %10066 = vmatprep.mubr.bf16.mxu0 0
      %10067 = vmatmul.mubr.bf16.gmra.mrb[0].mxu0 %v9926
      %v10068 = vpop.f32.mrb[0].mxu0
      %v10069 = vpop.f32.mrb[0].mxu0
      %v10070 = vpop.f32.mrb[0].mxu0
      %v10071 = vadd.f32 %v9937, %v10070
      %v10072 = vpop.f32.mrb[0].mxu0
      %10073 = vmatprep.mubr.bf16.mxu0 0
      %10074 = vmatmul.mubr.bf16.gmra.mrb[0].mxu0 %v9927
      %v10075 = vpop.f32.mrb[0].mxu0
      %v10076 = vpop.f32.mrb[0].mxu0
      %v10077 = vpop.f32.mrb[0].mxu0
      %v10078 = vpop.f32.mrb[0].mxu0
      %10079 = vmatprep.mubr.bf16.mxu0 0
      %10080 = vmatmul.mubr.bf16.gmra.mrb[0].mxu0 %v9928
      %v10081 = vpop.f32.mrb[0].mxu0
      %v10082 = vadd.f32 %v9937, %v10081
      %v10083 = vpop.f32.mrb[0].mxu0
      %v10084 = vpop.f32.mrb[0].mxu0
      %v10085 = vpop.f32.mrb[0].mxu0
      %10086 = vmatprep.mubr.bf16.mxu0 0
      %10087 = vmatmul.mubr.bf16.gmra.mrb[0].mxu0 %v9929
      %v10088 = vpop.f32.mrb[0].mxu0
      %v10089 = vpop.f32.mrb[0].mxu0
      %v10090 = vpop.f32.mrb[0].mxu0
      %v10091 = vadd.f32 %v9937, %v10090
      %v10092 = vpop.f32.mrb[0].mxu0
      %10093 = vmatprep.mubr.bf16.mxu0 0
      %10094 = vmatmul.mubr.bf16.gmra.mrb[0].mxu0 %v9930
      %v10095 = vpop.f32.mrb[0].mxu0
      %v10096 = vpop.f32.mrb[0].mxu0
      %v10097 = vpop.f32.mrb[0].mxu0
      %v10098 = vpop.f32.mrb[0].mxu0
      %10099 = vdwg.mxu0
      %v10100 = vadd.f32 %v9652, %v10022
      %v10101 = vadd.f32 %v9655, %v10031
      %v10102 = vadd.f32 %v9658, %v10042
      %v10103 = vadd.f32 %v9661, %v10051
      %v10104 = vadd.f32 %v9664, %v10062
      %v10105 = vadd.f32 %v9667, %v10071
      %v10106 = vadd.f32 %v9670, %v10082
      %v10107 = vadd.f32 %v9673, %v10091
      %s10108 = scalar_lea.vmem %s11, 2
      %v10109 = vld [vmem:[%s10108] sm:$0x1]
      %s10110 = scalar_lea.vmem %s12, 2
      %v10111 = vld [vmem:[%s10110] sm:$0x1]
      %v10112 = vsel %vm900, %v10100, 0.0
      %10113 = vadd.xlane.f32.xlu0 %v10112
      %v10114 = vpop.xlane.xlu0 %10113
      %v10115 = vsel %vm900, %v10101, 0.0
      %10116 = vadd.xlane.f32.xlu0 %v10115
      %v10117 = vpop.xlane.xlu0 %10116
      %v10118 = vsel %vm900, %v10102, 0.0
      %10119 = vadd.xlane.f32.xlu0 %v10118
      %v10120 = vpop.xlane.xlu0 %10119
      %v10121 = vsel %vm900, %v10103, 0.0
      %10122 = vadd.xlane.f32.xlu0 %v10121
      %v10123 = vpop.xlane.xlu0 %10122
      %v10124 = vsel %vm900, %v10104, 0.0
      %10125 = vadd.xlane.f32.xlu0 %v10124
      %v10126 = vpop.xlane.xlu0 %10125
      %v10127 = vsel %vm900, %v10105, 0.0
      %10128 = vadd.xlane.f32.xlu0 %v10127
      %v10129 = vpop.xlane.xlu0 %10128
      %v10130 = vsel %vm900, %v10106, 0.0
      %10131 = vadd.xlane.f32.xlu0 %v10130
      %v10132 = vpop.xlane.xlu0 %10131
      %v10133 = vsel %vm900, %v10107, 0.0
      %10134 = vadd.xlane.f32.xlu0 %v10133
      %v10135 = vpop.xlane.xlu0 %10134
      %v10136 = vmul.f32 %v10114, %v973
      %v10137 = vmul.f32 %v10117, %v973
      %v10138 = vmul.f32 %v10120, %v973
      %v10139 = vmul.f32 %v10123, %v973
      %v10140 = vmul.f32 %v10126, %v973
      %v10141 = vmul.f32 %v10129, %v973
      %v10142 = vmul.f32 %v10132, %v973
      %v10143 = vmul.f32 %v10135, %v973
      %v10144 = vmul.f32 %v10100, %v10100
      %v10145 = vmul.f32 %v10101, %v10101
      %v10146 = vmul.f32 %v10102, %v10102
      %v10147 = vmul.f32 %v10103, %v10103
      %v10148 = vmul.f32 %v10104, %v10104
      %v10149 = vmul.f32 %v10105, %v10105
      %v10150 = vmul.f32 %v10106, %v10106
      %v10151 = vmul.f32 %v10107, %v10107
      %v10152 = vsel %vm900, %v10144, 0.0
      %10153 = vadd.xlane.f32.xlu0 %v10152
      %v10154 = vpop.xlane.xlu0 %10153
      %v10155 = vsel %vm900, %v10145, 0.0
      %10156 = vadd.xlane.f32.xlu0 %v10155
      %v10157 = vpop.xlane.xlu0 %10156
      %v10158 = vsel %vm900, %v10146, 0.0
      %10159 = vadd.xlane.f32.xlu0 %v10158
      %v10160 = vpop.xlane.xlu0 %10159
      %v10161 = vsel %vm900, %v10147, 0.0
      %10162 = vadd.xlane.f32.xlu0 %v10161
      %v10163 = vpop.xlane.xlu0 %10162
      %v10164 = vsel %vm900, %v10148, 0.0
      %10165 = vadd.xlane.f32.xlu0 %v10164
      %v10166 = vpop.xlane.xlu0 %10165
      %v10167 = vsel %vm900, %v10149, 0.0
      %10168 = vadd.xlane.f32.xlu0 %v10167
      %v10169 = vpop.xlane.xlu0 %10168
      %v10170 = vsel %vm900, %v10150, 0.0
      %10171 = vadd.xlane.f32.xlu0 %v10170
      %v10172 = vpop.xlane.xlu0 %10171
      %v10173 = vsel %vm900, %v10151, 0.0
      %10174 = vadd.xlane.f32.xlu0 %v10173
      %v10175 = vpop.xlane.xlu0 %10174
      %v10176 = vmul.f32 %v10154, %v973
      %v10177 = vmul.f32 %v10157, %v973
      %v10178 = vmul.f32 %v10160, %v973
      %v10179 = vmul.f32 %v10163, %v973
      %v10180 = vmul.f32 %v10166, %v973
      %v10181 = vmul.f32 %v10169, %v973
      %v10182 = vmul.f32 %v10172, %v973
      %v10183 = vmul.f32 %v10175, %v973
      %v10184 = vmul.f32 %v10136, %v10136
      %v10185 = vmul.f32 %v10137, %v10137
      %v10186 = vmul.f32 %v10138, %v10138
      %v10187 = vmul.f32 %v10139, %v10139
      %v10188 = vmul.f32 %v10140, %v10140
      %v10189 = vmul.f32 %v10141, %v10141
      %v10190 = vmul.f32 %v10142, %v10142
      %v10191 = vmul.f32 %v10143, %v10143
      %v10192 = vsub.f32 %v10176, %v10184
      %v10193 = vsub.f32 %v10177, %v10185
      %v10194 = vsub.f32 %v10178, %v10186
      %v10195 = vsub.f32 %v10179, %v10187
      %v10196 = vsub.f32 %v10180, %v10188
      %v10197 = vsub.f32 %v10181, %v10189
      %v10198 = vsub.f32 %v10182, %v10190
      %v10199 = vsub.f32 %v10183, %v10191
      %v10200 = vsub.f32 %v10100, %v10136
      %v10201 = vsub.f32 %v10101, %v10137
      %v10202 = vsub.f32 %v10102, %v10138
      %v10203 = vsub.f32 %v10103, %v10139
      %v10204 = vsub.f32 %v10104, %v10140
      %v10205 = vsub.f32 %v10105, %v10141
      %v10206 = vsub.f32 %v10106, %v10142
      %v10207 = vsub.f32 %v10107, %v10143
      %v10208 = vadd.f32 %v10192, 1e-05
      %v10209 = vadd.f32 %v10193, 1e-05
      %v10210 = vadd.f32 %v10194, 1e-05
      %v10211 = vadd.f32 %v10195, 1e-05
      %v10212 = vadd.f32 %v10196, 1e-05
      %v10213 = vadd.f32 %v10197, 1e-05
      %v10214 = vadd.f32 %v10198, 1e-05
      %v10215 = vadd.f32 %v10199, 1e-05
      %v10216 = vrsqrt.pop %v10208
      %v10217 = vrsqrt.pop %v10209
      %v10218 = vrsqrt.pop %v10210
      %v10219 = vrsqrt.pop %v10211
      %v10220 = vrsqrt.pop %v10212
      %v10221 = vrsqrt.pop %v10213
      %v10222 = vrsqrt.pop %v10214
      %v10223 = vrsqrt.pop %v10215
      %v10224 = vmul.f32 %v10200, %v10216
      %v10225 = vmul.f32 %v10201, %v10217
      %v10226 = vmul.f32 %v10202, %v10218
      %v10227 = vmul.f32 %v10203, %v10219
      %v10228 = vmul.f32 %v10204, %v10220
      %v10229 = vmul.f32 %v10205, %v10221
      %v10230 = vmul.f32 %v10206, %v10222
      %v10231 = vmul.f32 %v10207, %v10223
      %v10233 = vlaneseq
      %v10234 = vshrl.u32 %v10233, 7
      %v10235 = vsub.s32 0, %v10234
      %v10236 = vrot.slane %v10109, %v10235
      %v10238 = vmul.f32 %v10224, %v10236
      %v10239 = vmul.f32 %v10225, %v10236
      %v10240 = vmul.f32 %v10226, %v10236
      %v10241 = vmul.f32 %v10227, %v10236
      %v10242 = vmul.f32 %v10228, %v10236
      %v10243 = vmul.f32 %v10229, %v10236
      %v10244 = vmul.f32 %v10230, %v10236
      %v10245 = vmul.f32 %v10231, %v10236
      %v10247 = vlaneseq
      %v10248 = vshrl.u32 %v10247, 7
      %v10249 = vsub.s32 0, %v10248
      %v10250 = vrot.slane %v10111, %v10249
      %v10252 = vadd.f32 %v10238, %v10250
      %v10253 = vadd.f32 %v10239, %v10250
      %v10254 = vadd.f32 %v10240, %v10250
      %v10255 = vadd.f32 %v10241, %v10250
      %v10256 = vadd.f32 %v10242, %v10250
      %v10257 = vadd.f32 %v10243, %v10250
      %v10258 = vadd.f32 %v10244, %v10250
      %v10259 = vadd.f32 %v10245, %v10250
      %v10260 = vld [vmem:[%s17] sm:$0xf]
      %v10261 = vld [vmem:[%s17 + $0x4] sm:$0xf]
      %v10262 = vld [vmem:[%s17 + $0x8] sm:$0xf]
      %v10263 = vld [vmem:[%s17 + $0xc] sm:$0xf]
      %v10264 = vpack.c.bf16 %v10253, %v10252
      %v10265 = vpack.c.bf16 %v10255, %v10254
      %v10266 = vpack.c.bf16 %v10257, %v10256
      %v10267 = vpack.c.bf16 %v10259, %v10258
      %v10268 = vld [vmem:[%s18] sm:$0x1]
      %v10270 = vlaneseq
      %v10271 = vshrl.u32 %v10270, 7
      %v10272 = vsub.s32 0, %v10271
      %v10273 = vrot.slane %v10268, %v10272
      %v10279 = vunpack.c.l.b16 %v10260
      %v10280 = vunpack.c.l.b16 %v10261
      %v10281 = vunpack.c.l.b16 %v10262
      %v10282 = vunpack.c.l.b16 %v10263
      %v10283 = vpack.c.b16 %v10280, %v10279
      %v10284 = vpack.c.b16 %v10282, %v10281
      %v10288 = vsel %vm900, %v10264, 0
      %v10291 = vsel %vm900, %v10265, 0
      %v10294 = vsel %vm900, %v10266, 0
      %v10297 = vsel %vm900, %v10267, 0
      %10299 = vmatprep.subr.bf16.mxu0 0
      %10300 = vmatpush1.bf16.msra.mxu0 %v10283
      %10301 = vmatprep.subr.bf16.mxu0 0
      %10302 = vmatpush1.bf16.msra.mxu0 %v10284
      %10303 = vmatprep.subr.bf16.mxu0 0
      %10304 = vmatpush1.bf16.msra.mxu0 0
      %10305 = vmatprep.subr.bf16.mxu0 0
      %10306 = vmatpush1.bf16.msra.mxu0 0
      %10307 = vmatprep.subr.bf16.mxu0 0
      %10308 = vmatpush1.bf16.msra.mxu0 0
      %10309 = vmatprep.subr.bf16.mxu0 0
      %10310 = vmatpush1.bf16.msra.mxu0 0
      %10311 = vmatprep.subr.bf16.mxu0 0
      %10312 = vmatpush1.bf16.msra.mxu0 0
      %10313 = vmatprep.subr.bf16.mxu0 0
      %10314 = vmatpush1.bf16.msra.mxu0 0
      %10315 = vmatprep.subr.bf16.mxu0 0
      %10316 = vmatpush1.bf16.msra.mxu0 0
      %10317 = vmatprep.subr.bf16.mxu0 0
      %10318 = vmatpush1.bf16.msra.mxu0 0
      %10319 = vmatprep.subr.bf16.mxu0 0
      %10320 = vmatpush1.bf16.msra.mxu0 0
      %10321 = vmatprep.subr.bf16.mxu0 0
      %10322 = vmatpush1.bf16.msra.mxu0 0
      %10323 = vmatprep.subr.bf16.mxu0 0
      %10324 = vmatpush1.bf16.msra.mxu0 0
      %10325 = vmatprep.subr.bf16.mxu0 0
      %10326 = vmatpush1.bf16.msra.mxu0 0
      %10327 = vmatprep.subr.bf16.mxu0 0
      %10328 = vmatpush1.bf16.msra.mxu0 0
      %10329 = vmatprep.subr.bf16.mxu0 0
      %10330 = vmatpush1.bf16.msra.mxu0 0
      %10331 = vmatprep.mubr.bf16.mxu0 0
      %10332 = vmatmul.mubr.bf16.gmra.mrb[0].mxu0 %v10288
      %v10333 = vpop.f32.mrb[0].mxu0
      %v10334 = vadd.f32 %v10273, %v10333
      %v10335 = vpop.f32.mrb[0].mxu0
      %v10336 = vpop.f32.mrb[0].mxu0
      %v10337 = vadd.f32 %v10273, %v10336
      %v10338 = vpop.f32.mrb[0].mxu0
      %10339 = vmatprep.mubr.bf16.mxu0 0
      %10340 = vmatmul.mubr.bf16.gmra.mrb[0].mxu0 %v10291
      %v10341 = vpop.f32.mrb[0].mxu0
      %v10342 = vadd.f32 %v10273, %v10341
      %v10343 = vpop.f32.mrb[0].mxu0
      %v10344 = vpop.f32.mrb[0].mxu0
      %v10345 = vadd.f32 %v10273, %v10344
      %v10346 = vpop.f32.mrb[0].mxu0
      %10347 = vmatprep.mubr.bf16.mxu0 0
      %10348 = vmatmul.mubr.bf16.gmra.mrb[0].mxu0 %v10294
      %v10349 = vpop.f32.mrb[0].mxu0
      %v10350 = vadd.f32 %v10273, %v10349
      %v10351 = vpop.f32.mrb[0].mxu0
      %v10352 = vpop.f32.mrb[0].mxu0
      %v10353 = vadd.f32 %v10273, %v10352
      %v10354 = vpop.f32.mrb[0].mxu0
      %10355 = vmatprep.mubr.bf16.mxu0 0
      %10356 = vmatmul.mubr.bf16.gmra.mrb[0].mxu0 %v10297
      %v10357 = vpop.f32.mrb[0].mxu0
      %v10358 = vadd.f32 %v10273, %v10357
      %v10359 = vpop.f32.mrb[0].mxu0
      %v10360 = vpop.f32.mrb[0].mxu0
      %v10361 = vadd.f32 %v10273, %v10360
      %v10362 = vpop.f32.mrb[0].mxu0
      %10363 = vdwg.mxu0
      %v10364 = vpack.c.bf16 %v10334, %v10334
      %v10365 = vpack.c.bf16 %v10337, %v10337
      %v10366 = vpack.c.bf16 %v10342, %v10342
      %v10367 = vpack.c.bf16 %v10345, %v10345
      %v10368 = vpack.c.bf16 %v10350, %v10350
      %v10369 = vpack.c.bf16 %v10353, %v10353
      %v10370 = vpack.c.bf16 %v10358, %v10358
      %v10371 = vpack.c.bf16 %v10361, %v10361
      %10372 = vst [vmem:[%s607] sm:$0xf] %v10364
      %10373 = vst [vmem:[%s607 + $0x4] sm:$0xf] %v10365
      %10374 = vst [vmem:[%s607 + $0x8] sm:$0xf] %v10366
      %10375 = vst [vmem:[%s607 + $0xc] sm:$0xf] %v10367
      %10376 = vst [vmem:[%s607 + $0x10] sm:$0xf] %v10368
      %10377 = vst [vmem:[%s607 + $0x14] sm:$0xf] %v10369
      %10378 = vst [vmem:[%s607 + $0x18] sm:$0xf] %v10370
      %10379 = vst [vmem:[%s607 + $0x1c] sm:$0xf] %v10371
      %s10380 = smul.u32 8, %s30
      %p10381 = scmp.lt.s32.totalorder %s10380, 31
      %s10382 = scalar_select %p10381, %s10380, 31
      %s10383 = smul.addr %s10382, 4
      %s10384 = scalar_lea.vmem %s19, %s10383
      // Predicated region
      $region97: #{dt_forward.1} parent=95 // pred_check
        %p10385 = pneg %p452
      $region98: #{dt_forward.1} parent=95 // pred_check_branch
        %10387 = sbr.rel (%p10385) target = $region100
      $region99: #{dt_forward.1} parent=95 // pred_region
        %s10388 = smul.u32 8, %s30
      $region100: #{dt_forward.1} parent=95 // pred_fallthru
        _
    $region96: #{dt_forward.1} parent=5 // pred_fallthru
      _
    %p10389 = scmp.le.s32.totalorder 2, %s25
    // Predicated region
    $region101: #{dt_forward.1} parent=5 // pred_check
      %p10390 = pneg %p10389
    $region102: #{dt_forward.1} parent=5 // pred_check_branch
      %10392 = sbr.rel (%p10390) target = $region104
    $region103: #{dt_forward.1} parent=5 // pred_region
      %s10393 = ssub.s32 %s25, 2
      // Predicated region
      $region105: #{dt_forward.1} parent=103 // pred_check
        %p10394 = pneg %p458
      $region106: #{dt_forward.1} parent=103 // pred_check_branch
        %10396 = sbr.rel (%p10394) target = $region108
      $region107: #{dt_forward.1} parent=103 // pred_region
        %s10397 = smul.u32 8, %s31
        %p10398 = scmp.lt.s32.totalorder %s10397, 31
        %s10399 = scalar_select %p10398, %s10397, 31
        %s10400 = smul.addr %s10399, 4
        %s10401 = scalar_lea.vmem %s19, %s10400
      $region108: #{dt_forward.1} parent=103 // pred_fallthru
        _
    $region104: #{dt_forward.1} parent=5 // pred_fallthru
      _
  $region6: #{dt_forward.1} parent=0 // loop_footer
    %s29 = sadd.s32 1, %s25
  $region7: #{dt_forward.1} parent=0 // loop_footer_branch
    %24 = sbr.rel target = $region3
  $region8: #{dt_forward.1} parent=0 // loop_exit
    _

</llo_original>
